<compile_context>
chip_gen: v7x
topology: tpu7x:2x2x1
jax: 0.10.0
libtpu: 0.0.40
codegen_flags: <defaults>
</compile_context>

<pallas_src>
import jax
import jax.numpy as jnp
from jax.experimental import pallas as pl
from jax.experimental.pallas import tpu as pltpu


_VMEM_LIMIT_BYTES = 48 * 1024 * 1024  # > default scoped limits, < v7x 64 MiB physical


def _round_up(a, m):
    return ((a + m - 1) // m) * m


def _tile_m(m, target=512):
    """8-aligned M tile (<= target) and the padded M that it evenly divides."""
    tm = min(target, _round_up(m, 8))
    return tm, _round_up(m, tm)


# ----------------------------------------------------------------------------
# im2col glue: taps are folded into the channel (K) dimension so each conv is a
# single GEMM with K = KH*KW*Cin.
# ----------------------------------------------------------------------------
def _im2col(x, ksize, stride, padding):
    n, h, w, c = x.shape
    ho = (h + 2 * padding - ksize) // stride + 1
    wo = (w + 2 * padding - ksize) // stride + 1
    xp = jnp.pad(x, ((0, 0), (padding, padding), (padding, padding), (0, 0)))
    taps = []
    for kh in range(ksize):
        for kw in range(ksize):
            taps.append(
                xp[:, kh:kh + stride * ho:stride, kw:kw + stride * wo:stride, :]
            )
    cols = jnp.concatenate(taps, axis=-1)                 # (N, Ho, Wo, T*C)
    return cols.reshape(n * ho * wo, ksize * ksize * c), (n, ho, wo)


def _im2col_up2x(x):
    """im2col of nearest-2x-upsample(x) followed by a 3x3/s1/p1 conv, with the
    upsample folded into the gather indices (4x tensor never materialized)."""
    n, h, w, c = x.shape
    ho, wo = 2 * h, 2 * w
    xp = jnp.pad(x, ((0, 0), (1, 1), (1, 1), (0, 0)))     # padded source
    taps = []
    for kh in range(3):
        r = jnp.arange(ho) + (kh - 1)                     # row coord in upsampled img
        rows = jnp.where(r < 0, 0, r // 2 + 1)            # -> padded-source row idx
        for kw in range(3):
            q = jnp.arange(wo) + (kw - 1)
            cols_i = jnp.where(q < 0, 0, q // 2 + 1)
            taps.append(xp[:, rows, :, :][:, :, cols_i, :])
    cols = jnp.concatenate(taps, axis=-1)
    return cols.reshape(n * ho * wo, 9 * c), (n, ho, wo)


# ----------------------------------------------------------------------------
# Pallas kernel: multi-part GEMM (split-K over channel-concat parts) with fused
# bias + ReLU, optional fused residual add, optional fused 1x1 flow head.
# ----------------------------------------------------------------------------
def _make_kernel(n_parts, has_flow, has_residual, flow_scale):
    def kernel(*refs):
        i = 0
        xs = refs[i:i + n_parts]; i += n_parts
        ws = refs[i:i + n_parts]; i += n_parts
        b_ref = refs[i]; i += 1
        wf_ref = bf_ref = r_ref = None
        if has_flow:
            wf_ref, bf_ref = refs[i], refs[i + 1]; i += 2
        if has_residual:
            r_ref = refs[i]; i += 1
        outs = refs[i:]

        # bf16 x bf16 -> f32 accumulation on the MXU; K = KH*KW*Cin (folded taps).
        acc = jnp.dot(xs[0][...], ws[0][...], preferred_element_type=jnp.float32)
        for p in range(1, n_parts):
            acc = acc + jnp.dot(xs[p][...], ws[p][...],
                                preferred_element_type=jnp.float32)
        y = jnp.maximum(acc + b_ref[...], 0.0)            # bias + ReLU in f32

        out = y + r_ref[...].astype(jnp.float32) if has_residual else y
        outs[0][...] = out.astype(outs[0].dtype)

        if has_flow:                                      # fused 1x1 flow head
            f = jnp.dot(y, wf_ref[...], preferred_element_type=jnp.float32)
            f = jnp.tanh(f + bf_ref[...]) * flow_scale
            outs[1][...] = f.astype(outs[1].dtype)
    return kernel


def fused_conv(parts, w, b, *, stride=1, padding=1, upsample=False,
               flow_head=None, flow_scale=256.0, residual=None,
               out_dtype=jnp.bfloat16, tm_target=512):
    """Conv (over the channel concatenation of `parts`, NHWC) + bias + ReLU,
    with optional fused residual add or fused 1x1 tanh flow head.
    Lowered to a single tiled GEMM per grid step (taps folded into K)."""
    ksize, _, cin_total, cout = w.shape
    part_c = [p.shape[-1] for p in parts]
    assert sum(part_c) == cin_total

    # im2col each part (bf16 operands for the MXU).
    cols, dims = [], None
    for p in parts:
        p16 = p.astype(jnp.bfloat16)
        c, dims = _im2col_up2x(p16) if upsample else _im2col(p16, ksize, stride, padding)
        cols.append(c)
    n, ho, wo = dims
    m = n * ho * wo
    tm, m_pad = _tile_m(m, tm_target)
    if m_pad != m:
        cols = [jnp.pad(c, ((0, m_pad - m), (0, 0))) for c in cols]

    # Split the conv weight along its input-channel axis to match the parts
    # (GEMM over concat(parts) == sum of per-part GEMMs -> no concat in HBM).
    w_parts, off = [], 0
    for c_i in part_c:
        w_parts.append(w[:, :, off:off + c_i, :]
                       .reshape(ksize * ksize * c_i, cout).astype(jnp.bfloat16))
        off += c_i
    b2 = b.reshape(1, cout).astype(jnp.float32)

    inputs = list(cols) + list(w_parts) + [b2]
    in_specs = (
        [pl.BlockSpec((tm, c.shape[1]), lambda i: (i, 0)) for c in cols]
        + [pl.BlockSpec(wp.shape, lambda i: (0, 0)) for wp in w_parts]
        + [pl.BlockSpec((1, cout), lambda i: (0, 0))]
    )

    has_flow = flow_head is not None
    if has_flow:
        wf, bf = flow_head
        inputs += [wf.reshape(cout, 2).astype(jnp.float32),
                   bf.reshape(1, 2).astype(jnp.float32)]
        in_specs += [pl.BlockSpec((cout, 2), lambda i: (0, 0)),
                     pl.BlockSpec((1, 2), lambda i: (0, 0))]

    has_residual = residual is not None
    if has_residual:
        r = residual.astype(out_dtype).reshape(m, cout)
        if m_pad != m:
            r = jnp.pad(r, ((0, m_pad - m), (0, 0)))
        inputs.append(r)
        in_specs.append(pl.BlockSpec((tm, cout), lambda i: (i, 0)))

    if has_flow:
        out_shape = (jax.ShapeDtypeStruct((m_pad, cout), out_dtype),
                     jax.ShapeDtypeStruct((m_pad, 2), jnp.float32))
        out_specs = (pl.BlockSpec((tm, cout), lambda i: (i, 0)),
                     pl.BlockSpec((tm, 2), lambda i: (i, 0)))
    else:
        out_shape = jax.ShapeDtypeStruct((m_pad, cout), out_dtype)
        out_specs = pl.BlockSpec((tm, cout), lambda i: (i, 0))

    kernel = _make_kernel(len(parts), has_flow, has_residual, flow_scale)

    outs = pl.pallas_call(
        kernel,
        out_shape=out_shape,
        grid_spec=pltpu.PrefetchScalarGridSpec(
            num_scalar_prefetch=0,
            grid=(m_pad // tm,),
            in_specs=in_specs,
            out_specs=out_specs,
        ),
        compiler_params=pltpu.CompilerParams(
            dimension_semantics=("parallel",),
            vmem_limit_bytes=_VMEM_LIMIT_BYTES,
        ),
    )(*inputs)

    if has_flow:
        conv_flat, flow_flat = outs
        conv = conv_flat[:m].reshape(n, ho, wo, cout)
        flow = flow_flat[:m].reshape(n, ho, wo, 2)
        return conv, flow
    return outs[:m].reshape(n, ho, wo, cout)


# ----------------------------------------------------------------------------
# Parameter construction (deterministic, synthetic)
# ----------------------------------------------------------------------------
def _init_conv(key, kh, kw, cin, cout):
    kw_, kb_ = jax.random.split(key)
    w = jax.random.normal(kw_, (kh, kw, cin, cout), jnp.float32) * 0.1
    b = jax.random.normal(kb_, (cout,), jnp.float32) * 0.01
    return w, b


def init_evflownet_params(key, in_channels, base_channels):
    bch = base_channels
    keys = iter(jax.random.split(key, 32))
    p = {}
    p["enc1"] = _init_conv(next(keys), 3, 3, in_channels, bch)
    p["enc2"] = _init_conv(next(keys), 3, 3, bch, 2 * bch)
    p["enc3"] = _init_conv(next(keys), 3, 3, 2 * bch, 4 * bch)
    p["enc4"] = _init_conv(next(keys), 3, 3, 4 * bch, 8 * bch)
    for r in range(2):
        for c in range(2):
            p[f"res{r}_{c}"] = _init_conv(next(keys), 3, 3, 8 * bch, 8 * bch)
    dec_cfg = [(16 * bch, 4 * bch), (8 * bch + 2, 2 * bch),
               (4 * bch + 2, bch), (2 * bch + 2, bch // 2)]
    for d, (cin, cout) in enumerate(dec_cfg):
        p[f"dec{d + 1}_conv"] = _init_conv(next(keys), 3, 3, cin, cout)
        p[f"dec{d + 1}_flow"] = _init_conv(next(keys), 1, 1, cout, 2)
    return p


# ----------------------------------------------------------------------------
# Forward pass
# ----------------------------------------------------------------------------
def evflownet_forward(params, x_nchw):
    # NCHW (PyTorch) -> NHWC; bf16 activations for the TPU matmul path.
    x = jnp.transpose(x_nchw, (0, 2, 3, 1)).astype(jnp.bfloat16)

    skips = []
    for i in range(4):
        w, b = params[f"enc{i + 1}"]
        x = fused_conv([x], w, b, stride=2)
        skips.append(x)

    # resnet blocks: residual add fused into the second conv's epilogue.
    for r in range(2):
        w0, b0 = params[f"res{r}_0"]
        w1, b1 = params[f"res{r}_1"]
        y = fused_conv([x], w0, b0, stride=1)
        x = fused_conv([y], w1, b1, stride=1, residual=x)

    flow_dict = {}
    prev_parts = [x]                      # channel-concat never materialized
    for d in range(4):
        skip = skips[3 - d]
        w, b = params[f"dec{d + 1}_conv"]
        wf, bf = params[f"dec{d + 1}_flow"]
        conv, flow = fused_conv(prev_parts + [skip], w, b, upsample=True,
                                flow_head=(wf, bf), flow_scale=256.0)
        prev_parts = [conv, flow]
        flow_dict[f"flow{d}"] = jnp.transpose(flow, (0, 3, 1, 2))  # NCHW, f32
    return flow_dict


# ----------------------------------------------------------------------------
if __name__ == "__main__":
    key = jax.random.PRNGKey(0)
    k_param, k_input = jax.random.split(key)

    batch, in_channels, base_channels, spatial = 2, 4, 8, 16
    params = init_evflownet_params(k_param, in_channels, base_channels)
    x = jax.random.normal(k_input, (batch, in_channels, spatial, spatial), jnp.float32)

    fwd = jax.jit(evflownet_forward)
    flows = jax.block_until_ready(fwd(params, x))

    expected = {
        "flow0": (batch, 2, 2, 2),
        "flow1": (batch, 2, 4, 4),
        "flow2": (batch, 2, 8, 8),
        "flow3": (batch, 2, 16, 16),
    }
    for name, shape in expected.items():
        assert flows[name].shape == shape, (name, flows[name].shape, shape)
        assert bool(jnp.all(jnp.isfinite(flows[name])))

    print("KERNEL_OK")
</pallas_src>

<mosaic_0001>
module attributes {stable_mosaic.version = 11 : i64} {
  func.func @kernel(%arg0: i32, %arg1: memref<128x36xbf16, #tpu.memory_space<vmem>>, %arg2: memref<36x8xbf16, #tpu.memory_space<vmem>>, %arg3: memref<1x8xf32, #tpu.memory_space<vmem>>, %arg4: memref<128x8xbf16, #tpu.memory_space<vmem>>) attributes {dimension_semantics = [#tpu.dimension_semantics<parallel>], iteration_bounds = array<i64: 1>, scalar_prefetch = 0 : i64, scratch_operands = 0 : i64, tpu.core_type = #tpu.core_type<tc>, window_params = [{transform_indices = @transform_0, window_bounds = array<i64: 128, 36>}, {pipeline_mode = #tpu.pipeline_mode<synchronous>, transform_indices = @transform_1, window_bounds = array<i64: 36, 8>}, {pipeline_mode = #tpu.pipeline_mode<synchronous>, transform_indices = @transform_2, window_bounds = array<i64: 1, 8>}, {transform_indices = @transform_3, window_bounds = array<i64: 128, 8>}]} {
    %c0 = arith.constant 0 : index
    %c0_0 = arith.constant 0 : index
    %0 = vector.load %arg1[%c0, %c0_0] : memref<128x36xbf16, #tpu.memory_space<vmem>>, vector<128x36xbf16>
    %c0_1 = arith.constant 0 : index
    %c0_2 = arith.constant 0 : index
    %1 = vector.load %arg2[%c0_1, %c0_2] : memref<36x8xbf16, #tpu.memory_space<vmem>>, vector<36x8xbf16>
    %cst = arith.constant dense<0.000000e+00> : vector<128x8xf32>
    %2 = tpu.matmul %0, %1, %cst {dimension_numbers = #tpu.dot_dimension_numbers<[1], [0], [0], [1], [0, 0, 1, 1], [], []>} : vector<128x36xbf16>, vector<36x8xbf16>, vector<128x8xf32> -> vector<128x8xf32>
    %c0_3 = arith.constant 0 : index
    %c0_4 = arith.constant 0 : index
    %3 = vector.load %arg3[%c0_3, %c0_4] : memref<1x8xf32, #tpu.memory_space<vmem>>, vector<1x8xf32>
    %4 = vector.broadcast %3 : vector<1x8xf32> to vector<128x8xf32>
    %5 = arith.addf %2, %4 : vector<128x8xf32>
    %cst_5 = arith.constant 0.000000e+00 : f32
    %6 = vector.broadcast %cst_5 : f32 to vector<128x8xf32>
    %7 = arith.maximumf %5, %6 : vector<128x8xf32>
    %8 = arith.truncf %7 : vector<128x8xf32> to vector<128x8xbf16>
    %c0_6 = arith.constant 0 : index
    %c0_7 = arith.constant 0 : index
    %9 = vector.load %arg4[%c0_6, %c0_7] : memref<128x8xbf16, #tpu.memory_space<vmem>>, vector<128x8xbf16>
    tpu.vector_store %arg4[%c0_6, %c0_7], %8 {strides = array<i32>} : memref<128x8xbf16, #tpu.memory_space<vmem>>, vector<128x8xbf16>,
    return
  }
  func.func @transform_0(%arg0: i32) -> (i32, i32) {
    %c0_i32 = arith.constant 0 : i32
    %c0_i32_0 = arith.constant 0 : i32
    return %arg0, %c0_i32 : i32, i32
  }
  func.func @transform_1(%arg0: i32) -> (i32, i32) {
    %c0_i32 = arith.constant 0 : i32
    %c0_i32_0 = arith.constant 0 : i32
    %c0_i32_1 = arith.constant 0 : i32
    return %c0_i32, %c0_i32_0 : i32, i32
  }
  func.func @transform_2(%arg0: i32) -> (i32, i32) {
    %c0_i32 = arith.constant 0 : i32
    %c0_i32_0 = arith.constant 0 : i32
    %c0_i32_1 = arith.constant 0 : i32
    return %c0_i32, %c0_i32_0 : i32, i32
  }
  func.func @transform_3(%arg0: i32) -> (i32, i32) {
    %c0_i32 = arith.constant 0 : i32
    %c0_i32_0 = arith.constant 0 : i32
    return %arg0, %c0_i32 : i32, i32
  }
}

module attributes {stable_mosaic.version = 11 : i64} {
  func.func @kernel(%arg0: i32, %arg1: memref<32x72xbf16, #tpu.memory_space<vmem>>, %arg2: memref<72x16xbf16, #tpu.memory_space<vmem>>, %arg3: memref<1x16xf32, #tpu.memory_space<vmem>>, %arg4: memref<32x16xbf16, #tpu.memory_space<vmem>>) attributes {dimension_semantics = [#tpu.dimension_semantics<parallel>], iteration_bounds = array<i64: 1>, scalar_prefetch = 0 : i64, scratch_operands = 0 : i64, tpu.core_type = #tpu.core_type<tc>, window_params = [{transform_indices = @transform_0, window_bounds = array<i64: 32, 72>}, {pipeline_mode = #tpu.pipeline_mode<synchronous>, transform_indices = @transform_1, window_bounds = array<i64: 72, 16>}, {pipeline_mode = #tpu.pipeline_mode<synchronous>, transform_indices = @transform_2, window_bounds = array<i64: 1, 16>}, {transform_indices = @transform_3, window_bounds = array<i64: 32, 16>}]} {
    %c0 = arith.constant 0 : index
    %c0_0 = arith.constant 0 : index
    %0 = vector.load %arg1[%c0, %c0_0] : memref<32x72xbf16, #tpu.memory_space<vmem>>, vector<32x72xbf16>
    %c0_1 = arith.constant 0 : index
    %c0_2 = arith.constant 0 : index
    %1 = vector.load %arg2[%c0_1, %c0_2] : memref<72x16xbf16, #tpu.memory_space<vmem>>, vector<72x16xbf16>
    %cst = arith.constant dense<0.000000e+00> : vector<32x16xf32>
    %2 = tpu.matmul %0, %1, %cst {dimension_numbers = #tpu.dot_dimension_numbers<[1], [0], [0], [1], [0, 0, 1, 1], [], []>} : vector<32x72xbf16>, vector<72x16xbf16>, vector<32x16xf32> -> vector<32x16xf32>
    %c0_3 = arith.constant 0 : index
    %c0_4 = arith.constant 0 : index
    %3 = vector.load %arg3[%c0_3, %c0_4] : memref<1x16xf32, #tpu.memory_space<vmem>>, vector<1x16xf32>
    %4 = vector.broadcast %3 : vector<1x16xf32> to vector<32x16xf32>
    %5 = arith.addf %2, %4 : vector<32x16xf32>
    %cst_5 = arith.constant 0.000000e+00 : f32
    %6 = vector.broadcast %cst_5 : f32 to vector<32x16xf32>
    %7 = arith.maximumf %5, %6 : vector<32x16xf32>
    %8 = arith.truncf %7 : vector<32x16xf32> to vector<32x16xbf16>
    %c0_6 = arith.constant 0 : index
    %c0_7 = arith.constant 0 : index
    %9 = vector.load %arg4[%c0_6, %c0_7] : memref<32x16xbf16, #tpu.memory_space<vmem>>, vector<32x16xbf16>
    tpu.vector_store %arg4[%c0_6, %c0_7], %8 {strides = array<i32>} : memref<32x16xbf16, #tpu.memory_space<vmem>>, vector<32x16xbf16>,
    return
  }
  func.func @transform_0(%arg0: i32) -> (i32, i32) {
    %c0_i32 = arith.constant 0 : i32
    %c0_i32_0 = arith.constant 0 : i32
    return %arg0, %c0_i32 : i32, i32
  }
  func.func @transform_1(%arg0: i32) -> (i32, i32) {
    %c0_i32 = arith.constant 0 : i32
    %c0_i32_0 = arith.constant 0 : i32
    %c0_i32_1 = arith.constant 0 : i32
    return %c0_i32, %c0_i32_0 : i32, i32
  }
  func.func @transform_2(%arg0: i32) -> (i32, i32) {
    %c0_i32 = arith.constant 0 : i32
    %c0_i32_0 = arith.constant 0 : i32
    %c0_i32_1 = arith.constant 0 : i32
    return %c0_i32, %c0_i32_0 : i32, i32
  }
  func.func @transform_3(%arg0: i32) -> (i32, i32) {
    %c0_i32 = arith.constant 0 : i32
    %c0_i32_0 = arith.constant 0 : i32
    return %arg0, %c0_i32 : i32, i32
  }
}

module attributes {stable_mosaic.version = 11 : i64} {
  func.func @kernel(%arg0: i32, %arg1: memref<8x144xbf16, #tpu.memory_space<vmem>>, %arg2: memref<144x32xbf16, #tpu.memory_space<vmem>>, %arg3: memref<1x32xf32, #tpu.memory_space<vmem>>, %arg4: memref<8x32xbf16, #tpu.memory_space<vmem>>) attributes {dimension_semantics = [#tpu.dimension_semantics<parallel>], iteration_bounds = array<i64: 1>, scalar_prefetch = 0 : i64, scratch_operands = 0 : i64, tpu.core_type = #tpu.core_type<tc>, window_params = [{transform_indices = @transform_0, window_bounds = array<i64: 8, 144>}, {pipeline_mode = #tpu.pipeline_mode<synchronous>, transform_indices = @transform_1, window_bounds = array<i64: 144, 32>}, {pipeline_mode = #tpu.pipeline_mode<synchronous>, transform_indices = @transform_2, window_bounds = array<i64: 1, 32>}, {transform_indices = @transform_3, window_bounds = array<i64: 8, 32>}]} {
    %c0 = arith.constant 0 : index
    %c0_0 = arith.constant 0 : index
    %0 = vector.load %arg1[%c0, %c0_0] : memref<8x144xbf16, #tpu.memory_space<vmem>>, vector<8x144xbf16>
    %c0_1 = arith.constant 0 : index
    %c0_2 = arith.constant 0 : index
    %1 = vector.load %arg2[%c0_1, %c0_2] : memref<144x32xbf16, #tpu.memory_space<vmem>>, vector<144x32xbf16>
    %cst = arith.constant dense<0.000000e+00> : vector<8x32xf32>
    %2 = tpu.matmul %0, %1, %cst {dimension_numbers = #tpu.dot_dimension_numbers<[1], [0], [0], [1], [0, 0, 1, 1], [], []>} : vector<8x144xbf16>, vector<144x32xbf16>, vector<8x32xf32> -> vector<8x32xf32>
    %c0_3 = arith.constant 0 : index
    %c0_4 = arith.constant 0 : index
    %3 = vector.load %arg3[%c0_3, %c0_4] : memref<1x32xf32, #tpu.memory_space<vmem>>, vector<1x32xf32>
    %4 = vector.broadcast %3 : vector<1x32xf32> to vector<8x32xf32>
    %5 = arith.addf %2, %4 : vector<8x32xf32>
    %cst_5 = arith.constant 0.000000e+00 : f32
    %6 = vector.broadcast %cst_5 : f32 to vector<8x32xf32>
    %7 = arith.maximumf %5, %6 : vector<8x32xf32>
    %8 = arith.truncf %7 : vector<8x32xf32> to vector<8x32xbf16>
    %c0_6 = arith.constant 0 : index
    %c0_7 = arith.constant 0 : index
    %9 = vector.load %arg4[%c0_6, %c0_7] : memref<8x32xbf16, #tpu.memory_space<vmem>>, vector<8x32xbf16>
    tpu.vector_store %arg4[%c0_6, %c0_7], %8 {strides = array<i32>} : memref<8x32xbf16, #tpu.memory_space<vmem>>, vector<8x32xbf16>,
    return
  }
  func.func @transform_0(%arg0: i32) -> (i32, i32) {
    %c0_i32 = arith.constant 0 : i32
    %c0_i32_0 = arith.constant 0 : i32
    return %arg0, %c0_i32 : i32, i32
  }
  func.func @transform_1(%arg0: i32) -> (i32, i32) {
    %c0_i32 = arith.constant 0 : i32
    %c0_i32_0 = arith.constant 0 : i32
    %c0_i32_1 = arith.constant 0 : i32
    return %c0_i32, %c0_i32_0 : i32, i32
  }
  func.func @transform_2(%arg0: i32) -> (i32, i32) {
    %c0_i32 = arith.constant 0 : i32
    %c0_i32_0 = arith.constant 0 : i32
    %c0_i32_1 = arith.constant 0 : i32
    return %c0_i32, %c0_i32_0 : i32, i32
  }
  func.func @transform_3(%arg0: i32) -> (i32, i32) {
    %c0_i32 = arith.constant 0 : i32
    %c0_i32_0 = arith.constant 0 : i32
    return %arg0, %c0_i32 : i32, i32
  }
}

module attributes {stable_mosaic.version = 11 : i64} {
  func.func @kernel(%arg0: i32, %arg1: memref<8x288xbf16, #tpu.memory_space<vmem>>, %arg2: memref<288x64xbf16, #tpu.memory_space<vmem>>, %arg3: memref<1x64xf32, #tpu.memory_space<vmem>>, %arg4: memref<8x64xbf16, #tpu.memory_space<vmem>>) attributes {dimension_semantics = [#tpu.dimension_semantics<parallel>], iteration_bounds = array<i64: 1>, scalar_prefetch = 0 : i64, scratch_operands = 0 : i64, tpu.core_type = #tpu.core_type<tc>, window_params = [{transform_indices = @transform_0, window_bounds = array<i64: 8, 288>}, {pipeline_mode = #tpu.pipeline_mode<synchronous>, transform_indices = @transform_1, window_bounds = array<i64: 288, 64>}, {pipeline_mode = #tpu.pipeline_mode<synchronous>, transform_indices = @transform_2, window_bounds = array<i64: 1, 64>}, {transform_indices = @transform_3, window_bounds = array<i64: 8, 64>}]} {
    %c0 = arith.constant 0 : index
    %c0_0 = arith.constant 0 : index
    %0 = vector.load %arg1[%c0, %c0_0] : memref<8x288xbf16, #tpu.memory_space<vmem>>, vector<8x288xbf16>
    %c0_1 = arith.constant 0 : index
    %c0_2 = arith.constant 0 : index
    %1 = vector.load %arg2[%c0_1, %c0_2] : memref<288x64xbf16, #tpu.memory_space<vmem>>, vector<288x64xbf16>
    %cst = arith.constant dense<0.000000e+00> : vector<8x64xf32>
    %2 = tpu.matmul %0, %1, %cst {dimension_numbers = #tpu.dot_dimension_numbers<[1], [0], [0], [1], [0, 0, 1, 1], [], []>} : vector<8x288xbf16>, vector<288x64xbf16>, vector<8x64xf32> -> vector<8x64xf32>
    %c0_3 = arith.constant 0 : index
    %c0_4 = arith.constant 0 : index
    %3 = vector.load %arg3[%c0_3, %c0_4] : memref<1x64xf32, #tpu.memory_space<vmem>>, vector<1x64xf32>
    %4 = vector.broadcast %3 : vector<1x64xf32> to vector<8x64xf32>
    %5 = arith.addf %2, %4 : vector<8x64xf32>
    %cst_5 = arith.constant 0.000000e+00 : f32
    %6 = vector.broadcast %cst_5 : f32 to vector<8x64xf32>
    %7 = arith.maximumf %5, %6 : vector<8x64xf32>
    %8 = arith.truncf %7 : vector<8x64xf32> to vector<8x64xbf16>
    %c0_6 = arith.constant 0 : index
    %c0_7 = arith.constant 0 : index
    %9 = vector.load %arg4[%c0_6, %c0_7] : memref<8x64xbf16, #tpu.memory_space<vmem>>, vector<8x64xbf16>
    tpu.vector_store %arg4[%c0_6, %c0_7], %8 {strides = array<i32>} : memref<8x64xbf16, #tpu.memory_space<vmem>>, vector<8x64xbf16>,
    return
  }
  func.func @transform_0(%arg0: i32) -> (i32, i32) {
    %c0_i32 = arith.constant 0 : i32
    %c0_i32_0 = arith.constant 0 : i32
    return %arg0, %c0_i32 : i32, i32
  }
  func.func @transform_1(%arg0: i32) -> (i32, i32) {
    %c0_i32 = arith.constant 0 : i32
    %c0_i32_0 = arith.constant 0 : i32
    %c0_i32_1 = arith.constant 0 : i32
    return %c0_i32, %c0_i32_0 : i32, i32
  }
  func.func @transform_2(%arg0: i32) -> (i32, i32) {
    %c0_i32 = arith.constant 0 : i32
    %c0_i32_0 = arith.constant 0 : i32
    %c0_i32_1 = arith.constant 0 : i32
    return %c0_i32, %c0_i32_0 : i32, i32
  }
  func.func @transform_3(%arg0: i32) -> (i32, i32) {
    %c0_i32 = arith.constant 0 : i32
    %c0_i32_0 = arith.constant 0 : i32
    return %arg0, %c0_i32 : i32, i32
  }
}

module attributes {stable_mosaic.version = 11 : i64} {
  func.func @kernel(%arg0: i32, %arg1: memref<8x576xbf16, #tpu.memory_space<vmem>>, %arg2: memref<576x64xbf16, #tpu.memory_space<vmem>>, %arg3: memref<1x64xf32, #tpu.memory_space<vmem>>, %arg4: memref<8x64xbf16, #tpu.memory_space<vmem>>) attributes {dimension_semantics = [#tpu.dimension_semantics<parallel>], iteration_bounds = array<i64: 1>, scalar_prefetch = 0 : i64, scratch_operands = 0 : i64, tpu.core_type = #tpu.core_type<tc>, window_params = [{transform_indices = @transform_0, window_bounds = array<i64: 8, 576>}, {pipeline_mode = #tpu.pipeline_mode<synchronous>, transform_indices = @transform_1, window_bounds = array<i64: 576, 64>}, {pipeline_mode = #tpu.pipeline_mode<synchronous>, transform_indices = @transform_2, window_bounds = array<i64: 1, 64>}, {transform_indices = @transform_3, window_bounds = array<i64: 8, 64>}]} {
    %c0 = arith.constant 0 : index
    %c0_0 = arith.constant 0 : index
    %0 = vector.load %arg1[%c0, %c0_0] : memref<8x576xbf16, #tpu.memory_space<vmem>>, vector<8x576xbf16>
    %c0_1 = arith.constant 0 : index
    %c0_2 = arith.constant 0 : index
    %1 = vector.load %arg2[%c0_1, %c0_2] : memref<576x64xbf16, #tpu.memory_space<vmem>>, vector<576x64xbf16>
    %cst = arith.constant dense<0.000000e+00> : vector<8x64xf32>
    %2 = tpu.matmul %0, %1, %cst {dimension_numbers = #tpu.dot_dimension_numbers<[1], [0], [0], [1], [0, 0, 1, 1], [], []>} : vector<8x576xbf16>, vector<576x64xbf16>, vector<8x64xf32> -> vector<8x64xf32>
    %c0_3 = arith.constant 0 : index
    %c0_4 = arith.constant 0 : index
    %3 = vector.load %arg3[%c0_3, %c0_4] : memref<1x64xf32, #tpu.memory_space<vmem>>, vector<1x64xf32>
    %4 = vector.broadcast %3 : vector<1x64xf32> to vector<8x64xf32>
    %5 = arith.addf %2, %4 : vector<8x64xf32>
    %cst_5 = arith.constant 0.000000e+00 : f32
    %6 = vector.broadcast %cst_5 : f32 to vector<8x64xf32>
    %7 = arith.maximumf %5, %6 : vector<8x64xf32>
    %8 = arith.truncf %7 : vector<8x64xf32> to vector<8x64xbf16>
    %c0_6 = arith.constant 0 : index
    %c0_7 = arith.constant 0 : index
    %9 = vector.load %arg4[%c0_6, %c0_7] : memref<8x64xbf16, #tpu.memory_space<vmem>>, vector<8x64xbf16>
    tpu.vector_store %arg4[%c0_6, %c0_7], %8 {strides = array<i32>} : memref<8x64xbf16, #tpu.memory_space<vmem>>, vector<8x64xbf16>,
    return
  }
  func.func @transform_0(%arg0: i32) -> (i32, i32) {
    %c0_i32 = arith.constant 0 : i32
    %c0_i32_0 = arith.constant 0 : i32
    return %arg0, %c0_i32 : i32, i32
  }
  func.func @transform_1(%arg0: i32) -> (i32, i32) {
    %c0_i32 = arith.constant 0 : i32
    %c0_i32_0 = arith.constant 0 : i32
    %c0_i32_1 = arith.constant 0 : i32
    return %c0_i32, %c0_i32_0 : i32, i32
  }
  func.func @transform_2(%arg0: i32) -> (i32, i32) {
    %c0_i32 = arith.constant 0 : i32
    %c0_i32_0 = arith.constant 0 : i32
    %c0_i32_1 = arith.constant 0 : i32
    return %c0_i32, %c0_i32_0 : i32, i32
  }
  func.func @transform_3(%arg0: i32) -> (i32, i32) {
    %c0_i32 = arith.constant 0 : i32
    %c0_i32_0 = arith.constant 0 : i32
    return %arg0, %c0_i32 : i32, i32
  }
}

module attributes {stable_mosaic.version = 11 : i64} {
  func.func @kernel(%arg0: i32, %arg1: memref<8x576xbf16, #tpu.memory_space<vmem>>, %arg2: memref<576x64xbf16, #tpu.memory_space<vmem>>, %arg3: memref<1x64xf32, #tpu.memory_space<vmem>>, %arg4: memref<8x64xbf16, #tpu.memory_space<vmem>>, %arg5: memref<8x64xbf16, #tpu.memory_space<vmem>>) attributes {dimension_semantics = [#tpu.dimension_semantics<parallel>], iteration_bounds = array<i64: 1>, scalar_prefetch = 0 : i64, scratch_operands = 0 : i64, tpu.core_type = #tpu.core_type<tc>, window_params = [{transform_indices = @transform_0, window_bounds = array<i64: 8, 576>}, {pipeline_mode = #tpu.pipeline_mode<synchronous>, transform_indices = @transform_1, window_bounds = array<i64: 576, 64>}, {pipeline_mode = #tpu.pipeline_mode<synchronous>, transform_indices = @transform_2, window_bounds = array<i64: 1, 64>}, {transform_indices = @transform_3, window_bounds = array<i64: 8, 64>}, {transform_indices = @transform_4, window_bounds = array<i64: 8, 64>}]} {
    %c0 = arith.constant 0 : index
    %c0_0 = arith.constant 0 : index
    %0 = vector.load %arg1[%c0, %c0_0] : memref<8x576xbf16, #tpu.memory_space<vmem>>, vector<8x576xbf16>
    %c0_1 = arith.constant 0 : index
    %c0_2 = arith.constant 0 : index
    %1 = vector.load %arg2[%c0_1, %c0_2] : memref<576x64xbf16, #tpu.memory_space<vmem>>, vector<576x64xbf16>
    %cst = arith.constant dense<0.000000e+00> : vector<8x64xf32>
    %2 = tpu.matmul %0, %1, %cst {dimension_numbers = #tpu.dot_dimension_numbers<[1], [0], [0], [1], [0, 0, 1, 1], [], []>} : vector<8x576xbf16>, vector<576x64xbf16>, vector<8x64xf32> -> vector<8x64xf32>
    %c0_3 = arith.constant 0 : index
    %c0_4 = arith.constant 0 : index
    %3 = vector.load %arg3[%c0_3, %c0_4] : memref<1x64xf32, #tpu.memory_space<vmem>>, vector<1x64xf32>
    %4 = vector.broadcast %3 : vector<1x64xf32> to vector<8x64xf32>
    %5 = arith.addf %2, %4 : vector<8x64xf32>
    %cst_5 = arith.constant 0.000000e+00 : f32
    %6 = vector.broadcast %cst_5 : f32 to vector<8x64xf32>
    %7 = arith.maximumf %5, %6 : vector<8x64xf32>
    %c0_6 = arith.constant 0 : index
    %c0_7 = arith.constant 0 : index
    %8 = vector.load %arg4[%c0_6, %c0_7] : memref<8x64xbf16, #tpu.memory_space<vmem>>, vector<8x64xbf16>
    %9 = arith.extf %8 : vector<8x64xbf16> to vector<8x64xf32>
    %10 = arith.addf %7, %9 : vector<8x64xf32>
    %11 = arith.truncf %10 : vector<8x64xf32> to vector<8x64xbf16>
    %c0_8 = arith.constant 0 : index
    %c0_9 = arith.constant 0 : index
    %12 = vector.load %arg5[%c0_8, %c0_9] : memref<8x64xbf16, #tpu.memory_space<vmem>>, vector<8x64xbf16>
    tpu.vector_store %arg5[%c0_8, %c0_9], %11 {strides = array<i32>} : memref<8x64xbf16, #tpu.memory_space<vmem>>, vector<8x64xbf16>,
    return
  }
  func.func @transform_0(%arg0: i32) -> (i32, i32) {
    %c0_i32 = arith.constant 0 : i32
    %c0_i32_0 = arith.constant 0 : i32
    return %arg0, %c0_i32 : i32, i32
  }
  func.func @transform_1(%arg0: i32) -> (i32, i32) {
    %c0_i32 = arith.constant 0 : i32
    %c0_i32_0 = arith.constant 0 : i32
    %c0_i32_1 = arith.constant 0 : i32
    return %c0_i32, %c0_i32_0 : i32, i32
  }
  func.func @transform_2(%arg0: i32) -> (i32, i32) {
    %c0_i32 = arith.constant 0 : i32
    %c0_i32_0 = arith.constant 0 : i32
    %c0_i32_1 = arith.constant 0 : i32
    return %c0_i32, %c0_i32_0 : i32, i32
  }
  func.func @transform_3(%arg0: i32) -> (i32, i32) {
    %c0_i32 = arith.constant 0 : i32
    %c0_i32_0 = arith.constant 0 : i32
    return %arg0, %c0_i32 : i32, i32
  }
  func.func @transform_4(%arg0: i32) -> (i32, i32) {
    %c0_i32 = arith.constant 0 : i32
    %c0_i32_0 = arith.constant 0 : i32
    return %arg0, %c0_i32 : i32, i32
  }
}

module attributes {stable_mosaic.version = 11 : i64} {
  func.func @kernel(%arg0: i32, %arg1: memref<8x576xbf16, #tpu.memory_space<vmem>>, %arg2: memref<8x576xbf16, #tpu.memory_space<vmem>>, %arg3: memref<576x32xbf16, #tpu.memory_space<vmem>>, %arg4: memref<576x32xbf16, #tpu.memory_space<vmem>>, %arg5: memref<1x32xf32, #tpu.memory_space<vmem>>, %arg6: memref<32x2xf32, #tpu.memory_space<vmem>>, %arg7: memref<1x2xf32, #tpu.memory_space<vmem>>, %arg8: memref<8x32xbf16, #tpu.memory_space<vmem>>, %arg9: memref<8x2xf32, #tpu.memory_space<vmem>>) attributes {dimension_semantics = [#tpu.dimension_semantics<parallel>], iteration_bounds = array<i64: 1>, scalar_prefetch = 0 : i64, scratch_operands = 0 : i64, tpu.core_type = #tpu.core_type<tc>, window_params = [{transform_indices = @transform_0, window_bounds = array<i64: 8, 576>}, {transform_indices = @transform_1, window_bounds = array<i64: 8, 576>}, {pipeline_mode = #tpu.pipeline_mode<synchronous>, transform_indices = @transform_2, window_bounds = array<i64: 576, 32>}, {pipeline_mode = #tpu.pipeline_mode<synchronous>, transform_indices = @transform_3, window_bounds = array<i64: 576, 32>}, {pipeline_mode = #tpu.pipeline_mode<synchronous>, transform_indices = @transform_4, window_bounds = array<i64: 1, 32>}, {pipeline_mode = #tpu.pipeline_mode<synchronous>, transform_indices = @transform_5, window_bounds = array<i64: 32, 2>}, {pipeline_mode = #tpu.pipeline_mode<synchronous>, transform_indices = @transform_6, window_bounds = array<i64: 1, 2>}, {transform_indices = @transform_7, window_bounds = array<i64: 8, 32>}, {transform_indices = @transform_8, window_bounds = array<i64: 8, 2>}]} {
    %c0 = arith.constant 0 : index
    %c0_0 = arith.constant 0 : index
    %0 = vector.load %arg1[%c0, %c0_0] : memref<8x576xbf16, #tpu.memory_space<vmem>>, vector<8x576xbf16>
    %c0_1 = arith.constant 0 : index
    %c0_2 = arith.constant 0 : index
    %1 = vector.load %arg3[%c0_1, %c0_2] : memref<576x32xbf16, #tpu.memory_space<vmem>>, vector<576x32xbf16>
    %cst = arith.constant dense<0.000000e+00> : vector<8x32xf32>
    %2 = tpu.matmul %0, %1, %cst {dimension_numbers = #tpu.dot_dimension_numbers<[1], [0], [0], [1], [0, 0, 1, 1], [], []>} : vector<8x576xbf16>, vector<576x32xbf16>, vector<8x32xf32> -> vector<8x32xf32>
    %c0_3 = arith.constant 0 : index
    %c0_4 = arith.constant 0 : index
    %3 = vector.load %arg2[%c0_3, %c0_4] : memref<8x576xbf16, #tpu.memory_space<vmem>>, vector<8x576xbf16>
    %c0_5 = arith.constant 0 : index
    %c0_6 = arith.constant 0 : index
    %4 = vector.load %arg4[%c0_5, %c0_6] : memref<576x32xbf16, #tpu.memory_space<vmem>>, vector<576x32xbf16>
    %cst_7 = arith.constant dense<0.000000e+00> : vector<8x32xf32>
    %5 = tpu.matmul %3, %4, %cst_7 {dimension_numbers = #tpu.dot_dimension_numbers<[1], [0], [0], [1], [0, 0, 1, 1], [], []>} : vector<8x576xbf16>, vector<576x32xbf16>, vector<8x32xf32> -> vector<8x32xf32>
    %6 = arith.addf %2, %5 : vector<8x32xf32>
    %c0_8 = arith.constant 0 : index
    %c0_9 = arith.constant 0 : index
    %7 = vector.load %arg5[%c0_8, %c0_9] : memref<1x32xf32, #tpu.memory_space<vmem>>, vector<1x32xf32>
    %8 = vector.broadcast %7 : vector<1x32xf32> to vector<8x32xf32>
    %9 = arith.addf %6, %8 : vector<8x32xf32>
    %cst_10 = arith.constant 0.000000e+00 : f32
    %10 = vector.broadcast %cst_10 : f32 to vector<8x32xf32>
    %11 = arith.maximumf %9, %10 : vector<8x32xf32>
    %12 = arith.truncf %11 : vector<8x32xf32> to vector<8x32xbf16>
    %c0_11 = arith.constant 0 : index
    %c0_12 = arith.constant 0 : index
    %13 = vector.load %arg8[%c0_11, %c0_12] : memref<8x32xbf16, #tpu.memory_space<vmem>>, vector<8x32xbf16>
    tpu.vector_store %arg8[%c0_11, %c0_12], %12 {strides = array<i32>} : memref<8x32xbf16, #tpu.memory_space<vmem>>, vector<8x32xbf16>,
    %c0_13 = arith.constant 0 : index
    %c0_14 = arith.constant 0 : index
    %14 = vector.load %arg6[%c0_13, %c0_14] : memref<32x2xf32, #tpu.memory_space<vmem>>, vector<32x2xf32>
    %cst_15 = arith.constant dense<0.000000e+00> : vector<8x2xf32>
    %15 = tpu.matmul %11, %14, %cst_15 {dimension_numbers = #tpu.dot_dimension_numbers<[1], [0], [0], [1], [0, 0, 1, 1], [], []>} : vector<8x32xf32>, vector<32x2xf32>, vector<8x2xf32> -> vector<8x2xf32>
    %c0_16 = arith.constant 0 : index
    %c0_17 = arith.constant 0 : index
    %16 = vector.load %arg7[%c0_16, %c0_17] : memref<1x2xf32, #tpu.memory_space<vmem>>, vector<1x2xf32>
    %17 = vector.broadcast %16 : vector<1x2xf32> to vector<8x2xf32>
    %18 = arith.addf %15, %17 : vector<8x2xf32>
    %19 = math.tanh %18 : vector<8x2xf32>
    %cst_18 = arith.constant 2.560000e+02 : f32
    %20 = vector.broadcast %cst_18 : f32 to vector<8x2xf32>
    %21 = arith.mulf %19, %20 : vector<8x2xf32>
    %c0_19 = arith.constant 0 : index
    %c0_20 = arith.constant 0 : index
    %22 = vector.load %arg9[%c0_19, %c0_20] : memref<8x2xf32, #tpu.memory_space<vmem>>, vector<8x2xf32>
    tpu.vector_store %arg9[%c0_19, %c0_20], %21 {strides = array<i32>} : memref<8x2xf32, #tpu.memory_space<vmem>>, vector<8x2xf32>,
    return
  }
  func.func @transform_0(%arg0: i32) -> (i32, i32) {
    %c0_i32 = arith.constant 0 : i32
    %c0_i32_0 = arith.constant 0 : i32
    return %arg0, %c0_i32 : i32, i32
  }
  func.func @transform_1(%arg0: i32) -> (i32, i32) {
    %c0_i32 = arith.constant 0 : i32
    %c0_i32_0 = arith.constant 0 : i32
    return %arg0, %c0_i32 : i32, i32
  }
  func.func @transform_2(%arg0: i32) -> (i32, i32) {
    %c0_i32 = arith.constant 0 : i32
    %c0_i32_0 = arith.constant 0 : i32
    %c0_i32_1 = arith.constant 0 : i32
    return %c0_i32, %c0_i32_0 : i32, i32
  }
  func.func @transform_3(%arg0: i32) -> (i32, i32) {
    %c0_i32 = arith.constant 0 : i32
    %c0_i32_0 = arith.constant 0 : i32
    %c0_i32_1 = arith.constant 0 : i32
    return %c0_i32, %c0_i32_0 : i32, i32
  }
  func.func @transform_4(%arg0: i32) -> (i32, i32) {
    %c0_i32 = arith.constant 0 : i32
    %c0_i32_0 = arith.constant 0 : i32
    %c0_i32_1 = arith.constant 0 : i32
    return %c0_i32, %c0_i32_0 : i32, i32
  }
  func.func @transform_5(%arg0: i32) -> (i32, i32) {
    %c0_i32 = arith.constant 0 : i32
    %c0_i32_0 = arith.constant 0 : i32
    %c0_i32_1 = arith.constant 0 : i32
    return %c0_i32, %c0_i32_0 : i32, i32
  }
  func.func @transform_6(%arg0: i32) -> (i32, i32) {
    %c0_i32 = arith.constant 0 : i32
    %c0_i32_0 = arith.constant 0 : i32
    %c0_i32_1 = arith.constant 0 : i32
    return %c0_i32, %c0_i32_0 : i32, i32
  }
  func.func @transform_7(%arg0: i32) -> (i32, i32) {
    %c0_i32 = arith.constant 0 : i32
    %c0_i32_0 = arith.constant 0 : i32
    return %arg0, %c0_i32 : i32, i32
  }
  func.func @transform_8(%arg0: i32) -> (i32, i32) {
    %c0_i32 = arith.constant 0 : i32
    %c0_i32_0 = arith.constant 0 : i32
    return %arg0, %c0_i32 : i32, i32
  }
}

module attributes {stable_mosaic.version = 11 : i64} {
  func.func @kernel(%arg0: i32, %arg1: memref<32x288xbf16, #tpu.memory_space<vmem>>, %arg2: memref<32x18xbf16, #tpu.memory_space<vmem>>, %arg3: memref<32x288xbf16, #tpu.memory_space<vmem>>, %arg4: memref<288x16xbf16, #tpu.memory_space<vmem>>, %arg5: memref<18x16xbf16, #tpu.memory_space<vmem>>, %arg6: memref<288x16xbf16, #tpu.memory_space<vmem>>, %arg7: memref<1x16xf32, #tpu.memory_space<vmem>>, %arg8: memref<16x2xf32, #tpu.memory_space<vmem>>, %arg9: memref<1x2xf32, #tpu.memory_space<vmem>>, %arg10: memref<32x16xbf16, #tpu.memory_space<vmem>>, %arg11: memref<32x2xf32, #tpu.memory_space<vmem>>) attributes {dimension_semantics = [#tpu.dimension_semantics<parallel>], iteration_bounds = array<i64: 1>, scalar_prefetch = 0 : i64, scratch_operands = 0 : i64, tpu.core_type = #tpu.core_type<tc>, window_params = [{transform_indices = @transform_0, window_bounds = array<i64: 32, 288>}, {transform_indices = @transform_1, window_bounds = array<i64: 32, 18>}, {transform_indices = @transform_2, window_bounds = array<i64: 32, 288>}, {pipeline_mode = #tpu.pipeline_mode<synchronous>, transform_indices = @transform_3, window_bounds = array<i64: 288, 16>}, {pipeline_mode = #tpu.pipeline_mode<synchronous>, transform_indices = @transform_4, window_bounds = array<i64: 18, 16>}, {pipeline_mode = #tpu.pipeline_mode<synchronous>, transform_indices = @transform_5, window_bounds = array<i64: 288, 16>}, {pipeline_mode = #tpu.pipeline_mode<synchronous>, transform_indices = @transform_6, window_bounds = array<i64: 1, 16>}, {pipeline_mode = #tpu.pipeline_mode<synchronous>, transform_indices = @transform_7, window_bounds = array<i64: 16, 2>}, {pipeline_mode = #tpu.pipeline_mode<synchronous>, transform_indices = @transform_8, window_bounds = array<i64: 1, 2>}, {transform_indices = @transform_9, window_bounds = array<i64: 32, 16>}, {transform_indices = @transform_10, window_bounds = array<i64: 32, 2>}]} {
    %c0 = arith.constant 0 : index
    %c0_0 = arith.constant 0 : index
    %0 = vector.load %arg1[%c0, %c0_0] : memref<32x288xbf16, #tpu.memory_space<vmem>>, vector<32x288xbf16>
    %c0_1 = arith.constant 0 : index
    %c0_2 = arith.constant 0 : index
    %1 = vector.load %arg4[%c0_1, %c0_2] : memref<288x16xbf16, #tpu.memory_space<vmem>>, vector<288x16xbf16>
    %cst = arith.constant dense<0.000000e+00> : vector<32x16xf32>
    %2 = tpu.matmul %0, %1, %cst {dimension_numbers = #tpu.dot_dimension_numbers<[1], [0], [0], [1], [0, 0, 1, 1], [], []>} : vector<32x288xbf16>, vector<288x16xbf16>, vector<32x16xf32> -> vector<32x16xf32>
    %c0_3 = arith.constant 0 : index
    %c0_4 = arith.constant 0 : index
    %3 = vector.load %arg2[%c0_3, %c0_4] : memref<32x18xbf16, #tpu.memory_space<vmem>>, vector<32x18xbf16>
    %c0_5 = arith.constant 0 : index
    %c0_6 = arith.constant 0 : index
    %4 = vector.load %arg5[%c0_5, %c0_6] : memref<18x16xbf16, #tpu.memory_space<vmem>>, vector<18x16xbf16>
    %cst_7 = arith.constant dense<0.000000e+00> : vector<32x16xf32>
    %5 = tpu.matmul %3, %4, %cst_7 {dimension_numbers = #tpu.dot_dimension_numbers<[1], [0], [0], [1], [0, 0, 1, 1], [], []>} : vector<32x18xbf16>, vector<18x16xbf16>, vector<32x16xf32> -> vector<32x16xf32>
    %6 = arith.addf %2, %5 : vector<32x16xf32>
    %c0_8 = arith.constant 0 : index
    %c0_9 = arith.constant 0 : index
    %7 = vector.load %arg3[%c0_8, %c0_9] : memref<32x288xbf16, #tpu.memory_space<vmem>>, vector<32x288xbf16>
    %c0_10 = arith.constant 0 : index
    %c0_11 = arith.constant 0 : index
    %8 = vector.load %arg6[%c0_10, %c0_11] : memref<288x16xbf16, #tpu.memory_space<vmem>>, vector<288x16xbf16>
    %cst_12 = arith.constant dense<0.000000e+00> : vector<32x16xf32>
    %9 = tpu.matmul %7, %8, %cst_12 {dimension_numbers = #tpu.dot_dimension_numbers<[1], [0], [0], [1], [0, 0, 1, 1], [], []>} : vector<32x288xbf16>, vector<288x16xbf16>, vector<32x16xf32> -> vector<32x16xf32>
    %10 = arith.addf %6, %9 : vector<32x16xf32>
    %c0_13 = arith.constant 0 : index
    %c0_14 = arith.constant 0 : index
    %11 = vector.load %arg7[%c0_13, %c0_14] : memref<1x16xf32, #tpu.memory_space<vmem>>, vector<1x16xf32>
    %12 = vector.broadcast %11 : vector<1x16xf32> to vector<32x16xf32>
    %13 = arith.addf %10, %12 : vector<32x16xf32>
    %cst_15 = arith.constant 0.000000e+00 : f32
    %14 = vector.broadcast %cst_15 : f32 to vector<32x16xf32>
    %15 = arith.maximumf %13, %14 : vector<32x16xf32>
    %16 = arith.truncf %15 : vector<32x16xf32> to vector<32x16xbf16>
    %c0_16 = arith.constant 0 : index
    %c0_17 = arith.constant 0 : index
    %17 = vector.load %arg10[%c0_16, %c0_17] : memref<32x16xbf16, #tpu.memory_space<vmem>>, vector<32x16xbf16>
    tpu.vector_store %arg10[%c0_16, %c0_17], %16 {strides = array<i32>} : memref<32x16xbf16, #tpu.memory_space<vmem>>, vector<32x16xbf16>,
    %c0_18 = arith.constant 0 : index
    %c0_19 = arith.constant 0 : index
    %18 = vector.load %arg8[%c0_18, %c0_19] : memref<16x2xf32, #tpu.memory_space<vmem>>, vector<16x2xf32>
    %cst_20 = arith.constant dense<0.000000e+00> : vector<32x2xf32>
    %19 = tpu.matmul %15, %18, %cst_20 {dimension_numbers = #tpu.dot_dimension_numbers<[1], [0], [0], [1], [0, 0, 1, 1], [], []>} : vector<32x16xf32>, vector<16x2xf32>, vector<32x2xf32> -> vector<32x2xf32>
    %c0_21 = arith.constant 0 : index
    %c0_22 = arith.constant 0 : index
    %20 = vector.load %arg9[%c0_21, %c0_22] : memref<1x2xf32, #tpu.memory_space<vmem>>, vector<1x2xf32>
    %21 = vector.broadcast %20 : vector<1x2xf32> to vector<32x2xf32>
    %22 = arith.addf %19, %21 : vector<32x2xf32>
    %23 = math.tanh %22 : vector<32x2xf32>
    %cst_23 = arith.constant 2.560000e+02 : f32
    %24 = vector.broadcast %cst_23 : f32 to vector<32x2xf32>
    %25 = arith.mulf %23, %24 : vector<32x2xf32>
    %c0_24 = arith.constant 0 : index
    %c0_25 = arith.constant 0 : index
    %26 = vector.load %arg11[%c0_24, %c0_25] : memref<32x2xf32, #tpu.memory_space<vmem>>, vector<32x2xf32>
    tpu.vector_store %arg11[%c0_24, %c0_25], %25 {strides = array<i32>} : memref<32x2xf32, #tpu.memory_space<vmem>>, vector<32x2xf32>,
    return
  }
  func.func @transform_0(%arg0: i32) -> (i32, i32) {
    %c0_i32 = arith.constant 0 : i32
    %c0_i32_0 = arith.constant 0 : i32
    return %arg0, %c0_i32 : i32, i32
  }
  func.func @transform_1(%arg0: i32) -> (i32, i32) {
    %c0_i32 = arith.constant 0 : i32
    %c0_i32_0 = arith.constant 0 : i32
    return %arg0, %c0_i32 : i32, i32
  }
  func.func @transform_2(%arg0: i32) -> (i32, i32) {
    %c0_i32 = arith.constant 0 : i32
    %c0_i32_0 = arith.constant 0 : i32
    return %arg0, %c0_i32 : i32, i32
  }
  func.func @transform_3(%arg0: i32) -> (i32, i32) {
    %c0_i32 = arith.constant 0 : i32
    %c0_i32_0 = arith.constant 0 : i32
    %c0_i32_1 = arith.constant 0 : i32
    return %c0_i32, %c0_i32_0 : i32, i32
  }
  func.func @transform_4(%arg0: i32) -> (i32, i32) {
    %c0_i32 = arith.constant 0 : i32
    %c0_i32_0 = arith.constant 0 : i32
    %c0_i32_1 = arith.constant 0 : i32
    return %c0_i32, %c0_i32_0 : i32, i32
  }
  func.func @transform_5(%arg0: i32) -> (i32, i32) {
    %c0_i32 = arith.constant 0 : i32
    %c0_i32_0 = arith.constant 0 : i32
    %c0_i32_1 = arith.constant 0 : i32
    return %c0_i32, %c0_i32_0 : i32, i32
  }
  func.func @transform_6(%arg0: i32) -> (i32, i32) {
    %c0_i32 = arith.constant 0 : i32
    %c0_i32_0 = arith.constant 0 : i32
    %c0_i32_1 = arith.constant 0 : i32
    return %c0_i32, %c0_i32_0 : i32, i32
  }
  func.func @transform_7(%arg0: i32) -> (i32, i32) {
    %c0_i32 = arith.constant 0 : i32
    %c0_i32_0 = arith.constant 0 : i32
    %c0_i32_1 = arith.constant 0 : i32
    return %c0_i32, %c0_i32_0 : i32, i32
  }
  func.func @transform_8(%arg0: i32) -> (i32, i32) {
    %c0_i32 = arith.constant 0 : i32
    %c0_i32_0 = arith.constant 0 : i32
    %c0_i32_1 = arith.constant 0 : i32
    return %c0_i32, %c0_i32_0 : i32, i32
  }
  func.func @transform_9(%arg0: i32) -> (i32, i32) {
    %c0_i32 = arith.constant 0 : i32
    %c0_i32_0 = arith.constant 0 : i32
    return %arg0, %c0_i32 : i32, i32
  }
  func.func @transform_10(%arg0: i32) -> (i32, i32) {
    %c0_i32 = arith.constant 0 : i32
    %c0_i32_0 = arith.constant 0 : i32
    return %arg0, %c0_i32 : i32, i32
  }
}

module attributes {stable_mosaic.version = 11 : i64} {
  func.func @kernel(%arg0: i32, %arg1: memref<128x144xbf16, #tpu.memory_space<vmem>>, %arg2: memref<128x18xbf16, #tpu.memory_space<vmem>>, %arg3: memref<128x144xbf16, #tpu.memory_space<vmem>>, %arg4: memref<144x8xbf16, #tpu.memory_space<vmem>>, %arg5: memref<18x8xbf16, #tpu.memory_space<vmem>>, %arg6: memref<144x8xbf16, #tpu.memory_space<vmem>>, %arg7: memref<1x8xf32, #tpu.memory_space<vmem>>, %arg8: memref<8x2xf32, #tpu.memory_space<vmem>>, %arg9: memref<1x2xf32, #tpu.memory_space<vmem>>, %arg10: memref<128x8xbf16, #tpu.memory_space<vmem>>, %arg11: memref<128x2xf32, #tpu.memory_space<vmem>>) attributes {dimension_semantics = [#tpu.dimension_semantics<parallel>], iteration_bounds = array<i64: 1>, scalar_prefetch = 0 : i64, scratch_operands = 0 : i64, tpu.core_type = #tpu.core_type<tc>, window_params = [{transform_indices = @transform_0, window_bounds = array<i64: 128, 144>}, {transform_indices = @transform_1, window_bounds = array<i64: 128, 18>}, {transform_indices = @transform_2, window_bounds = array<i64: 128, 144>}, {pipeline_mode = #tpu.pipeline_mode<synchronous>, transform_indices = @transform_3, window_bounds = array<i64: 144, 8>}, {pipeline_mode = #tpu.pipeline_mode<synchronous>, transform_indices = @transform_4, window_bounds = array<i64: 18, 8>}, {pipeline_mode = #tpu.pipeline_mode<synchronous>, transform_indices = @transform_5, window_bounds = array<i64: 144, 8>}, {pipeline_mode = #tpu.pipeline_mode<synchronous>, transform_indices = @transform_6, window_bounds = array<i64: 1, 8>}, {pipeline_mode = #tpu.pipeline_mode<synchronous>, transform_indices = @transform_7, window_bounds = array<i64: 8, 2>}, {pipeline_mode = #tpu.pipeline_mode<synchronous>, transform_indices = @transform_8, window_bounds = array<i64: 1, 2>}, {transform_indices = @transform_9, window_bounds = array<i64: 128, 8>}, {transform_indices = @transform_10, window_bounds = array<i64: 128, 2>}]} {
    %c0 = arith.constant 0 : index
    %c0_0 = arith.constant 0 : index
    %0 = vector.load %arg1[%c0, %c0_0] : memref<128x144xbf16, #tpu.memory_space<vmem>>, vector<128x144xbf16>
    %c0_1 = arith.constant 0 : index
    %c0_2 = arith.constant 0 : index
    %1 = vector.load %arg4[%c0_1, %c0_2] : memref<144x8xbf16, #tpu.memory_space<vmem>>, vector<144x8xbf16>
    %cst = arith.constant dense<0.000000e+00> : vector<128x8xf32>
    %2 = tpu.matmul %0, %1, %cst {dimension_numbers = #tpu.dot_dimension_numbers<[1], [0], [0], [1], [0, 0, 1, 1], [], []>} : vector<128x144xbf16>, vector<144x8xbf16>, vector<128x8xf32> -> vector<128x8xf32>
    %c0_3 = arith.constant 0 : index
    %c0_4 = arith.constant 0 : index
    %3 = vector.load %arg2[%c0_3, %c0_4] : memref<128x18xbf16, #tpu.memory_space<vmem>>, vector<128x18xbf16>
    %c0_5 = arith.constant 0 : index
    %c0_6 = arith.constant 0 : index
    %4 = vector.load %arg5[%c0_5, %c0_6] : memref<18x8xbf16, #tpu.memory_space<vmem>>, vector<18x8xbf16>
    %cst_7 = arith.constant dense<0.000000e+00> : vector<128x8xf32>
    %5 = tpu.matmul %3, %4, %cst_7 {dimension_numbers = #tpu.dot_dimension_numbers<[1], [0], [0], [1], [0, 0, 1, 1], [], []>} : vector<128x18xbf16>, vector<18x8xbf16>, vector<128x8xf32> -> vector<128x8xf32>
    %6 = arith.addf %2, %5 : vector<128x8xf32>
    %c0_8 = arith.constant 0 : index
    %c0_9 = arith.constant 0 : index
    %7 = vector.load %arg3[%c0_8, %c0_9] : memref<128x144xbf16, #tpu.memory_space<vmem>>, vector<128x144xbf16>
    %c0_10 = arith.constant 0 : index
    %c0_11 = arith.constant 0 : index
    %8 = vector.load %arg6[%c0_10, %c0_11] : memref<144x8xbf16, #tpu.memory_space<vmem>>, vector<144x8xbf16>
    %cst_12 = arith.constant dense<0.000000e+00> : vector<128x8xf32>
    %9 = tpu.matmul %7, %8, %cst_12 {dimension_numbers = #tpu.dot_dimension_numbers<[1], [0], [0], [1], [0, 0, 1, 1], [], []>} : vector<128x144xbf16>, vector<144x8xbf16>, vector<128x8xf32> -> vector<128x8xf32>
    %10 = arith.addf %6, %9 : vector<128x8xf32>
    %c0_13 = arith.constant 0 : index
    %c0_14 = arith.constant 0 : index
    %11 = vector.load %arg7[%c0_13, %c0_14] : memref<1x8xf32, #tpu.memory_space<vmem>>, vector<1x8xf32>
    %12 = vector.broadcast %11 : vector<1x8xf32> to vector<128x8xf32>
    %13 = arith.addf %10, %12 : vector<128x8xf32>
    %cst_15 = arith.constant 0.000000e+00 : f32
    %14 = vector.broadcast %cst_15 : f32 to vector<128x8xf32>
    %15 = arith.maximumf %13, %14 : vector<128x8xf32>
    %16 = arith.truncf %15 : vector<128x8xf32> to vector<128x8xbf16>
    %c0_16 = arith.constant 0 : index
    %c0_17 = arith.constant 0 : index
    %17 = vector.load %arg10[%c0_16, %c0_17] : memref<128x8xbf16, #tpu.memory_space<vmem>>, vector<128x8xbf16>
    tpu.vector_store %arg10[%c0_16, %c0_17], %16 {strides = array<i32>} : memref<128x8xbf16, #tpu.memory_space<vmem>>, vector<128x8xbf16>,
    %c0_18 = arith.constant 0 : index
    %c0_19 = arith.constant 0 : index
    %18 = vector.load %arg8[%c0_18, %c0_19] : memref<8x2xf32, #tpu.memory_space<vmem>>, vector<8x2xf32>
    %cst_20 = arith.constant dense<0.000000e+00> : vector<128x2xf32>
    %19 = tpu.matmul %15, %18, %cst_20 {dimension_numbers = #tpu.dot_dimension_numbers<[1], [0], [0], [1], [0, 0, 1, 1], [], []>} : vector<128x8xf32>, vector<8x2xf32>, vector<128x2xf32> -> vector<128x2xf32>
    %c0_21 = arith.constant 0 : index
    %c0_22 = arith.constant 0 : index
    %20 = vector.load %arg9[%c0_21, %c0_22] : memref<1x2xf32, #tpu.memory_space<vmem>>, vector<1x2xf32>
    %21 = vector.broadcast %20 : vector<1x2xf32> to vector<128x2xf32>
    %22 = arith.addf %19, %21 : vector<128x2xf32>
    %23 = math.tanh %22 : vector<128x2xf32>
    %cst_23 = arith.constant 2.560000e+02 : f32
    %24 = vector.broadcast %cst_23 : f32 to vector<128x2xf32>
    %25 = arith.mulf %23, %24 : vector<128x2xf32>
    %c0_24 = arith.constant 0 : index
    %c0_25 = arith.constant 0 : index
    %26 = vector.load %arg11[%c0_24, %c0_25] : memref<128x2xf32, #tpu.memory_space<vmem>>, vector<128x2xf32>
    tpu.vector_store %arg11[%c0_24, %c0_25], %25 {strides = array<i32>} : memref<128x2xf32, #tpu.memory_space<vmem>>, vector<128x2xf32>,
    return
  }
  func.func @transform_0(%arg0: i32) -> (i32, i32) {
    %c0_i32 = arith.constant 0 : i32
    %c0_i32_0 = arith.constant 0 : i32
    return %arg0, %c0_i32 : i32, i32
  }
  func.func @transform_1(%arg0: i32) -> (i32, i32) {
    %c0_i32 = arith.constant 0 : i32
    %c0_i32_0 = arith.constant 0 : i32
    return %arg0, %c0_i32 : i32, i32
  }
  func.func @transform_2(%arg0: i32) -> (i32, i32) {
    %c0_i32 = arith.constant 0 : i32
    %c0_i32_0 = arith.constant 0 : i32
    return %arg0, %c0_i32 : i32, i32
  }
  func.func @transform_3(%arg0: i32) -> (i32, i32) {
    %c0_i32 = arith.constant 0 : i32
    %c0_i32_0 = arith.constant 0 : i32
    %c0_i32_1 = arith.constant 0 : i32
    return %c0_i32, %c0_i32_0 : i32, i32
  }
  func.func @transform_4(%arg0: i32) -> (i32, i32) {
    %c0_i32 = arith.constant 0 : i32
    %c0_i32_0 = arith.constant 0 : i32
    %c0_i32_1 = arith.constant 0 : i32
    return %c0_i32, %c0_i32_0 : i32, i32
  }
  func.func @transform_5(%arg0: i32) -> (i32, i32) {
    %c0_i32 = arith.constant 0 : i32
    %c0_i32_0 = arith.constant 0 : i32
    %c0_i32_1 = arith.constant 0 : i32
    return %c0_i32, %c0_i32_0 : i32, i32
  }
  func.func @transform_6(%arg0: i32) -> (i32, i32) {
    %c0_i32 = arith.constant 0 : i32
    %c0_i32_0 = arith.constant 0 : i32
    %c0_i32_1 = arith.constant 0 : i32
    return %c0_i32, %c0_i32_0 : i32, i32
  }
  func.func @transform_7(%arg0: i32) -> (i32, i32) {
    %c0_i32 = arith.constant 0 : i32
    %c0_i32_0 = arith.constant 0 : i32
    %c0_i32_1 = arith.constant 0 : i32
    return %c0_i32, %c0_i32_0 : i32, i32
  }
  func.func @transform_8(%arg0: i32) -> (i32, i32) {
    %c0_i32 = arith.constant 0 : i32
    %c0_i32_0 = arith.constant 0 : i32
    %c0_i32_1 = arith.constant 0 : i32
    return %c0_i32, %c0_i32_0 : i32, i32
  }
  func.func @transform_9(%arg0: i32) -> (i32, i32) {
    %c0_i32 = arith.constant 0 : i32
    %c0_i32_0 = arith.constant 0 : i32
    return %arg0, %c0_i32 : i32, i32
  }
  func.func @transform_10(%arg0: i32) -> (i32, i32) {
    %c0_i32 = arith.constant 0 : i32
    %c0_i32_0 = arith.constant 0 : i32
    return %arg0, %c0_i32 : i32, i32
  }
}

module attributes {stable_mosaic.version = 11 : i64} {
  func.func @kernel(%arg0: i32, %arg1: memref<512x72xbf16, #tpu.memory_space<vmem>>, %arg2: memref<512x18xbf16, #tpu.memory_space<vmem>>, %arg3: memref<512x72xbf16, #tpu.memory_space<vmem>>, %arg4: memref<72x4xbf16, #tpu.memory_space<vmem>>, %arg5: memref<18x4xbf16, #tpu.memory_space<vmem>>, %arg6: memref<72x4xbf16, #tpu.memory_space<vmem>>, %arg7: memref<1x4xf32, #tpu.memory_space<vmem>>, %arg8: memref<4x2xf32, #tpu.memory_space<vmem>>, %arg9: memref<1x2xf32, #tpu.memory_space<vmem>>, %arg10: memref<512x4xbf16, #tpu.memory_space<vmem>>, %arg11: memref<512x2xf32, #tpu.memory_space<vmem>>) attributes {dimension_semantics = [#tpu.dimension_semantics<parallel>], iteration_bounds = array<i64: 1>, scalar_prefetch = 0 : i64, scratch_operands = 0 : i64, tpu.core_type = #tpu.core_type<tc>, window_params = [{transform_indices = @transform_0, window_bounds = array<i64: 512, 72>}, {transform_indices = @transform_1, window_bounds = array<i64: 512, 18>}, {transform_indices = @transform_2, window_bounds = array<i64: 512, 72>}, {pipeline_mode = #tpu.pipeline_mode<synchronous>, transform_indices = @transform_3, window_bounds = array<i64: 72, 4>}, {pipeline_mode = #tpu.pipeline_mode<synchronous>, transform_indices = @transform_4, window_bounds = array<i64: 18, 4>}, {pipeline_mode = #tpu.pipeline_mode<synchronous>, transform_indices = @transform_5, window_bounds = array<i64: 72, 4>}, {pipeline_mode = #tpu.pipeline_mode<synchronous>, transform_indices = @transform_6, window_bounds = array<i64: 1, 4>}, {pipeline_mode = #tpu.pipeline_mode<synchronous>, transform_indices = @transform_7, window_bounds = array<i64: 4, 2>}, {pipeline_mode = #tpu.pipeline_mode<synchronous>, transform_indices = @transform_8, window_bounds = array<i64: 1, 2>}, {transform_indices = @transform_9, window_bounds = array<i64: 512, 4>}, {transform_indices = @transform_10, window_bounds = array<i64: 512, 2>}]} {
    %c0 = arith.constant 0 : index
    %c0_0 = arith.constant 0 : index
    %0 = vector.load %arg1[%c0, %c0_0] : memref<512x72xbf16, #tpu.memory_space<vmem>>, vector<512x72xbf16>
    %c0_1 = arith.constant 0 : index
    %c0_2 = arith.constant 0 : index
    %1 = vector.load %arg4[%c0_1, %c0_2] : memref<72x4xbf16, #tpu.memory_space<vmem>>, vector<72x4xbf16>
    %cst = arith.constant dense<0.000000e+00> : vector<512x4xf32>
    %2 = tpu.matmul %0, %1, %cst {dimension_numbers = #tpu.dot_dimension_numbers<[1], [0], [0], [1], [0, 0, 1, 1], [], []>} : vector<512x72xbf16>, vector<72x4xbf16>, vector<512x4xf32> -> vector<512x4xf32>
    %c0_3 = arith.constant 0 : index
    %c0_4 = arith.constant 0 : index
    %3 = vector.load %arg2[%c0_3, %c0_4] : memref<512x18xbf16, #tpu.memory_space<vmem>>, vector<512x18xbf16>
    %c0_5 = arith.constant 0 : index
    %c0_6 = arith.constant 0 : index
    %4 = vector.load %arg5[%c0_5, %c0_6] : memref<18x4xbf16, #tpu.memory_space<vmem>>, vector<18x4xbf16>
    %cst_7 = arith.constant dense<0.000000e+00> : vector<512x4xf32>
    %5 = tpu.matmul %3, %4, %cst_7 {dimension_numbers = #tpu.dot_dimension_numbers<[1], [0], [0], [1], [0, 0, 1, 1], [], []>} : vector<512x18xbf16>, vector<18x4xbf16>, vector<512x4xf32> -> vector<512x4xf32>
    %6 = arith.addf %2, %5 : vector<512x4xf32>
    %c0_8 = arith.constant 0 : index
    %c0_9 = arith.constant 0 : index
    %7 = vector.load %arg3[%c0_8, %c0_9] : memref<512x72xbf16, #tpu.memory_space<vmem>>, vector<512x72xbf16>
    %c0_10 = arith.constant 0 : index
    %c0_11 = arith.constant 0 : index
    %8 = vector.load %arg6[%c0_10, %c0_11] : memref<72x4xbf16, #tpu.memory_space<vmem>>, vector<72x4xbf16>
    %cst_12 = arith.constant dense<0.000000e+00> : vector<512x4xf32>
    %9 = tpu.matmul %7, %8, %cst_12 {dimension_numbers = #tpu.dot_dimension_numbers<[1], [0], [0], [1], [0, 0, 1, 1], [], []>} : vector<512x72xbf16>, vector<72x4xbf16>, vector<512x4xf32> -> vector<512x4xf32>
    %10 = arith.addf %6, %9 : vector<512x4xf32>
    %c0_13 = arith.constant 0 : index
    %c0_14 = arith.constant 0 : index
    %11 = vector.load %arg7[%c0_13, %c0_14] : memref<1x4xf32, #tpu.memory_space<vmem>>, vector<1x4xf32>
    %12 = vector.broadcast %11 : vector<1x4xf32> to vector<512x4xf32>
    %13 = arith.addf %10, %12 : vector<512x4xf32>
    %cst_15 = arith.constant 0.000000e+00 : f32
    %14 = vector.broadcast %cst_15 : f32 to vector<512x4xf32>
    %15 = arith.maximumf %13, %14 : vector<512x4xf32>
    %16 = arith.truncf %15 : vector<512x4xf32> to vector<512x4xbf16>
    %c0_16 = arith.constant 0 : index
    %c0_17 = arith.constant 0 : index
    %17 = vector.load %arg10[%c0_16, %c0_17] : memref<512x4xbf16, #tpu.memory_space<vmem>>, vector<512x4xbf16>
    tpu.vector_store %arg10[%c0_16, %c0_17], %16 {strides = array<i32>} : memref<512x4xbf16, #tpu.memory_space<vmem>>, vector<512x4xbf16>,
    %c0_18 = arith.constant 0 : index
    %c0_19 = arith.constant 0 : index
    %18 = vector.load %arg8[%c0_18, %c0_19] : memref<4x2xf32, #tpu.memory_space<vmem>>, vector<4x2xf32>
    %cst_20 = arith.constant dense<0.000000e+00> : vector<512x2xf32>
    %19 = tpu.matmul %15, %18, %cst_20 {dimension_numbers = #tpu.dot_dimension_numbers<[1], [0], [0], [1], [0, 0, 1, 1], [], []>} : vector<512x4xf32>, vector<4x2xf32>, vector<512x2xf32> -> vector<512x2xf32>
    %c0_21 = arith.constant 0 : index
    %c0_22 = arith.constant 0 : index
    %20 = vector.load %arg9[%c0_21, %c0_22] : memref<1x2xf32, #tpu.memory_space<vmem>>, vector<1x2xf32>
    %21 = vector.broadcast %20 : vector<1x2xf32> to vector<512x2xf32>
    %22 = arith.addf %19, %21 : vector<512x2xf32>
    %23 = math.tanh %22 : vector<512x2xf32>
    %cst_23 = arith.constant 2.560000e+02 : f32
    %24 = vector.broadcast %cst_23 : f32 to vector<512x2xf32>
    %25 = arith.mulf %23, %24 : vector<512x2xf32>
    %c0_24 = arith.constant 0 : index
    %c0_25 = arith.constant 0 : index
    %26 = vector.load %arg11[%c0_24, %c0_25] : memref<512x2xf32, #tpu.memory_space<vmem>>, vector<512x2xf32>
    tpu.vector_store %arg11[%c0_24, %c0_25], %25 {strides = array<i32>} : memref<512x2xf32, #tpu.memory_space<vmem>>, vector<512x2xf32>,
    return
  }
  func.func @transform_0(%arg0: i32) -> (i32, i32) {
    %c0_i32 = arith.constant 0 : i32
    %c0_i32_0 = arith.constant 0 : i32
    return %arg0, %c0_i32 : i32, i32
  }
  func.func @transform_1(%arg0: i32) -> (i32, i32) {
    %c0_i32 = arith.constant 0 : i32
    %c0_i32_0 = arith.constant 0 : i32
    return %arg0, %c0_i32 : i32, i32
  }
  func.func @transform_2(%arg0: i32) -> (i32, i32) {
    %c0_i32 = arith.constant 0 : i32
    %c0_i32_0 = arith.constant 0 : i32
    return %arg0, %c0_i32 : i32, i32
  }
  func.func @transform_3(%arg0: i32) -> (i32, i32) {
    %c0_i32 = arith.constant 0 : i32
    %c0_i32_0 = arith.constant 0 : i32
    %c0_i32_1 = arith.constant 0 : i32
    return %c0_i32, %c0_i32_0 : i32, i32
  }
  func.func @transform_4(%arg0: i32) -> (i32, i32) {
    %c0_i32 = arith.constant 0 : i32
    %c0_i32_0 = arith.constant 0 : i32
    %c0_i32_1 = arith.constant 0 : i32
    return %c0_i32, %c0_i32_0 : i32, i32
  }
  func.func @transform_5(%arg0: i32) -> (i32, i32) {
    %c0_i32 = arith.constant 0 : i32
    %c0_i32_0 = arith.constant 0 : i32
    %c0_i32_1 = arith.constant 0 : i32
    return %c0_i32, %c0_i32_0 : i32, i32
  }
  func.func @transform_6(%arg0: i32) -> (i32, i32) {
    %c0_i32 = arith.constant 0 : i32
    %c0_i32_0 = arith.constant 0 : i32
    %c0_i32_1 = arith.constant 0 : i32
    return %c0_i32, %c0_i32_0 : i32, i32
  }
  func.func @transform_7(%arg0: i32) -> (i32, i32) {
    %c0_i32 = arith.constant 0 : i32
    %c0_i32_0 = arith.constant 0 : i32
    %c0_i32_1 = arith.constant 0 : i32
    return %c0_i32, %c0_i32_0 : i32, i32
  }
  func.func @transform_8(%arg0: i32) -> (i32, i32) {
    %c0_i32 = arith.constant 0 : i32
    %c0_i32_0 = arith.constant 0 : i32
    %c0_i32_1 = arith.constant 0 : i32
    return %c0_i32, %c0_i32_0 : i32, i32
  }
  func.func @transform_9(%arg0: i32) -> (i32, i32) {
    %c0_i32 = arith.constant 0 : i32
    %c0_i32_0 = arith.constant 0 : i32
    return %arg0, %c0_i32 : i32, i32
  }
  func.func @transform_10(%arg0: i32) -> (i32, i32) {
    %c0_i32 = arith.constant 0 : i32
    %c0_i32_0 = arith.constant 0 : i32
    return %arg0, %c0_i32 : i32, i32
  }
}

</mosaic_0001>

<llo_original>
// kernel: evflownet_forward.12
$region0: #{evflownet_forward.12}
  #allocation0 [shape = 'u32[]', space=smem, size = 0x4, offset = 0x4, fixed_abs, tag = 'smem constant byte address 0x4 - core index']
  #allocation1 [shape = 'u32[144,128]{1,0:T(1,128)}', space=vmem, size = 0x12000, scoped, tag = 'internal scratch']
  %s0 = inlined_call_operand.vmem [shape: bf16[128,36], index: 0, kind: input, shape index: {}]
  %s1 = inlined_call_operand.vmem [shape: bf16[36,8], index: 1, kind: input, shape index: {}]
  %s2 = inlined_call_operand.vmem [shape: f32[1,8], index: 2, kind: input, shape index: {}]
  %s3 = inlined_call_operand.vmem [shape: bf16[128,8], index: 3, kind: output, shape index: {}]
  %s4 = sld [smem:[#allocation0]]
  $region22: #{evflownet_forward.12} parent=0
    _
  %s6 = ssub.s32 1, %s4
  %s7 = scalar_select 0, %s6, %s4
  // Predicated region
  $region2: #{evflownet_forward.12} parent=0 // pred_check
    _
  $region3: #{evflownet_forward.12} parent=0 // pred_check_branch
    %9 = sbr.rel (0) target = $region5
  $region4: #{evflownet_forward.12} parent=0 // pred_region
    _
  $region5: #{evflownet_forward.12} parent=0 // pred_fallthru
    _
  // Predicated region
  $region6: #{evflownet_forward.12} parent=0 // pred_check
    _
  $region7: #{evflownet_forward.12} parent=0 // pred_check_branch
    %11 = sbr.rel (0) target = $region9
  $region8: #{evflownet_forward.12} parent=0 // pred_region
    _
  $region9: #{evflownet_forward.12} parent=0 // pred_fallthru
    _
  // Predicated region
  $region10: #{evflownet_forward.12} parent=0 // pred_check
    _
  $region11: #{evflownet_forward.12} parent=0 // pred_check_branch
    %13 = sbr.rel (0) target = $region13
  $region12: #{evflownet_forward.12} parent=0 // pred_region
    _
  $region13: #{evflownet_forward.12} parent=0 // pred_fallthru
    _
  %v15 = vld [vmem:[%s0] sm:$0xf]
  %v16 = vld [vmem:[%s0 + $0x4] sm:$0xf]
  %v17 = vld [vmem:[%s0 + $0x8] sm:$0xf]
  %v18 = vld [vmem:[%s0 + $0xc] sm:$0xf]
  %v19 = vld [vmem:[%s0 + $0x10] sm:$0xf]
  %v20 = vld [vmem:[%s0 + $0x14] sm:$0xf]
  %v21 = vld [vmem:[%s0 + $0x18] sm:$0xf]
  %v22 = vld [vmem:[%s0 + $0x1c] sm:$0xf]
  %v23 = vld [vmem:[%s0 + $0x20] sm:$0xf]
  %v24 = vld [vmem:[%s0 + $0x24] sm:$0xf]
  %v25 = vld [vmem:[%s0 + $0x28] sm:$0xf]
  %v26 = vld [vmem:[%s0 + $0x2c] sm:$0xf]
  %v27 = vld [vmem:[%s0 + $0x30] sm:$0xf]
  %v28 = vld [vmem:[%s0 + $0x34] sm:$0xf]
  %v29 = vld [vmem:[%s0 + $0x38] sm:$0xf]
  %v30 = vld [vmem:[%s0 + $0x3c] sm:$0xf]
  %v31 = vld [vmem:[%s1] sm:$0xf]
  %v32 = vld [vmem:[%s1 + $0x4] sm:$0xf]
  %v33 = vld [vmem:[%s1 + $0x8] sm:$0xf]
  %v34 = vld [vmem:[%s1 + $0xc] sm:$0xf]
  %v35 = vld [vmem:[%s1 + $0x10] sm:$0x3]
  %v36 = vld [vmem:[%s2] sm:$0x1]
  %v38 = vlaneseq
  %v39 = vshrl.u32 %v38, 7
  %v40 = vsub.s32 0, %v39
  %v41 = vrot.slane %v36, %v40
  %v59 = vunpack.c.l.b16 %v15
  %v60 = vunpack.c.l.b16 %v16
  %v61 = vunpack.c.l.b16 %v17
  %v62 = vunpack.c.l.b16 %v18
  %v63 = vunpack.c.l.b16 %v19
  %v64 = vunpack.c.l.b16 %v20
  %v65 = vunpack.c.l.b16 %v21
  %v66 = vunpack.c.l.b16 %v22
  %v67 = vunpack.c.l.b16 %v23
  %v68 = vunpack.c.l.b16 %v24
  %v69 = vunpack.c.l.b16 %v25
  %v70 = vunpack.c.l.b16 %v26
  %v71 = vunpack.c.l.b16 %v27
  %v72 = vunpack.c.l.b16 %v28
  %v73 = vunpack.c.l.b16 %v29
  %v74 = vunpack.c.l.b16 %v30
  %v75 = vpack.c.b16 %v60, %v59
  %v76 = vpack.c.b16 %v62, %v61
  %v77 = vpack.c.b16 %v64, %v63
  %v78 = vpack.c.b16 %v66, %v65
  %v79 = vpack.c.b16 %v68, %v67
  %v80 = vpack.c.b16 %v70, %v69
  %v81 = vpack.c.b16 %v72, %v71
  %v82 = vpack.c.b16 %v74, %v73
  %v88 = vunpack.c.l.b16 %v31
  %v89 = vunpack.c.l.b16 %v32
  %v90 = vunpack.c.l.b16 %v33
  %v91 = vunpack.c.l.b16 %v34
  %v92 = vunpack.c.l.b16 %v35
  %v93 = vpack.c.b16 %v89, %v88
  %v94 = vpack.c.b16 %v91, %v90
  %v95 = vpack.c.b16 %v92, %v92
  %vm98 = vcmask 293888
  %v100 = vsel %vm98, %v75, 0
  %v103 = vsel %vm98, %v76, 0
  %v106 = vsel %vm98, %v77, 0
  %v109 = vsel %vm98, %v78, 0
  %v112 = vsel %vm98, %v79, 0
  %v115 = vsel %vm98, %v80, 0
  %v118 = vsel %vm98, %v81, 0
  %v121 = vsel %vm98, %v82, 0
  %vm123 = vcmask 1041408
  %v125 = vsel %vm123, %v95, 0
  %127 = vmatprep.subr.bf16.mxu0 0
  %128 = vmatpush1.bf16.msra.mxu0 %v93
  %129 = vmatprep.subr.bf16.mxu0 0
  %130 = vmatpush1.bf16.msra.mxu0 %v94
  %131 = vmatprep.subr.bf16.mxu0 0
  %132 = vmatpush1.bf16.msra.mxu0 %v125
  %133 = vmatprep.subr.bf16.mxu0 0
  %134 = vmatpush1.bf16.msra.mxu0 0
  %135 = vmatprep.subr.bf16.mxu0 0
  %136 = vmatpush1.bf16.msra.mxu0 0
  %137 = vmatprep.subr.bf16.mxu0 0
  %138 = vmatpush1.bf16.msra.mxu0 0
  %139 = vmatprep.subr.bf16.mxu0 0
  %140 = vmatpush1.bf16.msra.mxu0 0
  %141 = vmatprep.subr.bf16.mxu0 0
  %142 = vmatpush1.bf16.msra.mxu0 0
  %143 = vmatprep.subr.bf16.mxu0 0
  %144 = vmatpush1.bf16.msra.mxu0 0
  %145 = vmatprep.subr.bf16.mxu0 0
  %146 = vmatpush1.bf16.msra.mxu0 0
  %147 = vmatprep.subr.bf16.mxu0 0
  %148 = vmatpush1.bf16.msra.mxu0 0
  %149 = vmatprep.subr.bf16.mxu0 0
  %150 = vmatpush1.bf16.msra.mxu0 0
  %151 = vmatprep.subr.bf16.mxu0 0
  %152 = vmatpush1.bf16.msra.mxu0 0
  %153 = vmatprep.subr.bf16.mxu0 0
  %154 = vmatpush1.bf16.msra.mxu0 0
  %155 = vmatprep.subr.bf16.mxu0 0
  %156 = vmatpush1.bf16.msra.mxu0 0
  %157 = vmatprep.subr.bf16.mxu0 0
  %158 = vmatpush1.bf16.msra.mxu0 0
  %159 = vmatprep.mubr.bf16.mxu0 0
  %160 = vmatmul.mubr.bf16.gmra.mrb[0].mxu0 %v100
  %v161 = vpop.f32.mrb[0].mxu0
  %v162 = vadd.f32 %v41, %v161
  %v163 = vpop.f32.mrb[0].mxu0
  %v164 = vpop.f32.mrb[0].mxu0
  %v165 = vadd.f32 %v41, %v164
  %v166 = vpop.f32.mrb[0].mxu0
  %167 = vmatprep.mubr.bf16.mxu0 0
  %168 = vmatmul.mubr.bf16.gmra.mrb[0].mxu0 %v103
  %v169 = vpop.f32.mrb[0].mxu0
  %v170 = vadd.f32 %v41, %v169
  %v171 = vpop.f32.mrb[0].mxu0
  %v172 = vpop.f32.mrb[0].mxu0
  %v173 = vadd.f32 %v41, %v172
  %v174 = vpop.f32.mrb[0].mxu0
  %175 = vmatprep.mubr.bf16.mxu0 0
  %176 = vmatmul.mubr.bf16.gmra.mrb[0].mxu0 %v106
  %v177 = vpop.f32.mrb[0].mxu0
  %v178 = vadd.f32 %v41, %v177
  %v179 = vpop.f32.mrb[0].mxu0
  %v180 = vpop.f32.mrb[0].mxu0
  %v181 = vadd.f32 %v41, %v180
  %v182 = vpop.f32.mrb[0].mxu0
  %183 = vmatprep.mubr.bf16.mxu0 0
  %184 = vmatmul.mubr.bf16.gmra.mrb[0].mxu0 %v109
  %v185 = vpop.f32.mrb[0].mxu0
  %v186 = vadd.f32 %v41, %v185
  %v187 = vpop.f32.mrb[0].mxu0
  %v188 = vpop.f32.mrb[0].mxu0
  %v189 = vadd.f32 %v41, %v188
  %v190 = vpop.f32.mrb[0].mxu0
  %191 = vmatprep.mubr.bf16.mxu0 0
  %192 = vmatmul.mubr.bf16.gmra.mrb[0].mxu0 %v112
  %v193 = vpop.f32.mrb[0].mxu0
  %v194 = vadd.f32 %v41, %v193
  %v195 = vpop.f32.mrb[0].mxu0
  %v196 = vpop.f32.mrb[0].mxu0
  %v197 = vadd.f32 %v41, %v196
  %v198 = vpop.f32.mrb[0].mxu0
  %199 = vmatprep.mubr.bf16.mxu0 0
  %200 = vmatmul.mubr.bf16.gmra.mrb[0].mxu0 %v115
  %v201 = vpop.f32.mrb[0].mxu0
  %v202 = vadd.f32 %v41, %v201
  %v203 = vpop.f32.mrb[0].mxu0
  %v204 = vpop.f32.mrb[0].mxu0
  %v205 = vadd.f32 %v41, %v204
  %v206 = vpop.f32.mrb[0].mxu0
  %207 = vmatprep.mubr.bf16.mxu0 0
  %208 = vmatmul.mubr.bf16.gmra.mrb[0].mxu0 %v118
  %v209 = vpop.f32.mrb[0].mxu0
  %v210 = vadd.f32 %v41, %v209
  %v211 = vpop.f32.mrb[0].mxu0
  %v212 = vpop.f32.mrb[0].mxu0
  %v213 = vadd.f32 %v41, %v212
  %v214 = vpop.f32.mrb[0].mxu0
  %215 = vmatprep.mubr.bf16.mxu0 0
  %216 = vmatmul.mubr.bf16.gmra.mrb[0].mxu0 %v121
  %v217 = vpop.f32.mrb[0].mxu0
  %v218 = vadd.f32 %v41, %v217
  %v219 = vpop.f32.mrb[0].mxu0
  %v220 = vpop.f32.mrb[0].mxu0
  %v221 = vadd.f32 %v41, %v220
  %v222 = vpop.f32.mrb[0].mxu0
  %223 = vdwg.mxu0
  %v224 = vmax.f32 %v162, 0.0
  %v225 = vmax.f32 %v165, 0.0
  %v226 = vmax.f32 %v170, 0.0
  %v227 = vmax.f32 %v173, 0.0
  %v228 = vmax.f32 %v178, 0.0
  %v229 = vmax.f32 %v181, 0.0
  %v230 = vmax.f32 %v186, 0.0
  %v231 = vmax.f32 %v189, 0.0
  %v232 = vmax.f32 %v194, 0.0
  %v233 = vmax.f32 %v197, 0.0
  %v234 = vmax.f32 %v202, 0.0
  %v235 = vmax.f32 %v205, 0.0
  %v236 = vmax.f32 %v210, 0.0
  %v237 = vmax.f32 %v213, 0.0
  %v238 = vmax.f32 %v218, 0.0
  %v239 = vmax.f32 %v221, 0.0
  %v240 = vpack.c.bf16 %v225, %v224
  %v241 = vpack.c.bf16 %v227, %v226
  %v242 = vpack.c.bf16 %v229, %v228
  %v243 = vpack.c.bf16 %v231, %v230
  %v244 = vpack.c.bf16 %v233, %v232
  %v245 = vpack.c.bf16 %v235, %v234
  %v246 = vpack.c.bf16 %v237, %v236
  %v247 = vpack.c.bf16 %v239, %v238
  %v256 = vunpack.c.l.b16 %v240
  %v257 = vunpack.c.h.b16 %v240
  %v258 = vunpack.c.l.b16 %v241
  %v259 = vunpack.c.h.b16 %v241
  %v260 = vunpack.c.l.b16 %v242
  %v261 = vunpack.c.h.b16 %v242
  %v262 = vunpack.c.l.b16 %v243
  %v263 = vunpack.c.h.b16 %v243
  %v264 = vunpack.c.l.b16 %v244
  %v265 = vunpack.c.h.b16 %v244
  %v266 = vunpack.c.l.b16 %v245
  %v267 = vunpack.c.h.b16 %v245
  %v268 = vunpack.c.l.b16 %v246
  %v269 = vunpack.c.h.b16 %v246
  %v270 = vunpack.c.l.b16 %v247
  %v271 = vunpack.c.h.b16 %v247
  %v272 = vpack.c.b16 %v256, %v256
  %v273 = vpack.c.b16 %v257, %v257
  %v274 = vpack.c.b16 %v258, %v258
  %v275 = vpack.c.b16 %v259, %v259
  %v276 = vpack.c.b16 %v260, %v260
  %v277 = vpack.c.b16 %v261, %v261
  %v278 = vpack.c.b16 %v262, %v262
  %v279 = vpack.c.b16 %v263, %v263
  %v280 = vpack.c.b16 %v264, %v264
  %v281 = vpack.c.b16 %v265, %v265
  %v282 = vpack.c.b16 %v266, %v266
  %v283 = vpack.c.b16 %v267, %v267
  %v284 = vpack.c.b16 %v268, %v268
  %v285 = vpack.c.b16 %v269, %v269
  %v286 = vpack.c.b16 %v270, %v270
  %v287 = vpack.c.b16 %v271, %v271
  %vm304 = vcmask 60416
  %305 = vst.msk [vmem:[%s3] sm:$0xf] %vm304, %v272
  %306 = vst.msk [vmem:[%s3 + $0x4] sm:$0xf] %vm304, %v273
  %307 = vst.msk [vmem:[%s3 + $0x8] sm:$0xf] %vm304, %v274
  %308 = vst.msk [vmem:[%s3 + $0xc] sm:$0xf] %vm304, %v275
  %309 = vst.msk [vmem:[%s3 + $0x10] sm:$0xf] %vm304, %v276
  %310 = vst.msk [vmem:[%s3 + $0x14] sm:$0xf] %vm304, %v277
  %311 = vst.msk [vmem:[%s3 + $0x18] sm:$0xf] %vm304, %v278
  %312 = vst.msk [vmem:[%s3 + $0x1c] sm:$0xf] %vm304, %v279
  %313 = vst.msk [vmem:[%s3 + $0x20] sm:$0xf] %vm304, %v280
  %314 = vst.msk [vmem:[%s3 + $0x24] sm:$0xf] %vm304, %v281
  %315 = vst.msk [vmem:[%s3 + $0x28] sm:$0xf] %vm304, %v282
  %316 = vst.msk [vmem:[%s3 + $0x2c] sm:$0xf] %vm304, %v283
  %317 = vst.msk [vmem:[%s3 + $0x30] sm:$0xf] %vm304, %v284
  %318 = vst.msk [vmem:[%s3 + $0x34] sm:$0xf] %vm304, %v285
  %319 = vst.msk [vmem:[%s3 + $0x38] sm:$0xf] %vm304, %v286
  %320 = vst.msk [vmem:[%s3 + $0x3c] sm:$0xf] %vm304, %v287
  // Predicated region
  $region14: #{evflownet_forward.12} parent=0 // pred_check
    _
  $region15: #{evflownet_forward.12} parent=0 // pred_check_branch
    %322 = sbr.rel (0) target = $region17
  $region16: #{evflownet_forward.12} parent=0 // pred_region
    _
  $region17: #{evflownet_forward.12} parent=0 // pred_fallthru
    _
  // Predicated region
  $region18: #{evflownet_forward.12} parent=0 // pred_check
    _
  $region19: #{evflownet_forward.12} parent=0 // pred_check_branch
    %324 = sbr.rel (0) target = $region21
  $region20: #{evflownet_forward.12} parent=0 // pred_region
    _
  $region21: #{evflownet_forward.12} parent=0 // pred_fallthru
    _

// kernel: evflownet_forward.13
$region0: #{evflownet_forward.13}
  #allocation0 [shape = 'u32[]', space=smem, size = 0x4, offset = 0x4, fixed_abs, tag = 'smem constant byte address 0x4 - core index']
  #allocation1 [shape = 'u32[144,128]{1,0:T(1,128)}', space=vmem, size = 0x12000, scoped, tag = 'internal scratch']
  %s0 = inlined_call_operand.vmem [shape: bf16[32,72], index: 0, kind: input, shape index: {}]
  %s1 = inlined_call_operand.vmem [shape: bf16[72,16], index: 1, kind: input, shape index: {}]
  %s2 = inlined_call_operand.vmem [shape: f32[1,16], index: 2, kind: input, shape index: {}]
  %s3 = inlined_call_operand.vmem [shape: bf16[32,16], index: 3, kind: output, shape index: {}]
  %s4 = sld [smem:[#allocation0]]
  $region22: #{evflownet_forward.13} parent=0
    _
  %s6 = ssub.s32 1, %s4
  %s7 = scalar_select 0, %s6, %s4
  // Predicated region
  $region2: #{evflownet_forward.13} parent=0 // pred_check
    _
  $region3: #{evflownet_forward.13} parent=0 // pred_check_branch
    %9 = sbr.rel (0) target = $region5
  $region4: #{evflownet_forward.13} parent=0 // pred_region
    _
  $region5: #{evflownet_forward.13} parent=0 // pred_fallthru
    _
  // Predicated region
  $region6: #{evflownet_forward.13} parent=0 // pred_check
    _
  $region7: #{evflownet_forward.13} parent=0 // pred_check_branch
    %11 = sbr.rel (0) target = $region9
  $region8: #{evflownet_forward.13} parent=0 // pred_region
    _
  $region9: #{evflownet_forward.13} parent=0 // pred_fallthru
    _
  // Predicated region
  $region10: #{evflownet_forward.13} parent=0 // pred_check
    _
  $region11: #{evflownet_forward.13} parent=0 // pred_check_branch
    %13 = sbr.rel (0) target = $region13
  $region12: #{evflownet_forward.13} parent=0 // pred_region
    _
  $region13: #{evflownet_forward.13} parent=0 // pred_fallthru
    _
  %v15 = vld [vmem:[%s0] sm:$0xf]
  %v16 = vld [vmem:[%s0 + $0x4] sm:$0xf]
  %v17 = vld [vmem:[%s0 + $0x8] sm:$0xf]
  %v18 = vld [vmem:[%s0 + $0xc] sm:$0xf]
  %v19 = vld [vmem:[%s1] sm:$0xf]
  %v20 = vld [vmem:[%s1 + $0x4] sm:$0xf]
  %v21 = vld [vmem:[%s1 + $0x8] sm:$0xf]
  %v22 = vld [vmem:[%s1 + $0xc] sm:$0xf]
  %v23 = vld [vmem:[%s1 + $0x10] sm:$0xf]
  %v24 = vld [vmem:[%s1 + $0x14] sm:$0xf]
  %v25 = vld [vmem:[%s1 + $0x18] sm:$0xf]
  %v26 = vld [vmem:[%s1 + $0x1c] sm:$0xf]
  %v27 = vld [vmem:[%s1 + $0x20] sm:$0xf]
  %v28 = vld [vmem:[%s2] sm:$0x1]
  %v30 = vlaneseq
  %v31 = vshrl.u32 %v30, 7
  %v32 = vsub.s32 0, %v31
  %v33 = vrot.slane %v28, %v32
  %v39 = vunpack.c.l.b16 %v15
  %v40 = vunpack.c.l.b16 %v16
  %v41 = vunpack.c.l.b16 %v17
  %v42 = vunpack.c.l.b16 %v18
  %v43 = vpack.c.b16 %v40, %v39
  %v44 = vpack.c.b16 %v42, %v41
  %v54 = vunpack.c.l.b16 %v19
  %v55 = vunpack.c.l.b16 %v20
  %v56 = vunpack.c.l.b16 %v21
  %v57 = vunpack.c.l.b16 %v22
  %v58 = vunpack.c.l.b16 %v23
  %v59 = vunpack.c.l.b16 %v24
  %v60 = vunpack.c.l.b16 %v25
  %v61 = vunpack.c.l.b16 %v26
  %v62 = vunpack.c.l.b16 %v27
  %v63 = vpack.c.b16 %v55, %v54
  %v64 = vpack.c.b16 %v57, %v56
  %v65 = vpack.c.b16 %v59, %v58
  %v66 = vpack.c.b16 %v61, %v60
  %v67 = vpack.c.b16 %v62, %v62
  %vm72 = vcmask 588800
  %v74 = vsel %vm72, %v43, 0
  %v77 = vsel %vm72, %v44, 0
  %vm79 = vcmask 1043456
  %v81 = vsel %vm79, %v67, 0
  %83 = vmatprep.subr.bf16.mxu0 0
  %84 = vmatpush1.bf16.msra.mxu0 %v63
  %85 = vmatprep.subr.bf16.mxu0 0
  %86 = vmatpush1.bf16.msra.mxu0 %v64
  %87 = vmatprep.subr.bf16.mxu0 0
  %88 = vmatpush1.bf16.msra.mxu0 %v65
  %89 = vmatprep.subr.bf16.mxu0 0
  %90 = vmatpush1.bf16.msra.mxu0 %v66
  %91 = vmatprep.subr.bf16.mxu0 0
  %92 = vmatpush1.bf16.msra.mxu0 %v81
  %93 = vmatprep.subr.bf16.mxu0 0
  %94 = vmatpush1.bf16.msra.mxu0 0
  %95 = vmatprep.subr.bf16.mxu0 0
  %96 = vmatpush1.bf16.msra.mxu0 0
  %97 = vmatprep.subr.bf16.mxu0 0
  %98 = vmatpush1.bf16.msra.mxu0 0
  %99 = vmatprep.subr.bf16.mxu0 0
  %100 = vmatpush1.bf16.msra.mxu0 0
  %101 = vmatprep.subr.bf16.mxu0 0
  %102 = vmatpush1.bf16.msra.mxu0 0
  %103 = vmatprep.subr.bf16.mxu0 0
  %104 = vmatpush1.bf16.msra.mxu0 0
  %105 = vmatprep.subr.bf16.mxu0 0
  %106 = vmatpush1.bf16.msra.mxu0 0
  %107 = vmatprep.subr.bf16.mxu0 0
  %108 = vmatpush1.bf16.msra.mxu0 0
  %109 = vmatprep.subr.bf16.mxu0 0
  %110 = vmatpush1.bf16.msra.mxu0 0
  %111 = vmatprep.subr.bf16.mxu0 0
  %112 = vmatpush1.bf16.msra.mxu0 0
  %113 = vmatprep.subr.bf16.mxu0 0
  %114 = vmatpush1.bf16.msra.mxu0 0
  %115 = vmatprep.mubr.bf16.mxu0 0
  %116 = vmatmul.mubr.bf16.gmra.mrb[0].mxu0 %v74
  %v117 = vpop.f32.mrb[0].mxu0
  %v118 = vadd.f32 %v33, %v117
  %v119 = vpop.f32.mrb[0].mxu0
  %v120 = vpop.f32.mrb[0].mxu0
  %v121 = vadd.f32 %v33, %v120
  %v122 = vpop.f32.mrb[0].mxu0
  %123 = vmatprep.mubr.bf16.mxu0 0
  %124 = vmatmul.mubr.bf16.gmra.mrb[0].mxu0 %v77
  %v125 = vpop.f32.mrb[0].mxu0
  %v126 = vadd.f32 %v33, %v125
  %v127 = vpop.f32.mrb[0].mxu0
  %v128 = vpop.f32.mrb[0].mxu0
  %v129 = vadd.f32 %v33, %v128
  %v130 = vpop.f32.mrb[0].mxu0
  %131 = vdwg.mxu0
  %v132 = vmax.f32 %v118, 0.0
  %v133 = vmax.f32 %v121, 0.0
  %v134 = vmax.f32 %v126, 0.0
  %v135 = vmax.f32 %v129, 0.0
  %v136 = vpack.c.bf16 %v133, %v132
  %v137 = vpack.c.bf16 %v135, %v134
  %v140 = vunpack.c.l.b16 %v136
  %v141 = vunpack.c.h.b16 %v136
  %v142 = vunpack.c.l.b16 %v137
  %v143 = vunpack.c.h.b16 %v137
  %v144 = vpack.c.b16 %v140, %v140
  %v145 = vpack.c.b16 %v141, %v141
  %v146 = vpack.c.b16 %v142, %v142
  %v147 = vpack.c.b16 %v143, %v143
  %vm152 = vcmask 125952
  %153 = vst.msk [vmem:[%s3] sm:$0xf] %vm152, %v144
  %154 = vst.msk [vmem:[%s3 + $0x4] sm:$0xf] %vm152, %v145
  %155 = vst.msk [vmem:[%s3 + $0x8] sm:$0xf] %vm152, %v146
  %156 = vst.msk [vmem:[%s3 + $0xc] sm:$0xf] %vm152, %v147
  // Predicated region
  $region14: #{evflownet_forward.13} parent=0 // pred_check
    _
  $region15: #{evflownet_forward.13} parent=0 // pred_check_branch
    %158 = sbr.rel (0) target = $region17
  $region16: #{evflownet_forward.13} parent=0 // pred_region
    _
  $region17: #{evflownet_forward.13} parent=0 // pred_fallthru
    _
  // Predicated region
  $region18: #{evflownet_forward.13} parent=0 // pred_check
    _
  $region19: #{evflownet_forward.13} parent=0 // pred_check_branch
    %160 = sbr.rel (0) target = $region21
  $region20: #{evflownet_forward.13} parent=0 // pred_region
    _
  $region21: #{evflownet_forward.13} parent=0 // pred_fallthru
    _

// kernel: evflownet_forward.14
$region0: #{evflownet_forward.14}
  #allocation0 [shape = 'u32[]', space=smem, size = 0x4, offset = 0x4, fixed_abs, tag = 'smem constant byte address 0x4 - core index']
  #allocation1 [shape = 'u32[144,128]{1,0:T(1,128)}', space=vmem, size = 0x12000, scoped, tag = 'internal scratch']
  %s0 = inlined_call_operand.vmem [shape: bf16[8,144], index: 0, kind: input, shape index: {}]
  %s1 = inlined_call_operand.vmem [shape: bf16[144,32], index: 1, kind: input, shape index: {}]
  %s2 = inlined_call_operand.vmem [shape: f32[1,32], index: 2, kind: input, shape index: {}]
  %s3 = inlined_call_operand.vmem [shape: bf16[8,32], index: 3, kind: output, shape index: {}]
  %s4 = sld [smem:[#allocation0]]
  $region22: #{evflownet_forward.14} parent=0
    _
  %s6 = ssub.s32 1, %s4
  %s7 = scalar_select 0, %s6, %s4
  // Predicated region
  $region2: #{evflownet_forward.14} parent=0 // pred_check
    _
  $region3: #{evflownet_forward.14} parent=0 // pred_check_branch
    %9 = sbr.rel (0) target = $region5
  $region4: #{evflownet_forward.14} parent=0 // pred_region
    _
  $region5: #{evflownet_forward.14} parent=0 // pred_fallthru
    _
  // Predicated region
  $region6: #{evflownet_forward.14} parent=0 // pred_check
    _
  $region7: #{evflownet_forward.14} parent=0 // pred_check_branch
    %11 = sbr.rel (0) target = $region9
  $region8: #{evflownet_forward.14} parent=0 // pred_region
    _
  $region9: #{evflownet_forward.14} parent=0 // pred_fallthru
    _
  // Predicated region
  $region10: #{evflownet_forward.14} parent=0 // pred_check
    _
  $region11: #{evflownet_forward.14} parent=0 // pred_check_branch
    %13 = sbr.rel (0) target = $region13
  $region12: #{evflownet_forward.14} parent=0 // pred_region
    _
  $region13: #{evflownet_forward.14} parent=0 // pred_fallthru
    _
  %v15 = vld [vmem:[%s0] sm:$0xff]
  %v16 = vld [vmem:[%s1] sm:$0xf]
  %v17 = vld [vmem:[%s1 + $0x4] sm:$0xf]
  %v18 = vld [vmem:[%s1 + $0x8] sm:$0xf]
  %v19 = vld [vmem:[%s1 + $0xc] sm:$0xf]
  %v20 = vld [vmem:[%s1 + $0x10] sm:$0xf]
  %v21 = vld [vmem:[%s1 + $0x14] sm:$0xf]
  %v22 = vld [vmem:[%s1 + $0x18] sm:$0xf]
  %v23 = vld [vmem:[%s1 + $0x1c] sm:$0xf]
  %v24 = vld [vmem:[%s1 + $0x20] sm:$0xf]
  %v25 = vld [vmem:[%s1 + $0x24] sm:$0xf]
  %v26 = vld [vmem:[%s1 + $0x28] sm:$0xf]
  %v27 = vld [vmem:[%s1 + $0x2c] sm:$0xf]
  %v28 = vld [vmem:[%s1 + $0x30] sm:$0xf]
  %v29 = vld [vmem:[%s1 + $0x34] sm:$0xf]
  %v30 = vld [vmem:[%s1 + $0x38] sm:$0xf]
  %v31 = vld [vmem:[%s1 + $0x3c] sm:$0xf]
  %v32 = vld [vmem:[%s1 + $0x40] sm:$0xf]
  %v33 = vld [vmem:[%s1 + $0x44] sm:$0xf]
  %v34 = vld [vmem:[%s2] sm:$0x1]
  %v36 = vlaneseq
  %v37 = vshrl.u32 %v36, 7
  %v38 = vsub.s32 0, %v37
  %v39 = vrot.slane %v34, %v38
  %v42 = vunpack.c.l.b16 %v15
  %v43 = vunpack.c.h.b16 %v15
  %v44 = vpack.c.b16 %v42, %v42
  %v45 = vpack.c.b16 %v43, %v43
  %v65 = vunpack.c.l.b16 %v16
  %v66 = vunpack.c.l.b16 %v17
  %v67 = vunpack.c.l.b16 %v18
  %v68 = vunpack.c.l.b16 %v19
  %v69 = vunpack.c.l.b16 %v20
  %v70 = vunpack.c.l.b16 %v21
  %v71 = vunpack.c.l.b16 %v22
  %v72 = vunpack.c.l.b16 %v23
  %v73 = vunpack.c.l.b16 %v24
  %v74 = vunpack.c.l.b16 %v25
  %v75 = vunpack.c.l.b16 %v26
  %v76 = vunpack.c.l.b16 %v27
  %v77 = vunpack.c.l.b16 %v28
  %v78 = vunpack.c.l.b16 %v29
  %v79 = vunpack.c.l.b16 %v30
  %v80 = vunpack.c.l.b16 %v31
  %v81 = vunpack.c.l.b16 %v32
  %v82 = vunpack.c.l.b16 %v33
  %v83 = vpack.c.b16 %v66, %v65
  %v84 = vpack.c.b16 %v68, %v67
  %v85 = vpack.c.b16 %v70, %v69
  %v86 = vpack.c.b16 %v72, %v71
  %v87 = vpack.c.b16 %v74, %v73
  %v88 = vpack.c.b16 %v76, %v75
  %v89 = vpack.c.b16 %v78, %v77
  %v90 = vpack.c.b16 %v80, %v79
  %v91 = vpack.c.b16 %v82, %v81
  %vm101 = vcmask 130048
  %v103 = vsel %vm101, %v45, 0
  %105 = vmatprep.subr.bf16.mxu0 0
  %106 = vmatpush1.bf16.msra.mxu0 %v83
  %107 = vmatprep.subr.bf16.mxu0 0
  %108 = vmatpush1.bf16.msra.mxu0 %v84
  %109 = vmatprep.subr.bf16.mxu0 0
  %110 = vmatpush1.bf16.msra.mxu0 %v85
  %111 = vmatprep.subr.bf16.mxu0 0
  %112 = vmatpush1.bf16.msra.mxu0 %v86
  %113 = vmatprep.subr.bf16.mxu0 0
  %114 = vmatpush1.bf16.msra.mxu0 %v87
  %115 = vmatprep.subr.bf16.mxu0 0
  %116 = vmatpush1.bf16.msra.mxu0 %v88
  %117 = vmatprep.subr.bf16.mxu0 0
  %118 = vmatpush1.bf16.msra.mxu0 %v89
  %119 = vmatprep.subr.bf16.mxu0 0
  %120 = vmatpush1.bf16.msra.mxu0 %v90
  %121 = vmatprep.subr.bf16.mxu0 0
  %122 = vmatpush1.bf16.msra.mxu0 %v91
  %123 = vmatprep.subr.bf16.mxu0 0
  %124 = vmatpush1.bf16.msra.mxu0 0
  %125 = vmatprep.subr.bf16.mxu0 0
  %126 = vmatpush1.bf16.msra.mxu0 0
  %127 = vmatprep.subr.bf16.mxu0 0
  %128 = vmatpush1.bf16.msra.mxu0 0
  %129 = vmatprep.subr.bf16.mxu0 0
  %130 = vmatpush1.bf16.msra.mxu0 0
  %131 = vmatprep.subr.bf16.mxu0 0
  %132 = vmatpush1.bf16.msra.mxu0 0
  %133 = vmatprep.subr.bf16.mxu0 0
  %134 = vmatpush1.bf16.msra.mxu0 0
  %135 = vmatprep.subr.bf16.mxu0 0
  %136 = vmatpush1.bf16.msra.mxu0 0
  %137 = vmatprep.mubr.bf16.mxu0 %v103
  %138 = vmatmul.mubr.bf16.gmra.mrb[0].mxu0 %v44
  %v139 = vpop.f32.mrb[0].mxu0
  %v140 = vadd.f32 %v39, %v139
  %v141 = vpop.f32.mrb[0].mxu0
  %v142 = vpop.f32.mrb[0].mxu0
  %v143 = vpop.f32.mrb[0].mxu0
  %144 = vdwg.mxu0
  %v145 = vmax.f32 %v140, 0.0
  %v146 = vpack.c.bf16 %v145, %v145
  %vm147 = vcmask 257024
  %148 = vst.msk [vmem:[%s3] sm:$0xf] %vm147, %v146
  // Predicated region
  $region14: #{evflownet_forward.14} parent=0 // pred_check
    _
  $region15: #{evflownet_forward.14} parent=0 // pred_check_branch
    %150 = sbr.rel (0) target = $region17
  $region16: #{evflownet_forward.14} parent=0 // pred_region
    _
  $region17: #{evflownet_forward.14} parent=0 // pred_fallthru
    _
  // Predicated region
  $region18: #{evflownet_forward.14} parent=0 // pred_check
    _
  $region19: #{evflownet_forward.14} parent=0 // pred_check_branch
    %152 = sbr.rel (0) target = $region21
  $region20: #{evflownet_forward.14} parent=0 // pred_region
    _
  $region21: #{evflownet_forward.14} parent=0 // pred_fallthru
    _

// kernel: evflownet_forward.15
$region0: #{evflownet_forward.15}
  #allocation0 [shape = 'u32[]', space=smem, size = 0x4, offset = 0x4, fixed_abs, tag = 'smem constant byte address 0x4 - core index']
  #allocation1 [shape = 'u32[144,128]{1,0:T(1,128)}', space=vmem, size = 0x12000, scoped, tag = 'internal scratch']
  %s0 = inlined_call_operand.vmem [shape: bf16[8,288], index: 0, kind: input, shape index: {}]
  %s1 = inlined_call_operand.vmem [shape: bf16[288,64], index: 1, kind: input, shape index: {}]
  %s2 = inlined_call_operand.vmem [shape: f32[1,64], index: 2, kind: input, shape index: {}]
  %s3 = inlined_call_operand.vmem [shape: bf16[8,64], index: 3, kind: output, shape index: {}]
  %s4 = sld [smem:[#allocation0]]
  $region22: #{evflownet_forward.15} parent=0
    _
  %s6 = ssub.s32 1, %s4
  %s7 = scalar_select 0, %s6, %s4
  // Predicated region
  $region2: #{evflownet_forward.15} parent=0 // pred_check
    _
  $region3: #{evflownet_forward.15} parent=0 // pred_check_branch
    %9 = sbr.rel (0) target = $region5
  $region4: #{evflownet_forward.15} parent=0 // pred_region
    _
  $region5: #{evflownet_forward.15} parent=0 // pred_fallthru
    _
  // Predicated region
  $region6: #{evflownet_forward.15} parent=0 // pred_check
    _
  $region7: #{evflownet_forward.15} parent=0 // pred_check_branch
    %11 = sbr.rel (0) target = $region9
  $region8: #{evflownet_forward.15} parent=0 // pred_region
    _
  $region9: #{evflownet_forward.15} parent=0 // pred_fallthru
    _
  // Predicated region
  $region10: #{evflownet_forward.15} parent=0 // pred_check
    _
  $region11: #{evflownet_forward.15} parent=0 // pred_check_branch
    %13 = sbr.rel (0) target = $region13
  $region12: #{evflownet_forward.15} parent=0 // pred_region
    _
  $region13: #{evflownet_forward.15} parent=0 // pred_fallthru
    _
  %v15 = vld [vmem:[%s0] sm:$0xff]
  %v16 = vld [vmem:[%s0 + $0x8] sm:$0xf]
  %v17 = vld [vmem:[%s1] sm:$0xf]
  %v18 = vld [vmem:[%s1 + $0x4] sm:$0xf]
  %v19 = vld [vmem:[%s1 + $0x8] sm:$0xf]
  %v20 = vld [vmem:[%s1 + $0xc] sm:$0xf]
  %v21 = vld [vmem:[%s1 + $0x10] sm:$0xf]
  %v22 = vld [vmem:[%s1 + $0x14] sm:$0xf]
  %v23 = vld [vmem:[%s1 + $0x18] sm:$0xf]
  %v24 = vld [vmem:[%s1 + $0x1c] sm:$0xf]
  %v25 = vld [vmem:[%s1 + $0x20] sm:$0xf]
  %v26 = vld [vmem:[%s1 + $0x24] sm:$0xf]
  %v27 = vld [vmem:[%s1 + $0x28] sm:$0xf]
  %v28 = vld [vmem:[%s1 + $0x2c] sm:$0xf]
  %v29 = vld [vmem:[%s1 + $0x30] sm:$0xf]
  %v30 = vld [vmem:[%s1 + $0x34] sm:$0xf]
  %v31 = vld [vmem:[%s1 + $0x38] sm:$0xf]
  %v32 = vld [vmem:[%s1 + $0x3c] sm:$0xf]
  %v33 = vld [vmem:[%s1 + $0x40] sm:$0xf]
  %v34 = vld [vmem:[%s1 + $0x44] sm:$0xf]
  %v35 = vld [vmem:[%s1 + $0x48] sm:$0xf]
  %v36 = vld [vmem:[%s1 + $0x4c] sm:$0xf]
  %v37 = vld [vmem:[%s1 + $0x50] sm:$0xf]
  %v38 = vld [vmem:[%s1 + $0x54] sm:$0xf]
  %v39 = vld [vmem:[%s1 + $0x58] sm:$0xf]
  %v40 = vld [vmem:[%s1 + $0x5c] sm:$0xf]
  %v41 = vld [vmem:[%s1 + $0x60] sm:$0xf]
  %v42 = vld [vmem:[%s1 + $0x64] sm:$0xf]
  %v43 = vld [vmem:[%s1 + $0x68] sm:$0xf]
  %v44 = vld [vmem:[%s1 + $0x6c] sm:$0xf]
  %v45 = vld [vmem:[%s1 + $0x70] sm:$0xf]
  %v46 = vld [vmem:[%s1 + $0x74] sm:$0xf]
  %v47 = vld [vmem:[%s1 + $0x78] sm:$0xf]
  %v48 = vld [vmem:[%s1 + $0x7c] sm:$0xf]
  %v49 = vld [vmem:[%s1 + $0x80] sm:$0xf]
  %v50 = vld [vmem:[%s1 + $0x84] sm:$0xf]
  %v51 = vld [vmem:[%s1 + $0x88] sm:$0xf]
  %v52 = vld [vmem:[%s1 + $0x8c] sm:$0xf]
  %v53 = vld [vmem:[%s2] sm:$0x1]
  %v55 = vlaneseq
  %v56 = vshrl.u32 %v55, 7
  %v57 = vsub.s32 0, %v56
  %v58 = vrot.slane %v53, %v57
  %v62 = vunpack.c.l.b16 %v15
  %v63 = vunpack.c.h.b16 %v15
  %v64 = vunpack.c.l.b16 %v16
  %v65 = vpack.c.b16 %v62, %v62
  %v66 = vpack.c.b16 %v63, %v63
  %v67 = vpack.c.b16 %v64, %v64
  %v106 = vunpack.c.l.b16 %v17
  %v107 = vunpack.c.l.b16 %v18
  %v108 = vunpack.c.l.b16 %v19
  %v109 = vunpack.c.l.b16 %v20
  %v110 = vunpack.c.l.b16 %v21
  %v111 = vunpack.c.l.b16 %v22
  %v112 = vunpack.c.l.b16 %v23
  %v113 = vunpack.c.l.b16 %v24
  %v114 = vunpack.c.l.b16 %v25
  %v115 = vunpack.c.l.b16 %v26
  %v116 = vunpack.c.l.b16 %v27
  %v117 = vunpack.c.l.b16 %v28
  %v118 = vunpack.c.l.b16 %v29
  %v119 = vunpack.c.l.b16 %v30
  %v120 = vunpack.c.l.b16 %v31
  %v121 = vunpack.c.l.b16 %v32
  %v122 = vunpack.c.l.b16 %v33
  %v123 = vunpack.c.l.b16 %v34
  %v124 = vunpack.c.l.b16 %v35
  %v125 = vunpack.c.l.b16 %v36
  %v126 = vunpack.c.l.b16 %v37
  %v127 = vunpack.c.l.b16 %v38
  %v128 = vunpack.c.l.b16 %v39
  %v129 = vunpack.c.l.b16 %v40
  %v130 = vunpack.c.l.b16 %v41
  %v131 = vunpack.c.l.b16 %v42
  %v132 = vunpack.c.l.b16 %v43
  %v133 = vunpack.c.l.b16 %v44
  %v134 = vunpack.c.l.b16 %v45
  %v135 = vunpack.c.l.b16 %v46
  %v136 = vunpack.c.l.b16 %v47
  %v137 = vunpack.c.l.b16 %v48
  %v138 = vunpack.c.l.b16 %v49
  %v139 = vunpack.c.l.b16 %v50
  %v140 = vunpack.c.l.b16 %v51
  %v141 = vunpack.c.l.b16 %v52
  %v142 = vpack.c.b16 %v107, %v106
  %v143 = vpack.c.b16 %v109, %v108
  %v144 = vpack.c.b16 %v111, %v110
  %v145 = vpack.c.b16 %v113, %v112
  %v146 = vpack.c.b16 %v115, %v114
  %v147 = vpack.c.b16 %v117, %v116
  %v148 = vpack.c.b16 %v119, %v118
  %v149 = vpack.c.b16 %v121, %v120
  %v150 = vpack.c.b16 %v123, %v122
  %v151 = vpack.c.b16 %v125, %v124
  %v152 = vpack.c.b16 %v127, %v126
  %v153 = vpack.c.b16 %v129, %v128
  %v154 = vpack.c.b16 %v131, %v130
  %v155 = vpack.c.b16 %v133, %v132
  %v156 = vpack.c.b16 %v135, %v134
  %v157 = vpack.c.b16 %v137, %v136
  %v158 = vpack.c.b16 %v139, %v138
  %v159 = vpack.c.b16 %v141, %v140
  %vm178 = vcmask 261120
  %v180 = vsel %vm178, %v67, 0
  %182 = vmatprep.subr.bf16.mxu0 0
  %183 = vmatpush1.bf16.msra.mxu0 %v142
  %184 = vmatprep.subr.bf16.mxu0 0
  %185 = vmatpush1.bf16.msra.mxu0 %v143
  %186 = vmatprep.subr.bf16.mxu0 0
  %187 = vmatpush1.bf16.msra.mxu0 %v144
  %188 = vmatprep.subr.bf16.mxu0 0
  %189 = vmatpush1.bf16.msra.mxu0 %v145
  %190 = vmatprep.subr.bf16.mxu0 0
  %191 = vmatpush1.bf16.msra.mxu0 %v146
  %192 = vmatprep.subr.bf16.mxu0 0
  %193 = vmatpush1.bf16.msra.mxu0 %v147
  %194 = vmatprep.subr.bf16.mxu0 0
  %195 = vmatpush1.bf16.msra.mxu0 %v148
  %196 = vmatprep.subr.bf16.mxu0 0
  %197 = vmatpush1.bf16.msra.mxu0 %v149
  %198 = vmatprep.subr.bf16.mxu0 0
  %199 = vmatpush1.bf16.msra.mxu0 %v150
  %200 = vmatprep.subr.bf16.mxu0 0
  %201 = vmatpush1.bf16.msra.mxu0 %v151
  %202 = vmatprep.subr.bf16.mxu0 0
  %203 = vmatpush1.bf16.msra.mxu0 %v152
  %204 = vmatprep.subr.bf16.mxu0 0
  %205 = vmatpush1.bf16.msra.mxu0 %v153
  %206 = vmatprep.subr.bf16.mxu0 0
  %207 = vmatpush1.bf16.msra.mxu0 %v154
  %208 = vmatprep.subr.bf16.mxu0 0
  %209 = vmatpush1.bf16.msra.mxu0 %v155
  %210 = vmatprep.subr.bf16.mxu0 0
  %211 = vmatpush1.bf16.msra.mxu0 %v156
  %212 = vmatprep.subr.bf16.mxu0 0
  %213 = vmatpush1.bf16.msra.mxu0 %v157
  %214 = vmatprep.mubr.bf16.mxu0 %v66
  %215 = vmatmul.mubr.bf16.gmra.mrb[0].mxu0 %v65
  %v216 = vpop.f32.mrb[0].mxu0
  %v217 = vadd.f32 %v58, %v216
  %v218 = vpop.f32.mrb[0].mxu0
  %v219 = vpop.f32.mrb[0].mxu0
  %v220 = vpop.f32.mrb[0].mxu0
  %221 = vdwg.mxu0
  %222 = vmatprep.subr.bf16.mxu0 0
  %223 = vmatpush1.bf16.msra.mxu0 %v158
  %224 = vmatprep.subr.bf16.mxu0 0
  %225 = vmatpush1.bf16.msra.mxu0 %v159
  %226 = vmatprep.subr.bf16.mxu0 0
  %227 = vmatpush1.bf16.msra.mxu0 0
  %228 = vmatprep.subr.bf16.mxu0 0
  %229 = vmatpush1.bf16.msra.mxu0 0
  %230 = vmatprep.subr.bf16.mxu0 0
  %231 = vmatpush1.bf16.msra.mxu0 0
  %232 = vmatprep.subr.bf16.mxu0 0
  %233 = vmatpush1.bf16.msra.mxu0 0
  %234 = vmatprep.subr.bf16.mxu0 0
  %235 = vmatpush1.bf16.msra.mxu0 0
  %236 = vmatprep.subr.bf16.mxu0 0
  %237 = vmatpush1.bf16.msra.mxu0 0
  %238 = vmatprep.subr.bf16.mxu0 0
  %239 = vmatpush1.bf16.msra.mxu0 0
  %240 = vmatprep.subr.bf16.mxu0 0
  %241 = vmatpush1.bf16.msra.mxu0 0
  %242 = vmatprep.subr.bf16.mxu0 0
  %243 = vmatpush1.bf16.msra.mxu0 0
  %244 = vmatprep.subr.bf16.mxu0 0
  %245 = vmatpush1.bf16.msra.mxu0 0
  %246 = vmatprep.subr.bf16.mxu0 0
  %247 = vmatpush1.bf16.msra.mxu0 0
  %248 = vmatprep.subr.bf16.mxu0 0
  %249 = vmatpush1.bf16.msra.mxu0 0
  %250 = vmatprep.subr.bf16.mxu0 0
  %251 = vmatpush1.bf16.msra.mxu0 0
  %252 = vmatprep.subr.bf16.mxu0 0
  %253 = vmatpush1.bf16.msra.mxu0 0
  %254 = vmatprep.mubr.bf16.mxu0 0
  %255 = vmatmul.mubr.bf16.gmra.mrb[0].mxu0 %v180
  %v256 = vpop.f32.mrb[0].mxu0
  %v257 = vadd.f32 %v217, %v256
  %v258 = vpop.f32.mrb[0].mxu0
  %v259 = vpop.f32.mrb[0].mxu0
  %v260 = vpop.f32.mrb[0].mxu0
  %261 = vdwg.mxu0
  %v262 = vmax.f32 %v257, 0.0
  %v263 = vpack.c.bf16 %v262, %v262
  %vm264 = vcmask 519168
  %265 = vst.msk [vmem:[%s3] sm:$0xf] %vm264, %v263
  // Predicated region
  $region14: #{evflownet_forward.15} parent=0 // pred_check
    _
  $region15: #{evflownet_forward.15} parent=0 // pred_check_branch
    %267 = sbr.rel (0) target = $region17
  $region16: #{evflownet_forward.15} parent=0 // pred_region
    _
  $region17: #{evflownet_forward.15} parent=0 // pred_fallthru
    _
  // Predicated region
  $region18: #{evflownet_forward.15} parent=0 // pred_check
    _
  $region19: #{evflownet_forward.15} parent=0 // pred_check_branch
    %269 = sbr.rel (0) target = $region21
  $region20: #{evflownet_forward.15} parent=0 // pred_region
    _
  $region21: #{evflownet_forward.15} parent=0 // pred_fallthru
    _

// kernel: evflownet_forward.16
$region0: #{evflownet_forward.16}
  #allocation0 [shape = 'u32[]', space=smem, size = 0x4, offset = 0x4, fixed_abs, tag = 'smem constant byte address 0x4 - core index']
  #allocation1 [shape = 'u32[144,128]{1,0:T(1,128)}', space=vmem, size = 0x12000, scoped, tag = 'internal scratch']
  %s0 = inlined_call_operand.vmem [shape: bf16[8,576], index: 0, kind: input, shape index: {}]
  %s1 = inlined_call_operand.vmem [shape: bf16[576,64], index: 1, kind: input, shape index: {}]
  %s2 = inlined_call_operand.vmem [shape: f32[1,64], index: 2, kind: input, shape index: {}]
  %s3 = inlined_call_operand.vmem [shape: bf16[8,64], index: 3, kind: output, shape index: {}]
  %s4 = sld [smem:[#allocation0]]
  $region22: #{evflownet_forward.16} parent=0
    _
  %s6 = ssub.s32 1, %s4
  %s7 = scalar_select 0, %s6, %s4
  // Predicated region
  $region2: #{evflownet_forward.16} parent=0 // pred_check
    _
  $region3: #{evflownet_forward.16} parent=0 // pred_check_branch
    %9 = sbr.rel (0) target = $region5
  $region4: #{evflownet_forward.16} parent=0 // pred_region
    _
  $region5: #{evflownet_forward.16} parent=0 // pred_fallthru
    _
  // Predicated region
  $region6: #{evflownet_forward.16} parent=0 // pred_check
    _
  $region7: #{evflownet_forward.16} parent=0 // pred_check_branch
    %11 = sbr.rel (0) target = $region9
  $region8: #{evflownet_forward.16} parent=0 // pred_region
    _
  $region9: #{evflownet_forward.16} parent=0 // pred_fallthru
    _
  // Predicated region
  $region10: #{evflownet_forward.16} parent=0 // pred_check
    _
  $region11: #{evflownet_forward.16} parent=0 // pred_check_branch
    %13 = sbr.rel (0) target = $region13
  $region12: #{evflownet_forward.16} parent=0 // pred_region
    _
  $region13: #{evflownet_forward.16} parent=0 // pred_fallthru
    _
  %v15 = vld [vmem:[%s0] sm:$0xff]
  %v16 = vld [vmem:[%s0 + $0x8] sm:$0xff]
  %v17 = vld [vmem:[%s0 + $0x10] sm:$0xf]
  %v18 = vld [vmem:[%s1] sm:$0xf]
  %v19 = vld [vmem:[%s1 + $0x4] sm:$0xf]
  %v20 = vld [vmem:[%s1 + $0x8] sm:$0xf]
  %v21 = vld [vmem:[%s1 + $0xc] sm:$0xf]
  %v22 = vld [vmem:[%s1 + $0x10] sm:$0xf]
  %v23 = vld [vmem:[%s1 + $0x14] sm:$0xf]
  %v24 = vld [vmem:[%s1 + $0x18] sm:$0xf]
  %v25 = vld [vmem:[%s1 + $0x1c] sm:$0xf]
  %v26 = vld [vmem:[%s1 + $0x20] sm:$0xf]
  %v27 = vld [vmem:[%s1 + $0x24] sm:$0xf]
  %v28 = vld [vmem:[%s1 + $0x28] sm:$0xf]
  %v29 = vld [vmem:[%s1 + $0x2c] sm:$0xf]
  %v30 = vld [vmem:[%s1 + $0x30] sm:$0xf]
  %v31 = vld [vmem:[%s1 + $0x34] sm:$0xf]
  %v32 = vld [vmem:[%s1 + $0x38] sm:$0xf]
  %v33 = vld [vmem:[%s1 + $0x3c] sm:$0xf]
  %v34 = vld [vmem:[%s1 + $0x40] sm:$0xf]
  %v35 = vld [vmem:[%s1 + $0x44] sm:$0xf]
  %v36 = vld [vmem:[%s1 + $0x48] sm:$0xf]
  %v37 = vld [vmem:[%s1 + $0x4c] sm:$0xf]
  %v38 = vld [vmem:[%s1 + $0x50] sm:$0xf]
  %v39 = vld [vmem:[%s1 + $0x54] sm:$0xf]
  %v40 = vld [vmem:[%s1 + $0x58] sm:$0xf]
  %v41 = vld [vmem:[%s1 + $0x5c] sm:$0xf]
  %v42 = vld [vmem:[%s1 + $0x60] sm:$0xf]
  %v43 = vld [vmem:[%s1 + $0x64] sm:$0xf]
  %v44 = vld [vmem:[%s1 + $0x68] sm:$0xf]
  %v45 = vld [vmem:[%s1 + $0x6c] sm:$0xf]
  %v46 = vld [vmem:[%s1 + $0x70] sm:$0xf]
  %v47 = vld [vmem:[%s1 + $0x74] sm:$0xf]
  %v48 = vld [vmem:[%s1 + $0x78] sm:$0xf]
  %v49 = vld [vmem:[%s1 + $0x7c] sm:$0xf]
  %v50 = vld [vmem:[%s1 + $0x80] sm:$0xf]
  %v51 = vld [vmem:[%s1 + $0x84] sm:$0xf]
  %v52 = vld [vmem:[%s1 + $0x88] sm:$0xf]
  %v53 = vld [vmem:[%s1 + $0x8c] sm:$0xf]
  %v54 = vld [vmem:[%s1 + $0x90] sm:$0xf]
  %v55 = vld [vmem:[%s1 + $0x94] sm:$0xf]
  %v56 = vld [vmem:[%s1 + $0x98] sm:$0xf]
  %v57 = vld [vmem:[%s1 + $0x9c] sm:$0xf]
  %v58 = vld [vmem:[%s1 + $0xa0] sm:$0xf]
  %v59 = vld [vmem:[%s1 + $0xa4] sm:$0xf]
  %v60 = vld [vmem:[%s1 + $0xa8] sm:$0xf]
  %v61 = vld [vmem:[%s1 + $0xac] sm:$0xf]
  %v62 = vld [vmem:[%s1 + $0xb0] sm:$0xf]
  %v63 = vld [vmem:[%s1 + $0xb4] sm:$0xf]
  %v64 = vld [vmem:[%s1 + $0xb8] sm:$0xf]
  %v65 = vld [vmem:[%s1 + $0xbc] sm:$0xf]
  %v66 = vld [vmem:[%s1 + $0xc0] sm:$0xf]
  %v67 = vld [vmem:[%s1 + $0xc4] sm:$0xf]
  %v68 = vld [vmem:[%s1 + $0xc8] sm:$0xf]
  %v69 = vld [vmem:[%s1 + $0xcc] sm:$0xf]
  %v70 = vld [vmem:[%s1 + $0xd0] sm:$0xf]
  %v71 = vld [vmem:[%s1 + $0xd4] sm:$0xf]
  %v72 = vld [vmem:[%s1 + $0xd8] sm:$0xf]
  %v73 = vld [vmem:[%s1 + $0xdc] sm:$0xf]
  %v74 = vld [vmem:[%s1 + $0xe0] sm:$0xf]
  %v75 = vld [vmem:[%s1 + $0xe4] sm:$0xf]
  %v76 = vld [vmem:[%s1 + $0xe8] sm:$0xf]
  %v77 = vld [vmem:[%s1 + $0xec] sm:$0xf]
  %v78 = vld [vmem:[%s1 + $0xf0] sm:$0xf]
  %v79 = vld [vmem:[%s1 + $0xf4] sm:$0xf]
  %v80 = vld [vmem:[%s1 + $0xf8] sm:$0xf]
  %v81 = vld [vmem:[%s1 + $0xfc] sm:$0xf]
  %v82 = vld [vmem:[%s1 + $0x100] sm:$0xf]
  %v83 = vld [vmem:[%s1 + $0x104] sm:$0xf]
  %v84 = vld [vmem:[%s1 + $0x108] sm:$0xf]
  %v85 = vld [vmem:[%s1 + $0x10c] sm:$0xf]
  %v86 = vld [vmem:[%s1 + $0x110] sm:$0xf]
  %v87 = vld [vmem:[%s1 + $0x114] sm:$0xf]
  %v88 = vld [vmem:[%s1 + $0x118] sm:$0xf]
  %v89 = vld [vmem:[%s1 + $0x11c] sm:$0xf]
  %v90 = vld [vmem:[%s2] sm:$0x1]
  %v92 = vlaneseq
  %v93 = vshrl.u32 %v92, 7
  %v94 = vsub.s32 0, %v93
  %v95 = vrot.slane %v90, %v94
  %v100 = vunpack.c.l.b16 %v15
  %v101 = vunpack.c.h.b16 %v15
  %v102 = vunpack.c.l.b16 %v16
  %v103 = vunpack.c.h.b16 %v16
  %v104 = vunpack.c.l.b16 %v17
  %v105 = vpack.c.b16 %v100, %v100
  %v106 = vpack.c.b16 %v101, %v101
  %v107 = vpack.c.b16 %v102, %v102
  %v108 = vpack.c.b16 %v103, %v103
  %v109 = vpack.c.b16 %v104, %v104
  %v186 = vunpack.c.l.b16 %v18
  %v187 = vunpack.c.l.b16 %v19
  %v188 = vunpack.c.l.b16 %v20
  %v189 = vunpack.c.l.b16 %v21
  %v190 = vunpack.c.l.b16 %v22
  %v191 = vunpack.c.l.b16 %v23
  %v192 = vunpack.c.l.b16 %v24
  %v193 = vunpack.c.l.b16 %v25
  %v194 = vunpack.c.l.b16 %v26
  %v195 = vunpack.c.l.b16 %v27
  %v196 = vunpack.c.l.b16 %v28
  %v197 = vunpack.c.l.b16 %v29
  %v198 = vunpack.c.l.b16 %v30
  %v199 = vunpack.c.l.b16 %v31
  %v200 = vunpack.c.l.b16 %v32
  %v201 = vunpack.c.l.b16 %v33
  %v202 = vunpack.c.l.b16 %v34
  %v203 = vunpack.c.l.b16 %v35
  %v204 = vunpack.c.l.b16 %v36
  %v205 = vunpack.c.l.b16 %v37
  %v206 = vunpack.c.l.b16 %v38
  %v207 = vunpack.c.l.b16 %v39
  %v208 = vunpack.c.l.b16 %v40
  %v209 = vunpack.c.l.b16 %v41
  %v210 = vunpack.c.l.b16 %v42
  %v211 = vunpack.c.l.b16 %v43
  %v212 = vunpack.c.l.b16 %v44
  %v213 = vunpack.c.l.b16 %v45
  %v214 = vunpack.c.l.b16 %v46
  %v215 = vunpack.c.l.b16 %v47
  %v216 = vunpack.c.l.b16 %v48
  %v217 = vunpack.c.l.b16 %v49
  %v218 = vunpack.c.l.b16 %v50
  %v219 = vunpack.c.l.b16 %v51
  %v220 = vunpack.c.l.b16 %v52
  %v221 = vunpack.c.l.b16 %v53
  %v222 = vunpack.c.l.b16 %v54
  %v223 = vunpack.c.l.b16 %v55
  %v224 = vunpack.c.l.b16 %v56
  %v225 = vunpack.c.l.b16 %v57
  %v226 = vunpack.c.l.b16 %v58
  %v227 = vunpack.c.l.b16 %v59
  %v228 = vunpack.c.l.b16 %v60
  %v229 = vunpack.c.l.b16 %v61
  %v230 = vunpack.c.l.b16 %v62
  %v231 = vunpack.c.l.b16 %v63
  %v232 = vunpack.c.l.b16 %v64
  %v233 = vunpack.c.l.b16 %v65
  %v234 = vunpack.c.l.b16 %v66
  %v235 = vunpack.c.l.b16 %v67
  %v236 = vunpack.c.l.b16 %v68
  %v237 = vunpack.c.l.b16 %v69
  %v238 = vunpack.c.l.b16 %v70
  %v239 = vunpack.c.l.b16 %v71
  %v240 = vunpack.c.l.b16 %v72
  %v241 = vunpack.c.l.b16 %v73
  %v242 = vunpack.c.l.b16 %v74
  %v243 = vunpack.c.l.b16 %v75
  %v244 = vunpack.c.l.b16 %v76
  %v245 = vunpack.c.l.b16 %v77
  %v246 = vunpack.c.l.b16 %v78
  %v247 = vunpack.c.l.b16 %v79
  %v248 = vunpack.c.l.b16 %v80
  %v249 = vunpack.c.l.b16 %v81
  %v250 = vunpack.c.l.b16 %v82
  %v251 = vunpack.c.l.b16 %v83
  %v252 = vunpack.c.l.b16 %v84
  %v253 = vunpack.c.l.b16 %v85
  %v254 = vunpack.c.l.b16 %v86
  %v255 = vunpack.c.l.b16 %v87
  %v256 = vunpack.c.l.b16 %v88
  %v257 = vunpack.c.l.b16 %v89
  %v258 = vpack.c.b16 %v187, %v186
  %v259 = vpack.c.b16 %v189, %v188
  %v260 = vpack.c.b16 %v191, %v190
  %v261 = vpack.c.b16 %v193, %v192
  %v262 = vpack.c.b16 %v195, %v194
  %v263 = vpack.c.b16 %v197, %v196
  %v264 = vpack.c.b16 %v199, %v198
  %v265 = vpack.c.b16 %v201, %v200
  %v266 = vpack.c.b16 %v203, %v202
  %v267 = vpack.c.b16 %v205, %v204
  %v268 = vpack.c.b16 %v207, %v206
  %v269 = vpack.c.b16 %v209, %v208
  %v270 = vpack.c.b16 %v211, %v210
  %v271 = vpack.c.b16 %v213, %v212
  %v272 = vpack.c.b16 %v215, %v214
  %v273 = vpack.c.b16 %v217, %v216
  %v274 = vpack.c.b16 %v219, %v218
  %v275 = vpack.c.b16 %v221, %v220
  %v276 = vpack.c.b16 %v223, %v222
  %v277 = vpack.c.b16 %v225, %v224
  %v278 = vpack.c.b16 %v227, %v226
  %v279 = vpack.c.b16 %v229, %v228
  %v280 = vpack.c.b16 %v231, %v230
  %v281 = vpack.c.b16 %v233, %v232
  %v282 = vpack.c.b16 %v235, %v234
  %v283 = vpack.c.b16 %v237, %v236
  %v284 = vpack.c.b16 %v239, %v238
  %v285 = vpack.c.b16 %v241, %v240
  %v286 = vpack.c.b16 %v243, %v242
  %v287 = vpack.c.b16 %v245, %v244
  %v288 = vpack.c.b16 %v247, %v246
  %v289 = vpack.c.b16 %v249, %v248
  %v290 = vpack.c.b16 %v251, %v250
  %v291 = vpack.c.b16 %v253, %v252
  %v292 = vpack.c.b16 %v255, %v254
  %v293 = vpack.c.b16 %v257, %v256
  %vm330 = vcmask 523264
  %v332 = vsel %vm330, %v109, 0
  %334 = vmatprep.subr.bf16.mxu0 0
  %335 = vmatpush1.bf16.msra.mxu0 %v258
  %336 = vmatprep.subr.bf16.mxu0 0
  %337 = vmatpush1.bf16.msra.mxu0 %v259
  %338 = vmatprep.subr.bf16.mxu0 0
  %339 = vmatpush1.bf16.msra.mxu0 %v260
  %340 = vmatprep.subr.bf16.mxu0 0
  %341 = vmatpush1.bf16.msra.mxu0 %v261
  %342 = vmatprep.subr.bf16.mxu0 0
  %343 = vmatpush1.bf16.msra.mxu0 %v262
  %344 = vmatprep.subr.bf16.mxu0 0
  %345 = vmatpush1.bf16.msra.mxu0 %v263
  %346 = vmatprep.subr.bf16.mxu0 0
  %347 = vmatpush1.bf16.msra.mxu0 %v264
  %348 = vmatprep.subr.bf16.mxu0 0
  %349 = vmatpush1.bf16.msra.mxu0 %v265
  %350 = vmatprep.subr.bf16.mxu0 0
  %351 = vmatpush1.bf16.msra.mxu0 %v266
  %352 = vmatprep.subr.bf16.mxu0 0
  %353 = vmatpush1.bf16.msra.mxu0 %v267
  %354 = vmatprep.subr.bf16.mxu0 0
  %355 = vmatpush1.bf16.msra.mxu0 %v268
  %356 = vmatprep.subr.bf16.mxu0 0
  %357 = vmatpush1.bf16.msra.mxu0 %v269
  %358 = vmatprep.subr.bf16.mxu0 0
  %359 = vmatpush1.bf16.msra.mxu0 %v270
  %360 = vmatprep.subr.bf16.mxu0 0
  %361 = vmatpush1.bf16.msra.mxu0 %v271
  %362 = vmatprep.subr.bf16.mxu0 0
  %363 = vmatpush1.bf16.msra.mxu0 %v272
  %364 = vmatprep.subr.bf16.mxu0 0
  %365 = vmatpush1.bf16.msra.mxu0 %v273
  %366 = vmatprep.mubr.bf16.mxu0 %v106
  %367 = vmatmul.mubr.bf16.gmra.mrb[0].mxu0 %v105
  %v368 = vpop.f32.mrb[0].mxu0
  %v369 = vadd.f32 %v95, %v368
  %v370 = vpop.f32.mrb[0].mxu0
  %v371 = vpop.f32.mrb[0].mxu0
  %v372 = vpop.f32.mrb[0].mxu0
  %373 = vdwg.mxu0
  %374 = vmatprep.subr.bf16.mxu0 0
  %375 = vmatpush1.bf16.msra.mxu0 %v274
  %376 = vmatprep.subr.bf16.mxu0 0
  %377 = vmatpush1.bf16.msra.mxu0 %v275
  %378 = vmatprep.subr.bf16.mxu0 0
  %379 = vmatpush1.bf16.msra.mxu0 %v276
  %380 = vmatprep.subr.bf16.mxu0 0
  %381 = vmatpush1.bf16.msra.mxu0 %v277
  %382 = vmatprep.subr.bf16.mxu0 0
  %383 = vmatpush1.bf16.msra.mxu0 %v278
  %384 = vmatprep.subr.bf16.mxu0 0
  %385 = vmatpush1.bf16.msra.mxu0 %v279
  %386 = vmatprep.subr.bf16.mxu0 0
  %387 = vmatpush1.bf16.msra.mxu0 %v280
  %388 = vmatprep.subr.bf16.mxu0 0
  %389 = vmatpush1.bf16.msra.mxu0 %v281
  %390 = vmatprep.subr.bf16.mxu0 0
  %391 = vmatpush1.bf16.msra.mxu0 %v282
  %392 = vmatprep.subr.bf16.mxu0 0
  %393 = vmatpush1.bf16.msra.mxu0 %v283
  %394 = vmatprep.subr.bf16.mxu0 0
  %395 = vmatpush1.bf16.msra.mxu0 %v284
  %396 = vmatprep.subr.bf16.mxu0 0
  %397 = vmatpush1.bf16.msra.mxu0 %v285
  %398 = vmatprep.subr.bf16.mxu0 0
  %399 = vmatpush1.bf16.msra.mxu0 %v286
  %400 = vmatprep.subr.bf16.mxu0 0
  %401 = vmatpush1.bf16.msra.mxu0 %v287
  %402 = vmatprep.subr.bf16.mxu0 0
  %403 = vmatpush1.bf16.msra.mxu0 %v288
  %404 = vmatprep.subr.bf16.mxu0 0
  %405 = vmatpush1.bf16.msra.mxu0 %v289
  %406 = vmatprep.mubr.bf16.mxu0 %v108
  %407 = vmatmul.mubr.bf16.gmra.mrb[0].mxu0 %v107
  %v408 = vpop.f32.mrb[0].mxu0
  %v409 = vadd.f32 %v369, %v408
  %v410 = vpop.f32.mrb[0].mxu0
  %v411 = vpop.f32.mrb[0].mxu0
  %v412 = vpop.f32.mrb[0].mxu0
  %413 = vdwg.mxu0
  %414 = vmatprep.subr.bf16.mxu0 0
  %415 = vmatpush1.bf16.msra.mxu0 %v290
  %416 = vmatprep.subr.bf16.mxu0 0
  %417 = vmatpush1.bf16.msra.mxu0 %v291
  %418 = vmatprep.subr.bf16.mxu0 0
  %419 = vmatpush1.bf16.msra.mxu0 %v292
  %420 = vmatprep.subr.bf16.mxu0 0
  %421 = vmatpush1.bf16.msra.mxu0 %v293
  %422 = vmatprep.subr.bf16.mxu0 0
  %423 = vmatpush1.bf16.msra.mxu0 0
  %424 = vmatprep.subr.bf16.mxu0 0
  %425 = vmatpush1.bf16.msra.mxu0 0
  %426 = vmatprep.subr.bf16.mxu0 0
  %427 = vmatpush1.bf16.msra.mxu0 0
  %428 = vmatprep.subr.bf16.mxu0 0
  %429 = vmatpush1.bf16.msra.mxu0 0
  %430 = vmatprep.subr.bf16.mxu0 0
  %431 = vmatpush1.bf16.msra.mxu0 0
  %432 = vmatprep.subr.bf16.mxu0 0
  %433 = vmatpush1.bf16.msra.mxu0 0
  %434 = vmatprep.subr.bf16.mxu0 0
  %435 = vmatpush1.bf16.msra.mxu0 0
  %436 = vmatprep.subr.bf16.mxu0 0
  %437 = vmatpush1.bf16.msra.mxu0 0
  %438 = vmatprep.subr.bf16.mxu0 0
  %439 = vmatpush1.bf16.msra.mxu0 0
  %440 = vmatprep.subr.bf16.mxu0 0
  %441 = vmatpush1.bf16.msra.mxu0 0
  %442 = vmatprep.subr.bf16.mxu0 0
  %443 = vmatpush1.bf16.msra.mxu0 0
  %444 = vmatprep.subr.bf16.mxu0 0
  %445 = vmatpush1.bf16.msra.mxu0 0
  %446 = vmatprep.mubr.bf16.mxu0 0
  %447 = vmatmul.mubr.bf16.gmra.mrb[0].mxu0 %v332
  %v448 = vpop.f32.mrb[0].mxu0
  %v449 = vadd.f32 %v409, %v448
  %v450 = vpop.f32.mrb[0].mxu0
  %v451 = vpop.f32.mrb[0].mxu0
  %v452 = vpop.f32.mrb[0].mxu0
  %453 = vdwg.mxu0
  %v454 = vmax.f32 %v449, 0.0
  %v455 = vpack.c.bf16 %v454, %v454
  %vm456 = vcmask 519168
  %457 = vst.msk [vmem:[%s3] sm:$0xf] %vm456, %v455
  // Predicated region
  $region14: #{evflownet_forward.16} parent=0 // pred_check
    _
  $region15: #{evflownet_forward.16} parent=0 // pred_check_branch
    %459 = sbr.rel (0) target = $region17
  $region16: #{evflownet_forward.16} parent=0 // pred_region
    _
  $region17: #{evflownet_forward.16} parent=0 // pred_fallthru
    _
  // Predicated region
  $region18: #{evflownet_forward.16} parent=0 // pred_check
    _
  $region19: #{evflownet_forward.16} parent=0 // pred_check_branch
    %461 = sbr.rel (0) target = $region21
  $region20: #{evflownet_forward.16} parent=0 // pred_region
    _
  $region21: #{evflownet_forward.16} parent=0 // pred_fallthru
    _

// kernel: evflownet_forward.17
$region0: #{evflownet_forward.17}
  #allocation0 [shape = 'u32[]', space=smem, size = 0x4, offset = 0x4, fixed_abs, tag = 'smem constant byte address 0x4 - core index']
  #allocation1 [shape = 'u32[144,128]{1,0:T(1,128)}', space=vmem, size = 0x12000, scoped, tag = 'internal scratch']
  %s0 = inlined_call_operand.vmem [shape: bf16[8,576], index: 0, kind: input, shape index: {}]
  %s1 = inlined_call_operand.vmem [shape: bf16[576,64], index: 1, kind: input, shape index: {}]
  %s2 = inlined_call_operand.vmem [shape: f32[1,64], index: 2, kind: input, shape index: {}]
  %s3 = inlined_call_operand.vmem [shape: bf16[8,64], index: 3, kind: input, shape index: {}]
  %s4 = inlined_call_operand.vmem [shape: bf16[8,64], index: 4, kind: output, shape index: {}]
  %s5 = sld [smem:[#allocation0]]
  $region26: #{evflownet_forward.17} parent=0
    _
  %s7 = ssub.s32 1, %s5
  %s8 = scalar_select 0, %s7, %s5
  // Predicated region
  $region2: #{evflownet_forward.17} parent=0 // pred_check
    _
  $region3: #{evflownet_forward.17} parent=0 // pred_check_branch
    %10 = sbr.rel (0) target = $region5
  $region4: #{evflownet_forward.17} parent=0 // pred_region
    _
  $region5: #{evflownet_forward.17} parent=0 // pred_fallthru
    _
  // Predicated region
  $region6: #{evflownet_forward.17} parent=0 // pred_check
    _
  $region7: #{evflownet_forward.17} parent=0 // pred_check_branch
    %12 = sbr.rel (0) target = $region9
  $region8: #{evflownet_forward.17} parent=0 // pred_region
    _
  $region9: #{evflownet_forward.17} parent=0 // pred_fallthru
    _
  // Predicated region
  $region10: #{evflownet_forward.17} parent=0 // pred_check
    _
  $region11: #{evflownet_forward.17} parent=0 // pred_check_branch
    %14 = sbr.rel (0) target = $region13
  $region12: #{evflownet_forward.17} parent=0 // pred_region
    _
  $region13: #{evflownet_forward.17} parent=0 // pred_fallthru
    _
  // Predicated region
  $region14: #{evflownet_forward.17} parent=0 // pred_check
    _
  $region15: #{evflownet_forward.17} parent=0 // pred_check_branch
    %16 = sbr.rel (0) target = $region17
  $region16: #{evflownet_forward.17} parent=0 // pred_region
    _
  $region17: #{evflownet_forward.17} parent=0 // pred_fallthru
    _
  %v18 = vld [vmem:[%s0] sm:$0xff]
  %v19 = vld [vmem:[%s0 + $0x8] sm:$0xff]
  %v20 = vld [vmem:[%s0 + $0x10] sm:$0xf]
  %v21 = vld [vmem:[%s1] sm:$0xf]
  %v22 = vld [vmem:[%s1 + $0x4] sm:$0xf]
  %v23 = vld [vmem:[%s1 + $0x8] sm:$0xf]
  %v24 = vld [vmem:[%s1 + $0xc] sm:$0xf]
  %v25 = vld [vmem:[%s1 + $0x10] sm:$0xf]
  %v26 = vld [vmem:[%s1 + $0x14] sm:$0xf]
  %v27 = vld [vmem:[%s1 + $0x18] sm:$0xf]
  %v28 = vld [vmem:[%s1 + $0x1c] sm:$0xf]
  %v29 = vld [vmem:[%s1 + $0x20] sm:$0xf]
  %v30 = vld [vmem:[%s1 + $0x24] sm:$0xf]
  %v31 = vld [vmem:[%s1 + $0x28] sm:$0xf]
  %v32 = vld [vmem:[%s1 + $0x2c] sm:$0xf]
  %v33 = vld [vmem:[%s1 + $0x30] sm:$0xf]
  %v34 = vld [vmem:[%s1 + $0x34] sm:$0xf]
  %v35 = vld [vmem:[%s1 + $0x38] sm:$0xf]
  %v36 = vld [vmem:[%s1 + $0x3c] sm:$0xf]
  %v37 = vld [vmem:[%s1 + $0x40] sm:$0xf]
  %v38 = vld [vmem:[%s1 + $0x44] sm:$0xf]
  %v39 = vld [vmem:[%s1 + $0x48] sm:$0xf]
  %v40 = vld [vmem:[%s1 + $0x4c] sm:$0xf]
  %v41 = vld [vmem:[%s1 + $0x50] sm:$0xf]
  %v42 = vld [vmem:[%s1 + $0x54] sm:$0xf]
  %v43 = vld [vmem:[%s1 + $0x58] sm:$0xf]
  %v44 = vld [vmem:[%s1 + $0x5c] sm:$0xf]
  %v45 = vld [vmem:[%s1 + $0x60] sm:$0xf]
  %v46 = vld [vmem:[%s1 + $0x64] sm:$0xf]
  %v47 = vld [vmem:[%s1 + $0x68] sm:$0xf]
  %v48 = vld [vmem:[%s1 + $0x6c] sm:$0xf]
  %v49 = vld [vmem:[%s1 + $0x70] sm:$0xf]
  %v50 = vld [vmem:[%s1 + $0x74] sm:$0xf]
  %v51 = vld [vmem:[%s1 + $0x78] sm:$0xf]
  %v52 = vld [vmem:[%s1 + $0x7c] sm:$0xf]
  %v53 = vld [vmem:[%s1 + $0x80] sm:$0xf]
  %v54 = vld [vmem:[%s1 + $0x84] sm:$0xf]
  %v55 = vld [vmem:[%s1 + $0x88] sm:$0xf]
  %v56 = vld [vmem:[%s1 + $0x8c] sm:$0xf]
  %v57 = vld [vmem:[%s1 + $0x90] sm:$0xf]
  %v58 = vld [vmem:[%s1 + $0x94] sm:$0xf]
  %v59 = vld [vmem:[%s1 + $0x98] sm:$0xf]
  %v60 = vld [vmem:[%s1 + $0x9c] sm:$0xf]
  %v61 = vld [vmem:[%s1 + $0xa0] sm:$0xf]
  %v62 = vld [vmem:[%s1 + $0xa4] sm:$0xf]
  %v63 = vld [vmem:[%s1 + $0xa8] sm:$0xf]
  %v64 = vld [vmem:[%s1 + $0xac] sm:$0xf]
  %v65 = vld [vmem:[%s1 + $0xb0] sm:$0xf]
  %v66 = vld [vmem:[%s1 + $0xb4] sm:$0xf]
  %v67 = vld [vmem:[%s1 + $0xb8] sm:$0xf]
  %v68 = vld [vmem:[%s1 + $0xbc] sm:$0xf]
  %v69 = vld [vmem:[%s1 + $0xc0] sm:$0xf]
  %v70 = vld [vmem:[%s1 + $0xc4] sm:$0xf]
  %v71 = vld [vmem:[%s1 + $0xc8] sm:$0xf]
  %v72 = vld [vmem:[%s1 + $0xcc] sm:$0xf]
  %v73 = vld [vmem:[%s1 + $0xd0] sm:$0xf]
  %v74 = vld [vmem:[%s1 + $0xd4] sm:$0xf]
  %v75 = vld [vmem:[%s1 + $0xd8] sm:$0xf]
  %v76 = vld [vmem:[%s1 + $0xdc] sm:$0xf]
  %v77 = vld [vmem:[%s1 + $0xe0] sm:$0xf]
  %v78 = vld [vmem:[%s1 + $0xe4] sm:$0xf]
  %v79 = vld [vmem:[%s1 + $0xe8] sm:$0xf]
  %v80 = vld [vmem:[%s1 + $0xec] sm:$0xf]
  %v81 = vld [vmem:[%s1 + $0xf0] sm:$0xf]
  %v82 = vld [vmem:[%s1 + $0xf4] sm:$0xf]
  %v83 = vld [vmem:[%s1 + $0xf8] sm:$0xf]
  %v84 = vld [vmem:[%s1 + $0xfc] sm:$0xf]
  %v85 = vld [vmem:[%s1 + $0x100] sm:$0xf]
  %v86 = vld [vmem:[%s1 + $0x104] sm:$0xf]
  %v87 = vld [vmem:[%s1 + $0x108] sm:$0xf]
  %v88 = vld [vmem:[%s1 + $0x10c] sm:$0xf]
  %v89 = vld [vmem:[%s1 + $0x110] sm:$0xf]
  %v90 = vld [vmem:[%s1 + $0x114] sm:$0xf]
  %v91 = vld [vmem:[%s1 + $0x118] sm:$0xf]
  %v92 = vld [vmem:[%s1 + $0x11c] sm:$0xf]
  %v93 = vld [vmem:[%s2] sm:$0x1]
  %v95 = vlaneseq
  %v96 = vshrl.u32 %v95, 7
  %v97 = vsub.s32 0, %v96
  %v98 = vrot.slane %v93, %v97
  %v103 = vunpack.c.l.b16 %v18
  %v104 = vunpack.c.h.b16 %v18
  %v105 = vunpack.c.l.b16 %v19
  %v106 = vunpack.c.h.b16 %v19
  %v107 = vunpack.c.l.b16 %v20
  %v108 = vpack.c.b16 %v103, %v103
  %v109 = vpack.c.b16 %v104, %v104
  %v110 = vpack.c.b16 %v105, %v105
  %v111 = vpack.c.b16 %v106, %v106
  %v112 = vpack.c.b16 %v107, %v107
  %v189 = vunpack.c.l.b16 %v21
  %v190 = vunpack.c.l.b16 %v22
  %v191 = vunpack.c.l.b16 %v23
  %v192 = vunpack.c.l.b16 %v24
  %v193 = vunpack.c.l.b16 %v25
  %v194 = vunpack.c.l.b16 %v26
  %v195 = vunpack.c.l.b16 %v27
  %v196 = vunpack.c.l.b16 %v28
  %v197 = vunpack.c.l.b16 %v29
  %v198 = vunpack.c.l.b16 %v30
  %v199 = vunpack.c.l.b16 %v31
  %v200 = vunpack.c.l.b16 %v32
  %v201 = vunpack.c.l.b16 %v33
  %v202 = vunpack.c.l.b16 %v34
  %v203 = vunpack.c.l.b16 %v35
  %v204 = vunpack.c.l.b16 %v36
  %v205 = vunpack.c.l.b16 %v37
  %v206 = vunpack.c.l.b16 %v38
  %v207 = vunpack.c.l.b16 %v39
  %v208 = vunpack.c.l.b16 %v40
  %v209 = vunpack.c.l.b16 %v41
  %v210 = vunpack.c.l.b16 %v42
  %v211 = vunpack.c.l.b16 %v43
  %v212 = vunpack.c.l.b16 %v44
  %v213 = vunpack.c.l.b16 %v45
  %v214 = vunpack.c.l.b16 %v46
  %v215 = vunpack.c.l.b16 %v47
  %v216 = vunpack.c.l.b16 %v48
  %v217 = vunpack.c.l.b16 %v49
  %v218 = vunpack.c.l.b16 %v50
  %v219 = vunpack.c.l.b16 %v51
  %v220 = vunpack.c.l.b16 %v52
  %v221 = vunpack.c.l.b16 %v53
  %v222 = vunpack.c.l.b16 %v54
  %v223 = vunpack.c.l.b16 %v55
  %v224 = vunpack.c.l.b16 %v56
  %v225 = vunpack.c.l.b16 %v57
  %v226 = vunpack.c.l.b16 %v58
  %v227 = vunpack.c.l.b16 %v59
  %v228 = vunpack.c.l.b16 %v60
  %v229 = vunpack.c.l.b16 %v61
  %v230 = vunpack.c.l.b16 %v62
  %v231 = vunpack.c.l.b16 %v63
  %v232 = vunpack.c.l.b16 %v64
  %v233 = vunpack.c.l.b16 %v65
  %v234 = vunpack.c.l.b16 %v66
  %v235 = vunpack.c.l.b16 %v67
  %v236 = vunpack.c.l.b16 %v68
  %v237 = vunpack.c.l.b16 %v69
  %v238 = vunpack.c.l.b16 %v70
  %v239 = vunpack.c.l.b16 %v71
  %v240 = vunpack.c.l.b16 %v72
  %v241 = vunpack.c.l.b16 %v73
  %v242 = vunpack.c.l.b16 %v74
  %v243 = vunpack.c.l.b16 %v75
  %v244 = vunpack.c.l.b16 %v76
  %v245 = vunpack.c.l.b16 %v77
  %v246 = vunpack.c.l.b16 %v78
  %v247 = vunpack.c.l.b16 %v79
  %v248 = vunpack.c.l.b16 %v80
  %v249 = vunpack.c.l.b16 %v81
  %v250 = vunpack.c.l.b16 %v82
  %v251 = vunpack.c.l.b16 %v83
  %v252 = vunpack.c.l.b16 %v84
  %v253 = vunpack.c.l.b16 %v85
  %v254 = vunpack.c.l.b16 %v86
  %v255 = vunpack.c.l.b16 %v87
  %v256 = vunpack.c.l.b16 %v88
  %v257 = vunpack.c.l.b16 %v89
  %v258 = vunpack.c.l.b16 %v90
  %v259 = vunpack.c.l.b16 %v91
  %v260 = vunpack.c.l.b16 %v92
  %v261 = vpack.c.b16 %v190, %v189
  %v262 = vpack.c.b16 %v192, %v191
  %v263 = vpack.c.b16 %v194, %v193
  %v264 = vpack.c.b16 %v196, %v195
  %v265 = vpack.c.b16 %v198, %v197
  %v266 = vpack.c.b16 %v200, %v199
  %v267 = vpack.c.b16 %v202, %v201
  %v268 = vpack.c.b16 %v204, %v203
  %v269 = vpack.c.b16 %v206, %v205
  %v270 = vpack.c.b16 %v208, %v207
  %v271 = vpack.c.b16 %v210, %v209
  %v272 = vpack.c.b16 %v212, %v211
  %v273 = vpack.c.b16 %v214, %v213
  %v274 = vpack.c.b16 %v216, %v215
  %v275 = vpack.c.b16 %v218, %v217
  %v276 = vpack.c.b16 %v220, %v219
  %v277 = vpack.c.b16 %v222, %v221
  %v278 = vpack.c.b16 %v224, %v223
  %v279 = vpack.c.b16 %v226, %v225
  %v280 = vpack.c.b16 %v228, %v227
  %v281 = vpack.c.b16 %v230, %v229
  %v282 = vpack.c.b16 %v232, %v231
  %v283 = vpack.c.b16 %v234, %v233
  %v284 = vpack.c.b16 %v236, %v235
  %v285 = vpack.c.b16 %v238, %v237
  %v286 = vpack.c.b16 %v240, %v239
  %v287 = vpack.c.b16 %v242, %v241
  %v288 = vpack.c.b16 %v244, %v243
  %v289 = vpack.c.b16 %v246, %v245
  %v290 = vpack.c.b16 %v248, %v247
  %v291 = vpack.c.b16 %v250, %v249
  %v292 = vpack.c.b16 %v252, %v251
  %v293 = vpack.c.b16 %v254, %v253
  %v294 = vpack.c.b16 %v256, %v255
  %v295 = vpack.c.b16 %v258, %v257
  %v296 = vpack.c.b16 %v260, %v259
  %vm333 = vcmask 523264
  %v335 = vsel %vm333, %v112, 0
  %337 = vmatprep.subr.bf16.mxu0 0
  %338 = vmatpush1.bf16.msra.mxu0 %v261
  %339 = vmatprep.subr.bf16.mxu0 0
  %340 = vmatpush1.bf16.msra.mxu0 %v262
  %341 = vmatprep.subr.bf16.mxu0 0
  %342 = vmatpush1.bf16.msra.mxu0 %v263
  %343 = vmatprep.subr.bf16.mxu0 0
  %344 = vmatpush1.bf16.msra.mxu0 %v264
  %345 = vmatprep.subr.bf16.mxu0 0
  %346 = vmatpush1.bf16.msra.mxu0 %v265
  %347 = vmatprep.subr.bf16.mxu0 0
  %348 = vmatpush1.bf16.msra.mxu0 %v266
  %349 = vmatprep.subr.bf16.mxu0 0
  %350 = vmatpush1.bf16.msra.mxu0 %v267
  %351 = vmatprep.subr.bf16.mxu0 0
  %352 = vmatpush1.bf16.msra.mxu0 %v268
  %353 = vmatprep.subr.bf16.mxu0 0
  %354 = vmatpush1.bf16.msra.mxu0 %v269
  %355 = vmatprep.subr.bf16.mxu0 0
  %356 = vmatpush1.bf16.msra.mxu0 %v270
  %357 = vmatprep.subr.bf16.mxu0 0
  %358 = vmatpush1.bf16.msra.mxu0 %v271
  %359 = vmatprep.subr.bf16.mxu0 0
  %360 = vmatpush1.bf16.msra.mxu0 %v272
  %361 = vmatprep.subr.bf16.mxu0 0
  %362 = vmatpush1.bf16.msra.mxu0 %v273
  %363 = vmatprep.subr.bf16.mxu0 0
  %364 = vmatpush1.bf16.msra.mxu0 %v274
  %365 = vmatprep.subr.bf16.mxu0 0
  %366 = vmatpush1.bf16.msra.mxu0 %v275
  %367 = vmatprep.subr.bf16.mxu0 0
  %368 = vmatpush1.bf16.msra.mxu0 %v276
  %369 = vmatprep.mubr.bf16.mxu0 %v109
  %370 = vmatmul.mubr.bf16.gmra.mrb[0].mxu0 %v108
  %v371 = vpop.f32.mrb[0].mxu0
  %v372 = vadd.f32 %v98, %v371
  %v373 = vpop.f32.mrb[0].mxu0
  %v374 = vpop.f32.mrb[0].mxu0
  %v375 = vpop.f32.mrb[0].mxu0
  %376 = vdwg.mxu0
  %377 = vmatprep.subr.bf16.mxu0 0
  %378 = vmatpush1.bf16.msra.mxu0 %v277
  %379 = vmatprep.subr.bf16.mxu0 0
  %380 = vmatpush1.bf16.msra.mxu0 %v278
  %381 = vmatprep.subr.bf16.mxu0 0
  %382 = vmatpush1.bf16.msra.mxu0 %v279
  %383 = vmatprep.subr.bf16.mxu0 0
  %384 = vmatpush1.bf16.msra.mxu0 %v280
  %385 = vmatprep.subr.bf16.mxu0 0
  %386 = vmatpush1.bf16.msra.mxu0 %v281
  %387 = vmatprep.subr.bf16.mxu0 0
  %388 = vmatpush1.bf16.msra.mxu0 %v282
  %389 = vmatprep.subr.bf16.mxu0 0
  %390 = vmatpush1.bf16.msra.mxu0 %v283
  %391 = vmatprep.subr.bf16.mxu0 0
  %392 = vmatpush1.bf16.msra.mxu0 %v284
  %393 = vmatprep.subr.bf16.mxu0 0
  %394 = vmatpush1.bf16.msra.mxu0 %v285
  %395 = vmatprep.subr.bf16.mxu0 0
  %396 = vmatpush1.bf16.msra.mxu0 %v286
  %397 = vmatprep.subr.bf16.mxu0 0
  %398 = vmatpush1.bf16.msra.mxu0 %v287
  %399 = vmatprep.subr.bf16.mxu0 0
  %400 = vmatpush1.bf16.msra.mxu0 %v288
  %401 = vmatprep.subr.bf16.mxu0 0
  %402 = vmatpush1.bf16.msra.mxu0 %v289
  %403 = vmatprep.subr.bf16.mxu0 0
  %404 = vmatpush1.bf16.msra.mxu0 %v290
  %405 = vmatprep.subr.bf16.mxu0 0
  %406 = vmatpush1.bf16.msra.mxu0 %v291
  %407 = vmatprep.subr.bf16.mxu0 0
  %408 = vmatpush1.bf16.msra.mxu0 %v292
  %409 = vmatprep.mubr.bf16.mxu0 %v111
  %410 = vmatmul.mubr.bf16.gmra.mrb[0].mxu0 %v110
  %v411 = vpop.f32.mrb[0].mxu0
  %v412 = vadd.f32 %v372, %v411
  %v413 = vpop.f32.mrb[0].mxu0
  %v414 = vpop.f32.mrb[0].mxu0
  %v415 = vpop.f32.mrb[0].mxu0
  %416 = vdwg.mxu0
  %417 = vmatprep.subr.bf16.mxu0 0
  %418 = vmatpush1.bf16.msra.mxu0 %v293
  %419 = vmatprep.subr.bf16.mxu0 0
  %420 = vmatpush1.bf16.msra.mxu0 %v294
  %421 = vmatprep.subr.bf16.mxu0 0
  %422 = vmatpush1.bf16.msra.mxu0 %v295
  %423 = vmatprep.subr.bf16.mxu0 0
  %424 = vmatpush1.bf16.msra.mxu0 %v296
  %425 = vmatprep.subr.bf16.mxu0 0
  %426 = vmatpush1.bf16.msra.mxu0 0
  %427 = vmatprep.subr.bf16.mxu0 0
  %428 = vmatpush1.bf16.msra.mxu0 0
  %429 = vmatprep.subr.bf16.mxu0 0
  %430 = vmatpush1.bf16.msra.mxu0 0
  %431 = vmatprep.subr.bf16.mxu0 0
  %432 = vmatpush1.bf16.msra.mxu0 0
  %433 = vmatprep.subr.bf16.mxu0 0
  %434 = vmatpush1.bf16.msra.mxu0 0
  %435 = vmatprep.subr.bf16.mxu0 0
  %436 = vmatpush1.bf16.msra.mxu0 0
  %437 = vmatprep.subr.bf16.mxu0 0
  %438 = vmatpush1.bf16.msra.mxu0 0
  %439 = vmatprep.subr.bf16.mxu0 0
  %440 = vmatpush1.bf16.msra.mxu0 0
  %441 = vmatprep.subr.bf16.mxu0 0
  %442 = vmatpush1.bf16.msra.mxu0 0
  %443 = vmatprep.subr.bf16.mxu0 0
  %444 = vmatpush1.bf16.msra.mxu0 0
  %445 = vmatprep.subr.bf16.mxu0 0
  %446 = vmatpush1.bf16.msra.mxu0 0
  %447 = vmatprep.subr.bf16.mxu0 0
  %448 = vmatpush1.bf16.msra.mxu0 0
  %449 = vmatprep.mubr.bf16.mxu0 0
  %450 = vmatmul.mubr.bf16.gmra.mrb[0].mxu0 %v335
  %v451 = vpop.f32.mrb[0].mxu0
  %v452 = vadd.f32 %v412, %v451
  %v453 = vpop.f32.mrb[0].mxu0
  %v454 = vpop.f32.mrb[0].mxu0
  %v455 = vpop.f32.mrb[0].mxu0
  %456 = vdwg.mxu0
  %v457 = vmax.f32 %v452, 0.0
  %v458 = vld [vmem:[%s3] sm:$0xf]
  %v459 = vunpack.c.l.bf16 %v458
  %v460 = vadd.f32 %v457, %v459
  %v461 = vpack.c.bf16 %v460, %v460
  %vm462 = vcmask 519168
  %463 = vst.msk [vmem:[%s4] sm:$0xf] %vm462, %v461
  // Predicated region
  $region18: #{evflownet_forward.17} parent=0 // pred_check
    _
  $region19: #{evflownet_forward.17} parent=0 // pred_check_branch
    %465 = sbr.rel (0) target = $region21
  $region20: #{evflownet_forward.17} parent=0 // pred_region
    _
  $region21: #{evflownet_forward.17} parent=0 // pred_fallthru
    _
  // Predicated region
  $region22: #{evflownet_forward.17} parent=0 // pred_check
    _
  $region23: #{evflownet_forward.17} parent=0 // pred_check_branch
    %467 = sbr.rel (0) target = $region25
  $region24: #{evflownet_forward.17} parent=0 // pred_region
    _
  $region25: #{evflownet_forward.17} parent=0 // pred_fallthru
    _

// kernel: evflownet_forward.20
$region0: #{evflownet_forward.20}
  #allocation0 [shape = 'u32[]', space=smem, size = 0x4, offset = 0x4, fixed_abs, tag = 'smem constant byte address 0x4 - core index']
  #allocation1 [shape = 'u32[144,128]{1,0:T(1,128)}', space=vmem, size = 0x12000, scoped, tag = 'internal scratch']
  %s0 = inlined_call_operand.vmem [shape: bf16[8,576], index: 0, kind: input, shape index: {}]
  %s1 = inlined_call_operand.vmem [shape: bf16[8,576], index: 1, kind: input, shape index: {}]
  %s2 = inlined_call_operand.vmem [shape: bf16[576,32], index: 2, kind: input, shape index: {}]
  %s3 = inlined_call_operand.vmem [shape: bf16[576,32], index: 3, kind: input, shape index: {}]
  %s4 = inlined_call_operand.vmem [shape: f32[1,32], index: 4, kind: input, shape index: {}]
  %s5 = inlined_call_operand.vmem [shape: f32[32,2], index: 5, kind: input, shape index: {}]
  %s6 = inlined_call_operand.vmem [shape: f32[1,2], index: 6, kind: input, shape index: {}]
  %s7 = inlined_call_operand.vmem [shape: bf16[8,32], index: 7, kind: output, shape index: {0}]
  %s8 = inlined_call_operand.vmem [shape: f32[8,2], index: 8, kind: output, shape index: {1}]
  %9 = xla_tuple %s7, %s8
  %s10 = sld [smem:[#allocation0]]
  $region46: #{evflownet_forward.20} parent=0
    _
  %s12 = ssub.s32 1, %s10
  %s13 = scalar_select 0, %s12, %s10
  // Predicated region
  $region2: #{evflownet_forward.20} parent=0 // pred_check
    _
  $region3: #{evflownet_forward.20} parent=0 // pred_check_branch
    %15 = sbr.rel (0) target = $region5
  $region4: #{evflownet_forward.20} parent=0 // pred_region
    _
  $region5: #{evflownet_forward.20} parent=0 // pred_fallthru
    _
  // Predicated region
  $region6: #{evflownet_forward.20} parent=0 // pred_check
    _
  $region7: #{evflownet_forward.20} parent=0 // pred_check_branch
    %17 = sbr.rel (0) target = $region9
  $region8: #{evflownet_forward.20} parent=0 // pred_region
    _
  $region9: #{evflownet_forward.20} parent=0 // pred_fallthru
    _
  // Predicated region
  $region10: #{evflownet_forward.20} parent=0 // pred_check
    _
  $region11: #{evflownet_forward.20} parent=0 // pred_check_branch
    %19 = sbr.rel (0) target = $region13
  $region12: #{evflownet_forward.20} parent=0 // pred_region
    _
  $region13: #{evflownet_forward.20} parent=0 // pred_fallthru
    _
  // Predicated region
  $region14: #{evflownet_forward.20} parent=0 // pred_check
    _
  $region15: #{evflownet_forward.20} parent=0 // pred_check_branch
    %21 = sbr.rel (0) target = $region17
  $region16: #{evflownet_forward.20} parent=0 // pred_region
    _
  $region17: #{evflownet_forward.20} parent=0 // pred_fallthru
    _
  // Predicated region
  $region18: #{evflownet_forward.20} parent=0 // pred_check
    _
  $region19: #{evflownet_forward.20} parent=0 // pred_check_branch
    %23 = sbr.rel (0) target = $region21
  $region20: #{evflownet_forward.20} parent=0 // pred_region
    _
  $region21: #{evflownet_forward.20} parent=0 // pred_fallthru
    _
  // Predicated region
  $region22: #{evflownet_forward.20} parent=0 // pred_check
    _
  $region23: #{evflownet_forward.20} parent=0 // pred_check_branch
    %25 = sbr.rel (0) target = $region25
  $region24: #{evflownet_forward.20} parent=0 // pred_region
    _
  $region25: #{evflownet_forward.20} parent=0 // pred_fallthru
    _
  // Predicated region
  $region26: #{evflownet_forward.20} parent=0 // pred_check
    _
  $region27: #{evflownet_forward.20} parent=0 // pred_check_branch
    %27 = sbr.rel (0) target = $region29
  $region28: #{evflownet_forward.20} parent=0 // pred_region
    _
  $region29: #{evflownet_forward.20} parent=0 // pred_fallthru
    _
  %v29 = vld [vmem:[%s0] sm:$0xff]
  %v30 = vld [vmem:[%s0 + $0x8] sm:$0xff]
  %v31 = vld [vmem:[%s0 + $0x10] sm:$0xf]
  %v32 = vld [vmem:[%s2] sm:$0xf]
  %v33 = vld [vmem:[%s2 + $0x4] sm:$0xf]
  %v34 = vld [vmem:[%s2 + $0x8] sm:$0xf]
  %v35 = vld [vmem:[%s2 + $0xc] sm:$0xf]
  %v36 = vld [vmem:[%s2 + $0x10] sm:$0xf]
  %v37 = vld [vmem:[%s2 + $0x14] sm:$0xf]
  %v38 = vld [vmem:[%s2 + $0x18] sm:$0xf]
  %v39 = vld [vmem:[%s2 + $0x1c] sm:$0xf]
  %v40 = vld [vmem:[%s2 + $0x20] sm:$0xf]
  %v41 = vld [vmem:[%s2 + $0x24] sm:$0xf]
  %v42 = vld [vmem:[%s2 + $0x28] sm:$0xf]
  %v43 = vld [vmem:[%s2 + $0x2c] sm:$0xf]
  %v44 = vld [vmem:[%s2 + $0x30] sm:$0xf]
  %v45 = vld [vmem:[%s2 + $0x34] sm:$0xf]
  %v46 = vld [vmem:[%s2 + $0x38] sm:$0xf]
  %v47 = vld [vmem:[%s2 + $0x3c] sm:$0xf]
  %v48 = vld [vmem:[%s2 + $0x40] sm:$0xf]
  %v49 = vld [vmem:[%s2 + $0x44] sm:$0xf]
  %v50 = vld [vmem:[%s2 + $0x48] sm:$0xf]
  %v51 = vld [vmem:[%s2 + $0x4c] sm:$0xf]
  %v52 = vld [vmem:[%s2 + $0x50] sm:$0xf]
  %v53 = vld [vmem:[%s2 + $0x54] sm:$0xf]
  %v54 = vld [vmem:[%s2 + $0x58] sm:$0xf]
  %v55 = vld [vmem:[%s2 + $0x5c] sm:$0xf]
  %v56 = vld [vmem:[%s2 + $0x60] sm:$0xf]
  %v57 = vld [vmem:[%s2 + $0x64] sm:$0xf]
  %v58 = vld [vmem:[%s2 + $0x68] sm:$0xf]
  %v59 = vld [vmem:[%s2 + $0x6c] sm:$0xf]
  %v60 = vld [vmem:[%s2 + $0x70] sm:$0xf]
  %v61 = vld [vmem:[%s2 + $0x74] sm:$0xf]
  %v62 = vld [vmem:[%s2 + $0x78] sm:$0xf]
  %v63 = vld [vmem:[%s2 + $0x7c] sm:$0xf]
  %v64 = vld [vmem:[%s2 + $0x80] sm:$0xf]
  %v65 = vld [vmem:[%s2 + $0x84] sm:$0xf]
  %v66 = vld [vmem:[%s2 + $0x88] sm:$0xf]
  %v67 = vld [vmem:[%s2 + $0x8c] sm:$0xf]
  %v68 = vld [vmem:[%s2 + $0x90] sm:$0xf]
  %v69 = vld [vmem:[%s2 + $0x94] sm:$0xf]
  %v70 = vld [vmem:[%s2 + $0x98] sm:$0xf]
  %v71 = vld [vmem:[%s2 + $0x9c] sm:$0xf]
  %v72 = vld [vmem:[%s2 + $0xa0] sm:$0xf]
  %v73 = vld [vmem:[%s2 + $0xa4] sm:$0xf]
  %v74 = vld [vmem:[%s2 + $0xa8] sm:$0xf]
  %v75 = vld [vmem:[%s2 + $0xac] sm:$0xf]
  %v76 = vld [vmem:[%s2 + $0xb0] sm:$0xf]
  %v77 = vld [vmem:[%s2 + $0xb4] sm:$0xf]
  %v78 = vld [vmem:[%s2 + $0xb8] sm:$0xf]
  %v79 = vld [vmem:[%s2 + $0xbc] sm:$0xf]
  %v80 = vld [vmem:[%s2 + $0xc0] sm:$0xf]
  %v81 = vld [vmem:[%s2 + $0xc4] sm:$0xf]
  %v82 = vld [vmem:[%s2 + $0xc8] sm:$0xf]
  %v83 = vld [vmem:[%s2 + $0xcc] sm:$0xf]
  %v84 = vld [vmem:[%s2 + $0xd0] sm:$0xf]
  %v85 = vld [vmem:[%s2 + $0xd4] sm:$0xf]
  %v86 = vld [vmem:[%s2 + $0xd8] sm:$0xf]
  %v87 = vld [vmem:[%s2 + $0xdc] sm:$0xf]
  %v88 = vld [vmem:[%s2 + $0xe0] sm:$0xf]
  %v89 = vld [vmem:[%s2 + $0xe4] sm:$0xf]
  %v90 = vld [vmem:[%s2 + $0xe8] sm:$0xf]
  %v91 = vld [vmem:[%s2 + $0xec] sm:$0xf]
  %v92 = vld [vmem:[%s2 + $0xf0] sm:$0xf]
  %v93 = vld [vmem:[%s2 + $0xf4] sm:$0xf]
  %v94 = vld [vmem:[%s2 + $0xf8] sm:$0xf]
  %v95 = vld [vmem:[%s2 + $0xfc] sm:$0xf]
  %v96 = vld [vmem:[%s2 + $0x100] sm:$0xf]
  %v97 = vld [vmem:[%s2 + $0x104] sm:$0xf]
  %v98 = vld [vmem:[%s2 + $0x108] sm:$0xf]
  %v99 = vld [vmem:[%s2 + $0x10c] sm:$0xf]
  %v100 = vld [vmem:[%s2 + $0x110] sm:$0xf]
  %v101 = vld [vmem:[%s2 + $0x114] sm:$0xf]
  %v102 = vld [vmem:[%s2 + $0x118] sm:$0xf]
  %v103 = vld [vmem:[%s2 + $0x11c] sm:$0xf]
  %v104 = vld [vmem:[%s1] sm:$0xff]
  %v105 = vld [vmem:[%s1 + $0x8] sm:$0xff]
  %v106 = vld [vmem:[%s1 + $0x10] sm:$0xf]
  %v107 = vld [vmem:[%s3] sm:$0xf]
  %v108 = vld [vmem:[%s3 + $0x4] sm:$0xf]
  %v109 = vld [vmem:[%s3 + $0x8] sm:$0xf]
  %v110 = vld [vmem:[%s3 + $0xc] sm:$0xf]
  %v111 = vld [vmem:[%s3 + $0x10] sm:$0xf]
  %v112 = vld [vmem:[%s3 + $0x14] sm:$0xf]
  %v113 = vld [vmem:[%s3 + $0x18] sm:$0xf]
  %v114 = vld [vmem:[%s3 + $0x1c] sm:$0xf]
  %v115 = vld [vmem:[%s3 + $0x20] sm:$0xf]
  %v116 = vld [vmem:[%s3 + $0x24] sm:$0xf]
  %v117 = vld [vmem:[%s3 + $0x28] sm:$0xf]
  %v118 = vld [vmem:[%s3 + $0x2c] sm:$0xf]
  %v119 = vld [vmem:[%s3 + $0x30] sm:$0xf]
  %v120 = vld [vmem:[%s3 + $0x34] sm:$0xf]
  %v121 = vld [vmem:[%s3 + $0x38] sm:$0xf]
  %v122 = vld [vmem:[%s3 + $0x3c] sm:$0xf]
  %v123 = vld [vmem:[%s3 + $0x40] sm:$0xf]
  %v124 = vld [vmem:[%s3 + $0x44] sm:$0xf]
  %v125 = vld [vmem:[%s3 + $0x48] sm:$0xf]
  %v126 = vld [vmem:[%s3 + $0x4c] sm:$0xf]
  %v127 = vld [vmem:[%s3 + $0x50] sm:$0xf]
  %v128 = vld [vmem:[%s3 + $0x54] sm:$0xf]
  %v129 = vld [vmem:[%s3 + $0x58] sm:$0xf]
  %v130 = vld [vmem:[%s3 + $0x5c] sm:$0xf]
  %v131 = vld [vmem:[%s3 + $0x60] sm:$0xf]
  %v132 = vld [vmem:[%s3 + $0x64] sm:$0xf]
  %v133 = vld [vmem:[%s3 + $0x68] sm:$0xf]
  %v134 = vld [vmem:[%s3 + $0x6c] sm:$0xf]
  %v135 = vld [vmem:[%s3 + $0x70] sm:$0xf]
  %v136 = vld [vmem:[%s3 + $0x74] sm:$0xf]
  %v137 = vld [vmem:[%s3 + $0x78] sm:$0xf]
  %v138 = vld [vmem:[%s3 + $0x7c] sm:$0xf]
  %v139 = vld [vmem:[%s3 + $0x80] sm:$0xf]
  %v140 = vld [vmem:[%s3 + $0x84] sm:$0xf]
  %v141 = vld [vmem:[%s3 + $0x88] sm:$0xf]
  %v142 = vld [vmem:[%s3 + $0x8c] sm:$0xf]
  %v143 = vld [vmem:[%s3 + $0x90] sm:$0xf]
  %v144 = vld [vmem:[%s3 + $0x94] sm:$0xf]
  %v145 = vld [vmem:[%s3 + $0x98] sm:$0xf]
  %v146 = vld [vmem:[%s3 + $0x9c] sm:$0xf]
  %v147 = vld [vmem:[%s3 + $0xa0] sm:$0xf]
  %v148 = vld [vmem:[%s3 + $0xa4] sm:$0xf]
  %v149 = vld [vmem:[%s3 + $0xa8] sm:$0xf]
  %v150 = vld [vmem:[%s3 + $0xac] sm:$0xf]
  %v151 = vld [vmem:[%s3 + $0xb0] sm:$0xf]
  %v152 = vld [vmem:[%s3 + $0xb4] sm:$0xf]
  %v153 = vld [vmem:[%s3 + $0xb8] sm:$0xf]
  %v154 = vld [vmem:[%s3 + $0xbc] sm:$0xf]
  %v155 = vld [vmem:[%s3 + $0xc0] sm:$0xf]
  %v156 = vld [vmem:[%s3 + $0xc4] sm:$0xf]
  %v157 = vld [vmem:[%s3 + $0xc8] sm:$0xf]
  %v158 = vld [vmem:[%s3 + $0xcc] sm:$0xf]
  %v159 = vld [vmem:[%s3 + $0xd0] sm:$0xf]
  %v160 = vld [vmem:[%s3 + $0xd4] sm:$0xf]
  %v161 = vld [vmem:[%s3 + $0xd8] sm:$0xf]
  %v162 = vld [vmem:[%s3 + $0xdc] sm:$0xf]
  %v163 = vld [vmem:[%s3 + $0xe0] sm:$0xf]
  %v164 = vld [vmem:[%s3 + $0xe4] sm:$0xf]
  %v165 = vld [vmem:[%s3 + $0xe8] sm:$0xf]
  %v166 = vld [vmem:[%s3 + $0xec] sm:$0xf]
  %v167 = vld [vmem:[%s3 + $0xf0] sm:$0xf]
  %v168 = vld [vmem:[%s3 + $0xf4] sm:$0xf]
  %v169 = vld [vmem:[%s3 + $0xf8] sm:$0xf]
  %v170 = vld [vmem:[%s3 + $0xfc] sm:$0xf]
  %v171 = vld [vmem:[%s3 + $0x100] sm:$0xf]
  %v172 = vld [vmem:[%s3 + $0x104] sm:$0xf]
  %v173 = vld [vmem:[%s3 + $0x108] sm:$0xf]
  %v174 = vld [vmem:[%s3 + $0x10c] sm:$0xf]
  %v175 = vld [vmem:[%s3 + $0x110] sm:$0xf]
  %v176 = vld [vmem:[%s3 + $0x114] sm:$0xf]
  %v177 = vld [vmem:[%s3 + $0x118] sm:$0xf]
  %v178 = vld [vmem:[%s3 + $0x11c] sm:$0xf]
  %v182 = vunpack.c.l.b16 %v104
  %v183 = vunpack.c.h.b16 %v104
  %v184 = vunpack.c.l.b16 %v105
  %v185 = vunpack.c.h.b16 %v105
  %v186 = vunpack.c.l.b16 %v106
  %v187 = vpack.c.b16 %v182, %v182
  %v188 = vpack.c.b16 %v183, %v183
  %v189 = vpack.c.b16 %v184, %v184
  %v190 = vpack.c.b16 %v185, %v185
  %v191 = vpack.c.b16 %v186, %v186
  %v268 = vunpack.c.l.b16 %v107
  %v269 = vunpack.c.l.b16 %v108
  %v270 = vunpack.c.l.b16 %v109
  %v271 = vunpack.c.l.b16 %v110
  %v272 = vunpack.c.l.b16 %v111
  %v273 = vunpack.c.l.b16 %v112
  %v274 = vunpack.c.l.b16 %v113
  %v275 = vunpack.c.l.b16 %v114
  %v276 = vunpack.c.l.b16 %v115
  %v277 = vunpack.c.l.b16 %v116
  %v278 = vunpack.c.l.b16 %v117
  %v279 = vunpack.c.l.b16 %v118
  %v280 = vunpack.c.l.b16 %v119
  %v281 = vunpack.c.l.b16 %v120
  %v282 = vunpack.c.l.b16 %v121
  %v283 = vunpack.c.l.b16 %v122
  %v284 = vunpack.c.l.b16 %v123
  %v285 = vunpack.c.l.b16 %v124
  %v286 = vunpack.c.l.b16 %v125
  %v287 = vunpack.c.l.b16 %v126
  %v288 = vunpack.c.l.b16 %v127
  %v289 = vunpack.c.l.b16 %v128
  %v290 = vunpack.c.l.b16 %v129
  %v291 = vunpack.c.l.b16 %v130
  %v292 = vunpack.c.l.b16 %v131
  %v293 = vunpack.c.l.b16 %v132
  %v294 = vunpack.c.l.b16 %v133
  %v295 = vunpack.c.l.b16 %v134
  %v296 = vunpack.c.l.b16 %v135
  %v297 = vunpack.c.l.b16 %v136
  %v298 = vunpack.c.l.b16 %v137
  %v299 = vunpack.c.l.b16 %v138
  %v300 = vunpack.c.l.b16 %v139
  %v301 = vunpack.c.l.b16 %v140
  %v302 = vunpack.c.l.b16 %v141
  %v303 = vunpack.c.l.b16 %v142
  %v304 = vunpack.c.l.b16 %v143
  %v305 = vunpack.c.l.b16 %v144
  %v306 = vunpack.c.l.b16 %v145
  %v307 = vunpack.c.l.b16 %v146
  %v308 = vunpack.c.l.b16 %v147
  %v309 = vunpack.c.l.b16 %v148
  %v310 = vunpack.c.l.b16 %v149
  %v311 = vunpack.c.l.b16 %v150
  %v312 = vunpack.c.l.b16 %v151
  %v313 = vunpack.c.l.b16 %v152
  %v314 = vunpack.c.l.b16 %v153
  %v315 = vunpack.c.l.b16 %v154
  %v316 = vunpack.c.l.b16 %v155
  %v317 = vunpack.c.l.b16 %v156
  %v318 = vunpack.c.l.b16 %v157
  %v319 = vunpack.c.l.b16 %v158
  %v320 = vunpack.c.l.b16 %v159
  %v321 = vunpack.c.l.b16 %v160
  %v322 = vunpack.c.l.b16 %v161
  %v323 = vunpack.c.l.b16 %v162
  %v324 = vunpack.c.l.b16 %v163
  %v325 = vunpack.c.l.b16 %v164
  %v326 = vunpack.c.l.b16 %v165
  %v327 = vunpack.c.l.b16 %v166
  %v328 = vunpack.c.l.b16 %v167
  %v329 = vunpack.c.l.b16 %v168
  %v330 = vunpack.c.l.b16 %v169
  %v331 = vunpack.c.l.b16 %v170
  %v332 = vunpack.c.l.b16 %v171
  %v333 = vunpack.c.l.b16 %v172
  %v334 = vunpack.c.l.b16 %v173
  %v335 = vunpack.c.l.b16 %v174
  %v336 = vunpack.c.l.b16 %v175
  %v337 = vunpack.c.l.b16 %v176
  %v338 = vunpack.c.l.b16 %v177
  %v339 = vunpack.c.l.b16 %v178
  %v340 = vpack.c.b16 %v269, %v268
  %v341 = vpack.c.b16 %v271, %v270
  %v342 = vpack.c.b16 %v273, %v272
  %v343 = vpack.c.b16 %v275, %v274
  %v344 = vpack.c.b16 %v277, %v276
  %v345 = vpack.c.b16 %v279, %v278
  %v346 = vpack.c.b16 %v281, %v280
  %v347 = vpack.c.b16 %v283, %v282
  %v348 = vpack.c.b16 %v285, %v284
  %v349 = vpack.c.b16 %v287, %v286
  %v350 = vpack.c.b16 %v289, %v288
  %v351 = vpack.c.b16 %v291, %v290
  %v352 = vpack.c.b16 %v293, %v292
  %v353 = vpack.c.b16 %v295, %v294
  %v354 = vpack.c.b16 %v297, %v296
  %v355 = vpack.c.b16 %v299, %v298
  %v356 = vpack.c.b16 %v301, %v300
  %v357 = vpack.c.b16 %v303, %v302
  %v358 = vpack.c.b16 %v305, %v304
  %v359 = vpack.c.b16 %v307, %v306
  %v360 = vpack.c.b16 %v309, %v308
  %v361 = vpack.c.b16 %v311, %v310
  %v362 = vpack.c.b16 %v313, %v312
  %v363 = vpack.c.b16 %v315, %v314
  %v364 = vpack.c.b16 %v317, %v316
  %v365 = vpack.c.b16 %v319, %v318
  %v366 = vpack.c.b16 %v321, %v320
  %v367 = vpack.c.b16 %v323, %v322
  %v368 = vpack.c.b16 %v325, %v324
  %v369 = vpack.c.b16 %v327, %v326
  %v370 = vpack.c.b16 %v329, %v328
  %v371 = vpack.c.b16 %v331, %v330
  %v372 = vpack.c.b16 %v333, %v332
  %v373 = vpack.c.b16 %v335, %v334
  %v374 = vpack.c.b16 %v337, %v336
  %v375 = vpack.c.b16 %v339, %v338
  %vm412 = vcmask 523264
  %v414 = vsel %vm412, %v191, 0
  %416 = vmatprep.subr.bf16.mxu0 0
  %417 = vmatpush1.bf16.msra.mxu0 %v340
  %418 = vmatprep.subr.bf16.mxu0 0
  %419 = vmatpush1.bf16.msra.mxu0 %v341
  %420 = vmatprep.subr.bf16.mxu0 0
  %421 = vmatpush1.bf16.msra.mxu0 %v342
  %422 = vmatprep.subr.bf16.mxu0 0
  %423 = vmatpush1.bf16.msra.mxu0 %v343
  %424 = vmatprep.subr.bf16.mxu0 0
  %425 = vmatpush1.bf16.msra.mxu0 %v344
  %426 = vmatprep.subr.bf16.mxu0 0
  %427 = vmatpush1.bf16.msra.mxu0 %v345
  %428 = vmatprep.subr.bf16.mxu0 0
  %429 = vmatpush1.bf16.msra.mxu0 %v346
  %430 = vmatprep.subr.bf16.mxu0 0
  %431 = vmatpush1.bf16.msra.mxu0 %v347
  %432 = vmatprep.subr.bf16.mxu0 0
  %433 = vmatpush1.bf16.msra.mxu0 %v348
  %434 = vmatprep.subr.bf16.mxu0 0
  %435 = vmatpush1.bf16.msra.mxu0 %v349
  %436 = vmatprep.subr.bf16.mxu0 0
  %437 = vmatpush1.bf16.msra.mxu0 %v350
  %438 = vmatprep.subr.bf16.mxu0 0
  %439 = vmatpush1.bf16.msra.mxu0 %v351
  %440 = vmatprep.subr.bf16.mxu0 0
  %441 = vmatpush1.bf16.msra.mxu0 %v352
  %442 = vmatprep.subr.bf16.mxu0 0
  %443 = vmatpush1.bf16.msra.mxu0 %v353
  %444 = vmatprep.subr.bf16.mxu0 0
  %445 = vmatpush1.bf16.msra.mxu0 %v354
  %446 = vmatprep.subr.bf16.mxu0 0
  %447 = vmatpush1.bf16.msra.mxu0 %v355
  %448 = vmatprep.mubr.bf16.mxu0 %v188
  %449 = vmatmul.mubr.bf16.gmra.mrb[0].mxu0 %v187
  %v450 = vpop.f32.mrb[0].mxu0
  %v451 = vadd.f32 0.0, %v450
  %v452 = vpop.f32.mrb[0].mxu0
  %v453 = vpop.f32.mrb[0].mxu0
  %v454 = vpop.f32.mrb[0].mxu0
  %455 = vdwg.mxu0
  %456 = vmatprep.subr.bf16.mxu0 0
  %457 = vmatpush1.bf16.msra.mxu0 %v356
  %458 = vmatprep.subr.bf16.mxu0 0
  %459 = vmatpush1.bf16.msra.mxu0 %v357
  %460 = vmatprep.subr.bf16.mxu0 0
  %461 = vmatpush1.bf16.msra.mxu0 %v358
  %462 = vmatprep.subr.bf16.mxu0 0
  %463 = vmatpush1.bf16.msra.mxu0 %v359
  %464 = vmatprep.subr.bf16.mxu0 0
  %465 = vmatpush1.bf16.msra.mxu0 %v360
  %466 = vmatprep.subr.bf16.mxu0 0
  %467 = vmatpush1.bf16.msra.mxu0 %v361
  %468 = vmatprep.subr.bf16.mxu0 0
  %469 = vmatpush1.bf16.msra.mxu0 %v362
  %470 = vmatprep.subr.bf16.mxu0 0
  %471 = vmatpush1.bf16.msra.mxu0 %v363
  %472 = vmatprep.subr.bf16.mxu0 0
  %473 = vmatpush1.bf16.msra.mxu0 %v364
  %474 = vmatprep.subr.bf16.mxu0 0
  %475 = vmatpush1.bf16.msra.mxu0 %v365
  %476 = vmatprep.subr.bf16.mxu0 0
  %477 = vmatpush1.bf16.msra.mxu0 %v366
  %478 = vmatprep.subr.bf16.mxu0 0
  %479 = vmatpush1.bf16.msra.mxu0 %v367
  %480 = vmatprep.subr.bf16.mxu0 0
  %481 = vmatpush1.bf16.msra.mxu0 %v368
  %482 = vmatprep.subr.bf16.mxu0 0
  %483 = vmatpush1.bf16.msra.mxu0 %v369
  %484 = vmatprep.subr.bf16.mxu0 0
  %485 = vmatpush1.bf16.msra.mxu0 %v370
  %486 = vmatprep.subr.bf16.mxu0 0
  %487 = vmatpush1.bf16.msra.mxu0 %v371
  %488 = vmatprep.mubr.bf16.mxu0 %v190
  %489 = vmatmul.mubr.bf16.gmra.mrb[0].mxu0 %v189
  %v490 = vpop.f32.mrb[0].mxu0
  %v491 = vadd.f32 %v451, %v490
  %v492 = vpop.f32.mrb[0].mxu0
  %v493 = vpop.f32.mrb[0].mxu0
  %v494 = vpop.f32.mrb[0].mxu0
  %495 = vdwg.mxu0
  %496 = vmatprep.subr.bf16.mxu0 0
  %497 = vmatpush1.bf16.msra.mxu0 %v372
  %498 = vmatprep.subr.bf16.mxu0 0
  %499 = vmatpush1.bf16.msra.mxu0 %v373
  %500 = vmatprep.subr.bf16.mxu0 0
  %501 = vmatpush1.bf16.msra.mxu0 %v374
  %502 = vmatprep.subr.bf16.mxu0 0
  %503 = vmatpush1.bf16.msra.mxu0 %v375
  %504 = vmatprep.subr.bf16.mxu0 0
  %505 = vmatpush1.bf16.msra.mxu0 0
  %506 = vmatprep.subr.bf16.mxu0 0
  %507 = vmatpush1.bf16.msra.mxu0 0
  %508 = vmatprep.subr.bf16.mxu0 0
  %509 = vmatpush1.bf16.msra.mxu0 0
  %510 = vmatprep.subr.bf16.mxu0 0
  %511 = vmatpush1.bf16.msra.mxu0 0
  %512 = vmatprep.subr.bf16.mxu0 0
  %513 = vmatpush1.bf16.msra.mxu0 0
  %514 = vmatprep.subr.bf16.mxu0 0
  %515 = vmatpush1.bf16.msra.mxu0 0
  %516 = vmatprep.subr.bf16.mxu0 0
  %517 = vmatpush1.bf16.msra.mxu0 0
  %518 = vmatprep.subr.bf16.mxu0 0
  %519 = vmatpush1.bf16.msra.mxu0 0
  %520 = vmatprep.subr.bf16.mxu0 0
  %521 = vmatpush1.bf16.msra.mxu0 0
  %522 = vmatprep.subr.bf16.mxu0 0
  %523 = vmatpush1.bf16.msra.mxu0 0
  %524 = vmatprep.subr.bf16.mxu0 0
  %525 = vmatpush1.bf16.msra.mxu0 0
  %526 = vmatprep.subr.bf16.mxu0 0
  %527 = vmatpush1.bf16.msra.mxu0 0
  %528 = vmatprep.mubr.bf16.mxu0 0
  %529 = vmatmul.mubr.bf16.gmra.mrb[0].mxu0 %v414
  %v530 = vpop.f32.mrb[0].mxu0
  %v531 = vadd.f32 %v491, %v530
  %v532 = vpop.f32.mrb[0].mxu0
  %v533 = vpop.f32.mrb[0].mxu0
  %v534 = vpop.f32.mrb[0].mxu0
  %535 = vdwg.mxu0
  %v539 = vunpack.c.l.b16 %v29
  %v540 = vunpack.c.h.b16 %v29
  %v541 = vunpack.c.l.b16 %v30
  %v542 = vunpack.c.h.b16 %v30
  %v543 = vunpack.c.l.b16 %v31
  %v544 = vpack.c.b16 %v539, %v539
  %v545 = vpack.c.b16 %v540, %v540
  %v546 = vpack.c.b16 %v541, %v541
  %v547 = vpack.c.b16 %v542, %v542
  %v548 = vpack.c.b16 %v543, %v543
  %v625 = vunpack.c.l.b16 %v32
  %v626 = vunpack.c.l.b16 %v33
  %v627 = vunpack.c.l.b16 %v34
  %v628 = vunpack.c.l.b16 %v35
  %v629 = vunpack.c.l.b16 %v36
  %v630 = vunpack.c.l.b16 %v37
  %v631 = vunpack.c.l.b16 %v38
  %v632 = vunpack.c.l.b16 %v39
  %v633 = vunpack.c.l.b16 %v40
  %v634 = vunpack.c.l.b16 %v41
  %v635 = vunpack.c.l.b16 %v42
  %v636 = vunpack.c.l.b16 %v43
  %v637 = vunpack.c.l.b16 %v44
  %v638 = vunpack.c.l.b16 %v45
  %v639 = vunpack.c.l.b16 %v46
  %v640 = vunpack.c.l.b16 %v47
  %v641 = vunpack.c.l.b16 %v48
  %v642 = vunpack.c.l.b16 %v49
  %v643 = vunpack.c.l.b16 %v50
  %v644 = vunpack.c.l.b16 %v51
  %v645 = vunpack.c.l.b16 %v52
  %v646 = vunpack.c.l.b16 %v53
  %v647 = vunpack.c.l.b16 %v54
  %v648 = vunpack.c.l.b16 %v55
  %v649 = vunpack.c.l.b16 %v56
  %v650 = vunpack.c.l.b16 %v57
  %v651 = vunpack.c.l.b16 %v58
  %v652 = vunpack.c.l.b16 %v59
  %v653 = vunpack.c.l.b16 %v60
  %v654 = vunpack.c.l.b16 %v61
  %v655 = vunpack.c.l.b16 %v62
  %v656 = vunpack.c.l.b16 %v63
  %v657 = vunpack.c.l.b16 %v64
  %v658 = vunpack.c.l.b16 %v65
  %v659 = vunpack.c.l.b16 %v66
  %v660 = vunpack.c.l.b16 %v67
  %v661 = vunpack.c.l.b16 %v68
  %v662 = vunpack.c.l.b16 %v69
  %v663 = vunpack.c.l.b16 %v70
  %v664 = vunpack.c.l.b16 %v71
  %v665 = vunpack.c.l.b16 %v72
  %v666 = vunpack.c.l.b16 %v73
  %v667 = vunpack.c.l.b16 %v74
  %v668 = vunpack.c.l.b16 %v75
  %v669 = vunpack.c.l.b16 %v76
  %v670 = vunpack.c.l.b16 %v77
  %v671 = vunpack.c.l.b16 %v78
  %v672 = vunpack.c.l.b16 %v79
  %v673 = vunpack.c.l.b16 %v80
  %v674 = vunpack.c.l.b16 %v81
  %v675 = vunpack.c.l.b16 %v82
  %v676 = vunpack.c.l.b16 %v83
  %v677 = vunpack.c.l.b16 %v84
  %v678 = vunpack.c.l.b16 %v85
  %v679 = vunpack.c.l.b16 %v86
  %v680 = vunpack.c.l.b16 %v87
  %v681 = vunpack.c.l.b16 %v88
  %v682 = vunpack.c.l.b16 %v89
  %v683 = vunpack.c.l.b16 %v90
  %v684 = vunpack.c.l.b16 %v91
  %v685 = vunpack.c.l.b16 %v92
  %v686 = vunpack.c.l.b16 %v93
  %v687 = vunpack.c.l.b16 %v94
  %v688 = vunpack.c.l.b16 %v95
  %v689 = vunpack.c.l.b16 %v96
  %v690 = vunpack.c.l.b16 %v97
  %v691 = vunpack.c.l.b16 %v98
  %v692 = vunpack.c.l.b16 %v99
  %v693 = vunpack.c.l.b16 %v100
  %v694 = vunpack.c.l.b16 %v101
  %v695 = vunpack.c.l.b16 %v102
  %v696 = vunpack.c.l.b16 %v103
  %v697 = vpack.c.b16 %v626, %v625
  %v698 = vpack.c.b16 %v628, %v627
  %v699 = vpack.c.b16 %v630, %v629
  %v700 = vpack.c.b16 %v632, %v631
  %v701 = vpack.c.b16 %v634, %v633
  %v702 = vpack.c.b16 %v636, %v635
  %v703 = vpack.c.b16 %v638, %v637
  %v704 = vpack.c.b16 %v640, %v639
  %v705 = vpack.c.b16 %v642, %v641
  %v706 = vpack.c.b16 %v644, %v643
  %v707 = vpack.c.b16 %v646, %v645
  %v708 = vpack.c.b16 %v648, %v647
  %v709 = vpack.c.b16 %v650, %v649
  %v710 = vpack.c.b16 %v652, %v651
  %v711 = vpack.c.b16 %v654, %v653
  %v712 = vpack.c.b16 %v656, %v655
  %v713 = vpack.c.b16 %v658, %v657
  %v714 = vpack.c.b16 %v660, %v659
  %v715 = vpack.c.b16 %v662, %v661
  %v716 = vpack.c.b16 %v664, %v663
  %v717 = vpack.c.b16 %v666, %v665
  %v718 = vpack.c.b16 %v668, %v667
  %v719 = vpack.c.b16 %v670, %v669
  %v720 = vpack.c.b16 %v672, %v671
  %v721 = vpack.c.b16 %v674, %v673
  %v722 = vpack.c.b16 %v676, %v675
  %v723 = vpack.c.b16 %v678, %v677
  %v724 = vpack.c.b16 %v680, %v679
  %v725 = vpack.c.b16 %v682, %v681
  %v726 = vpack.c.b16 %v684, %v683
  %v727 = vpack.c.b16 %v686, %v685
  %v728 = vpack.c.b16 %v688, %v687
  %v729 = vpack.c.b16 %v690, %v689
  %v730 = vpack.c.b16 %v692, %v691
  %v731 = vpack.c.b16 %v694, %v693
  %v732 = vpack.c.b16 %v696, %v695
  %v770 = vsel %vm412, %v548, 0
  %772 = vmatprep.subr.bf16.mxu0 0
  %773 = vmatpush1.bf16.msra.mxu0 %v697
  %774 = vmatprep.subr.bf16.mxu0 0
  %775 = vmatpush1.bf16.msra.mxu0 %v698
  %776 = vmatprep.subr.bf16.mxu0 0
  %777 = vmatpush1.bf16.msra.mxu0 %v699
  %778 = vmatprep.subr.bf16.mxu0 0
  %779 = vmatpush1.bf16.msra.mxu0 %v700
  %780 = vmatprep.subr.bf16.mxu0 0
  %781 = vmatpush1.bf16.msra.mxu0 %v701
  %782 = vmatprep.subr.bf16.mxu0 0
  %783 = vmatpush1.bf16.msra.mxu0 %v702
  %784 = vmatprep.subr.bf16.mxu0 0
  %785 = vmatpush1.bf16.msra.mxu0 %v703
  %786 = vmatprep.subr.bf16.mxu0 0
  %787 = vmatpush1.bf16.msra.mxu0 %v704
  %788 = vmatprep.subr.bf16.mxu0 0
  %789 = vmatpush1.bf16.msra.mxu0 %v705
  %790 = vmatprep.subr.bf16.mxu0 0
  %791 = vmatpush1.bf16.msra.mxu0 %v706
  %792 = vmatprep.subr.bf16.mxu0 0
  %793 = vmatpush1.bf16.msra.mxu0 %v707
  %794 = vmatprep.subr.bf16.mxu0 0
  %795 = vmatpush1.bf16.msra.mxu0 %v708
  %796 = vmatprep.subr.bf16.mxu0 0
  %797 = vmatpush1.bf16.msra.mxu0 %v709
  %798 = vmatprep.subr.bf16.mxu0 0
  %799 = vmatpush1.bf16.msra.mxu0 %v710
  %800 = vmatprep.subr.bf16.mxu0 0
  %801 = vmatpush1.bf16.msra.mxu0 %v711
  %802 = vmatprep.subr.bf16.mxu0 0
  %803 = vmatpush1.bf16.msra.mxu0 %v712
  %804 = vmatprep.mubr.bf16.mxu0 %v545
  %805 = vmatmul.mubr.bf16.gmra.mrb[0].mxu0 %v544
  %v806 = vpop.f32.mrb[0].mxu0
  %v807 = vadd.f32 %v531, %v806
  %v808 = vpop.f32.mrb[0].mxu0
  %v809 = vpop.f32.mrb[0].mxu0
  %v810 = vpop.f32.mrb[0].mxu0
  %811 = vdwg.mxu0
  %812 = vmatprep.subr.bf16.mxu0 0
  %813 = vmatpush1.bf16.msra.mxu0 %v713
  %814 = vmatprep.subr.bf16.mxu0 0
  %815 = vmatpush1.bf16.msra.mxu0 %v714
  %816 = vmatprep.subr.bf16.mxu0 0
  %817 = vmatpush1.bf16.msra.mxu0 %v715
  %818 = vmatprep.subr.bf16.mxu0 0
  %819 = vmatpush1.bf16.msra.mxu0 %v716
  %820 = vmatprep.subr.bf16.mxu0 0
  %821 = vmatpush1.bf16.msra.mxu0 %v717
  %822 = vmatprep.subr.bf16.mxu0 0
  %823 = vmatpush1.bf16.msra.mxu0 %v718
  %824 = vmatprep.subr.bf16.mxu0 0
  %825 = vmatpush1.bf16.msra.mxu0 %v719
  %826 = vmatprep.subr.bf16.mxu0 0
  %827 = vmatpush1.bf16.msra.mxu0 %v720
  %828 = vmatprep.subr.bf16.mxu0 0
  %829 = vmatpush1.bf16.msra.mxu0 %v721
  %830 = vmatprep.subr.bf16.mxu0 0
  %831 = vmatpush1.bf16.msra.mxu0 %v722
  %832 = vmatprep.subr.bf16.mxu0 0
  %833 = vmatpush1.bf16.msra.mxu0 %v723
  %834 = vmatprep.subr.bf16.mxu0 0
  %835 = vmatpush1.bf16.msra.mxu0 %v724
  %836 = vmatprep.subr.bf16.mxu0 0
  %837 = vmatpush1.bf16.msra.mxu0 %v725
  %838 = vmatprep.subr.bf16.mxu0 0
  %839 = vmatpush1.bf16.msra.mxu0 %v726
  %840 = vmatprep.subr.bf16.mxu0 0
  %841 = vmatpush1.bf16.msra.mxu0 %v727
  %842 = vmatprep.subr.bf16.mxu0 0
  %843 = vmatpush1.bf16.msra.mxu0 %v728
  %844 = vmatprep.mubr.bf16.mxu0 %v547
  %845 = vmatmul.mubr.bf16.gmra.mrb[0].mxu0 %v546
  %v846 = vpop.f32.mrb[0].mxu0
  %v847 = vadd.f32 %v807, %v846
  %v848 = vpop.f32.mrb[0].mxu0
  %v849 = vpop.f32.mrb[0].mxu0
  %v850 = vpop.f32.mrb[0].mxu0
  %851 = vdwg.mxu0
  %852 = vmatprep.subr.bf16.mxu0 0
  %853 = vmatpush1.bf16.msra.mxu0 %v729
  %854 = vmatprep.subr.bf16.mxu0 0
  %855 = vmatpush1.bf16.msra.mxu0 %v730
  %856 = vmatprep.subr.bf16.mxu0 0
  %857 = vmatpush1.bf16.msra.mxu0 %v731
  %858 = vmatprep.subr.bf16.mxu0 0
  %859 = vmatpush1.bf16.msra.mxu0 %v732
  %860 = vmatprep.subr.bf16.mxu0 0
  %861 = vmatpush1.bf16.msra.mxu0 0
  %862 = vmatprep.subr.bf16.mxu0 0
  %863 = vmatpush1.bf16.msra.mxu0 0
  %864 = vmatprep.subr.bf16.mxu0 0
  %865 = vmatpush1.bf16.msra.mxu0 0
  %866 = vmatprep.subr.bf16.mxu0 0
  %867 = vmatpush1.bf16.msra.mxu0 0
  %868 = vmatprep.subr.bf16.mxu0 0
  %869 = vmatpush1.bf16.msra.mxu0 0
  %870 = vmatprep.subr.bf16.mxu0 0
  %871 = vmatpush1.bf16.msra.mxu0 0
  %872 = vmatprep.subr.bf16.mxu0 0
  %873 = vmatpush1.bf16.msra.mxu0 0
  %874 = vmatprep.subr.bf16.mxu0 0
  %875 = vmatpush1.bf16.msra.mxu0 0
  %876 = vmatprep.subr.bf16.mxu0 0
  %877 = vmatpush1.bf16.msra.mxu0 0
  %878 = vmatprep.subr.bf16.mxu0 0
  %879 = vmatpush1.bf16.msra.mxu0 0
  %880 = vmatprep.subr.bf16.mxu0 0
  %881 = vmatpush1.bf16.msra.mxu0 0
  %882 = vmatprep.subr.bf16.mxu0 0
  %883 = vmatpush1.bf16.msra.mxu0 0
  %884 = vmatprep.mubr.bf16.mxu0 0
  %885 = vmatmul.mubr.bf16.gmra.mrb[0].mxu0 %v770
  %v886 = vpop.f32.mrb[0].mxu0
  %v887 = vadd.f32 %v847, %v886
  %v888 = vpop.f32.mrb[0].mxu0
  %v889 = vpop.f32.mrb[0].mxu0
  %v890 = vpop.f32.mrb[0].mxu0
  %891 = vdwg.mxu0
  %v892 = vld [vmem:[%s4] sm:$0x1]
  %v894 = vlaneseq
  %v895 = vshrl.u32 %v894, 7
  %v896 = vsub.s32 0, %v895
  %v897 = vrot.slane %v892, %v896
  %v899 = vadd.f32 %v887, %v897
  %v900 = vmax.f32 %v899, 0.0
  %v901 = vpack.c.bf16 %v900, %v900
  %vm902 = vcmask 257024
  %903 = vst.msk [vmem:[%s7] sm:$0xf] %vm902, %v901
  %v904 = vld [vmem:[%s5] sm:$0xff]
  %v905 = vld [vmem:[%s5 + $0x8] sm:$0xff]
  %v906 = vld [vmem:[%s5 + $0x10] sm:$0xff]
  %v907 = vld [vmem:[%s5 + $0x18] sm:$0xff]
  %v908 = vld [vmem:[%s6] sm:$0x1]
  %v910 = vlaneseq
  %v911 = vshrl.u32 %v910, 7
  %v912 = vsub.s32 0, %v911
  %v913 = vrot.slane %v908, %v912
  %vm915 = vcmask 261120
  %v917 = vsel %vm915, %v900, 0
  %919 = vmatprep.subr.mxu0 0.0
  %920 = vmatpush1.msra.mxu0 %v904
  %921 = vmatprep.subr.mxu0 0.0
  %922 = vmatpush1.msra.mxu0 %v905
  %923 = vmatprep.subr.mxu0 0.0
  %924 = vmatpush1.msra.mxu0 %v906
  %925 = vmatprep.subr.mxu0 0.0
  %926 = vmatpush1.msra.mxu0 %v907
  %927 = vmatprep.subr.mxu0 0.0
  %928 = vmatpush1.msra.mxu0 0.0
  %929 = vmatprep.subr.mxu0 0.0
  %930 = vmatpush1.msra.mxu0 0.0
  %931 = vmatprep.subr.mxu0 0.0
  %932 = vmatpush1.msra.mxu0 0.0
  %933 = vmatprep.subr.mxu0 0.0
  %934 = vmatpush1.msra.mxu0 0.0
  %935 = vmatprep.subr.mxu0 0.0
  %936 = vmatpush1.msra.mxu0 0.0
  %937 = vmatprep.subr.mxu0 0.0
  %938 = vmatpush1.msra.mxu0 0.0
  %939 = vmatprep.subr.mxu0 0.0
  %940 = vmatpush1.msra.mxu0 0.0
  %941 = vmatprep.subr.mxu0 0.0
  %942 = vmatpush1.msra.mxu0 0.0
  %943 = vmatprep.subr.mxu0 0.0
  %944 = vmatpush1.msra.mxu0 0.0
  %945 = vmatprep.subr.mxu0 0.0
  %946 = vmatpush1.msra.mxu0 0.0
  %947 = vmatprep.subr.mxu0 0.0
  %948 = vmatpush1.msra.mxu0 0.0
  %949 = vmatprep.subr.mxu0 0.0
  %950 = vmatpush1.msra.mxu0 0.0
  %951 = vmatprep.subr.mxu0 0.0
  %952 = vmatpush1.msra.mxu0 0.0
  %953 = vmatprep.subr.mxu0 0.0
  %954 = vmatpush1.msra.mxu0 0.0
  %955 = vmatprep.subr.mxu0 0.0
  %956 = vmatpush1.msra.mxu0 0.0
  %957 = vmatprep.subr.mxu0 0.0
  %958 = vmatpush1.msra.mxu0 0.0
  %959 = vmatprep.subr.mxu0 0.0
  %960 = vmatpush1.msra.mxu0 0.0
  %961 = vmatprep.subr.mxu0 0.0
  %962 = vmatpush1.msra.mxu0 0.0
  %963 = vmatprep.subr.mxu0 0.0
  %964 = vmatpush1.msra.mxu0 0.0
  %965 = vmatprep.subr.mxu0 0.0
  %966 = vmatpush1.msra.mxu0 0.0
  %967 = vmatprep.subr.mxu0 0.0
  %968 = vmatpush1.msra.mxu0 0.0
  %969 = vmatprep.subr.mxu0 0.0
  %970 = vmatpush1.msra.mxu0 0.0
  %971 = vmatprep.subr.mxu0 0.0
  %972 = vmatpush1.msra.mxu0 0.0
  %973 = vmatprep.subr.mxu0 0.0
  %974 = vmatpush1.msra.mxu0 0.0
  %975 = vmatprep.subr.mxu0 0.0
  %976 = vmatpush1.msra.mxu0 0.0
  %977 = vmatprep.subr.mxu0 0.0
  %978 = vmatpush1.msra.mxu0 0.0
  %979 = vmatprep.subr.mxu0 0.0
  %980 = vmatpush1.msra.mxu0 0.0
  %981 = vmatprep.subr.mxu0 0.0
  %982 = vmatpush1.msra.mxu0 0.0
  %983 = vmatprep.mubr.f32.mxu0 0.0
  %984 = vmatmul.mubr.f32.gmra.mrb[0].mxu0 %v917
  %v985 = vpop.f32.mrb[0].mxu0
  %v986 = vadd.f32 %v913, %v985
  %v987 = vpop.f32.mrb[0].mxu0
  %988 = vdwg.mxu0
  %v989 = vtanh.pop %v986
  %v990 = vmul.f32 %v989, 256.0
  %vm991 = vcmask 15360
  %992 = vst.msk [vmem:[%s8] sm:$0xff] %vm991, %v990
  // Predicated region
  $region30: #{evflownet_forward.20} parent=0 // pred_check
    _
  $region31: #{evflownet_forward.20} parent=0 // pred_check_branch
    %994 = sbr.rel (0) target = $region33
  $region32: #{evflownet_forward.20} parent=0 // pred_region
    _
  $region33: #{evflownet_forward.20} parent=0 // pred_fallthru
    _
  // Predicated region
  $region34: #{evflownet_forward.20} parent=0 // pred_check
    _
  $region35: #{evflownet_forward.20} parent=0 // pred_check_branch
    %996 = sbr.rel (0) target = $region37
  $region36: #{evflownet_forward.20} parent=0 // pred_region
    _
  $region37: #{evflownet_forward.20} parent=0 // pred_fallthru
    _
  // Predicated region
  $region38: #{evflownet_forward.20} parent=0 // pred_check
    _
  $region39: #{evflownet_forward.20} parent=0 // pred_check_branch
    %998 = sbr.rel (0) target = $region41
  $region40: #{evflownet_forward.20} parent=0 // pred_region
    _
  $region41: #{evflownet_forward.20} parent=0 // pred_fallthru
    _
  // Predicated region
  $region42: #{evflownet_forward.20} parent=0 // pred_check
    _
  $region43: #{evflownet_forward.20} parent=0 // pred_check_branch
    %1000 = sbr.rel (0) target = $region45
  $region44: #{evflownet_forward.20} parent=0 // pred_region
    _
  $region45: #{evflownet_forward.20} parent=0 // pred_fallthru
    _

// kernel: evflownet_forward.21
$region0: #{evflownet_forward.21}
  #allocation0 [shape = 'u32[]', space=smem, size = 0x4, offset = 0x4, fixed_abs, tag = 'smem constant byte address 0x4 - core index']
  #allocation1 [shape = 'u32[144,128]{1,0:T(1,128)}', space=vmem, size = 0x12000, scoped, tag = 'internal scratch']
  %s0 = inlined_call_operand.vmem [shape: bf16[32,288], index: 0, kind: input, shape index: {}]
  %s1 = inlined_call_operand.vmem [shape: bf16[32,18], index: 1, kind: input, shape index: {}]
  %s2 = inlined_call_operand.vmem [shape: bf16[32,288], index: 2, kind: input, shape index: {}]
  %s3 = inlined_call_operand.vmem [shape: bf16[288,16], index: 3, kind: input, shape index: {}]
  %s4 = inlined_call_operand.vmem [shape: bf16[18,16], index: 4, kind: input, shape index: {}]
  %s5 = inlined_call_operand.vmem [shape: bf16[288,16], index: 5, kind: input, shape index: {}]
  %s6 = inlined_call_operand.vmem [shape: f32[1,16], index: 6, kind: input, shape index: {}]
  %s7 = inlined_call_operand.vmem [shape: f32[16,2], index: 7, kind: input, shape index: {}]
  %s8 = inlined_call_operand.vmem [shape: f32[1,2], index: 8, kind: input, shape index: {}]
  %s9 = inlined_call_operand.vmem [shape: bf16[32,16], index: 9, kind: output, shape index: {0}]
  %s10 = inlined_call_operand.vmem [shape: f32[32,2], index: 10, kind: output, shape index: {1}]
  %11 = xla_tuple %s9, %s10
  %s12 = sld [smem:[#allocation0]]
  $region54: #{evflownet_forward.21} parent=0
    _
  %s14 = ssub.s32 1, %s12
  %s15 = scalar_select 0, %s14, %s12
  // Predicated region
  $region2: #{evflownet_forward.21} parent=0 // pred_check
    _
  $region3: #{evflownet_forward.21} parent=0 // pred_check_branch
    %17 = sbr.rel (0) target = $region5
  $region4: #{evflownet_forward.21} parent=0 // pred_region
    _
  $region5: #{evflownet_forward.21} parent=0 // pred_fallthru
    _
  // Predicated region
  $region6: #{evflownet_forward.21} parent=0 // pred_check
    _
  $region7: #{evflownet_forward.21} parent=0 // pred_check_branch
    %19 = sbr.rel (0) target = $region9
  $region8: #{evflownet_forward.21} parent=0 // pred_region
    _
  $region9: #{evflownet_forward.21} parent=0 // pred_fallthru
    _
  // Predicated region
  $region10: #{evflownet_forward.21} parent=0 // pred_check
    _
  $region11: #{evflownet_forward.21} parent=0 // pred_check_branch
    %21 = sbr.rel (0) target = $region13
  $region12: #{evflownet_forward.21} parent=0 // pred_region
    _
  $region13: #{evflownet_forward.21} parent=0 // pred_fallthru
    _
  // Predicated region
  $region14: #{evflownet_forward.21} parent=0 // pred_check
    _
  $region15: #{evflownet_forward.21} parent=0 // pred_check_branch
    %23 = sbr.rel (0) target = $region17
  $region16: #{evflownet_forward.21} parent=0 // pred_region
    _
  $region17: #{evflownet_forward.21} parent=0 // pred_fallthru
    _
  // Predicated region
  $region18: #{evflownet_forward.21} parent=0 // pred_check
    _
  $region19: #{evflownet_forward.21} parent=0 // pred_check_branch
    %25 = sbr.rel (0) target = $region21
  $region20: #{evflownet_forward.21} parent=0 // pred_region
    _
  $region21: #{evflownet_forward.21} parent=0 // pred_fallthru
    _
  // Predicated region
  $region22: #{evflownet_forward.21} parent=0 // pred_check
    _
  $region23: #{evflownet_forward.21} parent=0 // pred_check_branch
    %27 = sbr.rel (0) target = $region25
  $region24: #{evflownet_forward.21} parent=0 // pred_region
    _
  $region25: #{evflownet_forward.21} parent=0 // pred_fallthru
    _
  // Predicated region
  $region26: #{evflownet_forward.21} parent=0 // pred_check
    _
  $region27: #{evflownet_forward.21} parent=0 // pred_check_branch
    %29 = sbr.rel (0) target = $region29
  $region28: #{evflownet_forward.21} parent=0 // pred_region
    _
  $region29: #{evflownet_forward.21} parent=0 // pred_fallthru
    _
  // Predicated region
  $region30: #{evflownet_forward.21} parent=0 // pred_check
    _
  $region31: #{evflownet_forward.21} parent=0 // pred_check_branch
    %31 = sbr.rel (0) target = $region33
  $region32: #{evflownet_forward.21} parent=0 // pred_region
    _
  $region33: #{evflownet_forward.21} parent=0 // pred_fallthru
    _
  // Predicated region
  $region34: #{evflownet_forward.21} parent=0 // pred_check
    _
  $region35: #{evflownet_forward.21} parent=0 // pred_check_branch
    %33 = sbr.rel (0) target = $region37
  $region36: #{evflownet_forward.21} parent=0 // pred_region
    _
  $region37: #{evflownet_forward.21} parent=0 // pred_fallthru
    _
  %v35 = vld [vmem:[%s0] sm:$0xff]
  %v36 = vld [vmem:[%s0 + $0x8] sm:$0xf]
  %v37 = vld [vmem:[%s0 + $0xc] sm:$0xff]
  %v38 = vld [vmem:[%s0 + $0x14] sm:$0xf]
  %v39 = vld [vmem:[%s0 + $0x18] sm:$0xff]
  %v40 = vld [vmem:[%s0 + $0x20] sm:$0xf]
  %v41 = vld [vmem:[%s0 + $0x24] sm:$0xff]
  %v42 = vld [vmem:[%s0 + $0x2c] sm:$0xf]
  %v43 = vld [vmem:[%s3] sm:$0xf]
  %v44 = vld [vmem:[%s3 + $0x4] sm:$0xf]
  %v45 = vld [vmem:[%s3 + $0x8] sm:$0xf]
  %v46 = vld [vmem:[%s3 + $0xc] sm:$0xf]
  %v47 = vld [vmem:[%s3 + $0x10] sm:$0xf]
  %v48 = vld [vmem:[%s3 + $0x14] sm:$0xf]
  %v49 = vld [vmem:[%s3 + $0x18] sm:$0xf]
  %v50 = vld [vmem:[%s3 + $0x1c] sm:$0xf]
  %v51 = vld [vmem:[%s3 + $0x20] sm:$0xf]
  %v52 = vld [vmem:[%s3 + $0x24] sm:$0xf]
  %v53 = vld [vmem:[%s3 + $0x28] sm:$0xf]
  %v54 = vld [vmem:[%s3 + $0x2c] sm:$0xf]
  %v55 = vld [vmem:[%s3 + $0x30] sm:$0xf]
  %v56 = vld [vmem:[%s3 + $0x34] sm:$0xf]
  %v57 = vld [vmem:[%s3 + $0x38] sm:$0xf]
  %v58 = vld [vmem:[%s3 + $0x3c] sm:$0xf]
  %v59 = vld [vmem:[%s3 + $0x40] sm:$0xf]
  %v60 = vld [vmem:[%s3 + $0x44] sm:$0xf]
  %v61 = vld [vmem:[%s3 + $0x48] sm:$0xf]
  %v62 = vld [vmem:[%s3 + $0x4c] sm:$0xf]
  %v63 = vld [vmem:[%s3 + $0x50] sm:$0xf]
  %v64 = vld [vmem:[%s3 + $0x54] sm:$0xf]
  %v65 = vld [vmem:[%s3 + $0x58] sm:$0xf]
  %v66 = vld [vmem:[%s3 + $0x5c] sm:$0xf]
  %v67 = vld [vmem:[%s3 + $0x60] sm:$0xf]
  %v68 = vld [vmem:[%s3 + $0x64] sm:$0xf]
  %v69 = vld [vmem:[%s3 + $0x68] sm:$0xf]
  %v70 = vld [vmem:[%s3 + $0x6c] sm:$0xf]
  %v71 = vld [vmem:[%s3 + $0x70] sm:$0xf]
  %v72 = vld [vmem:[%s3 + $0x74] sm:$0xf]
  %v73 = vld [vmem:[%s3 + $0x78] sm:$0xf]
  %v74 = vld [vmem:[%s3 + $0x7c] sm:$0xf]
  %v75 = vld [vmem:[%s3 + $0x80] sm:$0xf]
  %v76 = vld [vmem:[%s3 + $0x84] sm:$0xf]
  %v77 = vld [vmem:[%s3 + $0x88] sm:$0xf]
  %v78 = vld [vmem:[%s3 + $0x8c] sm:$0xf]
  %v79 = vld [vmem:[%s1] sm:$0xf]
  %v80 = vld [vmem:[%s1 + $0x4] sm:$0xf]
  %v81 = vld [vmem:[%s1 + $0x8] sm:$0xf]
  %v82 = vld [vmem:[%s1 + $0xc] sm:$0xf]
  %v83 = vld [vmem:[%s4] sm:$0xf]
  %v84 = vld [vmem:[%s4 + $0x4] sm:$0xf]
  %v85 = vld [vmem:[%s4 + $0x8] sm:$0x1]
  %v90 = vunpack.c.l.b16 %v79
  %v91 = vunpack.c.l.b16 %v80
  %v92 = vunpack.c.l.b16 %v81
  %v93 = vunpack.c.l.b16 %v82
  %v94 = vpack.c.b16 %v91, %v90
  %v95 = vpack.c.b16 %v93, %v92
  %v99 = vunpack.c.l.b16 %v83
  %v100 = vunpack.c.l.b16 %v84
  %v101 = vunpack.c.l.b16 %v85
  %v102 = vpack.c.b16 %v100, %v99
  %v103 = vpack.c.b16 %v101, %v101
  %vm105 = vcmask 146432
  %v107 = vsel %vm105, %v94, 0
  %v110 = vsel %vm105, %v95, 0
  %vm112 = vcmask 1040384
  %v114 = vsel %vm112, %v103, 0
  %116 = vmatprep.subr.bf16.mxu0 0
  %117 = vmatpush1.bf16.msra.mxu0 %v102
  %118 = vmatprep.subr.bf16.mxu0 0
  %119 = vmatpush1.bf16.msra.mxu0 %v114
  %120 = vmatprep.subr.bf16.mxu0 0
  %121 = vmatpush1.bf16.msra.mxu0 0
  %122 = vmatprep.subr.bf16.mxu0 0
  %123 = vmatpush1.bf16.msra.mxu0 0
  %124 = vmatprep.subr.bf16.mxu0 0
  %125 = vmatpush1.bf16.msra.mxu0 0
  %126 = vmatprep.subr.bf16.mxu0 0
  %127 = vmatpush1.bf16.msra.mxu0 0
  %128 = vmatprep.subr.bf16.mxu0 0
  %129 = vmatpush1.bf16.msra.mxu0 0
  %130 = vmatprep.subr.bf16.mxu0 0
  %131 = vmatpush1.bf16.msra.mxu0 0
  %132 = vmatprep.subr.bf16.mxu0 0
  %133 = vmatpush1.bf16.msra.mxu0 0
  %134 = vmatprep.subr.bf16.mxu0 0
  %135 = vmatpush1.bf16.msra.mxu0 0
  %136 = vmatprep.subr.bf16.mxu0 0
  %137 = vmatpush1.bf16.msra.mxu0 0
  %138 = vmatprep.subr.bf16.mxu0 0
  %139 = vmatpush1.bf16.msra.mxu0 0
  %140 = vmatprep.subr.bf16.mxu0 0
  %141 = vmatpush1.bf16.msra.mxu0 0
  %142 = vmatprep.subr.bf16.mxu0 0
  %143 = vmatpush1.bf16.msra.mxu0 0
  %144 = vmatprep.subr.bf16.mxu0 0
  %145 = vmatpush1.bf16.msra.mxu0 0
  %146 = vmatprep.subr.bf16.mxu0 0
  %147 = vmatpush1.bf16.msra.mxu0 0
  %148 = vmatprep.mubr.bf16.mxu0 0
  %149 = vmatmul.mubr.bf16.gmra.mrb[0].mxu0 %v107
  %v150 = vpop.f32.mrb[0].mxu0
  %v151 = vadd.f32 0.0, %v150
  %v152 = vpop.f32.mrb[0].mxu0
  %v153 = vpop.f32.mrb[0].mxu0
  %v154 = vadd.f32 0.0, %v153
  %v155 = vpop.f32.mrb[0].mxu0
  %156 = vmatprep.mubr.bf16.mxu0 0
  %157 = vmatmul.mubr.bf16.gmra.mrb[0].mxu0 %v110
  %v158 = vpop.f32.mrb[0].mxu0
  %v159 = vadd.f32 0.0, %v158
  %v160 = vpop.f32.mrb[0].mxu0
  %v161 = vpop.f32.mrb[0].mxu0
  %v162 = vadd.f32 0.0, %v161
  %v163 = vpop.f32.mrb[0].mxu0
  %164 = vdwg.mxu0
  %v173 = vunpack.c.l.b16 %v35
  %v174 = vunpack.c.h.b16 %v35
  %v175 = vunpack.c.l.b16 %v36
  %v176 = vunpack.c.l.b16 %v37
  %v177 = vunpack.c.h.b16 %v37
  %v178 = vunpack.c.l.b16 %v38
  %v179 = vunpack.c.l.b16 %v39
  %v180 = vunpack.c.h.b16 %v39
  %v181 = vunpack.c.l.b16 %v40
  %v182 = vunpack.c.l.b16 %v41
  %v183 = vunpack.c.h.b16 %v41
  %v184 = vunpack.c.l.b16 %v42
  %v185 = vpack.c.b16 %v176, %v173
  %v186 = vpack.c.b16 %v177, %v174
  %v187 = vpack.c.b16 %v178, %v175
  %v188 = vpack.c.b16 %v182, %v179
  %v189 = vpack.c.b16 %v183, %v180
  %v190 = vpack.c.b16 %v184, %v181
  %v231 = vunpack.c.l.b16 %v43
  %v232 = vunpack.c.l.b16 %v44
  %v233 = vunpack.c.l.b16 %v45
  %v234 = vunpack.c.l.b16 %v46
  %v235 = vunpack.c.l.b16 %v47
  %v236 = vunpack.c.l.b16 %v48
  %v237 = vunpack.c.l.b16 %v49
  %v238 = vunpack.c.l.b16 %v50
  %v239 = vunpack.c.l.b16 %v51
  %v240 = vunpack.c.l.b16 %v52
  %v241 = vunpack.c.l.b16 %v53
  %v242 = vunpack.c.l.b16 %v54
  %v243 = vunpack.c.l.b16 %v55
  %v244 = vunpack.c.l.b16 %v56
  %v245 = vunpack.c.l.b16 %v57
  %v246 = vunpack.c.l.b16 %v58
  %v247 = vunpack.c.l.b16 %v59
  %v248 = vunpack.c.l.b16 %v60
  %v249 = vunpack.c.l.b16 %v61
  %v250 = vunpack.c.l.b16 %v62
  %v251 = vunpack.c.l.b16 %v63
  %v252 = vunpack.c.l.b16 %v64
  %v253 = vunpack.c.l.b16 %v65
  %v254 = vunpack.c.l.b16 %v66
  %v255 = vunpack.c.l.b16 %v67
  %v256 = vunpack.c.l.b16 %v68
  %v257 = vunpack.c.l.b16 %v69
  %v258 = vunpack.c.l.b16 %v70
  %v259 = vunpack.c.l.b16 %v71
  %v260 = vunpack.c.l.b16 %v72
  %v261 = vunpack.c.l.b16 %v73
  %v262 = vunpack.c.l.b16 %v74
  %v263 = vunpack.c.l.b16 %v75
  %v264 = vunpack.c.l.b16 %v76
  %v265 = vunpack.c.l.b16 %v77
  %v266 = vunpack.c.l.b16 %v78
  %v267 = vpack.c.b16 %v232, %v231
  %v268 = vpack.c.b16 %v234, %v233
  %v269 = vpack.c.b16 %v236, %v235
  %v270 = vpack.c.b16 %v238, %v237
  %v271 = vpack.c.b16 %v240, %v239
  %v272 = vpack.c.b16 %v242, %v241
  %v273 = vpack.c.b16 %v244, %v243
  %v274 = vpack.c.b16 %v246, %v245
  %v275 = vpack.c.b16 %v248, %v247
  %v276 = vpack.c.b16 %v250, %v249
  %v277 = vpack.c.b16 %v252, %v251
  %v278 = vpack.c.b16 %v254, %v253
  %v279 = vpack.c.b16 %v256, %v255
  %v280 = vpack.c.b16 %v258, %v257
  %v281 = vpack.c.b16 %v260, %v259
  %v282 = vpack.c.b16 %v262, %v261
  %v283 = vpack.c.b16 %v264, %v263
  %v284 = vpack.c.b16 %v266, %v265
  %vm303 = vcmask 261120
  %v305 = vsel %vm303, %v187, 0
  %v308 = vsel %vm303, %v190, 0
  %310 = vmatprep.subr.bf16.mxu0 0
  %311 = vmatpush1.bf16.msra.mxu0 %v267
  %312 = vmatprep.subr.bf16.mxu0 0
  %313 = vmatpush1.bf16.msra.mxu0 %v268
  %314 = vmatprep.subr.bf16.mxu0 0
  %315 = vmatpush1.bf16.msra.mxu0 %v269
  %316 = vmatprep.subr.bf16.mxu0 0
  %317 = vmatpush1.bf16.msra.mxu0 %v270
  %318 = vmatprep.subr.bf16.mxu0 0
  %319 = vmatpush1.bf16.msra.mxu0 %v271
  %320 = vmatprep.subr.bf16.mxu0 0
  %321 = vmatpush1.bf16.msra.mxu0 %v272
  %322 = vmatprep.subr.bf16.mxu0 0
  %323 = vmatpush1.bf16.msra.mxu0 %v273
  %324 = vmatprep.subr.bf16.mxu0 0
  %325 = vmatpush1.bf16.msra.mxu0 %v274
  %326 = vmatprep.subr.bf16.mxu0 0
  %327 = vmatpush1.bf16.msra.mxu0 %v275
  %328 = vmatprep.subr.bf16.mxu0 0
  %329 = vmatpush1.bf16.msra.mxu0 %v276
  %330 = vmatprep.subr.bf16.mxu0 0
  %331 = vmatpush1.bf16.msra.mxu0 %v277
  %332 = vmatprep.subr.bf16.mxu0 0
  %333 = vmatpush1.bf16.msra.mxu0 %v278
  %334 = vmatprep.subr.bf16.mxu0 0
  %335 = vmatpush1.bf16.msra.mxu0 %v279
  %336 = vmatprep.subr.bf16.mxu0 0
  %337 = vmatpush1.bf16.msra.mxu0 %v280
  %338 = vmatprep.subr.bf16.mxu0 0
  %339 = vmatpush1.bf16.msra.mxu0 %v281
  %340 = vmatprep.subr.bf16.mxu0 0
  %341 = vmatpush1.bf16.msra.mxu0 %v282
  %342 = vmatprep.mubr.bf16.mxu0 %v186
  %343 = vmatmul.mubr.bf16.gmra.mrb[0].mxu0 %v185
  %v344 = vpop.f32.mrb[0].mxu0
  %v345 = vadd.f32 %v151, %v344
  %v346 = vpop.f32.mrb[0].mxu0
  %v347 = vpop.f32.mrb[0].mxu0
  %v348 = vadd.f32 %v154, %v347
  %v349 = vpop.f32.mrb[0].mxu0
  %350 = vmatprep.mubr.bf16.mxu0 %v189
  %351 = vmatmul.mubr.bf16.gmra.mrb[0].mxu0 %v188
  %v352 = vpop.f32.mrb[0].mxu0
  %v353 = vadd.f32 %v159, %v352
  %v354 = vpop.f32.mrb[0].mxu0
  %v355 = vpop.f32.mrb[0].mxu0
  %v356 = vadd.f32 %v162, %v355
  %v357 = vpop.f32.mrb[0].mxu0
  %358 = vdwg.mxu0
  %359 = vmatprep.subr.bf16.mxu0 0
  %360 = vmatpush1.bf16.msra.mxu0 %v283
  %361 = vmatprep.subr.bf16.mxu0 0
  %362 = vmatpush1.bf16.msra.mxu0 %v284
  %363 = vmatprep.subr.bf16.mxu0 0
  %364 = vmatpush1.bf16.msra.mxu0 0
  %365 = vmatprep.subr.bf16.mxu0 0
  %366 = vmatpush1.bf16.msra.mxu0 0
  %367 = vmatprep.subr.bf16.mxu0 0
  %368 = vmatpush1.bf16.msra.mxu0 0
  %369 = vmatprep.subr.bf16.mxu0 0
  %370 = vmatpush1.bf16.msra.mxu0 0
  %371 = vmatprep.subr.bf16.mxu0 0
  %372 = vmatpush1.bf16.msra.mxu0 0
  %373 = vmatprep.subr.bf16.mxu0 0
  %374 = vmatpush1.bf16.msra.mxu0 0
  %375 = vmatprep.subr.bf16.mxu0 0
  %376 = vmatpush1.bf16.msra.mxu0 0
  %377 = vmatprep.subr.bf16.mxu0 0
  %378 = vmatpush1.bf16.msra.mxu0 0
  %379 = vmatprep.subr.bf16.mxu0 0
  %380 = vmatpush1.bf16.msra.mxu0 0
  %381 = vmatprep.subr.bf16.mxu0 0
  %382 = vmatpush1.bf16.msra.mxu0 0
  %383 = vmatprep.subr.bf16.mxu0 0
  %384 = vmatpush1.bf16.msra.mxu0 0
  %385 = vmatprep.subr.bf16.mxu0 0
  %386 = vmatpush1.bf16.msra.mxu0 0
  %387 = vmatprep.subr.bf16.mxu0 0
  %388 = vmatpush1.bf16.msra.mxu0 0
  %389 = vmatprep.subr.bf16.mxu0 0
  %390 = vmatpush1.bf16.msra.mxu0 0
  %391 = vmatprep.mubr.bf16.mxu0 0
  %392 = vmatmul.mubr.bf16.gmra.mrb[0].mxu0 %v305
  %v393 = vpop.f32.mrb[0].mxu0
  %v394 = vadd.f32 %v345, %v393
  %v395 = vpop.f32.mrb[0].mxu0
  %v396 = vpop.f32.mrb[0].mxu0
  %v397 = vadd.f32 %v348, %v396
  %v398 = vpop.f32.mrb[0].mxu0
  %399 = vmatprep.mubr.bf16.mxu0 0
  %400 = vmatmul.mubr.bf16.gmra.mrb[0].mxu0 %v308
  %v401 = vpop.f32.mrb[0].mxu0
  %v402 = vadd.f32 %v353, %v401
  %v403 = vpop.f32.mrb[0].mxu0
  %v404 = vpop.f32.mrb[0].mxu0
  %v405 = vadd.f32 %v356, %v404
  %v406 = vpop.f32.mrb[0].mxu0
  %407 = vdwg.mxu0
  %v408 = vld [vmem:[%s2] sm:$0xff]
  %v409 = vld [vmem:[%s2 + $0x8] sm:$0xf]
  %v410 = vld [vmem:[%s2 + $0xc] sm:$0xff]
  %v411 = vld [vmem:[%s2 + $0x14] sm:$0xf]
  %v412 = vld [vmem:[%s2 + $0x18] sm:$0xff]
  %v413 = vld [vmem:[%s2 + $0x20] sm:$0xf]
  %v414 = vld [vmem:[%s2 + $0x24] sm:$0xff]
  %v415 = vld [vmem:[%s2 + $0x2c] sm:$0xf]
  %v416 = vld [vmem:[%s5] sm:$0xf]
  %v417 = vld [vmem:[%s5 + $0x4] sm:$0xf]
  %v418 = vld [vmem:[%s5 + $0x8] sm:$0xf]
  %v419 = vld [vmem:[%s5 + $0xc] sm:$0xf]
  %v420 = vld [vmem:[%s5 + $0x10] sm:$0xf]
  %v421 = vld [vmem:[%s5 + $0x14] sm:$0xf]
  %v422 = vld [vmem:[%s5 + $0x18] sm:$0xf]
  %v423 = vld [vmem:[%s5 + $0x1c] sm:$0xf]
  %v424 = vld [vmem:[%s5 + $0x20] sm:$0xf]
  %v425 = vld [vmem:[%s5 + $0x24] sm:$0xf]
  %v426 = vld [vmem:[%s5 + $0x28] sm:$0xf]
  %v427 = vld [vmem:[%s5 + $0x2c] sm:$0xf]
  %v428 = vld [vmem:[%s5 + $0x30] sm:$0xf]
  %v429 = vld [vmem:[%s5 + $0x34] sm:$0xf]
  %v430 = vld [vmem:[%s5 + $0x38] sm:$0xf]
  %v431 = vld [vmem:[%s5 + $0x3c] sm:$0xf]
  %v432 = vld [vmem:[%s5 + $0x40] sm:$0xf]
  %v433 = vld [vmem:[%s5 + $0x44] sm:$0xf]
  %v434 = vld [vmem:[%s5 + $0x48] sm:$0xf]
  %v435 = vld [vmem:[%s5 + $0x4c] sm:$0xf]
  %v436 = vld [vmem:[%s5 + $0x50] sm:$0xf]
  %v437 = vld [vmem:[%s5 + $0x54] sm:$0xf]
  %v438 = vld [vmem:[%s5 + $0x58] sm:$0xf]
  %v439 = vld [vmem:[%s5 + $0x5c] sm:$0xf]
  %v440 = vld [vmem:[%s5 + $0x60] sm:$0xf]
  %v441 = vld [vmem:[%s5 + $0x64] sm:$0xf]
  %v442 = vld [vmem:[%s5 + $0x68] sm:$0xf]
  %v443 = vld [vmem:[%s5 + $0x6c] sm:$0xf]
  %v444 = vld [vmem:[%s5 + $0x70] sm:$0xf]
  %v445 = vld [vmem:[%s5 + $0x74] sm:$0xf]
  %v446 = vld [vmem:[%s5 + $0x78] sm:$0xf]
  %v447 = vld [vmem:[%s5 + $0x7c] sm:$0xf]
  %v448 = vld [vmem:[%s5 + $0x80] sm:$0xf]
  %v449 = vld [vmem:[%s5 + $0x84] sm:$0xf]
  %v450 = vld [vmem:[%s5 + $0x88] sm:$0xf]
  %v451 = vld [vmem:[%s5 + $0x8c] sm:$0xf]
  %v460 = vunpack.c.l.b16 %v408
  %v461 = vunpack.c.h.b16 %v408
  %v462 = vunpack.c.l.b16 %v409
  %v463 = vunpack.c.l.b16 %v410
  %v464 = vunpack.c.h.b16 %v410
  %v465 = vunpack.c.l.b16 %v411
  %v466 = vunpack.c.l.b16 %v412
  %v467 = vunpack.c.h.b16 %v412
  %v468 = vunpack.c.l.b16 %v413
  %v469 = vunpack.c.l.b16 %v414
  %v470 = vunpack.c.h.b16 %v414
  %v471 = vunpack.c.l.b16 %v415
  %v472 = vpack.c.b16 %v463, %v460
  %v473 = vpack.c.b16 %v464, %v461
  %v474 = vpack.c.b16 %v465, %v462
  %v475 = vpack.c.b16 %v469, %v466
  %v476 = vpack.c.b16 %v470, %v467
  %v477 = vpack.c.b16 %v471, %v468
  %v518 = vunpack.c.l.b16 %v416
  %v519 = vunpack.c.l.b16 %v417
  %v520 = vunpack.c.l.b16 %v418
  %v521 = vunpack.c.l.b16 %v419
  %v522 = vunpack.c.l.b16 %v420
  %v523 = vunpack.c.l.b16 %v421
  %v524 = vunpack.c.l.b16 %v422
  %v525 = vunpack.c.l.b16 %v423
  %v526 = vunpack.c.l.b16 %v424
  %v527 = vunpack.c.l.b16 %v425
  %v528 = vunpack.c.l.b16 %v426
  %v529 = vunpack.c.l.b16 %v427
  %v530 = vunpack.c.l.b16 %v428
  %v531 = vunpack.c.l.b16 %v429
  %v532 = vunpack.c.l.b16 %v430
  %v533 = vunpack.c.l.b16 %v431
  %v534 = vunpack.c.l.b16 %v432
  %v535 = vunpack.c.l.b16 %v433
  %v536 = vunpack.c.l.b16 %v434
  %v537 = vunpack.c.l.b16 %v435
  %v538 = vunpack.c.l.b16 %v436
  %v539 = vunpack.c.l.b16 %v437
  %v540 = vunpack.c.l.b16 %v438
  %v541 = vunpack.c.l.b16 %v439
  %v542 = vunpack.c.l.b16 %v440
  %v543 = vunpack.c.l.b16 %v441
  %v544 = vunpack.c.l.b16 %v442
  %v545 = vunpack.c.l.b16 %v443
  %v546 = vunpack.c.l.b16 %v444
  %v547 = vunpack.c.l.b16 %v445
  %v548 = vunpack.c.l.b16 %v446
  %v549 = vunpack.c.l.b16 %v447
  %v550 = vunpack.c.l.b16 %v448
  %v551 = vunpack.c.l.b16 %v449
  %v552 = vunpack.c.l.b16 %v450
  %v553 = vunpack.c.l.b16 %v451
  %v554 = vpack.c.b16 %v519, %v518
  %v555 = vpack.c.b16 %v521, %v520
  %v556 = vpack.c.b16 %v523, %v522
  %v557 = vpack.c.b16 %v525, %v524
  %v558 = vpack.c.b16 %v527, %v526
  %v559 = vpack.c.b16 %v529, %v528
  %v560 = vpack.c.b16 %v531, %v530
  %v561 = vpack.c.b16 %v533, %v532
  %v562 = vpack.c.b16 %v535, %v534
  %v563 = vpack.c.b16 %v537, %v536
  %v564 = vpack.c.b16 %v539, %v538
  %v565 = vpack.c.b16 %v541, %v540
  %v566 = vpack.c.b16 %v543, %v542
  %v567 = vpack.c.b16 %v545, %v544
  %v568 = vpack.c.b16 %v547, %v546
  %v569 = vpack.c.b16 %v549, %v548
  %v570 = vpack.c.b16 %v551, %v550
  %v571 = vpack.c.b16 %v553, %v552
  %v591 = vsel %vm303, %v474, 0
  %v594 = vsel %vm303, %v477, 0
  %596 = vmatprep.subr.bf16.mxu0 0
  %597 = vmatpush1.bf16.msra.mxu0 %v554
  %598 = vmatprep.subr.bf16.mxu0 0
  %599 = vmatpush1.bf16.msra.mxu0 %v555
  %600 = vmatprep.subr.bf16.mxu0 0
  %601 = vmatpush1.bf16.msra.mxu0 %v556
  %602 = vmatprep.subr.bf16.mxu0 0
  %603 = vmatpush1.bf16.msra.mxu0 %v557
  %604 = vmatprep.subr.bf16.mxu0 0
  %605 = vmatpush1.bf16.msra.mxu0 %v558
  %606 = vmatprep.subr.bf16.mxu0 0
  %607 = vmatpush1.bf16.msra.mxu0 %v559
  %608 = vmatprep.subr.bf16.mxu0 0
  %609 = vmatpush1.bf16.msra.mxu0 %v560
  %610 = vmatprep.subr.bf16.mxu0 0
  %611 = vmatpush1.bf16.msra.mxu0 %v561
  %612 = vmatprep.subr.bf16.mxu0 0
  %613 = vmatpush1.bf16.msra.mxu0 %v562
  %614 = vmatprep.subr.bf16.mxu0 0
  %615 = vmatpush1.bf16.msra.mxu0 %v563
  %616 = vmatprep.subr.bf16.mxu0 0
  %617 = vmatpush1.bf16.msra.mxu0 %v564
  %618 = vmatprep.subr.bf16.mxu0 0
  %619 = vmatpush1.bf16.msra.mxu0 %v565
  %620 = vmatprep.subr.bf16.mxu0 0
  %621 = vmatpush1.bf16.msra.mxu0 %v566
  %622 = vmatprep.subr.bf16.mxu0 0
  %623 = vmatpush1.bf16.msra.mxu0 %v567
  %624 = vmatprep.subr.bf16.mxu0 0
  %625 = vmatpush1.bf16.msra.mxu0 %v568
  %626 = vmatprep.subr.bf16.mxu0 0
  %627 = vmatpush1.bf16.msra.mxu0 %v569
  %628 = vmatprep.mubr.bf16.mxu0 %v473
  %629 = vmatmul.mubr.bf16.gmra.mrb[0].mxu0 %v472
  %v630 = vpop.f32.mrb[0].mxu0
  %v631 = vadd.f32 0.0, %v630
  %v632 = vpop.f32.mrb[0].mxu0
  %v633 = vpop.f32.mrb[0].mxu0
  %v634 = vadd.f32 0.0, %v633
  %v635 = vpop.f32.mrb[0].mxu0
  %636 = vmatprep.mubr.bf16.mxu0 %v476
  %637 = vmatmul.mubr.bf16.gmra.mrb[0].mxu0 %v475
  %v638 = vpop.f32.mrb[0].mxu0
  %v639 = vadd.f32 0.0, %v638
  %v640 = vpop.f32.mrb[0].mxu0
  %v641 = vpop.f32.mrb[0].mxu0
  %v642 = vadd.f32 0.0, %v641
  %v643 = vpop.f32.mrb[0].mxu0
  %644 = vdwg.mxu0
  %645 = vmatprep.subr.bf16.mxu0 0
  %646 = vmatpush1.bf16.msra.mxu0 %v570
  %647 = vmatprep.subr.bf16.mxu0 0
  %648 = vmatpush1.bf16.msra.mxu0 %v571
  %649 = vmatprep.subr.bf16.mxu0 0
  %650 = vmatpush1.bf16.msra.mxu0 0
  %651 = vmatprep.subr.bf16.mxu0 0
  %652 = vmatpush1.bf16.msra.mxu0 0
  %653 = vmatprep.subr.bf16.mxu0 0
  %654 = vmatpush1.bf16.msra.mxu0 0
  %655 = vmatprep.subr.bf16.mxu0 0
  %656 = vmatpush1.bf16.msra.mxu0 0
  %657 = vmatprep.subr.bf16.mxu0 0
  %658 = vmatpush1.bf16.msra.mxu0 0
  %659 = vmatprep.subr.bf16.mxu0 0
  %660 = vmatpush1.bf16.msra.mxu0 0
  %661 = vmatprep.subr.bf16.mxu0 0
  %662 = vmatpush1.bf16.msra.mxu0 0
  %663 = vmatprep.subr.bf16.mxu0 0
  %664 = vmatpush1.bf16.msra.mxu0 0
  %665 = vmatprep.subr.bf16.mxu0 0
  %666 = vmatpush1.bf16.msra.mxu0 0
  %667 = vmatprep.subr.bf16.mxu0 0
  %668 = vmatpush1.bf16.msra.mxu0 0
  %669 = vmatprep.subr.bf16.mxu0 0
  %670 = vmatpush1.bf16.msra.mxu0 0
  %671 = vmatprep.subr.bf16.mxu0 0
  %672 = vmatpush1.bf16.msra.mxu0 0
  %673 = vmatprep.subr.bf16.mxu0 0
  %674 = vmatpush1.bf16.msra.mxu0 0
  %675 = vmatprep.subr.bf16.mxu0 0
  %676 = vmatpush1.bf16.msra.mxu0 0
  %677 = vmatprep.mubr.bf16.mxu0 0
  %678 = vmatmul.mubr.bf16.gmra.mrb[0].mxu0 %v591
  %v679 = vpop.f32.mrb[0].mxu0
  %v680 = vadd.f32 %v631, %v679
  %v681 = vpop.f32.mrb[0].mxu0
  %v682 = vpop.f32.mrb[0].mxu0
  %v683 = vadd.f32 %v634, %v682
  %v684 = vpop.f32.mrb[0].mxu0
  %685 = vmatprep.mubr.bf16.mxu0 0
  %686 = vmatmul.mubr.bf16.gmra.mrb[0].mxu0 %v594
  %v687 = vpop.f32.mrb[0].mxu0
  %v688 = vadd.f32 %v639, %v687
  %v689 = vpop.f32.mrb[0].mxu0
  %v690 = vpop.f32.mrb[0].mxu0
  %v691 = vadd.f32 %v642, %v690
  %v692 = vpop.f32.mrb[0].mxu0
  %693 = vdwg.mxu0
  %v694 = vadd.f32 %v394, %v680
  %v695 = vadd.f32 %v397, %v683
  %v696 = vadd.f32 %v402, %v688
  %v697 = vadd.f32 %v405, %v691
  %v698 = vld [vmem:[%s6] sm:$0x1]
  %v700 = vlaneseq
  %v701 = vshrl.u32 %v700, 7
  %v702 = vsub.s32 0, %v701
  %v703 = vrot.slane %v698, %v702
  %v705 = vadd.f32 %v694, %v703
  %v706 = vadd.f32 %v695, %v703
  %v707 = vadd.f32 %v696, %v703
  %v708 = vadd.f32 %v697, %v703
  %v709 = vmax.f32 %v705, 0.0
  %v710 = vmax.f32 %v706, 0.0
  %v711 = vmax.f32 %v707, 0.0
  %v712 = vmax.f32 %v708, 0.0
  %v713 = vpack.c.bf16 %v710, %v709
  %v714 = vpack.c.bf16 %v712, %v711
  %v717 = vunpack.c.l.b16 %v713
  %v718 = vunpack.c.h.b16 %v713
  %v719 = vunpack.c.l.b16 %v714
  %v720 = vunpack.c.h.b16 %v714
  %v721 = vpack.c.b16 %v717, %v717
  %v722 = vpack.c.b16 %v718, %v718
  %v723 = vpack.c.b16 %v719, %v719
  %v724 = vpack.c.b16 %v720, %v720
  %vm729 = vcmask 125952
  %730 = vst.msk [vmem:[%s9] sm:$0xf] %vm729, %v721
  %731 = vst.msk [vmem:[%s9 + $0x4] sm:$0xf] %vm729, %v722
  %732 = vst.msk [vmem:[%s9 + $0x8] sm:$0xf] %vm729, %v723
  %733 = vst.msk [vmem:[%s9 + $0xc] sm:$0xf] %vm729, %v724
  %v734 = vld [vmem:[%s7] sm:$0xff]
  %v735 = vld [vmem:[%s7 + $0x8] sm:$0xff]
  %v736 = vld [vmem:[%s8] sm:$0x1]
  %v738 = vlaneseq
  %v739 = vshrl.u32 %v738, 7
  %v740 = vsub.s32 0, %v739
  %v741 = vrot.slane %v736, %v740
  %vm743 = vcmask 130048
  %v745 = vsel %vm743, %v709, 0
  %v748 = vsel %vm743, %v710, 0
  %v751 = vsel %vm743, %v711, 0
  %v754 = vsel %vm743, %v712, 0
  %756 = vmatprep.subr.mxu0 0.0
  %757 = vmatpush1.msra.mxu0 %v734
  %758 = vmatprep.subr.mxu0 0.0
  %759 = vmatpush1.msra.mxu0 %v735
  %760 = vmatprep.subr.mxu0 0.0
  %761 = vmatpush1.msra.mxu0 0.0
  %762 = vmatprep.subr.mxu0 0.0
  %763 = vmatpush1.msra.mxu0 0.0
  %764 = vmatprep.subr.mxu0 0.0
  %765 = vmatpush1.msra.mxu0 0.0
  %766 = vmatprep.subr.mxu0 0.0
  %767 = vmatpush1.msra.mxu0 0.0
  %768 = vmatprep.subr.mxu0 0.0
  %769 = vmatpush1.msra.mxu0 0.0
  %770 = vmatprep.subr.mxu0 0.0
  %771 = vmatpush1.msra.mxu0 0.0
  %772 = vmatprep.subr.mxu0 0.0
  %773 = vmatpush1.msra.mxu0 0.0
  %774 = vmatprep.subr.mxu0 0.0
  %775 = vmatpush1.msra.mxu0 0.0
  %776 = vmatprep.subr.mxu0 0.0
  %777 = vmatpush1.msra.mxu0 0.0
  %778 = vmatprep.subr.mxu0 0.0
  %779 = vmatpush1.msra.mxu0 0.0
  %780 = vmatprep.subr.mxu0 0.0
  %781 = vmatpush1.msra.mxu0 0.0
  %782 = vmatprep.subr.mxu0 0.0
  %783 = vmatpush1.msra.mxu0 0.0
  %784 = vmatprep.subr.mxu0 0.0
  %785 = vmatpush1.msra.mxu0 0.0
  %786 = vmatprep.subr.mxu0 0.0
  %787 = vmatpush1.msra.mxu0 0.0
  %788 = vmatprep.subr.mxu0 0.0
  %789 = vmatpush1.msra.mxu0 0.0
  %790 = vmatprep.subr.mxu0 0.0
  %791 = vmatpush1.msra.mxu0 0.0
  %792 = vmatprep.subr.mxu0 0.0
  %793 = vmatpush1.msra.mxu0 0.0
  %794 = vmatprep.subr.mxu0 0.0
  %795 = vmatpush1.msra.mxu0 0.0
  %796 = vmatprep.subr.mxu0 0.0
  %797 = vmatpush1.msra.mxu0 0.0
  %798 = vmatprep.subr.mxu0 0.0
  %799 = vmatpush1.msra.mxu0 0.0
  %800 = vmatprep.subr.mxu0 0.0
  %801 = vmatpush1.msra.mxu0 0.0
  %802 = vmatprep.subr.mxu0 0.0
  %803 = vmatpush1.msra.mxu0 0.0
  %804 = vmatprep.subr.mxu0 0.0
  %805 = vmatpush1.msra.mxu0 0.0
  %806 = vmatprep.subr.mxu0 0.0
  %807 = vmatpush1.msra.mxu0 0.0
  %808 = vmatprep.subr.mxu0 0.0
  %809 = vmatpush1.msra.mxu0 0.0
  %810 = vmatprep.subr.mxu0 0.0
  %811 = vmatpush1.msra.mxu0 0.0
  %812 = vmatprep.subr.mxu0 0.0
  %813 = vmatpush1.msra.mxu0 0.0
  %814 = vmatprep.subr.mxu0 0.0
  %815 = vmatpush1.msra.mxu0 0.0
  %816 = vmatprep.subr.mxu0 0.0
  %817 = vmatpush1.msra.mxu0 0.0
  %818 = vmatprep.subr.mxu0 0.0
  %819 = vmatpush1.msra.mxu0 0.0
  %820 = vmatprep.mubr.f32.mxu0 0.0
  %821 = vmatmul.mubr.f32.gmra.mrb[0].mxu0 %v745
  %v822 = vpop.f32.mrb[0].mxu0
  %v823 = vadd.f32 %v741, %v822
  %v824 = vpop.f32.mrb[0].mxu0
  %825 = vmatprep.mubr.f32.mxu0 0.0
  %826 = vmatmul.mubr.f32.gmra.mrb[0].mxu0 %v748
  %v827 = vpop.f32.mrb[0].mxu0
  %v828 = vadd.f32 %v741, %v827
  %v829 = vpop.f32.mrb[0].mxu0
  %830 = vmatprep.mubr.f32.mxu0 0.0
  %831 = vmatmul.mubr.f32.gmra.mrb[0].mxu0 %v751
  %v832 = vpop.f32.mrb[0].mxu0
  %v833 = vadd.f32 %v741, %v832
  %v834 = vpop.f32.mrb[0].mxu0
  %835 = vmatprep.mubr.f32.mxu0 0.0
  %836 = vmatmul.mubr.f32.gmra.mrb[0].mxu0 %v754
  %v837 = vpop.f32.mrb[0].mxu0
  %v838 = vadd.f32 %v741, %v837
  %v839 = vpop.f32.mrb[0].mxu0
  %840 = vdwg.mxu0
  %v841 = vtanh.pop %v823
  %v842 = vtanh.pop %v828
  %v843 = vtanh.pop %v833
  %v844 = vtanh.pop %v838
  %v845 = vmul.f32 %v841, 256.0
  %v846 = vmul.f32 %v842, 256.0
  %v847 = vmul.f32 %v843, 256.0
  %v848 = vmul.f32 %v844, 256.0
  %vm849 = vcmask 15360
  %850 = vst.msk [vmem:[%s10] sm:$0xff] %vm849, %v845
  %851 = vst.msk [vmem:[%s10 + $0x8] sm:$0xff] %vm849, %v846
  %852 = vst.msk [vmem:[%s10 + $0x10] sm:$0xff] %vm849, %v847
  %853 = vst.msk [vmem:[%s10 + $0x18] sm:$0xff] %vm849, %v848
  // Predicated region
  $region38: #{evflownet_forward.21} parent=0 // pred_check
    _
  $region39: #{evflownet_forward.21} parent=0 // pred_check_branch
    %855 = sbr.rel (0) target = $region41
  $region40: #{evflownet_forward.21} parent=0 // pred_region
    _
  $region41: #{evflownet_forward.21} parent=0 // pred_fallthru
    _
  // Predicated region
  $region42: #{evflownet_forward.21} parent=0 // pred_check
    _
  $region43: #{evflownet_forward.21} parent=0 // pred_check_branch
    %857 = sbr.rel (0) target = $region45
  $region44: #{evflownet_forward.21} parent=0 // pred_region
    _
  $region45: #{evflownet_forward.21} parent=0 // pred_fallthru
    _
  // Predicated region
  $region46: #{evflownet_forward.21} parent=0 // pred_check
    _
  $region47: #{evflownet_forward.21} parent=0 // pred_check_branch
    %859 = sbr.rel (0) target = $region49
  $region48: #{evflownet_forward.21} parent=0 // pred_region
    _
  $region49: #{evflownet_forward.21} parent=0 // pred_fallthru
    _
  // Predicated region
  $region50: #{evflownet_forward.21} parent=0 // pred_check
    _
  $region51: #{evflownet_forward.21} parent=0 // pred_check_branch
    %861 = sbr.rel (0) target = $region53
  $region52: #{evflownet_forward.21} parent=0 // pred_region
    _
  $region53: #{evflownet_forward.21} parent=0 // pred_fallthru
    _

// kernel: evflownet_forward.22
$region0: #{evflownet_forward.22}
  #allocation0 [shape = 'u32[]', space=smem, size = 0x4, offset = 0x4, fixed_abs, tag = 'smem constant byte address 0x4 - core index']
  #allocation1 [shape = 'u32[144,128]{1,0:T(1,128)}', space=vmem, size = 0x12000, scoped, tag = 'internal scratch']
  %s0 = inlined_call_operand.vmem [shape: bf16[128,144], index: 0, kind: input, shape index: {}]
  %s1 = inlined_call_operand.vmem [shape: bf16[128,18], index: 1, kind: input, shape index: {}]
  %s2 = inlined_call_operand.vmem [shape: bf16[128,144], index: 2, kind: input, shape index: {}]
  %s3 = inlined_call_operand.vmem [shape: bf16[144,8], index: 3, kind: input, shape index: {}]
  %s4 = inlined_call_operand.vmem [shape: bf16[18,8], index: 4, kind: input, shape index: {}]
  %s5 = inlined_call_operand.vmem [shape: bf16[144,8], index: 5, kind: input, shape index: {}]
  %s6 = inlined_call_operand.vmem [shape: f32[1,8], index: 6, kind: input, shape index: {}]
  %s7 = inlined_call_operand.vmem [shape: f32[8,2], index: 7, kind: input, shape index: {}]
  %s8 = inlined_call_operand.vmem [shape: f32[1,2], index: 8, kind: input, shape index: {}]
  %s9 = inlined_call_operand.vmem [shape: bf16[128,8], index: 9, kind: output, shape index: {0}]
  %s10 = inlined_call_operand.vmem [shape: f32[128,2], index: 10, kind: output, shape index: {1}]
  %11 = xla_tuple %s9, %s10
  %s12 = sld [smem:[#allocation0]]
  $region54: #{evflownet_forward.22} parent=0
    _
  %s14 = ssub.s32 1, %s12
  %s15 = scalar_select 0, %s14, %s12
  // Predicated region
  $region2: #{evflownet_forward.22} parent=0 // pred_check
    _
  $region3: #{evflownet_forward.22} parent=0 // pred_check_branch
    %17 = sbr.rel (0) target = $region5
  $region4: #{evflownet_forward.22} parent=0 // pred_region
    _
  $region5: #{evflownet_forward.22} parent=0 // pred_fallthru
    _
  // Predicated region
  $region6: #{evflownet_forward.22} parent=0 // pred_check
    _
  $region7: #{evflownet_forward.22} parent=0 // pred_check_branch
    %19 = sbr.rel (0) target = $region9
  $region8: #{evflownet_forward.22} parent=0 // pred_region
    _
  $region9: #{evflownet_forward.22} parent=0 // pred_fallthru
    _
  // Predicated region
  $region10: #{evflownet_forward.22} parent=0 // pred_check
    _
  $region11: #{evflownet_forward.22} parent=0 // pred_check_branch
    %21 = sbr.rel (0) target = $region13
  $region12: #{evflownet_forward.22} parent=0 // pred_region
    _
  $region13: #{evflownet_forward.22} parent=0 // pred_fallthru
    _
  // Predicated region
  $region14: #{evflownet_forward.22} parent=0 // pred_check
    _
  $region15: #{evflownet_forward.22} parent=0 // pred_check_branch
    %23 = sbr.rel (0) target = $region17
  $region16: #{evflownet_forward.22} parent=0 // pred_region
    _
  $region17: #{evflownet_forward.22} parent=0 // pred_fallthru
    _
  // Predicated region
  $region18: #{evflownet_forward.22} parent=0 // pred_check
    _
  $region19: #{evflownet_forward.22} parent=0 // pred_check_branch
    %25 = sbr.rel (0) target = $region21
  $region20: #{evflownet_forward.22} parent=0 // pred_region
    _
  $region21: #{evflownet_forward.22} parent=0 // pred_fallthru
    _
  // Predicated region
  $region22: #{evflownet_forward.22} parent=0 // pred_check
    _
  $region23: #{evflownet_forward.22} parent=0 // pred_check_branch
    %27 = sbr.rel (0) target = $region25
  $region24: #{evflownet_forward.22} parent=0 // pred_region
    _
  $region25: #{evflownet_forward.22} parent=0 // pred_fallthru
    _
  // Predicated region
  $region26: #{evflownet_forward.22} parent=0 // pred_check
    _
  $region27: #{evflownet_forward.22} parent=0 // pred_check_branch
    %29 = sbr.rel (0) target = $region29
  $region28: #{evflownet_forward.22} parent=0 // pred_region
    _
  $region29: #{evflownet_forward.22} parent=0 // pred_fallthru
    _
  // Predicated region
  $region30: #{evflownet_forward.22} parent=0 // pred_check
    _
  $region31: #{evflownet_forward.22} parent=0 // pred_check_branch
    %31 = sbr.rel (0) target = $region33
  $region32: #{evflownet_forward.22} parent=0 // pred_region
    _
  $region33: #{evflownet_forward.22} parent=0 // pred_fallthru
    _
  // Predicated region
  $region34: #{evflownet_forward.22} parent=0 // pred_check
    _
  $region35: #{evflownet_forward.22} parent=0 // pred_check_branch
    %33 = sbr.rel (0) target = $region37
  $region36: #{evflownet_forward.22} parent=0 // pred_region
    _
  $region37: #{evflownet_forward.22} parent=0 // pred_fallthru
    _
  %v35 = vld [vmem:[%s0] sm:$0xff]
  %v36 = vld [vmem:[%s0 + $0x8] sm:$0xff]
  %v37 = vld [vmem:[%s0 + $0x10] sm:$0xff]
  %v38 = vld [vmem:[%s0 + $0x18] sm:$0xff]
  %v39 = vld [vmem:[%s0 + $0x20] sm:$0xff]
  %v40 = vld [vmem:[%s0 + $0x28] sm:$0xff]
  %v41 = vld [vmem:[%s0 + $0x30] sm:$0xff]
  %v42 = vld [vmem:[%s0 + $0x38] sm:$0xff]
  %v43 = vld [vmem:[%s0 + $0x40] sm:$0xff]
  %v44 = vld [vmem:[%s0 + $0x48] sm:$0xff]
  %v45 = vld [vmem:[%s0 + $0x50] sm:$0xff]
  %v46 = vld [vmem:[%s0 + $0x58] sm:$0xff]
  %v47 = vld [vmem:[%s0 + $0x60] sm:$0xff]
  %v48 = vld [vmem:[%s0 + $0x68] sm:$0xff]
  %v49 = vld [vmem:[%s0 + $0x70] sm:$0xff]
  %v50 = vld [vmem:[%s0 + $0x78] sm:$0xff]
  %v51 = vld [vmem:[%s3] sm:$0xf]
  %v52 = vld [vmem:[%s3 + $0x4] sm:$0xf]
  %v53 = vld [vmem:[%s3 + $0x8] sm:$0xf]
  %v54 = vld [vmem:[%s3 + $0xc] sm:$0xf]
  %v55 = vld [vmem:[%s3 + $0x10] sm:$0xf]
  %v56 = vld [vmem:[%s3 + $0x14] sm:$0xf]
  %v57 = vld [vmem:[%s3 + $0x18] sm:$0xf]
  %v58 = vld [vmem:[%s3 + $0x1c] sm:$0xf]
  %v59 = vld [vmem:[%s3 + $0x20] sm:$0xf]
  %v60 = vld [vmem:[%s3 + $0x24] sm:$0xf]
  %v61 = vld [vmem:[%s3 + $0x28] sm:$0xf]
  %v62 = vld [vmem:[%s3 + $0x2c] sm:$0xf]
  %v63 = vld [vmem:[%s3 + $0x30] sm:$0xf]
  %v64 = vld [vmem:[%s3 + $0x34] sm:$0xf]
  %v65 = vld [vmem:[%s3 + $0x38] sm:$0xf]
  %v66 = vld [vmem:[%s3 + $0x3c] sm:$0xf]
  %v67 = vld [vmem:[%s3 + $0x40] sm:$0xf]
  %v68 = vld [vmem:[%s3 + $0x44] sm:$0xf]
  %v69 = vld [vmem:[%s1] sm:$0xf]
  %v70 = vld [vmem:[%s1 + $0x4] sm:$0xf]
  %v71 = vld [vmem:[%s1 + $0x8] sm:$0xf]
  %v72 = vld [vmem:[%s1 + $0xc] sm:$0xf]
  %v73 = vld [vmem:[%s1 + $0x10] sm:$0xf]
  %v74 = vld [vmem:[%s1 + $0x14] sm:$0xf]
  %v75 = vld [vmem:[%s1 + $0x18] sm:$0xf]
  %v76 = vld [vmem:[%s1 + $0x1c] sm:$0xf]
  %v77 = vld [vmem:[%s1 + $0x20] sm:$0xf]
  %v78 = vld [vmem:[%s1 + $0x24] sm:$0xf]
  %v79 = vld [vmem:[%s1 + $0x28] sm:$0xf]
  %v80 = vld [vmem:[%s1 + $0x2c] sm:$0xf]
  %v81 = vld [vmem:[%s1 + $0x30] sm:$0xf]
  %v82 = vld [vmem:[%s1 + $0x34] sm:$0xf]
  %v83 = vld [vmem:[%s1 + $0x38] sm:$0xf]
  %v84 = vld [vmem:[%s1 + $0x3c] sm:$0xf]
  %v85 = vld [vmem:[%s4] sm:$0xf]
  %v86 = vld [vmem:[%s4 + $0x4] sm:$0xf]
  %v87 = vld [vmem:[%s4 + $0x8] sm:$0x1]
  %v104 = vunpack.c.l.b16 %v69
  %v105 = vunpack.c.l.b16 %v70
  %v106 = vunpack.c.l.b16 %v71
  %v107 = vunpack.c.l.b16 %v72
  %v108 = vunpack.c.l.b16 %v73
  %v109 = vunpack.c.l.b16 %v74
  %v110 = vunpack.c.l.b16 %v75
  %v111 = vunpack.c.l.b16 %v76
  %v112 = vunpack.c.l.b16 %v77
  %v113 = vunpack.c.l.b16 %v78
  %v114 = vunpack.c.l.b16 %v79
  %v115 = vunpack.c.l.b16 %v80
  %v116 = vunpack.c.l.b16 %v81
  %v117 = vunpack.c.l.b16 %v82
  %v118 = vunpack.c.l.b16 %v83
  %v119 = vunpack.c.l.b16 %v84
  %v120 = vpack.c.b16 %v105, %v104
  %v121 = vpack.c.b16 %v107, %v106
  %v122 = vpack.c.b16 %v109, %v108
  %v123 = vpack.c.b16 %v111, %v110
  %v124 = vpack.c.b16 %v113, %v112
  %v125 = vpack.c.b16 %v115, %v114
  %v126 = vpack.c.b16 %v117, %v116
  %v127 = vpack.c.b16 %v119, %v118
  %v131 = vunpack.c.l.b16 %v85
  %v132 = vunpack.c.l.b16 %v86
  %v133 = vunpack.c.l.b16 %v87
  %v134 = vpack.c.b16 %v132, %v131
  %v135 = vpack.c.b16 %v133, %v133
  %vm137 = vcmask 146432
  %v139 = vsel %vm137, %v120, 0
  %v142 = vsel %vm137, %v121, 0
  %v145 = vsel %vm137, %v122, 0
  %v148 = vsel %vm137, %v123, 0
  %v151 = vsel %vm137, %v124, 0
  %v154 = vsel %vm137, %v125, 0
  %v157 = vsel %vm137, %v126, 0
  %v160 = vsel %vm137, %v127, 0
  %vm162 = vcmask 1040384
  %v164 = vsel %vm162, %v135, 0
  %166 = vmatprep.subr.bf16.mxu0 0
  %167 = vmatpush1.bf16.msra.mxu0 %v134
  %168 = vmatprep.subr.bf16.mxu0 0
  %169 = vmatpush1.bf16.msra.mxu0 %v164
  %170 = vmatprep.subr.bf16.mxu0 0
  %171 = vmatpush1.bf16.msra.mxu0 0
  %172 = vmatprep.subr.bf16.mxu0 0
  %173 = vmatpush1.bf16.msra.mxu0 0
  %174 = vmatprep.subr.bf16.mxu0 0
  %175 = vmatpush1.bf16.msra.mxu0 0
  %176 = vmatprep.subr.bf16.mxu0 0
  %177 = vmatpush1.bf16.msra.mxu0 0
  %178 = vmatprep.subr.bf16.mxu0 0
  %179 = vmatpush1.bf16.msra.mxu0 0
  %180 = vmatprep.subr.bf16.mxu0 0
  %181 = vmatpush1.bf16.msra.mxu0 0
  %182 = vmatprep.subr.bf16.mxu0 0
  %183 = vmatpush1.bf16.msra.mxu0 0
  %184 = vmatprep.subr.bf16.mxu0 0
  %185 = vmatpush1.bf16.msra.mxu0 0
  %186 = vmatprep.subr.bf16.mxu0 0
  %187 = vmatpush1.bf16.msra.mxu0 0
  %188 = vmatprep.subr.bf16.mxu0 0
  %189 = vmatpush1.bf16.msra.mxu0 0
  %190 = vmatprep.subr.bf16.mxu0 0
  %191 = vmatpush1.bf16.msra.mxu0 0
  %192 = vmatprep.subr.bf16.mxu0 0
  %193 = vmatpush1.bf16.msra.mxu0 0
  %194 = vmatprep.subr.bf16.mxu0 0
  %195 = vmatpush1.bf16.msra.mxu0 0
  %196 = vmatprep.subr.bf16.mxu0 0
  %197 = vmatpush1.bf16.msra.mxu0 0
  %198 = vmatprep.mubr.bf16.mxu0 0
  %199 = vmatmul.mubr.bf16.gmra.mrb[0].mxu0 %v139
  %v200 = vpop.f32.mrb[0].mxu0
  %v201 = vadd.f32 0.0, %v200
  %v202 = vpop.f32.mrb[0].mxu0
  %v203 = vpop.f32.mrb[0].mxu0
  %v204 = vadd.f32 0.0, %v203
  %v205 = vpop.f32.mrb[0].mxu0
  %206 = vmatprep.mubr.bf16.mxu0 0
  %207 = vmatmul.mubr.bf16.gmra.mrb[0].mxu0 %v142
  %v208 = vpop.f32.mrb[0].mxu0
  %v209 = vadd.f32 0.0, %v208
  %v210 = vpop.f32.mrb[0].mxu0
  %v211 = vpop.f32.mrb[0].mxu0
  %v212 = vadd.f32 0.0, %v211
  %v213 = vpop.f32.mrb[0].mxu0
  %214 = vmatprep.mubr.bf16.mxu0 0
  %215 = vmatmul.mubr.bf16.gmra.mrb[0].mxu0 %v145
  %v216 = vpop.f32.mrb[0].mxu0
  %v217 = vadd.f32 0.0, %v216
  %v218 = vpop.f32.mrb[0].mxu0
  %v219 = vpop.f32.mrb[0].mxu0
  %v220 = vadd.f32 0.0, %v219
  %v221 = vpop.f32.mrb[0].mxu0
  %222 = vmatprep.mubr.bf16.mxu0 0
  %223 = vmatmul.mubr.bf16.gmra.mrb[0].mxu0 %v148
  %v224 = vpop.f32.mrb[0].mxu0
  %v225 = vadd.f32 0.0, %v224
  %v226 = vpop.f32.mrb[0].mxu0
  %v227 = vpop.f32.mrb[0].mxu0
  %v228 = vadd.f32 0.0, %v227
  %v229 = vpop.f32.mrb[0].mxu0
  %230 = vmatprep.mubr.bf16.mxu0 0
  %231 = vmatmul.mubr.bf16.gmra.mrb[0].mxu0 %v151
  %v232 = vpop.f32.mrb[0].mxu0
  %v233 = vadd.f32 0.0, %v232
  %v234 = vpop.f32.mrb[0].mxu0
  %v235 = vpop.f32.mrb[0].mxu0
  %v236 = vadd.f32 0.0, %v235
  %v237 = vpop.f32.mrb[0].mxu0
  %238 = vmatprep.mubr.bf16.mxu0 0
  %239 = vmatmul.mubr.bf16.gmra.mrb[0].mxu0 %v154
  %v240 = vpop.f32.mrb[0].mxu0
  %v241 = vadd.f32 0.0, %v240
  %v242 = vpop.f32.mrb[0].mxu0
  %v243 = vpop.f32.mrb[0].mxu0
  %v244 = vadd.f32 0.0, %v243
  %v245 = vpop.f32.mrb[0].mxu0
  %246 = vmatprep.mubr.bf16.mxu0 0
  %247 = vmatmul.mubr.bf16.gmra.mrb[0].mxu0 %v157
  %v248 = vpop.f32.mrb[0].mxu0
  %v249 = vadd.f32 0.0, %v248
  %v250 = vpop.f32.mrb[0].mxu0
  %v251 = vpop.f32.mrb[0].mxu0
  %v252 = vadd.f32 0.0, %v251
  %v253 = vpop.f32.mrb[0].mxu0
  %254 = vmatprep.mubr.bf16.mxu0 0
  %255 = vmatmul.mubr.bf16.gmra.mrb[0].mxu0 %v160
  %v256 = vpop.f32.mrb[0].mxu0
  %v257 = vadd.f32 0.0, %v256
  %v258 = vpop.f32.mrb[0].mxu0
  %v259 = vpop.f32.mrb[0].mxu0
  %v260 = vadd.f32 0.0, %v259
  %v261 = vpop.f32.mrb[0].mxu0
  %262 = vdwg.mxu0
  %v279 = vunpack.c.l.b16 %v35
  %v280 = vunpack.c.h.b16 %v35
  %v281 = vunpack.c.l.b16 %v36
  %v282 = vunpack.c.h.b16 %v36
  %v283 = vunpack.c.l.b16 %v37
  %v284 = vunpack.c.h.b16 %v37
  %v285 = vunpack.c.l.b16 %v38
  %v286 = vunpack.c.h.b16 %v38
  %v287 = vunpack.c.l.b16 %v39
  %v288 = vunpack.c.h.b16 %v39
  %v289 = vunpack.c.l.b16 %v40
  %v290 = vunpack.c.h.b16 %v40
  %v291 = vunpack.c.l.b16 %v41
  %v292 = vunpack.c.h.b16 %v41
  %v293 = vunpack.c.l.b16 %v42
  %v294 = vunpack.c.h.b16 %v42
  %v295 = vunpack.c.l.b16 %v43
  %v296 = vunpack.c.h.b16 %v43
  %v297 = vunpack.c.l.b16 %v44
  %v298 = vunpack.c.h.b16 %v44
  %v299 = vunpack.c.l.b16 %v45
  %v300 = vunpack.c.h.b16 %v45
  %v301 = vunpack.c.l.b16 %v46
  %v302 = vunpack.c.h.b16 %v46
  %v303 = vunpack.c.l.b16 %v47
  %v304 = vunpack.c.h.b16 %v47
  %v305 = vunpack.c.l.b16 %v48
  %v306 = vunpack.c.h.b16 %v48
  %v307 = vunpack.c.l.b16 %v49
  %v308 = vunpack.c.h.b16 %v49
  %v309 = vunpack.c.l.b16 %v50
  %v310 = vunpack.c.h.b16 %v50
  %v311 = vpack.c.b16 %v281, %v279
  %v312 = vpack.c.b16 %v282, %v280
  %v313 = vpack.c.b16 %v285, %v283
  %v314 = vpack.c.b16 %v286, %v284
  %v315 = vpack.c.b16 %v289, %v287
  %v316 = vpack.c.b16 %v290, %v288
  %v317 = vpack.c.b16 %v293, %v291
  %v318 = vpack.c.b16 %v294, %v292
  %v319 = vpack.c.b16 %v297, %v295
  %v320 = vpack.c.b16 %v298, %v296
  %v321 = vpack.c.b16 %v301, %v299
  %v322 = vpack.c.b16 %v302, %v300
  %v323 = vpack.c.b16 %v305, %v303
  %v324 = vpack.c.b16 %v306, %v304
  %v325 = vpack.c.b16 %v309, %v307
  %v326 = vpack.c.b16 %v310, %v308
  %v353 = vunpack.c.l.b16 %v51
  %v354 = vunpack.c.l.b16 %v52
  %v355 = vunpack.c.l.b16 %v53
  %v356 = vunpack.c.l.b16 %v54
  %v357 = vunpack.c.l.b16 %v55
  %v358 = vunpack.c.l.b16 %v56
  %v359 = vunpack.c.l.b16 %v57
  %v360 = vunpack.c.l.b16 %v58
  %v361 = vunpack.c.l.b16 %v59
  %v362 = vunpack.c.l.b16 %v60
  %v363 = vunpack.c.l.b16 %v61
  %v364 = vunpack.c.l.b16 %v62
  %v365 = vunpack.c.l.b16 %v63
  %v366 = vunpack.c.l.b16 %v64
  %v367 = vunpack.c.l.b16 %v65
  %v368 = vunpack.c.l.b16 %v66
  %v369 = vunpack.c.l.b16 %v67
  %v370 = vunpack.c.l.b16 %v68
  %v371 = vpack.c.b16 %v354, %v353
  %v372 = vpack.c.b16 %v356, %v355
  %v373 = vpack.c.b16 %v358, %v357
  %v374 = vpack.c.b16 %v360, %v359
  %v375 = vpack.c.b16 %v362, %v361
  %v376 = vpack.c.b16 %v364, %v363
  %v377 = vpack.c.b16 %v366, %v365
  %v378 = vpack.c.b16 %v368, %v367
  %v379 = vpack.c.b16 %v370, %v369
  %vm389 = vcmask 130048
  %v391 = vsel %vm389, %v312, 0
  %v394 = vsel %vm389, %v314, 0
  %v397 = vsel %vm389, %v316, 0
  %v400 = vsel %vm389, %v318, 0
  %v403 = vsel %vm389, %v320, 0
  %v406 = vsel %vm389, %v322, 0
  %v409 = vsel %vm389, %v324, 0
  %v412 = vsel %vm389, %v326, 0
  %414 = vmatprep.subr.bf16.mxu0 0
  %415 = vmatpush1.bf16.msra.mxu0 %v371
  %416 = vmatprep.subr.bf16.mxu0 0
  %417 = vmatpush1.bf16.msra.mxu0 %v372
  %418 = vmatprep.subr.bf16.mxu0 0
  %419 = vmatpush1.bf16.msra.mxu0 %v373
  %420 = vmatprep.subr.bf16.mxu0 0
  %421 = vmatpush1.bf16.msra.mxu0 %v374
  %422 = vmatprep.subr.bf16.mxu0 0
  %423 = vmatpush1.bf16.msra.mxu0 %v375
  %424 = vmatprep.subr.bf16.mxu0 0
  %425 = vmatpush1.bf16.msra.mxu0 %v376
  %426 = vmatprep.subr.bf16.mxu0 0
  %427 = vmatpush1.bf16.msra.mxu0 %v377
  %428 = vmatprep.subr.bf16.mxu0 0
  %429 = vmatpush1.bf16.msra.mxu0 %v378
  %430 = vmatprep.subr.bf16.mxu0 0
  %431 = vmatpush1.bf16.msra.mxu0 %v379
  %432 = vmatprep.subr.bf16.mxu0 0
  %433 = vmatpush1.bf16.msra.mxu0 0
  %434 = vmatprep.subr.bf16.mxu0 0
  %435 = vmatpush1.bf16.msra.mxu0 0
  %436 = vmatprep.subr.bf16.mxu0 0
  %437 = vmatpush1.bf16.msra.mxu0 0
  %438 = vmatprep.subr.bf16.mxu0 0
  %439 = vmatpush1.bf16.msra.mxu0 0
  %440 = vmatprep.subr.bf16.mxu0 0
  %441 = vmatpush1.bf16.msra.mxu0 0
  %442 = vmatprep.subr.bf16.mxu0 0
  %443 = vmatpush1.bf16.msra.mxu0 0
  %444 = vmatprep.subr.bf16.mxu0 0
  %445 = vmatpush1.bf16.msra.mxu0 0
  %446 = vmatprep.mubr.bf16.mxu0 %v391
  %447 = vmatmul.mubr.bf16.gmra.mrb[0].mxu0 %v311
  %v448 = vpop.f32.mrb[0].mxu0
  %v449 = vadd.f32 %v201, %v448
  %v450 = vpop.f32.mrb[0].mxu0
  %v451 = vpop.f32.mrb[0].mxu0
  %v452 = vadd.f32 %v204, %v451
  %v453 = vpop.f32.mrb[0].mxu0
  %454 = vmatprep.mubr.bf16.mxu0 %v394
  %455 = vmatmul.mubr.bf16.gmra.mrb[0].mxu0 %v313
  %v456 = vpop.f32.mrb[0].mxu0
  %v457 = vadd.f32 %v209, %v456
  %v458 = vpop.f32.mrb[0].mxu0
  %v459 = vpop.f32.mrb[0].mxu0
  %v460 = vadd.f32 %v212, %v459
  %v461 = vpop.f32.mrb[0].mxu0
  %462 = vmatprep.mubr.bf16.mxu0 %v397
  %463 = vmatmul.mubr.bf16.gmra.mrb[0].mxu0 %v315
  %v464 = vpop.f32.mrb[0].mxu0
  %v465 = vadd.f32 %v217, %v464
  %v466 = vpop.f32.mrb[0].mxu0
  %v467 = vpop.f32.mrb[0].mxu0
  %v468 = vadd.f32 %v220, %v467
  %v469 = vpop.f32.mrb[0].mxu0
  %470 = vmatprep.mubr.bf16.mxu0 %v400
  %471 = vmatmul.mubr.bf16.gmra.mrb[0].mxu0 %v317
  %v472 = vpop.f32.mrb[0].mxu0
  %v473 = vadd.f32 %v225, %v472
  %v474 = vpop.f32.mrb[0].mxu0
  %v475 = vpop.f32.mrb[0].mxu0
  %v476 = vadd.f32 %v228, %v475
  %v477 = vpop.f32.mrb[0].mxu0
  %478 = vmatprep.mubr.bf16.mxu0 %v403
  %479 = vmatmul.mubr.bf16.gmra.mrb[0].mxu0 %v319
  %v480 = vpop.f32.mrb[0].mxu0
  %v481 = vadd.f32 %v233, %v480
  %v482 = vpop.f32.mrb[0].mxu0
  %v483 = vpop.f32.mrb[0].mxu0
  %v484 = vadd.f32 %v236, %v483
  %v485 = vpop.f32.mrb[0].mxu0
  %486 = vmatprep.mubr.bf16.mxu0 %v406
  %487 = vmatmul.mubr.bf16.gmra.mrb[0].mxu0 %v321
  %v488 = vpop.f32.mrb[0].mxu0
  %v489 = vadd.f32 %v241, %v488
  %v490 = vpop.f32.mrb[0].mxu0
  %v491 = vpop.f32.mrb[0].mxu0
  %v492 = vadd.f32 %v244, %v491
  %v493 = vpop.f32.mrb[0].mxu0
  %494 = vmatprep.mubr.bf16.mxu0 %v409
  %495 = vmatmul.mubr.bf16.gmra.mrb[0].mxu0 %v323
  %v496 = vpop.f32.mrb[0].mxu0
  %v497 = vadd.f32 %v249, %v496
  %v498 = vpop.f32.mrb[0].mxu0
  %v499 = vpop.f32.mrb[0].mxu0
  %v500 = vadd.f32 %v252, %v499
  %v501 = vpop.f32.mrb[0].mxu0
  %502 = vmatprep.mubr.bf16.mxu0 %v412
  %503 = vmatmul.mubr.bf16.gmra.mrb[0].mxu0 %v325
  %v504 = vpop.f32.mrb[0].mxu0
  %v505 = vadd.f32 %v257, %v504
  %v506 = vpop.f32.mrb[0].mxu0
  %v507 = vpop.f32.mrb[0].mxu0
  %v508 = vadd.f32 %v260, %v507
  %v509 = vpop.f32.mrb[0].mxu0
  %510 = vdwg.mxu0
  %v511 = vld [vmem:[%s2] sm:$0xff]
  %v512 = vld [vmem:[%s2 + $0x8] sm:$0xff]
  %v513 = vld [vmem:[%s2 + $0x10] sm:$0xff]
  %v514 = vld [vmem:[%s2 + $0x18] sm:$0xff]
  %v515 = vld [vmem:[%s2 + $0x20] sm:$0xff]
  %v516 = vld [vmem:[%s2 + $0x28] sm:$0xff]
  %v517 = vld [vmem:[%s2 + $0x30] sm:$0xff]
  %v518 = vld [vmem:[%s2 + $0x38] sm:$0xff]
  %v519 = vld [vmem:[%s2 + $0x40] sm:$0xff]
  %v520 = vld [vmem:[%s2 + $0x48] sm:$0xff]
  %v521 = vld [vmem:[%s2 + $0x50] sm:$0xff]
  %v522 = vld [vmem:[%s2 + $0x58] sm:$0xff]
  %v523 = vld [vmem:[%s2 + $0x60] sm:$0xff]
  %v524 = vld [vmem:[%s2 + $0x68] sm:$0xff]
  %v525 = vld [vmem:[%s2 + $0x70] sm:$0xff]
  %v526 = vld [vmem:[%s2 + $0x78] sm:$0xff]
  %v527 = vld [vmem:[%s5] sm:$0xf]
  %v528 = vld [vmem:[%s5 + $0x4] sm:$0xf]
  %v529 = vld [vmem:[%s5 + $0x8] sm:$0xf]
  %v530 = vld [vmem:[%s5 + $0xc] sm:$0xf]
  %v531 = vld [vmem:[%s5 + $0x10] sm:$0xf]
  %v532 = vld [vmem:[%s5 + $0x14] sm:$0xf]
  %v533 = vld [vmem:[%s5 + $0x18] sm:$0xf]
  %v534 = vld [vmem:[%s5 + $0x1c] sm:$0xf]
  %v535 = vld [vmem:[%s5 + $0x20] sm:$0xf]
  %v536 = vld [vmem:[%s5 + $0x24] sm:$0xf]
  %v537 = vld [vmem:[%s5 + $0x28] sm:$0xf]
  %v538 = vld [vmem:[%s5 + $0x2c] sm:$0xf]
  %v539 = vld [vmem:[%s5 + $0x30] sm:$0xf]
  %v540 = vld [vmem:[%s5 + $0x34] sm:$0xf]
  %v541 = vld [vmem:[%s5 + $0x38] sm:$0xf]
  %v542 = vld [vmem:[%s5 + $0x3c] sm:$0xf]
  %v543 = vld [vmem:[%s5 + $0x40] sm:$0xf]
  %v544 = vld [vmem:[%s5 + $0x44] sm:$0xf]
  %v561 = vunpack.c.l.b16 %v511
  %v562 = vunpack.c.h.b16 %v511
  %v563 = vunpack.c.l.b16 %v512
  %v564 = vunpack.c.h.b16 %v512
  %v565 = vunpack.c.l.b16 %v513
  %v566 = vunpack.c.h.b16 %v513
  %v567 = vunpack.c.l.b16 %v514
  %v568 = vunpack.c.h.b16 %v514
  %v569 = vunpack.c.l.b16 %v515
  %v570 = vunpack.c.h.b16 %v515
  %v571 = vunpack.c.l.b16 %v516
  %v572 = vunpack.c.h.b16 %v516
  %v573 = vunpack.c.l.b16 %v517
  %v574 = vunpack.c.h.b16 %v517
  %v575 = vunpack.c.l.b16 %v518
  %v576 = vunpack.c.h.b16 %v518
  %v577 = vunpack.c.l.b16 %v519
  %v578 = vunpack.c.h.b16 %v519
  %v579 = vunpack.c.l.b16 %v520
  %v580 = vunpack.c.h.b16 %v520
  %v581 = vunpack.c.l.b16 %v521
  %v582 = vunpack.c.h.b16 %v521
  %v583 = vunpack.c.l.b16 %v522
  %v584 = vunpack.c.h.b16 %v522
  %v585 = vunpack.c.l.b16 %v523
  %v586 = vunpack.c.h.b16 %v523
  %v587 = vunpack.c.l.b16 %v524
  %v588 = vunpack.c.h.b16 %v524
  %v589 = vunpack.c.l.b16 %v525
  %v590 = vunpack.c.h.b16 %v525
  %v591 = vunpack.c.l.b16 %v526
  %v592 = vunpack.c.h.b16 %v526
  %v593 = vpack.c.b16 %v563, %v561
  %v594 = vpack.c.b16 %v564, %v562
  %v595 = vpack.c.b16 %v567, %v565
  %v596 = vpack.c.b16 %v568, %v566
  %v597 = vpack.c.b16 %v571, %v569
  %v598 = vpack.c.b16 %v572, %v570
  %v599 = vpack.c.b16 %v575, %v573
  %v600 = vpack.c.b16 %v576, %v574
  %v601 = vpack.c.b16 %v579, %v577
  %v602 = vpack.c.b16 %v580, %v578
  %v603 = vpack.c.b16 %v583, %v581
  %v604 = vpack.c.b16 %v584, %v582
  %v605 = vpack.c.b16 %v587, %v585
  %v606 = vpack.c.b16 %v588, %v586
  %v607 = vpack.c.b16 %v591, %v589
  %v608 = vpack.c.b16 %v592, %v590
  %v635 = vunpack.c.l.b16 %v527
  %v636 = vunpack.c.l.b16 %v528
  %v637 = vunpack.c.l.b16 %v529
  %v638 = vunpack.c.l.b16 %v530
  %v639 = vunpack.c.l.b16 %v531
  %v640 = vunpack.c.l.b16 %v532
  %v641 = vunpack.c.l.b16 %v533
  %v642 = vunpack.c.l.b16 %v534
  %v643 = vunpack.c.l.b16 %v535
  %v644 = vunpack.c.l.b16 %v536
  %v645 = vunpack.c.l.b16 %v537
  %v646 = vunpack.c.l.b16 %v538
  %v647 = vunpack.c.l.b16 %v539
  %v648 = vunpack.c.l.b16 %v540
  %v649 = vunpack.c.l.b16 %v541
  %v650 = vunpack.c.l.b16 %v542
  %v651 = vunpack.c.l.b16 %v543
  %v652 = vunpack.c.l.b16 %v544
  %v653 = vpack.c.b16 %v636, %v635
  %v654 = vpack.c.b16 %v638, %v637
  %v655 = vpack.c.b16 %v640, %v639
  %v656 = vpack.c.b16 %v642, %v641
  %v657 = vpack.c.b16 %v644, %v643
  %v658 = vpack.c.b16 %v646, %v645
  %v659 = vpack.c.b16 %v648, %v647
  %v660 = vpack.c.b16 %v650, %v649
  %v661 = vpack.c.b16 %v652, %v651
  %v672 = vsel %vm389, %v594, 0
  %v675 = vsel %vm389, %v596, 0
  %v678 = vsel %vm389, %v598, 0
  %v681 = vsel %vm389, %v600, 0
  %v684 = vsel %vm389, %v602, 0
  %v687 = vsel %vm389, %v604, 0
  %v690 = vsel %vm389, %v606, 0
  %v693 = vsel %vm389, %v608, 0
  %695 = vmatprep.subr.bf16.mxu0 0
  %696 = vmatpush1.bf16.msra.mxu0 %v653
  %697 = vmatprep.subr.bf16.mxu0 0
  %698 = vmatpush1.bf16.msra.mxu0 %v654
  %699 = vmatprep.subr.bf16.mxu0 0
  %700 = vmatpush1.bf16.msra.mxu0 %v655
  %701 = vmatprep.subr.bf16.mxu0 0
  %702 = vmatpush1.bf16.msra.mxu0 %v656
  %703 = vmatprep.subr.bf16.mxu0 0
  %704 = vmatpush1.bf16.msra.mxu0 %v657
  %705 = vmatprep.subr.bf16.mxu0 0
  %706 = vmatpush1.bf16.msra.mxu0 %v658
  %707 = vmatprep.subr.bf16.mxu0 0
  %708 = vmatpush1.bf16.msra.mxu0 %v659
  %709 = vmatprep.subr.bf16.mxu0 0
  %710 = vmatpush1.bf16.msra.mxu0 %v660
  %711 = vmatprep.subr.bf16.mxu0 0
  %712 = vmatpush1.bf16.msra.mxu0 %v661
  %713 = vmatprep.subr.bf16.mxu0 0
  %714 = vmatpush1.bf16.msra.mxu0 0
  %715 = vmatprep.subr.bf16.mxu0 0
  %716 = vmatpush1.bf16.msra.mxu0 0
  %717 = vmatprep.subr.bf16.mxu0 0
  %718 = vmatpush1.bf16.msra.mxu0 0
  %719 = vmatprep.subr.bf16.mxu0 0
  %720 = vmatpush1.bf16.msra.mxu0 0
  %721 = vmatprep.subr.bf16.mxu0 0
  %722 = vmatpush1.bf16.msra.mxu0 0
  %723 = vmatprep.subr.bf16.mxu0 0
  %724 = vmatpush1.bf16.msra.mxu0 0
  %725 = vmatprep.subr.bf16.mxu0 0
  %726 = vmatpush1.bf16.msra.mxu0 0
  %727 = vmatprep.mubr.bf16.mxu0 %v672
  %728 = vmatmul.mubr.bf16.gmra.mrb[0].mxu0 %v593
  %v729 = vpop.f32.mrb[0].mxu0
  %v730 = vadd.f32 0.0, %v729
  %v731 = vpop.f32.mrb[0].mxu0
  %v732 = vpop.f32.mrb[0].mxu0
  %v733 = vadd.f32 0.0, %v732
  %v734 = vpop.f32.mrb[0].mxu0
  %735 = vmatprep.mubr.bf16.mxu0 %v675
  %736 = vmatmul.mubr.bf16.gmra.mrb[0].mxu0 %v595
  %v737 = vpop.f32.mrb[0].mxu0
  %v738 = vadd.f32 0.0, %v737
  %v739 = vpop.f32.mrb[0].mxu0
  %v740 = vpop.f32.mrb[0].mxu0
  %v741 = vadd.f32 0.0, %v740
  %v742 = vpop.f32.mrb[0].mxu0
  %743 = vmatprep.mubr.bf16.mxu0 %v678
  %744 = vmatmul.mubr.bf16.gmra.mrb[0].mxu0 %v597
  %v745 = vpop.f32.mrb[0].mxu0
  %v746 = vadd.f32 0.0, %v745
  %v747 = vpop.f32.mrb[0].mxu0
  %v748 = vpop.f32.mrb[0].mxu0
  %v749 = vadd.f32 0.0, %v748
  %v750 = vpop.f32.mrb[0].mxu0
  %751 = vmatprep.mubr.bf16.mxu0 %v681
  %752 = vmatmul.mubr.bf16.gmra.mrb[0].mxu0 %v599
  %v753 = vpop.f32.mrb[0].mxu0
  %v754 = vadd.f32 0.0, %v753
  %v755 = vpop.f32.mrb[0].mxu0
  %v756 = vpop.f32.mrb[0].mxu0
  %v757 = vadd.f32 0.0, %v756
  %v758 = vpop.f32.mrb[0].mxu0
  %759 = vmatprep.mubr.bf16.mxu0 %v684
  %760 = vmatmul.mubr.bf16.gmra.mrb[0].mxu0 %v601
  %v761 = vpop.f32.mrb[0].mxu0
  %v762 = vadd.f32 0.0, %v761
  %v763 = vpop.f32.mrb[0].mxu0
  %v764 = vpop.f32.mrb[0].mxu0
  %v765 = vadd.f32 0.0, %v764
  %v766 = vpop.f32.mrb[0].mxu0
  %767 = vmatprep.mubr.bf16.mxu0 %v687
  %768 = vmatmul.mubr.bf16.gmra.mrb[0].mxu0 %v603
  %v769 = vpop.f32.mrb[0].mxu0
  %v770 = vadd.f32 0.0, %v769
  %v771 = vpop.f32.mrb[0].mxu0
  %v772 = vpop.f32.mrb[0].mxu0
  %v773 = vadd.f32 0.0, %v772
  %v774 = vpop.f32.mrb[0].mxu0
  %775 = vmatprep.mubr.bf16.mxu0 %v690
  %776 = vmatmul.mubr.bf16.gmra.mrb[0].mxu0 %v605
  %v777 = vpop.f32.mrb[0].mxu0
  %v778 = vadd.f32 0.0, %v777
  %v779 = vpop.f32.mrb[0].mxu0
  %v780 = vpop.f32.mrb[0].mxu0
  %v781 = vadd.f32 0.0, %v780
  %v782 = vpop.f32.mrb[0].mxu0
  %783 = vmatprep.mubr.bf16.mxu0 %v693
  %784 = vmatmul.mubr.bf16.gmra.mrb[0].mxu0 %v607
  %v785 = vpop.f32.mrb[0].mxu0
  %v786 = vadd.f32 0.0, %v785
  %v787 = vpop.f32.mrb[0].mxu0
  %v788 = vpop.f32.mrb[0].mxu0
  %v789 = vadd.f32 0.0, %v788
  %v790 = vpop.f32.mrb[0].mxu0
  %791 = vdwg.mxu0
  %v792 = vadd.f32 %v449, %v730
  %v793 = vadd.f32 %v452, %v733
  %v794 = vadd.f32 %v457, %v738
  %v795 = vadd.f32 %v460, %v741
  %v796 = vadd.f32 %v465, %v746
  %v797 = vadd.f32 %v468, %v749
  %v798 = vadd.f32 %v473, %v754
  %v799 = vadd.f32 %v476, %v757
  %v800 = vadd.f32 %v481, %v762
  %v801 = vadd.f32 %v484, %v765
  %v802 = vadd.f32 %v489, %v770
  %v803 = vadd.f32 %v492, %v773
  %v804 = vadd.f32 %v497, %v778
  %v805 = vadd.f32 %v500, %v781
  %v806 = vadd.f32 %v505, %v786
  %v807 = vadd.f32 %v508, %v789
  %v808 = vld [vmem:[%s6] sm:$0x1]
  %v810 = vlaneseq
  %v811 = vshrl.u32 %v810, 7
  %v812 = vsub.s32 0, %v811
  %v813 = vrot.slane %v808, %v812
  %v815 = vadd.f32 %v792, %v813
  %v816 = vadd.f32 %v793, %v813
  %v817 = vadd.f32 %v794, %v813
  %v818 = vadd.f32 %v795, %v813
  %v819 = vadd.f32 %v796, %v813
  %v820 = vadd.f32 %v797, %v813
  %v821 = vadd.f32 %v798, %v813
  %v822 = vadd.f32 %v799, %v813
  %v823 = vadd.f32 %v800, %v813
  %v824 = vadd.f32 %v801, %v813
  %v825 = vadd.f32 %v802, %v813
  %v826 = vadd.f32 %v803, %v813
  %v827 = vadd.f32 %v804, %v813
  %v828 = vadd.f32 %v805, %v813
  %v829 = vadd.f32 %v806, %v813
  %v830 = vadd.f32 %v807, %v813
  %v831 = vmax.f32 %v815, 0.0
  %v832 = vmax.f32 %v816, 0.0
  %v833 = vmax.f32 %v817, 0.0
  %v834 = vmax.f32 %v818, 0.0
  %v835 = vmax.f32 %v819, 0.0
  %v836 = vmax.f32 %v820, 0.0
  %v837 = vmax.f32 %v821, 0.0
  %v838 = vmax.f32 %v822, 0.0
  %v839 = vmax.f32 %v823, 0.0
  %v840 = vmax.f32 %v824, 0.0
  %v841 = vmax.f32 %v825, 0.0
  %v842 = vmax.f32 %v826, 0.0
  %v843 = vmax.f32 %v827, 0.0
  %v844 = vmax.f32 %v828, 0.0
  %v845 = vmax.f32 %v829, 0.0
  %v846 = vmax.f32 %v830, 0.0
  %v847 = vpack.c.bf16 %v832, %v831
  %v848 = vpack.c.bf16 %v834, %v833
  %v849 = vpack.c.bf16 %v836, %v835
  %v850 = vpack.c.bf16 %v838, %v837
  %v851 = vpack.c.bf16 %v840, %v839
  %v852 = vpack.c.bf16 %v842, %v841
  %v853 = vpack.c.bf16 %v844, %v843
  %v854 = vpack.c.bf16 %v846, %v845
  %v863 = vunpack.c.l.b16 %v847
  %v864 = vunpack.c.h.b16 %v847
  %v865 = vunpack.c.l.b16 %v848
  %v866 = vunpack.c.h.b16 %v848
  %v867 = vunpack.c.l.b16 %v849
  %v868 = vunpack.c.h.b16 %v849
  %v869 = vunpack.c.l.b16 %v850
  %v870 = vunpack.c.h.b16 %v850
  %v871 = vunpack.c.l.b16 %v851
  %v872 = vunpack.c.h.b16 %v851
  %v873 = vunpack.c.l.b16 %v852
  %v874 = vunpack.c.h.b16 %v852
  %v875 = vunpack.c.l.b16 %v853
  %v876 = vunpack.c.h.b16 %v853
  %v877 = vunpack.c.l.b16 %v854
  %v878 = vunpack.c.h.b16 %v854
  %v879 = vpack.c.b16 %v863, %v863
  %v880 = vpack.c.b16 %v864, %v864
  %v881 = vpack.c.b16 %v865, %v865
  %v882 = vpack.c.b16 %v866, %v866
  %v883 = vpack.c.b16 %v867, %v867
  %v884 = vpack.c.b16 %v868, %v868
  %v885 = vpack.c.b16 %v869, %v869
  %v886 = vpack.c.b16 %v870, %v870
  %v887 = vpack.c.b16 %v871, %v871
  %v888 = vpack.c.b16 %v872, %v872
  %v889 = vpack.c.b16 %v873, %v873
  %v890 = vpack.c.b16 %v874, %v874
  %v891 = vpack.c.b16 %v875, %v875
  %v892 = vpack.c.b16 %v876, %v876
  %v893 = vpack.c.b16 %v877, %v877
  %v894 = vpack.c.b16 %v878, %v878
  %vm911 = vcmask 60416
  %912 = vst.msk [vmem:[%s9] sm:$0xf] %vm911, %v879
  %913 = vst.msk [vmem:[%s9 + $0x4] sm:$0xf] %vm911, %v880
  %914 = vst.msk [vmem:[%s9 + $0x8] sm:$0xf] %vm911, %v881
  %915 = vst.msk [vmem:[%s9 + $0xc] sm:$0xf] %vm911, %v882
  %916 = vst.msk [vmem:[%s9 + $0x10] sm:$0xf] %vm911, %v883
  %917 = vst.msk [vmem:[%s9 + $0x14] sm:$0xf] %vm911, %v884
  %918 = vst.msk [vmem:[%s9 + $0x18] sm:$0xf] %vm911, %v885
  %919 = vst.msk [vmem:[%s9 + $0x1c] sm:$0xf] %vm911, %v886
  %920 = vst.msk [vmem:[%s9 + $0x20] sm:$0xf] %vm911, %v887
  %921 = vst.msk [vmem:[%s9 + $0x24] sm:$0xf] %vm911, %v888
  %922 = vst.msk [vmem:[%s9 + $0x28] sm:$0xf] %vm911, %v889
  %923 = vst.msk [vmem:[%s9 + $0x2c] sm:$0xf] %vm911, %v890
  %924 = vst.msk [vmem:[%s9 + $0x30] sm:$0xf] %vm911, %v891
  %925 = vst.msk [vmem:[%s9 + $0x34] sm:$0xf] %vm911, %v892
  %926 = vst.msk [vmem:[%s9 + $0x38] sm:$0xf] %vm911, %v893
  %927 = vst.msk [vmem:[%s9 + $0x3c] sm:$0xf] %vm911, %v894
  %v928 = vld [vmem:[%s7] sm:$0xff]
  %v929 = vld [vmem:[%s8] sm:$0x1]
  %v931 = vlaneseq
  %v932 = vshrl.u32 %v931, 7
  %v933 = vsub.s32 0, %v932
  %v934 = vrot.slane %v929, %v933
  %vm936 = vcmask 64512
  %v938 = vsel %vm936, %v831, 0
  %v941 = vsel %vm936, %v832, 0
  %v944 = vsel %vm936, %v833, 0
  %v947 = vsel %vm936, %v834, 0
  %v950 = vsel %vm936, %v835, 0
  %v953 = vsel %vm936, %v836, 0
  %v956 = vsel %vm936, %v837, 0
  %v959 = vsel %vm936, %v838, 0
  %v962 = vsel %vm936, %v839, 0
  %v965 = vsel %vm936, %v840, 0
  %v968 = vsel %vm936, %v841, 0
  %v971 = vsel %vm936, %v842, 0
  %v974 = vsel %vm936, %v843, 0
  %v977 = vsel %vm936, %v844, 0
  %v980 = vsel %vm936, %v845, 0
  %v983 = vsel %vm936, %v846, 0
  %985 = vmatprep.subr.mxu0 0.0
  %986 = vmatpush1.msra.mxu0 %v928
  %987 = vmatprep.subr.mxu0 0.0
  %988 = vmatpush1.msra.mxu0 0.0
  %989 = vmatprep.subr.mxu0 0.0
  %990 = vmatpush1.msra.mxu0 0.0
  %991 = vmatprep.subr.mxu0 0.0
  %992 = vmatpush1.msra.mxu0 0.0
  %993 = vmatprep.subr.mxu0 0.0
  %994 = vmatpush1.msra.mxu0 0.0
  %995 = vmatprep.subr.mxu0 0.0
  %996 = vmatpush1.msra.mxu0 0.0
  %997 = vmatprep.subr.mxu0 0.0
  %998 = vmatpush1.msra.mxu0 0.0
  %999 = vmatprep.subr.mxu0 0.0
  %1000 = vmatpush1.msra.mxu0 0.0
  %1001 = vmatprep.subr.mxu0 0.0
  %1002 = vmatpush1.msra.mxu0 0.0
  %1003 = vmatprep.subr.mxu0 0.0
  %1004 = vmatpush1.msra.mxu0 0.0
  %1005 = vmatprep.subr.mxu0 0.0
  %1006 = vmatpush1.msra.mxu0 0.0
  %1007 = vmatprep.subr.mxu0 0.0
  %1008 = vmatpush1.msra.mxu0 0.0
  %1009 = vmatprep.subr.mxu0 0.0
  %1010 = vmatpush1.msra.mxu0 0.0
  %1011 = vmatprep.subr.mxu0 0.0
  %1012 = vmatpush1.msra.mxu0 0.0
  %1013 = vmatprep.subr.mxu0 0.0
  %1014 = vmatpush1.msra.mxu0 0.0
  %1015 = vmatprep.subr.mxu0 0.0
  %1016 = vmatpush1.msra.mxu0 0.0
  %1017 = vmatprep.subr.mxu0 0.0
  %1018 = vmatpush1.msra.mxu0 0.0
  %1019 = vmatprep.subr.mxu0 0.0
  %1020 = vmatpush1.msra.mxu0 0.0
  %1021 = vmatprep.subr.mxu0 0.0
  %1022 = vmatpush1.msra.mxu0 0.0
  %1023 = vmatprep.subr.mxu0 0.0
  %1024 = vmatpush1.msra.mxu0 0.0
  %1025 = vmatprep.subr.mxu0 0.0
  %1026 = vmatpush1.msra.mxu0 0.0
  %1027 = vmatprep.subr.mxu0 0.0
  %1028 = vmatpush1.msra.mxu0 0.0
  %1029 = vmatprep.subr.mxu0 0.0
  %1030 = vmatpush1.msra.mxu0 0.0
  %1031 = vmatprep.subr.mxu0 0.0
  %1032 = vmatpush1.msra.mxu0 0.0
  %1033 = vmatprep.subr.mxu0 0.0
  %1034 = vmatpush1.msra.mxu0 0.0
  %1035 = vmatprep.subr.mxu0 0.0
  %1036 = vmatpush1.msra.mxu0 0.0
  %1037 = vmatprep.subr.mxu0 0.0
  %1038 = vmatpush1.msra.mxu0 0.0
  %1039 = vmatprep.subr.mxu0 0.0
  %1040 = vmatpush1.msra.mxu0 0.0
  %1041 = vmatprep.subr.mxu0 0.0
  %1042 = vmatpush1.msra.mxu0 0.0
  %1043 = vmatprep.subr.mxu0 0.0
  %1044 = vmatpush1.msra.mxu0 0.0
  %1045 = vmatprep.subr.mxu0 0.0
  %1046 = vmatpush1.msra.mxu0 0.0
  %1047 = vmatprep.subr.mxu0 0.0
  %1048 = vmatpush1.msra.mxu0 0.0
  %1049 = vmatprep.mubr.f32.mxu0 0.0
  %1050 = vmatmul.mubr.f32.gmra.mrb[0].mxu0 %v938
  %v1051 = vpop.f32.mrb[0].mxu0
  %v1052 = vadd.f32 %v934, %v1051
  %v1053 = vpop.f32.mrb[0].mxu0
  %1054 = vmatprep.mubr.f32.mxu0 0.0
  %1055 = vmatmul.mubr.f32.gmra.mrb[0].mxu0 %v941
  %v1056 = vpop.f32.mrb[0].mxu0
  %v1057 = vadd.f32 %v934, %v1056
  %v1058 = vpop.f32.mrb[0].mxu0
  %1059 = vmatprep.mubr.f32.mxu0 0.0
  %1060 = vmatmul.mubr.f32.gmra.mrb[0].mxu0 %v944
  %v1061 = vpop.f32.mrb[0].mxu0
  %v1062 = vadd.f32 %v934, %v1061
  %v1063 = vpop.f32.mrb[0].mxu0
  %1064 = vmatprep.mubr.f32.mxu0 0.0
  %1065 = vmatmul.mubr.f32.gmra.mrb[0].mxu0 %v947
  %v1066 = vpop.f32.mrb[0].mxu0
  %v1067 = vadd.f32 %v934, %v1066
  %v1068 = vpop.f32.mrb[0].mxu0
  %1069 = vmatprep.mubr.f32.mxu0 0.0
  %1070 = vmatmul.mubr.f32.gmra.mrb[0].mxu0 %v950
  %v1071 = vpop.f32.mrb[0].mxu0
  %v1072 = vadd.f32 %v934, %v1071
  %v1073 = vpop.f32.mrb[0].mxu0
  %1074 = vmatprep.mubr.f32.mxu0 0.0
  %1075 = vmatmul.mubr.f32.gmra.mrb[0].mxu0 %v953
  %v1076 = vpop.f32.mrb[0].mxu0
  %v1077 = vadd.f32 %v934, %v1076
  %v1078 = vpop.f32.mrb[0].mxu0
  %1079 = vmatprep.mubr.f32.mxu0 0.0
  %1080 = vmatmul.mubr.f32.gmra.mrb[0].mxu0 %v956
  %v1081 = vpop.f32.mrb[0].mxu0
  %v1082 = vadd.f32 %v934, %v1081
  %v1083 = vpop.f32.mrb[0].mxu0
  %1084 = vmatprep.mubr.f32.mxu0 0.0
  %1085 = vmatmul.mubr.f32.gmra.mrb[0].mxu0 %v959
  %v1086 = vpop.f32.mrb[0].mxu0
  %v1087 = vadd.f32 %v934, %v1086
  %v1088 = vpop.f32.mrb[0].mxu0
  %1089 = vmatprep.mubr.f32.mxu0 0.0
  %1090 = vmatmul.mubr.f32.gmra.mrb[0].mxu0 %v962
  %v1091 = vpop.f32.mrb[0].mxu0
  %v1092 = vadd.f32 %v934, %v1091
  %v1093 = vpop.f32.mrb[0].mxu0
  %1094 = vmatprep.mubr.f32.mxu0 0.0
  %1095 = vmatmul.mubr.f32.gmra.mrb[0].mxu0 %v965
  %v1096 = vpop.f32.mrb[0].mxu0
  %v1097 = vadd.f32 %v934, %v1096
  %v1098 = vpop.f32.mrb[0].mxu0
  %1099 = vmatprep.mubr.f32.mxu0 0.0
  %1100 = vmatmul.mubr.f32.gmra.mrb[0].mxu0 %v968
  %v1101 = vpop.f32.mrb[0].mxu0
  %v1102 = vadd.f32 %v934, %v1101
  %v1103 = vpop.f32.mrb[0].mxu0
  %1104 = vmatprep.mubr.f32.mxu0 0.0
  %1105 = vmatmul.mubr.f32.gmra.mrb[0].mxu0 %v971
  %v1106 = vpop.f32.mrb[0].mxu0
  %v1107 = vadd.f32 %v934, %v1106
  %v1108 = vpop.f32.mrb[0].mxu0
  %1109 = vmatprep.mubr.f32.mxu0 0.0
  %1110 = vmatmul.mubr.f32.gmra.mrb[0].mxu0 %v974
  %v1111 = vpop.f32.mrb[0].mxu0
  %v1112 = vadd.f32 %v934, %v1111
  %v1113 = vpop.f32.mrb[0].mxu0
  %1114 = vmatprep.mubr.f32.mxu0 0.0
  %1115 = vmatmul.mubr.f32.gmra.mrb[0].mxu0 %v977
  %v1116 = vpop.f32.mrb[0].mxu0
  %v1117 = vadd.f32 %v934, %v1116
  %v1118 = vpop.f32.mrb[0].mxu0
  %1119 = vmatprep.mubr.f32.mxu0 0.0
  %1120 = vmatmul.mubr.f32.gmra.mrb[0].mxu0 %v980
  %v1121 = vpop.f32.mrb[0].mxu0
  %v1122 = vadd.f32 %v934, %v1121
  %v1123 = vpop.f32.mrb[0].mxu0
  %1124 = vmatprep.mubr.f32.mxu0 0.0
  %1125 = vmatmul.mubr.f32.gmra.mrb[0].mxu0 %v983
  %v1126 = vpop.f32.mrb[0].mxu0
  %v1127 = vadd.f32 %v934, %v1126
  %v1128 = vpop.f32.mrb[0].mxu0
  %1129 = vdwg.mxu0
  %v1130 = vtanh.pop %v1052
  %v1131 = vtanh.pop %v1057
  %v1132 = vtanh.pop %v1062
  %v1133 = vtanh.pop %v1067
  %v1134 = vtanh.pop %v1072
  %v1135 = vtanh.pop %v1077
  %v1136 = vtanh.pop %v1082
  %v1137 = vtanh.pop %v1087
  %v1138 = vtanh.pop %v1092
  %v1139 = vtanh.pop %v1097
  %v1140 = vtanh.pop %v1102
  %v1141 = vtanh.pop %v1107
  %v1142 = vtanh.pop %v1112
  %v1143 = vtanh.pop %v1117
  %v1144 = vtanh.pop %v1122
  %v1145 = vtanh.pop %v1127
  %v1146 = vmul.f32 %v1130, 256.0
  %v1147 = vmul.f32 %v1131, 256.0
  %v1148 = vmul.f32 %v1132, 256.0
  %v1149 = vmul.f32 %v1133, 256.0
  %v1150 = vmul.f32 %v1134, 256.0
  %v1151 = vmul.f32 %v1135, 256.0
  %v1152 = vmul.f32 %v1136, 256.0
  %v1153 = vmul.f32 %v1137, 256.0
  %v1154 = vmul.f32 %v1138, 256.0
  %v1155 = vmul.f32 %v1139, 256.0
  %v1156 = vmul.f32 %v1140, 256.0
  %v1157 = vmul.f32 %v1141, 256.0
  %v1158 = vmul.f32 %v1142, 256.0
  %v1159 = vmul.f32 %v1143, 256.0
  %v1160 = vmul.f32 %v1144, 256.0
  %v1161 = vmul.f32 %v1145, 256.0
  %vm1162 = vcmask 15360
  %1163 = vst.msk [vmem:[%s10] sm:$0xff] %vm1162, %v1146
  %1164 = vst.msk [vmem:[%s10 + $0x8] sm:$0xff] %vm1162, %v1147
  %1165 = vst.msk [vmem:[%s10 + $0x10] sm:$0xff] %vm1162, %v1148
  %1166 = vst.msk [vmem:[%s10 + $0x18] sm:$0xff] %vm1162, %v1149
  %1167 = vst.msk [vmem:[%s10 + $0x20] sm:$0xff] %vm1162, %v1150
  %1168 = vst.msk [vmem:[%s10 + $0x28] sm:$0xff] %vm1162, %v1151
  %1169 = vst.msk [vmem:[%s10 + $0x30] sm:$0xff] %vm1162, %v1152
  %1170 = vst.msk [vmem:[%s10 + $0x38] sm:$0xff] %vm1162, %v1153
  %1171 = vst.msk [vmem:[%s10 + $0x40] sm:$0xff] %vm1162, %v1154
  %1172 = vst.msk [vmem:[%s10 + $0x48] sm:$0xff] %vm1162, %v1155
  %1173 = vst.msk [vmem:[%s10 + $0x50] sm:$0xff] %vm1162, %v1156
  %1174 = vst.msk [vmem:[%s10 + $0x58] sm:$0xff] %vm1162, %v1157
  %1175 = vst.msk [vmem:[%s10 + $0x60] sm:$0xff] %vm1162, %v1158
  %1176 = vst.msk [vmem:[%s10 + $0x68] sm:$0xff] %vm1162, %v1159
  %1177 = vst.msk [vmem:[%s10 + $0x70] sm:$0xff] %vm1162, %v1160
  %1178 = vst.msk [vmem:[%s10 + $0x78] sm:$0xff] %vm1162, %v1161
  // Predicated region
  $region38: #{evflownet_forward.22} parent=0 // pred_check
    _
  $region39: #{evflownet_forward.22} parent=0 // pred_check_branch
    %1180 = sbr.rel (0) target = $region41
  $region40: #{evflownet_forward.22} parent=0 // pred_region
    _
  $region41: #{evflownet_forward.22} parent=0 // pred_fallthru
    _
  // Predicated region
  $region42: #{evflownet_forward.22} parent=0 // pred_check
    _
  $region43: #{evflownet_forward.22} parent=0 // pred_check_branch
    %1182 = sbr.rel (0) target = $region45
  $region44: #{evflownet_forward.22} parent=0 // pred_region
    _
  $region45: #{evflownet_forward.22} parent=0 // pred_fallthru
    _
  // Predicated region
  $region46: #{evflownet_forward.22} parent=0 // pred_check
    _
  $region47: #{evflownet_forward.22} parent=0 // pred_check_branch
    %1184 = sbr.rel (0) target = $region49
  $region48: #{evflownet_forward.22} parent=0 // pred_region
    _
  $region49: #{evflownet_forward.22} parent=0 // pred_fallthru
    _
  // Predicated region
  $region50: #{evflownet_forward.22} parent=0 // pred_check
    _
  $region51: #{evflownet_forward.22} parent=0 // pred_check_branch
    %1186 = sbr.rel (0) target = $region53
  $region52: #{evflownet_forward.22} parent=0 // pred_region
    _
  $region53: #{evflownet_forward.22} parent=0 // pred_fallthru
    _

// kernel: evflownet_forward.23
$region0: #{evflownet_forward.23}
  #allocation0 [shape = 'u32[]', space=smem, size = 0x4, offset = 0x4, fixed_abs, tag = 'smem constant byte address 0x4 - core index']
  #allocation1 [shape = 'u32[144,128]{1,0:T(1,128)}', space=vmem, size = 0x12000, scoped, tag = 'internal scratch']
  %s0 = inlined_call_operand.vmem [shape: bf16[512,72], index: 0, kind: input, shape index: {}]
  %s1 = inlined_call_operand.vmem [shape: bf16[512,18], index: 1, kind: input, shape index: {}]
  %s2 = inlined_call_operand.vmem [shape: bf16[512,72], index: 2, kind: input, shape index: {}]
  %s3 = inlined_call_operand.vmem [shape: bf16[72,4], index: 3, kind: input, shape index: {}]
  %s4 = inlined_call_operand.vmem [shape: bf16[18,4], index: 4, kind: input, shape index: {}]
  %s5 = inlined_call_operand.vmem [shape: bf16[72,4], index: 5, kind: input, shape index: {}]
  %s6 = inlined_call_operand.vmem [shape: f32[1,4], index: 6, kind: input, shape index: {}]
  %s7 = inlined_call_operand.vmem [shape: f32[4,2], index: 7, kind: input, shape index: {}]
  %s8 = inlined_call_operand.vmem [shape: f32[1,2], index: 8, kind: input, shape index: {}]
  %s9 = inlined_call_operand.hbm [shape: bf16[512,4], index: 9, kind: output, shape index: {0}]
  %s10 = inlined_call_operand.vmem [shape: f32[512,2], index: 10, kind: output, shape index: {1}]
  %11 = xla_tuple %s9, %s10
  %s12 = sld [smem:[#allocation0]]
  $region54: #{evflownet_forward.23} parent=0
    _
  %s14 = ssub.s32 1, %s12
  %s15 = scalar_select 0, %s14, %s12
  $region1: #{evflownet_forward.23} parent=0
    #allocation2 [shape = 'u8[131072]{0}', space=vmem, size = 0x20000, scoped, tag = 'output window, operand 0, single buffered']
    #allocation3 [shape = 's32[1]{0}', space=sflag, size = 0x4, scoped, tag = 'scoped memory for evflownet_forward.23']
    %16 = vsyncpa [#allocation3], 0
    // Predicated region
    $region2: #{evflownet_forward.23} parent=1 // pred_check
      _
    $region3: #{evflownet_forward.23} parent=1 // pred_check_branch
      %18 = sbr.rel (0) target = $region5
    $region4: #{evflownet_forward.23} parent=1 // pred_region
      _
    $region5: #{evflownet_forward.23} parent=1 // pred_fallthru
      _
    // Predicated region
    $region6: #{evflownet_forward.23} parent=1 // pred_check
      _
    $region7: #{evflownet_forward.23} parent=1 // pred_check_branch
      %20 = sbr.rel (0) target = $region9
    $region8: #{evflownet_forward.23} parent=1 // pred_region
      _
    $region9: #{evflownet_forward.23} parent=1 // pred_fallthru
      _
    // Predicated region
    $region10: #{evflownet_forward.23} parent=1 // pred_check
      _
    $region11: #{evflownet_forward.23} parent=1 // pred_check_branch
      %22 = sbr.rel (0) target = $region13
    $region12: #{evflownet_forward.23} parent=1 // pred_region
      _
    $region13: #{evflownet_forward.23} parent=1 // pred_fallthru
      _
    // Predicated region
    $region14: #{evflownet_forward.23} parent=1 // pred_check
      _
    $region15: #{evflownet_forward.23} parent=1 // pred_check_branch
      %24 = sbr.rel (0) target = $region17
    $region16: #{evflownet_forward.23} parent=1 // pred_region
      _
    $region17: #{evflownet_forward.23} parent=1 // pred_fallthru
      _
    // Predicated region
    $region18: #{evflownet_forward.23} parent=1 // pred_check
      _
    $region19: #{evflownet_forward.23} parent=1 // pred_check_branch
      %26 = sbr.rel (0) target = $region21
    $region20: #{evflownet_forward.23} parent=1 // pred_region
      _
    $region21: #{evflownet_forward.23} parent=1 // pred_fallthru
      _
    // Predicated region
    $region22: #{evflownet_forward.23} parent=1 // pred_check
      _
    $region23: #{evflownet_forward.23} parent=1 // pred_check_branch
      %28 = sbr.rel (0) target = $region25
    $region24: #{evflownet_forward.23} parent=1 // pred_region
      _
    $region25: #{evflownet_forward.23} parent=1 // pred_fallthru
      _
    // Predicated region
    $region26: #{evflownet_forward.23} parent=1 // pred_check
      _
    $region27: #{evflownet_forward.23} parent=1 // pred_check_branch
      %30 = sbr.rel (0) target = $region29
    $region28: #{evflownet_forward.23} parent=1 // pred_region
      _
    $region29: #{evflownet_forward.23} parent=1 // pred_fallthru
      _
    // Predicated region
    $region30: #{evflownet_forward.23} parent=1 // pred_check
      _
    $region31: #{evflownet_forward.23} parent=1 // pred_check_branch
      %32 = sbr.rel (0) target = $region33
    $region32: #{evflownet_forward.23} parent=1 // pred_region
      _
    $region33: #{evflownet_forward.23} parent=1 // pred_fallthru
      _
    // Predicated region
    $region34: #{evflownet_forward.23} parent=1 // pred_check
      _
    $region35: #{evflownet_forward.23} parent=1 // pred_check_branch
      %34 = sbr.rel (0) target = $region37
    $region36: #{evflownet_forward.23} parent=1 // pred_region
      _
    $region37: #{evflownet_forward.23} parent=1 // pred_fallthru
      _
    %v36 = vld [vmem:[%s0] sm:$0xf]
    %v37 = vld [vmem:[%s0 + $0x4] sm:$0xf]
    %v38 = vld [vmem:[%s0 + $0x8] sm:$0xf]
    %v39 = vld [vmem:[%s0 + $0xc] sm:$0xf]
    %v40 = vld [vmem:[%s0 + $0x10] sm:$0xf]
    %v41 = vld [vmem:[%s0 + $0x14] sm:$0xf]
    %v42 = vld [vmem:[%s0 + $0x18] sm:$0xf]
    %v43 = vld [vmem:[%s0 + $0x1c] sm:$0xf]
    %v44 = vld [vmem:[%s0 + $0x20] sm:$0xf]
    %v45 = vld [vmem:[%s0 + $0x24] sm:$0xf]
    %v46 = vld [vmem:[%s0 + $0x28] sm:$0xf]
    %v47 = vld [vmem:[%s0 + $0x2c] sm:$0xf]
    %v48 = vld [vmem:[%s0 + $0x30] sm:$0xf]
    %v49 = vld [vmem:[%s0 + $0x34] sm:$0xf]
    %v50 = vld [vmem:[%s0 + $0x38] sm:$0xf]
    %v51 = vld [vmem:[%s0 + $0x3c] sm:$0xf]
    %v52 = vld [vmem:[%s0 + $0x40] sm:$0xf]
    %v53 = vld [vmem:[%s0 + $0x44] sm:$0xf]
    %v54 = vld [vmem:[%s0 + $0x48] sm:$0xf]
    %v55 = vld [vmem:[%s0 + $0x4c] sm:$0xf]
    %v56 = vld [vmem:[%s0 + $0x50] sm:$0xf]
    %v57 = vld [vmem:[%s0 + $0x54] sm:$0xf]
    %v58 = vld [vmem:[%s0 + $0x58] sm:$0xf]
    %v59 = vld [vmem:[%s0 + $0x5c] sm:$0xf]
    %v60 = vld [vmem:[%s0 + $0x60] sm:$0xf]
    %v61 = vld [vmem:[%s0 + $0x64] sm:$0xf]
    %v62 = vld [vmem:[%s0 + $0x68] sm:$0xf]
    %v63 = vld [vmem:[%s0 + $0x6c] sm:$0xf]
    %v64 = vld [vmem:[%s0 + $0x70] sm:$0xf]
    %v65 = vld [vmem:[%s0 + $0x74] sm:$0xf]
    %v66 = vld [vmem:[%s0 + $0x78] sm:$0xf]
    %v67 = vld [vmem:[%s0 + $0x7c] sm:$0xf]
    %v68 = vld [vmem:[%s0 + $0x80] sm:$0xf]
    %v69 = vld [vmem:[%s0 + $0x84] sm:$0xf]
    %v70 = vld [vmem:[%s0 + $0x88] sm:$0xf]
    %v71 = vld [vmem:[%s0 + $0x8c] sm:$0xf]
    %v72 = vld [vmem:[%s0 + $0x90] sm:$0xf]
    %v73 = vld [vmem:[%s0 + $0x94] sm:$0xf]
    %v74 = vld [vmem:[%s0 + $0x98] sm:$0xf]
    %v75 = vld [vmem:[%s0 + $0x9c] sm:$0xf]
    %v76 = vld [vmem:[%s0 + $0xa0] sm:$0xf]
    %v77 = vld [vmem:[%s0 + $0xa4] sm:$0xf]
    %v78 = vld [vmem:[%s0 + $0xa8] sm:$0xf]
    %v79 = vld [vmem:[%s0 + $0xac] sm:$0xf]
    %v80 = vld [vmem:[%s0 + $0xb0] sm:$0xf]
    %v81 = vld [vmem:[%s0 + $0xb4] sm:$0xf]
    %v82 = vld [vmem:[%s0 + $0xb8] sm:$0xf]
    %v83 = vld [vmem:[%s0 + $0xbc] sm:$0xf]
    %v84 = vld [vmem:[%s0 + $0xc0] sm:$0xf]
    %v85 = vld [vmem:[%s0 + $0xc4] sm:$0xf]
    %v86 = vld [vmem:[%s0 + $0xc8] sm:$0xf]
    %v87 = vld [vmem:[%s0 + $0xcc] sm:$0xf]
    %v88 = vld [vmem:[%s0 + $0xd0] sm:$0xf]
    %v89 = vld [vmem:[%s0 + $0xd4] sm:$0xf]
    %v90 = vld [vmem:[%s0 + $0xd8] sm:$0xf]
    %v91 = vld [vmem:[%s0 + $0xdc] sm:$0xf]
    %v92 = vld [vmem:[%s0 + $0xe0] sm:$0xf]
    %v93 = vld [vmem:[%s0 + $0xe4] sm:$0xf]
    %v94 = vld [vmem:[%s0 + $0xe8] sm:$0xf]
    %v95 = vld [vmem:[%s0 + $0xec] sm:$0xf]
    %v96 = vld [vmem:[%s0 + $0xf0] sm:$0xf]
    %v97 = vld [vmem:[%s0 + $0xf4] sm:$0xf]
    %v98 = vld [vmem:[%s0 + $0xf8] sm:$0xf]
    %v99 = vld [vmem:[%s0 + $0xfc] sm:$0xf]
    %v100 = vld [vmem:[%s3] sm:$0xf]
    %v101 = vld [vmem:[%s3 + $0x4] sm:$0xf]
    %v102 = vld [vmem:[%s3 + $0x8] sm:$0xf]
    %v103 = vld [vmem:[%s3 + $0xc] sm:$0xf]
    %v104 = vld [vmem:[%s3 + $0x10] sm:$0xf]
    %v105 = vld [vmem:[%s3 + $0x14] sm:$0xf]
    %v106 = vld [vmem:[%s3 + $0x18] sm:$0xf]
    %v107 = vld [vmem:[%s3 + $0x1c] sm:$0xf]
    %v108 = vld [vmem:[%s3 + $0x20] sm:$0xf]
    %v109 = vld [vmem:[%s1] sm:$0xf]
    %v110 = vld [vmem:[%s1 + $0x4] sm:$0xf]
    %v111 = vld [vmem:[%s1 + $0x8] sm:$0xf]
    %v112 = vld [vmem:[%s1 + $0xc] sm:$0xf]
    %v113 = vld [vmem:[%s1 + $0x10] sm:$0xf]
    %v114 = vld [vmem:[%s1 + $0x14] sm:$0xf]
    %v115 = vld [vmem:[%s1 + $0x18] sm:$0xf]
    %v116 = vld [vmem:[%s1 + $0x1c] sm:$0xf]
    %v117 = vld [vmem:[%s1 + $0x20] sm:$0xf]
    %v118 = vld [vmem:[%s1 + $0x24] sm:$0xf]
    %v119 = vld [vmem:[%s1 + $0x28] sm:$0xf]
    %v120 = vld [vmem:[%s1 + $0x2c] sm:$0xf]
    %v121 = vld [vmem:[%s1 + $0x30] sm:$0xf]
    %v122 = vld [vmem:[%s1 + $0x34] sm:$0xf]
    %v123 = vld [vmem:[%s1 + $0x38] sm:$0xf]
    %v124 = vld [vmem:[%s1 + $0x3c] sm:$0xf]
    %v125 = vld [vmem:[%s1 + $0x40] sm:$0xf]
    %v126 = vld [vmem:[%s1 + $0x44] sm:$0xf]
    %v127 = vld [vmem:[%s1 + $0x48] sm:$0xf]
    %v128 = vld [vmem:[%s1 + $0x4c] sm:$0xf]
    %v129 = vld [vmem:[%s1 + $0x50] sm:$0xf]
    %v130 = vld [vmem:[%s1 + $0x54] sm:$0xf]
    %v131 = vld [vmem:[%s1 + $0x58] sm:$0xf]
    %v132 = vld [vmem:[%s1 + $0x5c] sm:$0xf]
    %v133 = vld [vmem:[%s1 + $0x60] sm:$0xf]
    %v134 = vld [vmem:[%s1 + $0x64] sm:$0xf]
    %v135 = vld [vmem:[%s1 + $0x68] sm:$0xf]
    %v136 = vld [vmem:[%s1 + $0x6c] sm:$0xf]
    %v137 = vld [vmem:[%s1 + $0x70] sm:$0xf]
    %v138 = vld [vmem:[%s1 + $0x74] sm:$0xf]
    %v139 = vld [vmem:[%s1 + $0x78] sm:$0xf]
    %v140 = vld [vmem:[%s1 + $0x7c] sm:$0xf]
    %v141 = vld [vmem:[%s1 + $0x80] sm:$0xf]
    %v142 = vld [vmem:[%s1 + $0x84] sm:$0xf]
    %v143 = vld [vmem:[%s1 + $0x88] sm:$0xf]
    %v144 = vld [vmem:[%s1 + $0x8c] sm:$0xf]
    %v145 = vld [vmem:[%s1 + $0x90] sm:$0xf]
    %v146 = vld [vmem:[%s1 + $0x94] sm:$0xf]
    %v147 = vld [vmem:[%s1 + $0x98] sm:$0xf]
    %v148 = vld [vmem:[%s1 + $0x9c] sm:$0xf]
    %v149 = vld [vmem:[%s1 + $0xa0] sm:$0xf]
    %v150 = vld [vmem:[%s1 + $0xa4] sm:$0xf]
    %v151 = vld [vmem:[%s1 + $0xa8] sm:$0xf]
    %v152 = vld [vmem:[%s1 + $0xac] sm:$0xf]
    %v153 = vld [vmem:[%s1 + $0xb0] sm:$0xf]
    %v154 = vld [vmem:[%s1 + $0xb4] sm:$0xf]
    %v155 = vld [vmem:[%s1 + $0xb8] sm:$0xf]
    %v156 = vld [vmem:[%s1 + $0xbc] sm:$0xf]
    %v157 = vld [vmem:[%s1 + $0xc0] sm:$0xf]
    %v158 = vld [vmem:[%s1 + $0xc4] sm:$0xf]
    %v159 = vld [vmem:[%s1 + $0xc8] sm:$0xf]
    %v160 = vld [vmem:[%s1 + $0xcc] sm:$0xf]
    %v161 = vld [vmem:[%s1 + $0xd0] sm:$0xf]
    %v162 = vld [vmem:[%s1 + $0xd4] sm:$0xf]
    %v163 = vld [vmem:[%s1 + $0xd8] sm:$0xf]
    %v164 = vld [vmem:[%s1 + $0xdc] sm:$0xf]
    %v165 = vld [vmem:[%s1 + $0xe0] sm:$0xf]
    %v166 = vld [vmem:[%s1 + $0xe4] sm:$0xf]
    %v167 = vld [vmem:[%s1 + $0xe8] sm:$0xf]
    %v168 = vld [vmem:[%s1 + $0xec] sm:$0xf]
    %v169 = vld [vmem:[%s1 + $0xf0] sm:$0xf]
    %v170 = vld [vmem:[%s1 + $0xf4] sm:$0xf]
    %v171 = vld [vmem:[%s1 + $0xf8] sm:$0xf]
    %v172 = vld [vmem:[%s1 + $0xfc] sm:$0xf]
    %v173 = vld [vmem:[%s4] sm:$0xf]
    %v174 = vld [vmem:[%s4 + $0x4] sm:$0xf]
    %v175 = vld [vmem:[%s4 + $0x8] sm:$0x1]
    %v240 = vunpack.c.l.b16 %v109
    %v241 = vunpack.c.l.b16 %v110
    %v242 = vunpack.c.l.b16 %v111
    %v243 = vunpack.c.l.b16 %v112
    %v244 = vunpack.c.l.b16 %v113
    %v245 = vunpack.c.l.b16 %v114
    %v246 = vunpack.c.l.b16 %v115
    %v247 = vunpack.c.l.b16 %v116
    %v248 = vunpack.c.l.b16 %v117
    %v249 = vunpack.c.l.b16 %v118
    %v250 = vunpack.c.l.b16 %v119
    %v251 = vunpack.c.l.b16 %v120
    %v252 = vunpack.c.l.b16 %v121
    %v253 = vunpack.c.l.b16 %v122
    %v254 = vunpack.c.l.b16 %v123
    %v255 = vunpack.c.l.b16 %v124
    %v256 = vunpack.c.l.b16 %v125
    %v257 = vunpack.c.l.b16 %v126
    %v258 = vunpack.c.l.b16 %v127
    %v259 = vunpack.c.l.b16 %v128
    %v260 = vunpack.c.l.b16 %v129
    %v261 = vunpack.c.l.b16 %v130
    %v262 = vunpack.c.l.b16 %v131
    %v263 = vunpack.c.l.b16 %v132
    %v264 = vunpack.c.l.b16 %v133
    %v265 = vunpack.c.l.b16 %v134
    %v266 = vunpack.c.l.b16 %v135
    %v267 = vunpack.c.l.b16 %v136
    %v268 = vunpack.c.l.b16 %v137
    %v269 = vunpack.c.l.b16 %v138
    %v270 = vunpack.c.l.b16 %v139
    %v271 = vunpack.c.l.b16 %v140
    %v272 = vunpack.c.l.b16 %v141
    %v273 = vunpack.c.l.b16 %v142
    %v274 = vunpack.c.l.b16 %v143
    %v275 = vunpack.c.l.b16 %v144
    %v276 = vunpack.c.l.b16 %v145
    %v277 = vunpack.c.l.b16 %v146
    %v278 = vunpack.c.l.b16 %v147
    %v279 = vunpack.c.l.b16 %v148
    %v280 = vunpack.c.l.b16 %v149
    %v281 = vunpack.c.l.b16 %v150
    %v282 = vunpack.c.l.b16 %v151
    %v283 = vunpack.c.l.b16 %v152
    %v284 = vunpack.c.l.b16 %v153
    %v285 = vunpack.c.l.b16 %v154
    %v286 = vunpack.c.l.b16 %v155
    %v287 = vunpack.c.l.b16 %v156
    %v288 = vunpack.c.l.b16 %v157
    %v289 = vunpack.c.l.b16 %v158
    %v290 = vunpack.c.l.b16 %v159
    %v291 = vunpack.c.l.b16 %v160
    %v292 = vunpack.c.l.b16 %v161
    %v293 = vunpack.c.l.b16 %v162
    %v294 = vunpack.c.l.b16 %v163
    %v295 = vunpack.c.l.b16 %v164
    %v296 = vunpack.c.l.b16 %v165
    %v297 = vunpack.c.l.b16 %v166
    %v298 = vunpack.c.l.b16 %v167
    %v299 = vunpack.c.l.b16 %v168
    %v300 = vunpack.c.l.b16 %v169
    %v301 = vunpack.c.l.b16 %v170
    %v302 = vunpack.c.l.b16 %v171
    %v303 = vunpack.c.l.b16 %v172
    %v304 = vpack.c.b16 %v241, %v240
    %v305 = vpack.c.b16 %v243, %v242
    %v306 = vpack.c.b16 %v245, %v244
    %v307 = vpack.c.b16 %v247, %v246
    %v308 = vpack.c.b16 %v249, %v248
    %v309 = vpack.c.b16 %v251, %v250
    %v310 = vpack.c.b16 %v253, %v252
    %v311 = vpack.c.b16 %v255, %v254
    %v312 = vpack.c.b16 %v257, %v256
    %v313 = vpack.c.b16 %v259, %v258
    %v314 = vpack.c.b16 %v261, %v260
    %v315 = vpack.c.b16 %v263, %v262
    %v316 = vpack.c.b16 %v265, %v264
    %v317 = vpack.c.b16 %v267, %v266
    %v318 = vpack.c.b16 %v269, %v268
    %v319 = vpack.c.b16 %v271, %v270
    %v320 = vpack.c.b16 %v273, %v272
    %v321 = vpack.c.b16 %v275, %v274
    %v322 = vpack.c.b16 %v277, %v276
    %v323 = vpack.c.b16 %v279, %v278
    %v324 = vpack.c.b16 %v281, %v280
    %v325 = vpack.c.b16 %v283, %v282
    %v326 = vpack.c.b16 %v285, %v284
    %v327 = vpack.c.b16 %v287, %v286
    %v328 = vpack.c.b16 %v289, %v288
    %v329 = vpack.c.b16 %v291, %v290
    %v330 = vpack.c.b16 %v293, %v292
    %v331 = vpack.c.b16 %v295, %v294
    %v332 = vpack.c.b16 %v297, %v296
    %v333 = vpack.c.b16 %v299, %v298
    %v334 = vpack.c.b16 %v301, %v300
    %v335 = vpack.c.b16 %v303, %v302
    %v339 = vunpack.c.l.b16 %v173
    %v340 = vunpack.c.l.b16 %v174
    %v341 = vunpack.c.l.b16 %v175
    %v342 = vpack.c.b16 %v340, %v339
    %v343 = vpack.c.b16 %v341, %v341
    %vm345 = vcmask 146432
    %v347 = vsel %vm345, %v304, 0
    %v350 = vsel %vm345, %v305, 0
    %v353 = vsel %vm345, %v306, 0
    %v356 = vsel %vm345, %v307, 0
    %v359 = vsel %vm345, %v308, 0
    %v362 = vsel %vm345, %v309, 0
    %v365 = vsel %vm345, %v310, 0
    %v368 = vsel %vm345, %v311, 0
    %v371 = vsel %vm345, %v312, 0
    %v374 = vsel %vm345, %v313, 0
    %v377 = vsel %vm345, %v314, 0
    %v380 = vsel %vm345, %v315, 0
    %v383 = vsel %vm345, %v316, 0
    %v386 = vsel %vm345, %v317, 0
    %v389 = vsel %vm345, %v318, 0
    %v392 = vsel %vm345, %v319, 0
    %v395 = vsel %vm345, %v320, 0
    %v398 = vsel %vm345, %v321, 0
    %v401 = vsel %vm345, %v322, 0
    %v404 = vsel %vm345, %v323, 0
    %v407 = vsel %vm345, %v324, 0
    %v410 = vsel %vm345, %v325, 0
    %v413 = vsel %vm345, %v326, 0
    %v416 = vsel %vm345, %v327, 0
    %v419 = vsel %vm345, %v328, 0
    %v422 = vsel %vm345, %v329, 0
    %v425 = vsel %vm345, %v330, 0
    %v428 = vsel %vm345, %v331, 0
    %v431 = vsel %vm345, %v332, 0
    %v434 = vsel %vm345, %v333, 0
    %v437 = vsel %vm345, %v334, 0
    %v440 = vsel %vm345, %v335, 0
    %vm442 = vcmask 1040384
    %v444 = vsel %vm442, %v343, 0
    %446 = vmatprep.subr.bf16.mxu0 0
    %447 = vmatpush1.bf16.msra.mxu0 %v342
    %448 = vmatprep.subr.bf16.mxu0 0
    %449 = vmatpush1.bf16.msra.mxu0 %v444
    %450 = vmatprep.subr.bf16.mxu0 0
    %451 = vmatpush1.bf16.msra.mxu0 0
    %452 = vmatprep.subr.bf16.mxu0 0
    %453 = vmatpush1.bf16.msra.mxu0 0
    %454 = vmatprep.subr.bf16.mxu0 0
    %455 = vmatpush1.bf16.msra.mxu0 0
    %456 = vmatprep.subr.bf16.mxu0 0
    %457 = vmatpush1.bf16.msra.mxu0 0
    %458 = vmatprep.subr.bf16.mxu0 0
    %459 = vmatpush1.bf16.msra.mxu0 0
    %460 = vmatprep.subr.bf16.mxu0 0
    %461 = vmatpush1.bf16.msra.mxu0 0
    %462 = vmatprep.subr.bf16.mxu0 0
    %463 = vmatpush1.bf16.msra.mxu0 0
    %464 = vmatprep.subr.bf16.mxu0 0
    %465 = vmatpush1.bf16.msra.mxu0 0
    %466 = vmatprep.subr.bf16.mxu0 0
    %467 = vmatpush1.bf16.msra.mxu0 0
    %468 = vmatprep.subr.bf16.mxu0 0
    %469 = vmatpush1.bf16.msra.mxu0 0
    %470 = vmatprep.subr.bf16.mxu0 0
    %471 = vmatpush1.bf16.msra.mxu0 0
    %472 = vmatprep.subr.bf16.mxu0 0
    %473 = vmatpush1.bf16.msra.mxu0 0
    %474 = vmatprep.subr.bf16.mxu0 0
    %475 = vmatpush1.bf16.msra.mxu0 0
    %476 = vmatprep.subr.bf16.mxu0 0
    %477 = vmatpush1.bf16.msra.mxu0 0
    %478 = vmatprep.mubr.bf16.mxu0 0
    %479 = vmatmul.mubr.bf16.gmra.mrb[0].mxu0 %v347
    %v480 = vpop.f32.mrb[0].mxu0
    %v481 = vadd.f32 0.0, %v480
    %v482 = vpop.f32.mrb[0].mxu0
    %v483 = vpop.f32.mrb[0].mxu0
    %v484 = vadd.f32 0.0, %v483
    %v485 = vpop.f32.mrb[0].mxu0
    %486 = vmatprep.mubr.bf16.mxu0 0
    %487 = vmatmul.mubr.bf16.gmra.mrb[0].mxu0 %v350
    %v488 = vpop.f32.mrb[0].mxu0
    %v489 = vadd.f32 0.0, %v488
    %v490 = vpop.f32.mrb[0].mxu0
    %v491 = vpop.f32.mrb[0].mxu0
    %v492 = vadd.f32 0.0, %v491
    %v493 = vpop.f32.mrb[0].mxu0
    %494 = vmatprep.mubr.bf16.mxu0 0
    %495 = vmatmul.mubr.bf16.gmra.mrb[0].mxu0 %v353
    %v496 = vpop.f32.mrb[0].mxu0
    %v497 = vadd.f32 0.0, %v496
    %v498 = vpop.f32.mrb[0].mxu0
    %v499 = vpop.f32.mrb[0].mxu0
    %v500 = vadd.f32 0.0, %v499
    %v501 = vpop.f32.mrb[0].mxu0
    %502 = vmatprep.mubr.bf16.mxu0 0
    %503 = vmatmul.mubr.bf16.gmra.mrb[0].mxu0 %v356
    %v504 = vpop.f32.mrb[0].mxu0
    %v505 = vadd.f32 0.0, %v504
    %v506 = vpop.f32.mrb[0].mxu0
    %v507 = vpop.f32.mrb[0].mxu0
    %v508 = vadd.f32 0.0, %v507
    %v509 = vpop.f32.mrb[0].mxu0
    %510 = vmatprep.mubr.bf16.mxu0 0
    %511 = vmatmul.mubr.bf16.gmra.mrb[0].mxu0 %v359
    %v512 = vpop.f32.mrb[0].mxu0
    %v513 = vadd.f32 0.0, %v512
    %v514 = vpop.f32.mrb[0].mxu0
    %v515 = vpop.f32.mrb[0].mxu0
    %v516 = vadd.f32 0.0, %v515
    %v517 = vpop.f32.mrb[0].mxu0
    %518 = vmatprep.mubr.bf16.mxu0 0
    %519 = vmatmul.mubr.bf16.gmra.mrb[0].mxu0 %v362
    %v520 = vpop.f32.mrb[0].mxu0
    %v521 = vadd.f32 0.0, %v520
    %v522 = vpop.f32.mrb[0].mxu0
    %v523 = vpop.f32.mrb[0].mxu0
    %v524 = vadd.f32 0.0, %v523
    %v525 = vpop.f32.mrb[0].mxu0
    %526 = vmatprep.mubr.bf16.mxu0 0
    %527 = vmatmul.mubr.bf16.gmra.mrb[0].mxu0 %v365
    %v528 = vpop.f32.mrb[0].mxu0
    %v529 = vadd.f32 0.0, %v528
    %v530 = vpop.f32.mrb[0].mxu0
    %v531 = vpop.f32.mrb[0].mxu0
    %v532 = vadd.f32 0.0, %v531
    %v533 = vpop.f32.mrb[0].mxu0
    %534 = vmatprep.mubr.bf16.mxu0 0
    %535 = vmatmul.mubr.bf16.gmra.mrb[0].mxu0 %v368
    %v536 = vpop.f32.mrb[0].mxu0
    %v537 = vadd.f32 0.0, %v536
    %v538 = vpop.f32.mrb[0].mxu0
    %v539 = vpop.f32.mrb[0].mxu0
    %v540 = vadd.f32 0.0, %v539
    %v541 = vpop.f32.mrb[0].mxu0
    %542 = vmatprep.mubr.bf16.mxu0 0
    %543 = vmatmul.mubr.bf16.gmra.mrb[0].mxu0 %v371
    %v544 = vpop.f32.mrb[0].mxu0
    %v545 = vadd.f32 0.0, %v544
    %v546 = vpop.f32.mrb[0].mxu0
    %v547 = vpop.f32.mrb[0].mxu0
    %v548 = vadd.f32 0.0, %v547
    %v549 = vpop.f32.mrb[0].mxu0
    %550 = vmatprep.mubr.bf16.mxu0 0
    %551 = vmatmul.mubr.bf16.gmra.mrb[0].mxu0 %v374
    %v552 = vpop.f32.mrb[0].mxu0
    %v553 = vadd.f32 0.0, %v552
    %v554 = vpop.f32.mrb[0].mxu0
    %v555 = vpop.f32.mrb[0].mxu0
    %v556 = vadd.f32 0.0, %v555
    %v557 = vpop.f32.mrb[0].mxu0
    %558 = vmatprep.mubr.bf16.mxu0 0
    %559 = vmatmul.mubr.bf16.gmra.mrb[0].mxu0 %v377
    %v560 = vpop.f32.mrb[0].mxu0
    %v561 = vadd.f32 0.0, %v560
    %v562 = vpop.f32.mrb[0].mxu0
    %v563 = vpop.f32.mrb[0].mxu0
    %v564 = vadd.f32 0.0, %v563
    %v565 = vpop.f32.mrb[0].mxu0
    %566 = vmatprep.mubr.bf16.mxu0 0
    %567 = vmatmul.mubr.bf16.gmra.mrb[0].mxu0 %v380
    %v568 = vpop.f32.mrb[0].mxu0
    %v569 = vadd.f32 0.0, %v568
    %v570 = vpop.f32.mrb[0].mxu0
    %v571 = vpop.f32.mrb[0].mxu0
    %v572 = vadd.f32 0.0, %v571
    %v573 = vpop.f32.mrb[0].mxu0
    %574 = vmatprep.mubr.bf16.mxu0 0
    %575 = vmatmul.mubr.bf16.gmra.mrb[0].mxu0 %v383
    %v576 = vpop.f32.mrb[0].mxu0
    %v577 = vadd.f32 0.0, %v576
    %v578 = vpop.f32.mrb[0].mxu0
    %v579 = vpop.f32.mrb[0].mxu0
    %v580 = vadd.f32 0.0, %v579
    %v581 = vpop.f32.mrb[0].mxu0
    %582 = vmatprep.mubr.bf16.mxu0 0
    %583 = vmatmul.mubr.bf16.gmra.mrb[0].mxu0 %v386
    %v584 = vpop.f32.mrb[0].mxu0
    %v585 = vadd.f32 0.0, %v584
    %v586 = vpop.f32.mrb[0].mxu0
    %v587 = vpop.f32.mrb[0].mxu0
    %v588 = vadd.f32 0.0, %v587
    %v589 = vpop.f32.mrb[0].mxu0
    %590 = vmatprep.mubr.bf16.mxu0 0
    %591 = vmatmul.mubr.bf16.gmra.mrb[0].mxu0 %v389
    %v592 = vpop.f32.mrb[0].mxu0
    %v593 = vadd.f32 0.0, %v592
    %v594 = vpop.f32.mrb[0].mxu0
    %v595 = vpop.f32.mrb[0].mxu0
    %v596 = vadd.f32 0.0, %v595
    %v597 = vpop.f32.mrb[0].mxu0
    %598 = vmatprep.mubr.bf16.mxu0 0
    %599 = vmatmul.mubr.bf16.gmra.mrb[0].mxu0 %v392
    %v600 = vpop.f32.mrb[0].mxu0
    %v601 = vadd.f32 0.0, %v600
    %v602 = vpop.f32.mrb[0].mxu0
    %v603 = vpop.f32.mrb[0].mxu0
    %v604 = vadd.f32 0.0, %v603
    %v605 = vpop.f32.mrb[0].mxu0
    %606 = vmatprep.mubr.bf16.mxu0 0
    %607 = vmatmul.mubr.bf16.gmra.mrb[0].mxu0 %v395
    %v608 = vpop.f32.mrb[0].mxu0
    %v609 = vadd.f32 0.0, %v608
    %v610 = vpop.f32.mrb[0].mxu0
    %v611 = vpop.f32.mrb[0].mxu0
    %v612 = vadd.f32 0.0, %v611
    %v613 = vpop.f32.mrb[0].mxu0
    %614 = vmatprep.mubr.bf16.mxu0 0
    %615 = vmatmul.mubr.bf16.gmra.mrb[0].mxu0 %v398
    %v616 = vpop.f32.mrb[0].mxu0
    %v617 = vadd.f32 0.0, %v616
    %v618 = vpop.f32.mrb[0].mxu0
    %v619 = vpop.f32.mrb[0].mxu0
    %v620 = vadd.f32 0.0, %v619
    %v621 = vpop.f32.mrb[0].mxu0
    %622 = vmatprep.mubr.bf16.mxu0 0
    %623 = vmatmul.mubr.bf16.gmra.mrb[0].mxu0 %v401
    %v624 = vpop.f32.mrb[0].mxu0
    %v625 = vadd.f32 0.0, %v624
    %v626 = vpop.f32.mrb[0].mxu0
    %v627 = vpop.f32.mrb[0].mxu0
    %v628 = vadd.f32 0.0, %v627
    %v629 = vpop.f32.mrb[0].mxu0
    %630 = vmatprep.mubr.bf16.mxu0 0
    %631 = vmatmul.mubr.bf16.gmra.mrb[0].mxu0 %v404
    %v632 = vpop.f32.mrb[0].mxu0
    %v633 = vadd.f32 0.0, %v632
    %v634 = vpop.f32.mrb[0].mxu0
    %v635 = vpop.f32.mrb[0].mxu0
    %v636 = vadd.f32 0.0, %v635
    %v637 = vpop.f32.mrb[0].mxu0
    %638 = vmatprep.mubr.bf16.mxu0 0
    %639 = vmatmul.mubr.bf16.gmra.mrb[0].mxu0 %v407
    %v640 = vpop.f32.mrb[0].mxu0
    %v641 = vadd.f32 0.0, %v640
    %v642 = vpop.f32.mrb[0].mxu0
    %v643 = vpop.f32.mrb[0].mxu0
    %v644 = vadd.f32 0.0, %v643
    %v645 = vpop.f32.mrb[0].mxu0
    %646 = vmatprep.mubr.bf16.mxu0 0
    %647 = vmatmul.mubr.bf16.gmra.mrb[0].mxu0 %v410
    %v648 = vpop.f32.mrb[0].mxu0
    %v649 = vadd.f32 0.0, %v648
    %v650 = vpop.f32.mrb[0].mxu0
    %v651 = vpop.f32.mrb[0].mxu0
    %v652 = vadd.f32 0.0, %v651
    %v653 = vpop.f32.mrb[0].mxu0
    %654 = vmatprep.mubr.bf16.mxu0 0
    %655 = vmatmul.mubr.bf16.gmra.mrb[0].mxu0 %v413
    %v656 = vpop.f32.mrb[0].mxu0
    %v657 = vadd.f32 0.0, %v656
    %v658 = vpop.f32.mrb[0].mxu0
    %v659 = vpop.f32.mrb[0].mxu0
    %v660 = vadd.f32 0.0, %v659
    %v661 = vpop.f32.mrb[0].mxu0
    %662 = vmatprep.mubr.bf16.mxu0 0
    %663 = vmatmul.mubr.bf16.gmra.mrb[0].mxu0 %v416
    %v664 = vpop.f32.mrb[0].mxu0
    %v665 = vadd.f32 0.0, %v664
    %v666 = vpop.f32.mrb[0].mxu0
    %v667 = vpop.f32.mrb[0].mxu0
    %v668 = vadd.f32 0.0, %v667
    %v669 = vpop.f32.mrb[0].mxu0
    %670 = vmatprep.mubr.bf16.mxu0 0
    %671 = vmatmul.mubr.bf16.gmra.mrb[0].mxu0 %v419
    %v672 = vpop.f32.mrb[0].mxu0
    %v673 = vadd.f32 0.0, %v672
    %v674 = vpop.f32.mrb[0].mxu0
    %v675 = vpop.f32.mrb[0].mxu0
    %v676 = vadd.f32 0.0, %v675
    %v677 = vpop.f32.mrb[0].mxu0
    %678 = vmatprep.mubr.bf16.mxu0 0
    %679 = vmatmul.mubr.bf16.gmra.mrb[0].mxu0 %v422
    %v680 = vpop.f32.mrb[0].mxu0
    %v681 = vadd.f32 0.0, %v680
    %v682 = vpop.f32.mrb[0].mxu0
    %v683 = vpop.f32.mrb[0].mxu0
    %v684 = vadd.f32 0.0, %v683
    %v685 = vpop.f32.mrb[0].mxu0
    %686 = vmatprep.mubr.bf16.mxu0 0
    %687 = vmatmul.mubr.bf16.gmra.mrb[0].mxu0 %v425
    %v688 = vpop.f32.mrb[0].mxu0
    %v689 = vadd.f32 0.0, %v688
    %v690 = vpop.f32.mrb[0].mxu0
    %v691 = vpop.f32.mrb[0].mxu0
    %v692 = vadd.f32 0.0, %v691
    %v693 = vpop.f32.mrb[0].mxu0
    %694 = vmatprep.mubr.bf16.mxu0 0
    %695 = vmatmul.mubr.bf16.gmra.mrb[0].mxu0 %v428
    %v696 = vpop.f32.mrb[0].mxu0
    %v697 = vadd.f32 0.0, %v696
    %v698 = vpop.f32.mrb[0].mxu0
    %v699 = vpop.f32.mrb[0].mxu0
    %v700 = vadd.f32 0.0, %v699
    %v701 = vpop.f32.mrb[0].mxu0
    %702 = vmatprep.mubr.bf16.mxu0 0
    %703 = vmatmul.mubr.bf16.gmra.mrb[0].mxu0 %v431
    %v704 = vpop.f32.mrb[0].mxu0
    %v705 = vadd.f32 0.0, %v704
    %v706 = vpop.f32.mrb[0].mxu0
    %v707 = vpop.f32.mrb[0].mxu0
    %v708 = vadd.f32 0.0, %v707
    %v709 = vpop.f32.mrb[0].mxu0
    %710 = vmatprep.mubr.bf16.mxu0 0
    %711 = vmatmul.mubr.bf16.gmra.mrb[0].mxu0 %v434
    %v712 = vpop.f32.mrb[0].mxu0
    %v713 = vadd.f32 0.0, %v712
    %v714 = vpop.f32.mrb[0].mxu0
    %v715 = vpop.f32.mrb[0].mxu0
    %v716 = vadd.f32 0.0, %v715
    %v717 = vpop.f32.mrb[0].mxu0
    %718 = vmatprep.mubr.bf16.mxu0 0
    %719 = vmatmul.mubr.bf16.gmra.mrb[0].mxu0 %v437
    %v720 = vpop.f32.mrb[0].mxu0
    %v721 = vadd.f32 0.0, %v720
    %v722 = vpop.f32.mrb[0].mxu0
    %v723 = vpop.f32.mrb[0].mxu0
    %v724 = vadd.f32 0.0, %v723
    %v725 = vpop.f32.mrb[0].mxu0
    %726 = vmatprep.mubr.bf16.mxu0 0
    %727 = vmatmul.mubr.bf16.gmra.mrb[0].mxu0 %v440
    %v728 = vpop.f32.mrb[0].mxu0
    %v729 = vadd.f32 0.0, %v728
    %v730 = vpop.f32.mrb[0].mxu0
    %v731 = vpop.f32.mrb[0].mxu0
    %v732 = vadd.f32 0.0, %v731
    %v733 = vpop.f32.mrb[0].mxu0
    %734 = vdwg.mxu0
    %v799 = vunpack.c.l.b16 %v36
    %v800 = vunpack.c.l.b16 %v37
    %v801 = vunpack.c.l.b16 %v38
    %v802 = vunpack.c.l.b16 %v39
    %v803 = vunpack.c.l.b16 %v40
    %v804 = vunpack.c.l.b16 %v41
    %v805 = vunpack.c.l.b16 %v42
    %v806 = vunpack.c.l.b16 %v43
    %v807 = vunpack.c.l.b16 %v44
    %v808 = vunpack.c.l.b16 %v45
    %v809 = vunpack.c.l.b16 %v46
    %v810 = vunpack.c.l.b16 %v47
    %v811 = vunpack.c.l.b16 %v48
    %v812 = vunpack.c.l.b16 %v49
    %v813 = vunpack.c.l.b16 %v50
    %v814 = vunpack.c.l.b16 %v51
    %v815 = vunpack.c.l.b16 %v52
    %v816 = vunpack.c.l.b16 %v53
    %v817 = vunpack.c.l.b16 %v54
    %v818 = vunpack.c.l.b16 %v55
    %v819 = vunpack.c.l.b16 %v56
    %v820 = vunpack.c.l.b16 %v57
    %v821 = vunpack.c.l.b16 %v58
    %v822 = vunpack.c.l.b16 %v59
    %v823 = vunpack.c.l.b16 %v60
    %v824 = vunpack.c.l.b16 %v61
    %v825 = vunpack.c.l.b16 %v62
    %v826 = vunpack.c.l.b16 %v63
    %v827 = vunpack.c.l.b16 %v64
    %v828 = vunpack.c.l.b16 %v65
    %v829 = vunpack.c.l.b16 %v66
    %v830 = vunpack.c.l.b16 %v67
    %v831 = vunpack.c.l.b16 %v68
    %v832 = vunpack.c.l.b16 %v69
    %v833 = vunpack.c.l.b16 %v70
    %v834 = vunpack.c.l.b16 %v71
    %v835 = vunpack.c.l.b16 %v72
    %v836 = vunpack.c.l.b16 %v73
    %v837 = vunpack.c.l.b16 %v74
    %v838 = vunpack.c.l.b16 %v75
    %v839 = vunpack.c.l.b16 %v76
    %v840 = vunpack.c.l.b16 %v77
    %v841 = vunpack.c.l.b16 %v78
    %v842 = vunpack.c.l.b16 %v79
    %v843 = vunpack.c.l.b16 %v80
    %v844 = vunpack.c.l.b16 %v81
    %v845 = vunpack.c.l.b16 %v82
    %v846 = vunpack.c.l.b16 %v83
    %v847 = vunpack.c.l.b16 %v84
    %v848 = vunpack.c.l.b16 %v85
    %v849 = vunpack.c.l.b16 %v86
    %v850 = vunpack.c.l.b16 %v87
    %v851 = vunpack.c.l.b16 %v88
    %v852 = vunpack.c.l.b16 %v89
    %v853 = vunpack.c.l.b16 %v90
    %v854 = vunpack.c.l.b16 %v91
    %v855 = vunpack.c.l.b16 %v92
    %v856 = vunpack.c.l.b16 %v93
    %v857 = vunpack.c.l.b16 %v94
    %v858 = vunpack.c.l.b16 %v95
    %v859 = vunpack.c.l.b16 %v96
    %v860 = vunpack.c.l.b16 %v97
    %v861 = vunpack.c.l.b16 %v98
    %v862 = vunpack.c.l.b16 %v99
    %v863 = vpack.c.b16 %v800, %v799
    %v864 = vpack.c.b16 %v802, %v801
    %v865 = vpack.c.b16 %v804, %v803
    %v866 = vpack.c.b16 %v806, %v805
    %v867 = vpack.c.b16 %v808, %v807
    %v868 = vpack.c.b16 %v810, %v809
    %v869 = vpack.c.b16 %v812, %v811
    %v870 = vpack.c.b16 %v814, %v813
    %v871 = vpack.c.b16 %v816, %v815
    %v872 = vpack.c.b16 %v818, %v817
    %v873 = vpack.c.b16 %v820, %v819
    %v874 = vpack.c.b16 %v822, %v821
    %v875 = vpack.c.b16 %v824, %v823
    %v876 = vpack.c.b16 %v826, %v825
    %v877 = vpack.c.b16 %v828, %v827
    %v878 = vpack.c.b16 %v830, %v829
    %v879 = vpack.c.b16 %v832, %v831
    %v880 = vpack.c.b16 %v834, %v833
    %v881 = vpack.c.b16 %v836, %v835
    %v882 = vpack.c.b16 %v838, %v837
    %v883 = vpack.c.b16 %v840, %v839
    %v884 = vpack.c.b16 %v842, %v841
    %v885 = vpack.c.b16 %v844, %v843
    %v886 = vpack.c.b16 %v846, %v845
    %v887 = vpack.c.b16 %v848, %v847
    %v888 = vpack.c.b16 %v850, %v849
    %v889 = vpack.c.b16 %v852, %v851
    %v890 = vpack.c.b16 %v854, %v853
    %v891 = vpack.c.b16 %v856, %v855
    %v892 = vpack.c.b16 %v858, %v857
    %v893 = vpack.c.b16 %v860, %v859
    %v894 = vpack.c.b16 %v862, %v861
    %v904 = vunpack.c.l.b16 %v100
    %v905 = vunpack.c.l.b16 %v101
    %v906 = vunpack.c.l.b16 %v102
    %v907 = vunpack.c.l.b16 %v103
    %v908 = vunpack.c.l.b16 %v104
    %v909 = vunpack.c.l.b16 %v105
    %v910 = vunpack.c.l.b16 %v106
    %v911 = vunpack.c.l.b16 %v107
    %v912 = vunpack.c.l.b16 %v108
    %v913 = vpack.c.b16 %v905, %v904
    %v914 = vpack.c.b16 %v907, %v906
    %v915 = vpack.c.b16 %v909, %v908
    %v916 = vpack.c.b16 %v911, %v910
    %v917 = vpack.c.b16 %v912, %v912
    %vm922 = vcmask 588800
    %v924 = vsel %vm922, %v863, 0
    %v927 = vsel %vm922, %v864, 0
    %v930 = vsel %vm922, %v865, 0
    %v933 = vsel %vm922, %v866, 0
    %v936 = vsel %vm922, %v867, 0
    %v939 = vsel %vm922, %v868, 0
    %v942 = vsel %vm922, %v869, 0
    %v945 = vsel %vm922, %v870, 0
    %v948 = vsel %vm922, %v871, 0
    %v951 = vsel %vm922, %v872, 0
    %v954 = vsel %vm922, %v873, 0
    %v957 = vsel %vm922, %v874, 0
    %v960 = vsel %vm922, %v875, 0
    %v963 = vsel %vm922, %v876, 0
    %v966 = vsel %vm922, %v877, 0
    %v969 = vsel %vm922, %v878, 0
    %v972 = vsel %vm922, %v879, 0
    %v975 = vsel %vm922, %v880, 0
    %v978 = vsel %vm922, %v881, 0
    %v981 = vsel %vm922, %v882, 0
    %v984 = vsel %vm922, %v883, 0
    %v987 = vsel %vm922, %v884, 0
    %v990 = vsel %vm922, %v885, 0
    %v993 = vsel %vm922, %v886, 0
    %v996 = vsel %vm922, %v887, 0
    %v999 = vsel %vm922, %v888, 0
    %v1002 = vsel %vm922, %v889, 0
    %v1005 = vsel %vm922, %v890, 0
    %v1008 = vsel %vm922, %v891, 0
    %v1011 = vsel %vm922, %v892, 0
    %v1014 = vsel %vm922, %v893, 0
    %v1017 = vsel %vm922, %v894, 0
    %vm1019 = vcmask 1043456
    %v1021 = vsel %vm1019, %v917, 0
    %1023 = vmatprep.subr.bf16.mxu0 0
    %1024 = vmatpush1.bf16.msra.mxu0 %v913
    %1025 = vmatprep.subr.bf16.mxu0 0
    %1026 = vmatpush1.bf16.msra.mxu0 %v914
    %1027 = vmatprep.subr.bf16.mxu0 0
    %1028 = vmatpush1.bf16.msra.mxu0 %v915
    %1029 = vmatprep.subr.bf16.mxu0 0
    %1030 = vmatpush1.bf16.msra.mxu0 %v916
    %1031 = vmatprep.subr.bf16.mxu0 0
    %1032 = vmatpush1.bf16.msra.mxu0 %v1021
    %1033 = vmatprep.subr.bf16.mxu0 0
    %1034 = vmatpush1.bf16.msra.mxu0 0
    %1035 = vmatprep.subr.bf16.mxu0 0
    %1036 = vmatpush1.bf16.msra.mxu0 0
    %1037 = vmatprep.subr.bf16.mxu0 0
    %1038 = vmatpush1.bf16.msra.mxu0 0
    %1039 = vmatprep.subr.bf16.mxu0 0
    %1040 = vmatpush1.bf16.msra.mxu0 0
    %1041 = vmatprep.subr.bf16.mxu0 0
    %1042 = vmatpush1.bf16.msra.mxu0 0
    %1043 = vmatprep.subr.bf16.mxu0 0
    %1044 = vmatpush1.bf16.msra.mxu0 0
    %1045 = vmatprep.subr.bf16.mxu0 0
    %1046 = vmatpush1.bf16.msra.mxu0 0
    %1047 = vmatprep.subr.bf16.mxu0 0
    %1048 = vmatpush1.bf16.msra.mxu0 0
    %1049 = vmatprep.subr.bf16.mxu0 0
    %1050 = vmatpush1.bf16.msra.mxu0 0
    %1051 = vmatprep.subr.bf16.mxu0 0
    %1052 = vmatpush1.bf16.msra.mxu0 0
    %1053 = vmatprep.subr.bf16.mxu0 0
    %1054 = vmatpush1.bf16.msra.mxu0 0
    %1055 = vmatprep.mubr.bf16.mxu0 0
    %1056 = vmatmul.mubr.bf16.gmra.mrb[0].mxu0 %v924
    %v1057 = vpop.f32.mrb[0].mxu0
    %v1058 = vadd.f32 %v481, %v1057
    %v1059 = vpop.f32.mrb[0].mxu0
    %v1060 = vpop.f32.mrb[0].mxu0
    %v1061 = vadd.f32 %v484, %v1060
    %v1062 = vpop.f32.mrb[0].mxu0
    %1063 = vmatprep.mubr.bf16.mxu0 0
    %1064 = vmatmul.mubr.bf16.gmra.mrb[0].mxu0 %v927
    %v1065 = vpop.f32.mrb[0].mxu0
    %v1066 = vadd.f32 %v489, %v1065
    %v1067 = vpop.f32.mrb[0].mxu0
    %v1068 = vpop.f32.mrb[0].mxu0
    %v1069 = vadd.f32 %v492, %v1068
    %v1070 = vpop.f32.mrb[0].mxu0
    %1071 = vmatprep.mubr.bf16.mxu0 0
    %1072 = vmatmul.mubr.bf16.gmra.mrb[0].mxu0 %v930
    %v1073 = vpop.f32.mrb[0].mxu0
    %v1074 = vadd.f32 %v497, %v1073
    %v1075 = vpop.f32.mrb[0].mxu0
    %v1076 = vpop.f32.mrb[0].mxu0
    %v1077 = vadd.f32 %v500, %v1076
    %v1078 = vpop.f32.mrb[0].mxu0
    %1079 = vmatprep.mubr.bf16.mxu0 0
    %1080 = vmatmul.mubr.bf16.gmra.mrb[0].mxu0 %v933
    %v1081 = vpop.f32.mrb[0].mxu0
    %v1082 = vadd.f32 %v505, %v1081
    %v1083 = vpop.f32.mrb[0].mxu0
    %v1084 = vpop.f32.mrb[0].mxu0
    %v1085 = vadd.f32 %v508, %v1084
    %v1086 = vpop.f32.mrb[0].mxu0
    %1087 = vmatprep.mubr.bf16.mxu0 0
    %1088 = vmatmul.mubr.bf16.gmra.mrb[0].mxu0 %v936
    %v1089 = vpop.f32.mrb[0].mxu0
    %v1090 = vadd.f32 %v513, %v1089
    %v1091 = vpop.f32.mrb[0].mxu0
    %v1092 = vpop.f32.mrb[0].mxu0
    %v1093 = vadd.f32 %v516, %v1092
    %v1094 = vpop.f32.mrb[0].mxu0
    %1095 = vmatprep.mubr.bf16.mxu0 0
    %1096 = vmatmul.mubr.bf16.gmra.mrb[0].mxu0 %v939
    %v1097 = vpop.f32.mrb[0].mxu0
    %v1098 = vadd.f32 %v521, %v1097
    %v1099 = vpop.f32.mrb[0].mxu0
    %v1100 = vpop.f32.mrb[0].mxu0
    %v1101 = vadd.f32 %v524, %v1100
    %v1102 = vpop.f32.mrb[0].mxu0
    %1103 = vmatprep.mubr.bf16.mxu0 0
    %1104 = vmatmul.mubr.bf16.gmra.mrb[0].mxu0 %v942
    %v1105 = vpop.f32.mrb[0].mxu0
    %v1106 = vadd.f32 %v529, %v1105
    %v1107 = vpop.f32.mrb[0].mxu0
    %v1108 = vpop.f32.mrb[0].mxu0
    %v1109 = vadd.f32 %v532, %v1108
    %v1110 = vpop.f32.mrb[0].mxu0
    %1111 = vmatprep.mubr.bf16.mxu0 0
    %1112 = vmatmul.mubr.bf16.gmra.mrb[0].mxu0 %v945
    %v1113 = vpop.f32.mrb[0].mxu0
    %v1114 = vadd.f32 %v537, %v1113
    %v1115 = vpop.f32.mrb[0].mxu0
    %v1116 = vpop.f32.mrb[0].mxu0
    %v1117 = vadd.f32 %v540, %v1116
    %v1118 = vpop.f32.mrb[0].mxu0
    %1119 = vmatprep.mubr.bf16.mxu0 0
    %1120 = vmatmul.mubr.bf16.gmra.mrb[0].mxu0 %v948
    %v1121 = vpop.f32.mrb[0].mxu0
    %v1122 = vadd.f32 %v545, %v1121
    %v1123 = vpop.f32.mrb[0].mxu0
    %v1124 = vpop.f32.mrb[0].mxu0
    %v1125 = vadd.f32 %v548, %v1124
    %v1126 = vpop.f32.mrb[0].mxu0
    %1127 = vmatprep.mubr.bf16.mxu0 0
    %1128 = vmatmul.mubr.bf16.gmra.mrb[0].mxu0 %v951
    %v1129 = vpop.f32.mrb[0].mxu0
    %v1130 = vadd.f32 %v553, %v1129
    %v1131 = vpop.f32.mrb[0].mxu0
    %v1132 = vpop.f32.mrb[0].mxu0
    %v1133 = vadd.f32 %v556, %v1132
    %v1134 = vpop.f32.mrb[0].mxu0
    %1135 = vmatprep.mubr.bf16.mxu0 0
    %1136 = vmatmul.mubr.bf16.gmra.mrb[0].mxu0 %v954
    %v1137 = vpop.f32.mrb[0].mxu0
    %v1138 = vadd.f32 %v561, %v1137
    %v1139 = vpop.f32.mrb[0].mxu0
    %v1140 = vpop.f32.mrb[0].mxu0
    %v1141 = vadd.f32 %v564, %v1140
    %v1142 = vpop.f32.mrb[0].mxu0
    %1143 = vmatprep.mubr.bf16.mxu0 0
    %1144 = vmatmul.mubr.bf16.gmra.mrb[0].mxu0 %v957
    %v1145 = vpop.f32.mrb[0].mxu0
    %v1146 = vadd.f32 %v569, %v1145
    %v1147 = vpop.f32.mrb[0].mxu0
    %v1148 = vpop.f32.mrb[0].mxu0
    %v1149 = vadd.f32 %v572, %v1148
    %v1150 = vpop.f32.mrb[0].mxu0
    %1151 = vmatprep.mubr.bf16.mxu0 0
    %1152 = vmatmul.mubr.bf16.gmra.mrb[0].mxu0 %v960
    %v1153 = vpop.f32.mrb[0].mxu0
    %v1154 = vadd.f32 %v577, %v1153
    %v1155 = vpop.f32.mrb[0].mxu0
    %v1156 = vpop.f32.mrb[0].mxu0
    %v1157 = vadd.f32 %v580, %v1156
    %v1158 = vpop.f32.mrb[0].mxu0
    %1159 = vmatprep.mubr.bf16.mxu0 0
    %1160 = vmatmul.mubr.bf16.gmra.mrb[0].mxu0 %v963
    %v1161 = vpop.f32.mrb[0].mxu0
    %v1162 = vadd.f32 %v585, %v1161
    %v1163 = vpop.f32.mrb[0].mxu0
    %v1164 = vpop.f32.mrb[0].mxu0
    %v1165 = vadd.f32 %v588, %v1164
    %v1166 = vpop.f32.mrb[0].mxu0
    %1167 = vmatprep.mubr.bf16.mxu0 0
    %1168 = vmatmul.mubr.bf16.gmra.mrb[0].mxu0 %v966
    %v1169 = vpop.f32.mrb[0].mxu0
    %v1170 = vadd.f32 %v593, %v1169
    %v1171 = vpop.f32.mrb[0].mxu0
    %v1172 = vpop.f32.mrb[0].mxu0
    %v1173 = vadd.f32 %v596, %v1172
    %v1174 = vpop.f32.mrb[0].mxu0
    %1175 = vmatprep.mubr.bf16.mxu0 0
    %1176 = vmatmul.mubr.bf16.gmra.mrb[0].mxu0 %v969
    %v1177 = vpop.f32.mrb[0].mxu0
    %v1178 = vadd.f32 %v601, %v1177
    %v1179 = vpop.f32.mrb[0].mxu0
    %v1180 = vpop.f32.mrb[0].mxu0
    %v1181 = vadd.f32 %v604, %v1180
    %v1182 = vpop.f32.mrb[0].mxu0
    %1183 = vmatprep.mubr.bf16.mxu0 0
    %1184 = vmatmul.mubr.bf16.gmra.mrb[0].mxu0 %v972
    %v1185 = vpop.f32.mrb[0].mxu0
    %v1186 = vadd.f32 %v609, %v1185
    %v1187 = vpop.f32.mrb[0].mxu0
    %v1188 = vpop.f32.mrb[0].mxu0
    %v1189 = vadd.f32 %v612, %v1188
    %v1190 = vpop.f32.mrb[0].mxu0
    %1191 = vmatprep.mubr.bf16.mxu0 0
    %1192 = vmatmul.mubr.bf16.gmra.mrb[0].mxu0 %v975
    %v1193 = vpop.f32.mrb[0].mxu0
    %v1194 = vadd.f32 %v617, %v1193
    %v1195 = vpop.f32.mrb[0].mxu0
    %v1196 = vpop.f32.mrb[0].mxu0
    %v1197 = vadd.f32 %v620, %v1196
    %v1198 = vpop.f32.mrb[0].mxu0
    %1199 = vmatprep.mubr.bf16.mxu0 0
    %1200 = vmatmul.mubr.bf16.gmra.mrb[0].mxu0 %v978
    %v1201 = vpop.f32.mrb[0].mxu0
    %v1202 = vadd.f32 %v625, %v1201
    %v1203 = vpop.f32.mrb[0].mxu0
    %v1204 = vpop.f32.mrb[0].mxu0
    %v1205 = vadd.f32 %v628, %v1204
    %v1206 = vpop.f32.mrb[0].mxu0
    %1207 = vmatprep.mubr.bf16.mxu0 0
    %1208 = vmatmul.mubr.bf16.gmra.mrb[0].mxu0 %v981
    %v1209 = vpop.f32.mrb[0].mxu0
    %v1210 = vadd.f32 %v633, %v1209
    %v1211 = vpop.f32.mrb[0].mxu0
    %v1212 = vpop.f32.mrb[0].mxu0
    %v1213 = vadd.f32 %v636, %v1212
    %v1214 = vpop.f32.mrb[0].mxu0
    %1215 = vmatprep.mubr.bf16.mxu0 0
    %1216 = vmatmul.mubr.bf16.gmra.mrb[0].mxu0 %v984
    %v1217 = vpop.f32.mrb[0].mxu0
    %v1218 = vadd.f32 %v641, %v1217
    %v1219 = vpop.f32.mrb[0].mxu0
    %v1220 = vpop.f32.mrb[0].mxu0
    %v1221 = vadd.f32 %v644, %v1220
    %v1222 = vpop.f32.mrb[0].mxu0
    %1223 = vmatprep.mubr.bf16.mxu0 0
    %1224 = vmatmul.mubr.bf16.gmra.mrb[0].mxu0 %v987
    %v1225 = vpop.f32.mrb[0].mxu0
    %v1226 = vadd.f32 %v649, %v1225
    %v1227 = vpop.f32.mrb[0].mxu0
    %v1228 = vpop.f32.mrb[0].mxu0
    %v1229 = vadd.f32 %v652, %v1228
    %v1230 = vpop.f32.mrb[0].mxu0
    %1231 = vmatprep.mubr.bf16.mxu0 0
    %1232 = vmatmul.mubr.bf16.gmra.mrb[0].mxu0 %v990
    %v1233 = vpop.f32.mrb[0].mxu0
    %v1234 = vadd.f32 %v657, %v1233
    %v1235 = vpop.f32.mrb[0].mxu0
    %v1236 = vpop.f32.mrb[0].mxu0
    %v1237 = vadd.f32 %v660, %v1236
    %v1238 = vpop.f32.mrb[0].mxu0
    %1239 = vmatprep.mubr.bf16.mxu0 0
    %1240 = vmatmul.mubr.bf16.gmra.mrb[0].mxu0 %v993
    %v1241 = vpop.f32.mrb[0].mxu0
    %v1242 = vadd.f32 %v665, %v1241
    %v1243 = vpop.f32.mrb[0].mxu0
    %v1244 = vpop.f32.mrb[0].mxu0
    %v1245 = vadd.f32 %v668, %v1244
    %v1246 = vpop.f32.mrb[0].mxu0
    %1247 = vmatprep.mubr.bf16.mxu0 0
    %1248 = vmatmul.mubr.bf16.gmra.mrb[0].mxu0 %v996
    %v1249 = vpop.f32.mrb[0].mxu0
    %v1250 = vadd.f32 %v673, %v1249
    %v1251 = vpop.f32.mrb[0].mxu0
    %v1252 = vpop.f32.mrb[0].mxu0
    %v1253 = vadd.f32 %v676, %v1252
    %v1254 = vpop.f32.mrb[0].mxu0
    %1255 = vmatprep.mubr.bf16.mxu0 0
    %1256 = vmatmul.mubr.bf16.gmra.mrb[0].mxu0 %v999
    %v1257 = vpop.f32.mrb[0].mxu0
    %v1258 = vadd.f32 %v681, %v1257
    %v1259 = vpop.f32.mrb[0].mxu0
    %v1260 = vpop.f32.mrb[0].mxu0
    %v1261 = vadd.f32 %v684, %v1260
    %v1262 = vpop.f32.mrb[0].mxu0
    %1263 = vmatprep.mubr.bf16.mxu0 0
    %1264 = vmatmul.mubr.bf16.gmra.mrb[0].mxu0 %v1002
    %v1265 = vpop.f32.mrb[0].mxu0
    %v1266 = vadd.f32 %v689, %v1265
    %v1267 = vpop.f32.mrb[0].mxu0
    %v1268 = vpop.f32.mrb[0].mxu0
    %v1269 = vadd.f32 %v692, %v1268
    %v1270 = vpop.f32.mrb[0].mxu0
    %1271 = vmatprep.mubr.bf16.mxu0 0
    %1272 = vmatmul.mubr.bf16.gmra.mrb[0].mxu0 %v1005
    %v1273 = vpop.f32.mrb[0].mxu0
    %v1274 = vadd.f32 %v697, %v1273
    %v1275 = vpop.f32.mrb[0].mxu0
    %v1276 = vpop.f32.mrb[0].mxu0
    %v1277 = vadd.f32 %v700, %v1276
    %v1278 = vpop.f32.mrb[0].mxu0
    %1279 = vmatprep.mubr.bf16.mxu0 0
    %1280 = vmatmul.mubr.bf16.gmra.mrb[0].mxu0 %v1008
    %v1281 = vpop.f32.mrb[0].mxu0
    %v1282 = vadd.f32 %v705, %v1281
    %v1283 = vpop.f32.mrb[0].mxu0
    %v1284 = vpop.f32.mrb[0].mxu0
    %v1285 = vadd.f32 %v708, %v1284
    %v1286 = vpop.f32.mrb[0].mxu0
    %1287 = vmatprep.mubr.bf16.mxu0 0
    %1288 = vmatmul.mubr.bf16.gmra.mrb[0].mxu0 %v1011
    %v1289 = vpop.f32.mrb[0].mxu0
    %v1290 = vadd.f32 %v713, %v1289
    %v1291 = vpop.f32.mrb[0].mxu0
    %v1292 = vpop.f32.mrb[0].mxu0
    %v1293 = vadd.f32 %v716, %v1292
    %v1294 = vpop.f32.mrb[0].mxu0
    %1295 = vmatprep.mubr.bf16.mxu0 0
    %1296 = vmatmul.mubr.bf16.gmra.mrb[0].mxu0 %v1014
    %v1297 = vpop.f32.mrb[0].mxu0
    %v1298 = vadd.f32 %v721, %v1297
    %v1299 = vpop.f32.mrb[0].mxu0
    %v1300 = vpop.f32.mrb[0].mxu0
    %v1301 = vadd.f32 %v724, %v1300
    %v1302 = vpop.f32.mrb[0].mxu0
    %1303 = vmatprep.mubr.bf16.mxu0 0
    %1304 = vmatmul.mubr.bf16.gmra.mrb[0].mxu0 %v1017
    %v1305 = vpop.f32.mrb[0].mxu0
    %v1306 = vadd.f32 %v729, %v1305
    %v1307 = vpop.f32.mrb[0].mxu0
    %v1308 = vpop.f32.mrb[0].mxu0
    %v1309 = vadd.f32 %v732, %v1308
    %v1310 = vpop.f32.mrb[0].mxu0
    %1311 = vdwg.mxu0
    %v1312 = vld [vmem:[%s2] sm:$0xf]
    %v1313 = vld [vmem:[%s2 + $0x4] sm:$0xf]
    %v1314 = vld [vmem:[%s2 + $0x8] sm:$0xf]
    %v1315 = vld [vmem:[%s2 + $0xc] sm:$0xf]
    %v1316 = vld [vmem:[%s2 + $0x10] sm:$0xf]
    %v1317 = vld [vmem:[%s2 + $0x14] sm:$0xf]
    %v1318 = vld [vmem:[%s2 + $0x18] sm:$0xf]
    %v1319 = vld [vmem:[%s2 + $0x1c] sm:$0xf]
    %v1320 = vld [vmem:[%s2 + $0x20] sm:$0xf]
    %v1321 = vld [vmem:[%s2 + $0x24] sm:$0xf]
    %v1322 = vld [vmem:[%s2 + $0x28] sm:$0xf]
    %v1323 = vld [vmem:[%s2 + $0x2c] sm:$0xf]
    %v1324 = vld [vmem:[%s2 + $0x30] sm:$0xf]
    %v1325 = vld [vmem:[%s2 + $0x34] sm:$0xf]
    %v1326 = vld [vmem:[%s2 + $0x38] sm:$0xf]
    %v1327 = vld [vmem:[%s2 + $0x3c] sm:$0xf]
    %v1328 = vld [vmem:[%s2 + $0x40] sm:$0xf]
    %v1329 = vld [vmem:[%s2 + $0x44] sm:$0xf]
    %v1330 = vld [vmem:[%s2 + $0x48] sm:$0xf]
    %v1331 = vld [vmem:[%s2 + $0x4c] sm:$0xf]
    %v1332 = vld [vmem:[%s2 + $0x50] sm:$0xf]
    %v1333 = vld [vmem:[%s2 + $0x54] sm:$0xf]
    %v1334 = vld [vmem:[%s2 + $0x58] sm:$0xf]
    %v1335 = vld [vmem:[%s2 + $0x5c] sm:$0xf]
    %v1336 = vld [vmem:[%s2 + $0x60] sm:$0xf]
    %v1337 = vld [vmem:[%s2 + $0x64] sm:$0xf]
    %v1338 = vld [vmem:[%s2 + $0x68] sm:$0xf]
    %v1339 = vld [vmem:[%s2 + $0x6c] sm:$0xf]
    %v1340 = vld [vmem:[%s2 + $0x70] sm:$0xf]
    %v1341 = vld [vmem:[%s2 + $0x74] sm:$0xf]
    %v1342 = vld [vmem:[%s2 + $0x78] sm:$0xf]
    %v1343 = vld [vmem:[%s2 + $0x7c] sm:$0xf]
    %v1344 = vld [vmem:[%s2 + $0x80] sm:$0xf]
    %v1345 = vld [vmem:[%s2 + $0x84] sm:$0xf]
    %v1346 = vld [vmem:[%s2 + $0x88] sm:$0xf]
    %v1347 = vld [vmem:[%s2 + $0x8c] sm:$0xf]
    %v1348 = vld [vmem:[%s2 + $0x90] sm:$0xf]
    %v1349 = vld [vmem:[%s2 + $0x94] sm:$0xf]
    %v1350 = vld [vmem:[%s2 + $0x98] sm:$0xf]
    %v1351 = vld [vmem:[%s2 + $0x9c] sm:$0xf]
    %v1352 = vld [vmem:[%s2 + $0xa0] sm:$0xf]
    %v1353 = vld [vmem:[%s2 + $0xa4] sm:$0xf]
    %v1354 = vld [vmem:[%s2 + $0xa8] sm:$0xf]
    %v1355 = vld [vmem:[%s2 + $0xac] sm:$0xf]
    %v1356 = vld [vmem:[%s2 + $0xb0] sm:$0xf]
    %v1357 = vld [vmem:[%s2 + $0xb4] sm:$0xf]
    %v1358 = vld [vmem:[%s2 + $0xb8] sm:$0xf]
    %v1359 = vld [vmem:[%s2 + $0xbc] sm:$0xf]
    %v1360 = vld [vmem:[%s2 + $0xc0] sm:$0xf]
    %v1361 = vld [vmem:[%s2 + $0xc4] sm:$0xf]
    %v1362 = vld [vmem:[%s2 + $0xc8] sm:$0xf]
    %v1363 = vld [vmem:[%s2 + $0xcc] sm:$0xf]
    %v1364 = vld [vmem:[%s2 + $0xd0] sm:$0xf]
    %v1365 = vld [vmem:[%s2 + $0xd4] sm:$0xf]
    %v1366 = vld [vmem:[%s2 + $0xd8] sm:$0xf]
    %v1367 = vld [vmem:[%s2 + $0xdc] sm:$0xf]
    %v1368 = vld [vmem:[%s2 + $0xe0] sm:$0xf]
    %v1369 = vld [vmem:[%s2 + $0xe4] sm:$0xf]
    %v1370 = vld [vmem:[%s2 + $0xe8] sm:$0xf]
    %v1371 = vld [vmem:[%s2 + $0xec] sm:$0xf]
    %v1372 = vld [vmem:[%s2 + $0xf0] sm:$0xf]
    %v1373 = vld [vmem:[%s2 + $0xf4] sm:$0xf]
    %v1374 = vld [vmem:[%s2 + $0xf8] sm:$0xf]
    %v1375 = vld [vmem:[%s2 + $0xfc] sm:$0xf]
    %v1376 = vld [vmem:[%s5] sm:$0xf]
    %v1377 = vld [vmem:[%s5 + $0x4] sm:$0xf]
    %v1378 = vld [vmem:[%s5 + $0x8] sm:$0xf]
    %v1379 = vld [vmem:[%s5 + $0xc] sm:$0xf]
    %v1380 = vld [vmem:[%s5 + $0x10] sm:$0xf]
    %v1381 = vld [vmem:[%s5 + $0x14] sm:$0xf]
    %v1382 = vld [vmem:[%s5 + $0x18] sm:$0xf]
    %v1383 = vld [vmem:[%s5 + $0x1c] sm:$0xf]
    %v1384 = vld [vmem:[%s5 + $0x20] sm:$0xf]
    %v1449 = vunpack.c.l.b16 %v1312
    %v1450 = vunpack.c.l.b16 %v1313
    %v1451 = vunpack.c.l.b16 %v1314
    %v1452 = vunpack.c.l.b16 %v1315
    %v1453 = vunpack.c.l.b16 %v1316
    %v1454 = vunpack.c.l.b16 %v1317
    %v1455 = vunpack.c.l.b16 %v1318
    %v1456 = vunpack.c.l.b16 %v1319
    %v1457 = vunpack.c.l.b16 %v1320
    %v1458 = vunpack.c.l.b16 %v1321
    %v1459 = vunpack.c.l.b16 %v1322
    %v1460 = vunpack.c.l.b16 %v1323
    %v1461 = vunpack.c.l.b16 %v1324
    %v1462 = vunpack.c.l.b16 %v1325
    %v1463 = vunpack.c.l.b16 %v1326
    %v1464 = vunpack.c.l.b16 %v1327
    %v1465 = vunpack.c.l.b16 %v1328
    %v1466 = vunpack.c.l.b16 %v1329
    %v1467 = vunpack.c.l.b16 %v1330
    %v1468 = vunpack.c.l.b16 %v1331
    %v1469 = vunpack.c.l.b16 %v1332
    %v1470 = vunpack.c.l.b16 %v1333
    %v1471 = vunpack.c.l.b16 %v1334
    %v1472 = vunpack.c.l.b16 %v1335
    %v1473 = vunpack.c.l.b16 %v1336
    %v1474 = vunpack.c.l.b16 %v1337
    %v1475 = vunpack.c.l.b16 %v1338
    %v1476 = vunpack.c.l.b16 %v1339
    %v1477 = vunpack.c.l.b16 %v1340
    %v1478 = vunpack.c.l.b16 %v1341
    %v1479 = vunpack.c.l.b16 %v1342
    %v1480 = vunpack.c.l.b16 %v1343
    %v1481 = vunpack.c.l.b16 %v1344
    %v1482 = vunpack.c.l.b16 %v1345
    %v1483 = vunpack.c.l.b16 %v1346
    %v1484 = vunpack.c.l.b16 %v1347
    %v1485 = vunpack.c.l.b16 %v1348
    %v1486 = vunpack.c.l.b16 %v1349
    %v1487 = vunpack.c.l.b16 %v1350
    %v1488 = vunpack.c.l.b16 %v1351
    %v1489 = vunpack.c.l.b16 %v1352
    %v1490 = vunpack.c.l.b16 %v1353
    %v1491 = vunpack.c.l.b16 %v1354
    %v1492 = vunpack.c.l.b16 %v1355
    %v1493 = vunpack.c.l.b16 %v1356
    %v1494 = vunpack.c.l.b16 %v1357
    %v1495 = vunpack.c.l.b16 %v1358
    %v1496 = vunpack.c.l.b16 %v1359
    %v1497 = vunpack.c.l.b16 %v1360
    %v1498 = vunpack.c.l.b16 %v1361
    %v1499 = vunpack.c.l.b16 %v1362
    %v1500 = vunpack.c.l.b16 %v1363
    %v1501 = vunpack.c.l.b16 %v1364
    %v1502 = vunpack.c.l.b16 %v1365
    %v1503 = vunpack.c.l.b16 %v1366
    %v1504 = vunpack.c.l.b16 %v1367
    %v1505 = vunpack.c.l.b16 %v1368
    %v1506 = vunpack.c.l.b16 %v1369
    %v1507 = vunpack.c.l.b16 %v1370
    %v1508 = vunpack.c.l.b16 %v1371
    %v1509 = vunpack.c.l.b16 %v1372
    %v1510 = vunpack.c.l.b16 %v1373
    %v1511 = vunpack.c.l.b16 %v1374
    %v1512 = vunpack.c.l.b16 %v1375
    %v1513 = vpack.c.b16 %v1450, %v1449
    %v1514 = vpack.c.b16 %v1452, %v1451
    %v1515 = vpack.c.b16 %v1454, %v1453
    %v1516 = vpack.c.b16 %v1456, %v1455
    %v1517 = vpack.c.b16 %v1458, %v1457
    %v1518 = vpack.c.b16 %v1460, %v1459
    %v1519 = vpack.c.b16 %v1462, %v1461
    %v1520 = vpack.c.b16 %v1464, %v1463
    %v1521 = vpack.c.b16 %v1466, %v1465
    %v1522 = vpack.c.b16 %v1468, %v1467
    %v1523 = vpack.c.b16 %v1470, %v1469
    %v1524 = vpack.c.b16 %v1472, %v1471
    %v1525 = vpack.c.b16 %v1474, %v1473
    %v1526 = vpack.c.b16 %v1476, %v1475
    %v1527 = vpack.c.b16 %v1478, %v1477
    %v1528 = vpack.c.b16 %v1480, %v1479
    %v1529 = vpack.c.b16 %v1482, %v1481
    %v1530 = vpack.c.b16 %v1484, %v1483
    %v1531 = vpack.c.b16 %v1486, %v1485
    %v1532 = vpack.c.b16 %v1488, %v1487
    %v1533 = vpack.c.b16 %v1490, %v1489
    %v1534 = vpack.c.b16 %v1492, %v1491
    %v1535 = vpack.c.b16 %v1494, %v1493
    %v1536 = vpack.c.b16 %v1496, %v1495
    %v1537 = vpack.c.b16 %v1498, %v1497
    %v1538 = vpack.c.b16 %v1500, %v1499
    %v1539 = vpack.c.b16 %v1502, %v1501
    %v1540 = vpack.c.b16 %v1504, %v1503
    %v1541 = vpack.c.b16 %v1506, %v1505
    %v1542 = vpack.c.b16 %v1508, %v1507
    %v1543 = vpack.c.b16 %v1510, %v1509
    %v1544 = vpack.c.b16 %v1512, %v1511
    %v1554 = vunpack.c.l.b16 %v1376
    %v1555 = vunpack.c.l.b16 %v1377
    %v1556 = vunpack.c.l.b16 %v1378
    %v1557 = vunpack.c.l.b16 %v1379
    %v1558 = vunpack.c.l.b16 %v1380
    %v1559 = vunpack.c.l.b16 %v1381
    %v1560 = vunpack.c.l.b16 %v1382
    %v1561 = vunpack.c.l.b16 %v1383
    %v1562 = vunpack.c.l.b16 %v1384
    %v1563 = vpack.c.b16 %v1555, %v1554
    %v1564 = vpack.c.b16 %v1557, %v1556
    %v1565 = vpack.c.b16 %v1559, %v1558
    %v1566 = vpack.c.b16 %v1561, %v1560
    %v1567 = vpack.c.b16 %v1562, %v1562
    %v1573 = vsel %vm922, %v1513, 0
    %v1576 = vsel %vm922, %v1514, 0
    %v1579 = vsel %vm922, %v1515, 0
    %v1582 = vsel %vm922, %v1516, 0
    %v1585 = vsel %vm922, %v1517, 0
    %v1588 = vsel %vm922, %v1518, 0
    %v1591 = vsel %vm922, %v1519, 0
    %v1594 = vsel %vm922, %v1520, 0
    %v1597 = vsel %vm922, %v1521, 0
    %v1600 = vsel %vm922, %v1522, 0
    %v1603 = vsel %vm922, %v1523, 0
    %v1606 = vsel %vm922, %v1524, 0
    %v1609 = vsel %vm922, %v1525, 0
    %v1612 = vsel %vm922, %v1526, 0
    %v1615 = vsel %vm922, %v1527, 0
    %v1618 = vsel %vm922, %v1528, 0
    %v1621 = vsel %vm922, %v1529, 0
    %v1624 = vsel %vm922, %v1530, 0
    %v1627 = vsel %vm922, %v1531, 0
    %v1630 = vsel %vm922, %v1532, 0
    %v1633 = vsel %vm922, %v1533, 0
    %v1636 = vsel %vm922, %v1534, 0
    %v1639 = vsel %vm922, %v1535, 0
    %v1642 = vsel %vm922, %v1536, 0
    %v1645 = vsel %vm922, %v1537, 0
    %v1648 = vsel %vm922, %v1538, 0
    %v1651 = vsel %vm922, %v1539, 0
    %v1654 = vsel %vm922, %v1540, 0
    %v1657 = vsel %vm922, %v1541, 0
    %v1660 = vsel %vm922, %v1542, 0
    %v1663 = vsel %vm922, %v1543, 0
    %v1666 = vsel %vm922, %v1544, 0
    %v1669 = vsel %vm1019, %v1567, 0
    %1671 = vmatprep.subr.bf16.mxu0 0
    %1672 = vmatpush1.bf16.msra.mxu0 %v1563
    %1673 = vmatprep.subr.bf16.mxu0 0
    %1674 = vmatpush1.bf16.msra.mxu0 %v1564
    %1675 = vmatprep.subr.bf16.mxu0 0
    %1676 = vmatpush1.bf16.msra.mxu0 %v1565
    %1677 = vmatprep.subr.bf16.mxu0 0
    %1678 = vmatpush1.bf16.msra.mxu0 %v1566
    %1679 = vmatprep.subr.bf16.mxu0 0
    %1680 = vmatpush1.bf16.msra.mxu0 %v1669
    %1681 = vmatprep.subr.bf16.mxu0 0
    %1682 = vmatpush1.bf16.msra.mxu0 0
    %1683 = vmatprep.subr.bf16.mxu0 0
    %1684 = vmatpush1.bf16.msra.mxu0 0
    %1685 = vmatprep.subr.bf16.mxu0 0
    %1686 = vmatpush1.bf16.msra.mxu0 0
    %1687 = vmatprep.subr.bf16.mxu0 0
    %1688 = vmatpush1.bf16.msra.mxu0 0
    %1689 = vmatprep.subr.bf16.mxu0 0
    %1690 = vmatpush1.bf16.msra.mxu0 0
    %1691 = vmatprep.subr.bf16.mxu0 0
    %1692 = vmatpush1.bf16.msra.mxu0 0
    %1693 = vmatprep.subr.bf16.mxu0 0
    %1694 = vmatpush1.bf16.msra.mxu0 0
    %1695 = vmatprep.subr.bf16.mxu0 0
    %1696 = vmatpush1.bf16.msra.mxu0 0
    %1697 = vmatprep.subr.bf16.mxu0 0
    %1698 = vmatpush1.bf16.msra.mxu0 0
    %1699 = vmatprep.subr.bf16.mxu0 0
    %1700 = vmatpush1.bf16.msra.mxu0 0
    %1701 = vmatprep.subr.bf16.mxu0 0
    %1702 = vmatpush1.bf16.msra.mxu0 0
    %1703 = vmatprep.mubr.bf16.mxu0 0
    %1704 = vmatmul.mubr.bf16.gmra.mrb[0].mxu0 %v1573
    %v1705 = vpop.f32.mrb[0].mxu0
    %v1706 = vadd.f32 0.0, %v1705
    %v1707 = vpop.f32.mrb[0].mxu0
    %v1708 = vpop.f32.mrb[0].mxu0
    %v1709 = vadd.f32 0.0, %v1708
    %v1710 = vpop.f32.mrb[0].mxu0
    %1711 = vmatprep.mubr.bf16.mxu0 0
    %1712 = vmatmul.mubr.bf16.gmra.mrb[0].mxu0 %v1576
    %v1713 = vpop.f32.mrb[0].mxu0
    %v1714 = vadd.f32 0.0, %v1713
    %v1715 = vpop.f32.mrb[0].mxu0
    %v1716 = vpop.f32.mrb[0].mxu0
    %v1717 = vadd.f32 0.0, %v1716
    %v1718 = vpop.f32.mrb[0].mxu0
    %1719 = vmatprep.mubr.bf16.mxu0 0
    %1720 = vmatmul.mubr.bf16.gmra.mrb[0].mxu0 %v1579
    %v1721 = vpop.f32.mrb[0].mxu0
    %v1722 = vadd.f32 0.0, %v1721
    %v1723 = vpop.f32.mrb[0].mxu0
    %v1724 = vpop.f32.mrb[0].mxu0
    %v1725 = vadd.f32 0.0, %v1724
    %v1726 = vpop.f32.mrb[0].mxu0
    %1727 = vmatprep.mubr.bf16.mxu0 0
    %1728 = vmatmul.mubr.bf16.gmra.mrb[0].mxu0 %v1582
    %v1729 = vpop.f32.mrb[0].mxu0
    %v1730 = vadd.f32 0.0, %v1729
    %v1731 = vpop.f32.mrb[0].mxu0
    %v1732 = vpop.f32.mrb[0].mxu0
    %v1733 = vadd.f32 0.0, %v1732
    %v1734 = vpop.f32.mrb[0].mxu0
    %1735 = vmatprep.mubr.bf16.mxu0 0
    %1736 = vmatmul.mubr.bf16.gmra.mrb[0].mxu0 %v1585
    %v1737 = vpop.f32.mrb[0].mxu0
    %v1738 = vadd.f32 0.0, %v1737
    %v1739 = vpop.f32.mrb[0].mxu0
    %v1740 = vpop.f32.mrb[0].mxu0
    %v1741 = vadd.f32 0.0, %v1740
    %v1742 = vpop.f32.mrb[0].mxu0
    %1743 = vmatprep.mubr.bf16.mxu0 0
    %1744 = vmatmul.mubr.bf16.gmra.mrb[0].mxu0 %v1588
    %v1745 = vpop.f32.mrb[0].mxu0
    %v1746 = vadd.f32 0.0, %v1745
    %v1747 = vpop.f32.mrb[0].mxu0
    %v1748 = vpop.f32.mrb[0].mxu0
    %v1749 = vadd.f32 0.0, %v1748
    %v1750 = vpop.f32.mrb[0].mxu0
    %1751 = vmatprep.mubr.bf16.mxu0 0
    %1752 = vmatmul.mubr.bf16.gmra.mrb[0].mxu0 %v1591
    %v1753 = vpop.f32.mrb[0].mxu0
    %v1754 = vadd.f32 0.0, %v1753
    %v1755 = vpop.f32.mrb[0].mxu0
    %v1756 = vpop.f32.mrb[0].mxu0
    %v1757 = vadd.f32 0.0, %v1756
    %v1758 = vpop.f32.mrb[0].mxu0
    %1759 = vmatprep.mubr.bf16.mxu0 0
    %1760 = vmatmul.mubr.bf16.gmra.mrb[0].mxu0 %v1594
    %v1761 = vpop.f32.mrb[0].mxu0
    %v1762 = vadd.f32 0.0, %v1761
    %v1763 = vpop.f32.mrb[0].mxu0
    %v1764 = vpop.f32.mrb[0].mxu0
    %v1765 = vadd.f32 0.0, %v1764
    %v1766 = vpop.f32.mrb[0].mxu0
    %1767 = vmatprep.mubr.bf16.mxu0 0
    %1768 = vmatmul.mubr.bf16.gmra.mrb[0].mxu0 %v1597
    %v1769 = vpop.f32.mrb[0].mxu0
    %v1770 = vadd.f32 0.0, %v1769
    %v1771 = vpop.f32.mrb[0].mxu0
    %v1772 = vpop.f32.mrb[0].mxu0
    %v1773 = vadd.f32 0.0, %v1772
    %v1774 = vpop.f32.mrb[0].mxu0
    %1775 = vmatprep.mubr.bf16.mxu0 0
    %1776 = vmatmul.mubr.bf16.gmra.mrb[0].mxu0 %v1600
    %v1777 = vpop.f32.mrb[0].mxu0
    %v1778 = vadd.f32 0.0, %v1777
    %v1779 = vpop.f32.mrb[0].mxu0
    %v1780 = vpop.f32.mrb[0].mxu0
    %v1781 = vadd.f32 0.0, %v1780
    %v1782 = vpop.f32.mrb[0].mxu0
    %1783 = vmatprep.mubr.bf16.mxu0 0
    %1784 = vmatmul.mubr.bf16.gmra.mrb[0].mxu0 %v1603
    %v1785 = vpop.f32.mrb[0].mxu0
    %v1786 = vadd.f32 0.0, %v1785
    %v1787 = vpop.f32.mrb[0].mxu0
    %v1788 = vpop.f32.mrb[0].mxu0
    %v1789 = vadd.f32 0.0, %v1788
    %v1790 = vpop.f32.mrb[0].mxu0
    %1791 = vmatprep.mubr.bf16.mxu0 0
    %1792 = vmatmul.mubr.bf16.gmra.mrb[0].mxu0 %v1606
    %v1793 = vpop.f32.mrb[0].mxu0
    %v1794 = vadd.f32 0.0, %v1793
    %v1795 = vpop.f32.mrb[0].mxu0
    %v1796 = vpop.f32.mrb[0].mxu0
    %v1797 = vadd.f32 0.0, %v1796
    %v1798 = vpop.f32.mrb[0].mxu0
    %1799 = vmatprep.mubr.bf16.mxu0 0
    %1800 = vmatmul.mubr.bf16.gmra.mrb[0].mxu0 %v1609
    %v1801 = vpop.f32.mrb[0].mxu0
    %v1802 = vadd.f32 0.0, %v1801
    %v1803 = vpop.f32.mrb[0].mxu0
    %v1804 = vpop.f32.mrb[0].mxu0
    %v1805 = vadd.f32 0.0, %v1804
    %v1806 = vpop.f32.mrb[0].mxu0
    %1807 = vmatprep.mubr.bf16.mxu0 0
    %1808 = vmatmul.mubr.bf16.gmra.mrb[0].mxu0 %v1612
    %v1809 = vpop.f32.mrb[0].mxu0
    %v1810 = vadd.f32 0.0, %v1809
    %v1811 = vpop.f32.mrb[0].mxu0
    %v1812 = vpop.f32.mrb[0].mxu0
    %v1813 = vadd.f32 0.0, %v1812
    %v1814 = vpop.f32.mrb[0].mxu0
    %1815 = vmatprep.mubr.bf16.mxu0 0
    %1816 = vmatmul.mubr.bf16.gmra.mrb[0].mxu0 %v1615
    %v1817 = vpop.f32.mrb[0].mxu0
    %v1818 = vadd.f32 0.0, %v1817
    %v1819 = vpop.f32.mrb[0].mxu0
    %v1820 = vpop.f32.mrb[0].mxu0
    %v1821 = vadd.f32 0.0, %v1820
    %v1822 = vpop.f32.mrb[0].mxu0
    %1823 = vmatprep.mubr.bf16.mxu0 0
    %1824 = vmatmul.mubr.bf16.gmra.mrb[0].mxu0 %v1618
    %v1825 = vpop.f32.mrb[0].mxu0
    %v1826 = vadd.f32 0.0, %v1825
    %v1827 = vpop.f32.mrb[0].mxu0
    %v1828 = vpop.f32.mrb[0].mxu0
    %v1829 = vadd.f32 0.0, %v1828
    %v1830 = vpop.f32.mrb[0].mxu0
    %1831 = vmatprep.mubr.bf16.mxu0 0
    %1832 = vmatmul.mubr.bf16.gmra.mrb[0].mxu0 %v1621
    %v1833 = vpop.f32.mrb[0].mxu0
    %v1834 = vadd.f32 0.0, %v1833
    %v1835 = vpop.f32.mrb[0].mxu0
    %v1836 = vpop.f32.mrb[0].mxu0
    %v1837 = vadd.f32 0.0, %v1836
    %v1838 = vpop.f32.mrb[0].mxu0
    %1839 = vmatprep.mubr.bf16.mxu0 0
    %1840 = vmatmul.mubr.bf16.gmra.mrb[0].mxu0 %v1624
    %v1841 = vpop.f32.mrb[0].mxu0
    %v1842 = vadd.f32 0.0, %v1841
    %v1843 = vpop.f32.mrb[0].mxu0
    %v1844 = vpop.f32.mrb[0].mxu0
    %v1845 = vadd.f32 0.0, %v1844
    %v1846 = vpop.f32.mrb[0].mxu0
    %1847 = vmatprep.mubr.bf16.mxu0 0
    %1848 = vmatmul.mubr.bf16.gmra.mrb[0].mxu0 %v1627
    %v1849 = vpop.f32.mrb[0].mxu0
    %v1850 = vadd.f32 0.0, %v1849
    %v1851 = vpop.f32.mrb[0].mxu0
    %v1852 = vpop.f32.mrb[0].mxu0
    %v1853 = vadd.f32 0.0, %v1852
    %v1854 = vpop.f32.mrb[0].mxu0
    %1855 = vmatprep.mubr.bf16.mxu0 0
    %1856 = vmatmul.mubr.bf16.gmra.mrb[0].mxu0 %v1630
    %v1857 = vpop.f32.mrb[0].mxu0
    %v1858 = vadd.f32 0.0, %v1857
    %v1859 = vpop.f32.mrb[0].mxu0
    %v1860 = vpop.f32.mrb[0].mxu0
    %v1861 = vadd.f32 0.0, %v1860
    %v1862 = vpop.f32.mrb[0].mxu0
    %1863 = vmatprep.mubr.bf16.mxu0 0
    %1864 = vmatmul.mubr.bf16.gmra.mrb[0].mxu0 %v1633
    %v1865 = vpop.f32.mrb[0].mxu0
    %v1866 = vadd.f32 0.0, %v1865
    %v1867 = vpop.f32.mrb[0].mxu0
    %v1868 = vpop.f32.mrb[0].mxu0
    %v1869 = vadd.f32 0.0, %v1868
    %v1870 = vpop.f32.mrb[0].mxu0
    %1871 = vmatprep.mubr.bf16.mxu0 0
    %1872 = vmatmul.mubr.bf16.gmra.mrb[0].mxu0 %v1636
    %v1873 = vpop.f32.mrb[0].mxu0
    %v1874 = vadd.f32 0.0, %v1873
    %v1875 = vpop.f32.mrb[0].mxu0
    %v1876 = vpop.f32.mrb[0].mxu0
    %v1877 = vadd.f32 0.0, %v1876
    %v1878 = vpop.f32.mrb[0].mxu0
    %1879 = vmatprep.mubr.bf16.mxu0 0
    %1880 = vmatmul.mubr.bf16.gmra.mrb[0].mxu0 %v1639
    %v1881 = vpop.f32.mrb[0].mxu0
    %v1882 = vadd.f32 0.0, %v1881
    %v1883 = vpop.f32.mrb[0].mxu0
    %v1884 = vpop.f32.mrb[0].mxu0
    %v1885 = vadd.f32 0.0, %v1884
    %v1886 = vpop.f32.mrb[0].mxu0
    %1887 = vmatprep.mubr.bf16.mxu0 0
    %1888 = vmatmul.mubr.bf16.gmra.mrb[0].mxu0 %v1642
    %v1889 = vpop.f32.mrb[0].mxu0
    %v1890 = vadd.f32 0.0, %v1889
    %v1891 = vpop.f32.mrb[0].mxu0
    %v1892 = vpop.f32.mrb[0].mxu0
    %v1893 = vadd.f32 0.0, %v1892
    %v1894 = vpop.f32.mrb[0].mxu0
    %1895 = vmatprep.mubr.bf16.mxu0 0
    %1896 = vmatmul.mubr.bf16.gmra.mrb[0].mxu0 %v1645
    %v1897 = vpop.f32.mrb[0].mxu0
    %v1898 = vadd.f32 0.0, %v1897
    %v1899 = vpop.f32.mrb[0].mxu0
    %v1900 = vpop.f32.mrb[0].mxu0
    %v1901 = vadd.f32 0.0, %v1900
    %v1902 = vpop.f32.mrb[0].mxu0
    %1903 = vmatprep.mubr.bf16.mxu0 0
    %1904 = vmatmul.mubr.bf16.gmra.mrb[0].mxu0 %v1648
    %v1905 = vpop.f32.mrb[0].mxu0
    %v1906 = vadd.f32 0.0, %v1905
    %v1907 = vpop.f32.mrb[0].mxu0
    %v1908 = vpop.f32.mrb[0].mxu0
    %v1909 = vadd.f32 0.0, %v1908
    %v1910 = vpop.f32.mrb[0].mxu0
    %1911 = vmatprep.mubr.bf16.mxu0 0
    %1912 = vmatmul.mubr.bf16.gmra.mrb[0].mxu0 %v1651
    %v1913 = vpop.f32.mrb[0].mxu0
    %v1914 = vadd.f32 0.0, %v1913
    %v1915 = vpop.f32.mrb[0].mxu0
    %v1916 = vpop.f32.mrb[0].mxu0
    %v1917 = vadd.f32 0.0, %v1916
    %v1918 = vpop.f32.mrb[0].mxu0
    %1919 = vmatprep.mubr.bf16.mxu0 0
    %1920 = vmatmul.mubr.bf16.gmra.mrb[0].mxu0 %v1654
    %v1921 = vpop.f32.mrb[0].mxu0
    %v1922 = vadd.f32 0.0, %v1921
    %v1923 = vpop.f32.mrb[0].mxu0
    %v1924 = vpop.f32.mrb[0].mxu0
    %v1925 = vadd.f32 0.0, %v1924
    %v1926 = vpop.f32.mrb[0].mxu0
    %1927 = vmatprep.mubr.bf16.mxu0 0
    %1928 = vmatmul.mubr.bf16.gmra.mrb[0].mxu0 %v1657
    %v1929 = vpop.f32.mrb[0].mxu0
    %v1930 = vadd.f32 0.0, %v1929
    %v1931 = vpop.f32.mrb[0].mxu0
    %v1932 = vpop.f32.mrb[0].mxu0
    %v1933 = vadd.f32 0.0, %v1932
    %v1934 = vpop.f32.mrb[0].mxu0
    %1935 = vmatprep.mubr.bf16.mxu0 0
    %1936 = vmatmul.mubr.bf16.gmra.mrb[0].mxu0 %v1660
    %v1937 = vpop.f32.mrb[0].mxu0
    %v1938 = vadd.f32 0.0, %v1937
    %v1939 = vpop.f32.mrb[0].mxu0
    %v1940 = vpop.f32.mrb[0].mxu0
    %v1941 = vadd.f32 0.0, %v1940
    %v1942 = vpop.f32.mrb[0].mxu0
    %1943 = vmatprep.mubr.bf16.mxu0 0
    %1944 = vmatmul.mubr.bf16.gmra.mrb[0].mxu0 %v1663
    %v1945 = vpop.f32.mrb[0].mxu0
    %v1946 = vadd.f32 0.0, %v1945
    %v1947 = vpop.f32.mrb[0].mxu0
    %v1948 = vpop.f32.mrb[0].mxu0
    %v1949 = vadd.f32 0.0, %v1948
    %v1950 = vpop.f32.mrb[0].mxu0
    %1951 = vmatprep.mubr.bf16.mxu0 0
    %1952 = vmatmul.mubr.bf16.gmra.mrb[0].mxu0 %v1666
    %v1953 = vpop.f32.mrb[0].mxu0
    %v1954 = vadd.f32 0.0, %v1953
    %v1955 = vpop.f32.mrb[0].mxu0
    %v1956 = vpop.f32.mrb[0].mxu0
    %v1957 = vadd.f32 0.0, %v1956
    %v1958 = vpop.f32.mrb[0].mxu0
    %1959 = vdwg.mxu0
    %v1960 = vadd.f32 %v1058, %v1706
    %v1961 = vadd.f32 %v1061, %v1709
    %v1962 = vadd.f32 %v1066, %v1714
    %v1963 = vadd.f32 %v1069, %v1717
    %v1964 = vadd.f32 %v1074, %v1722
    %v1965 = vadd.f32 %v1077, %v1725
    %v1966 = vadd.f32 %v1082, %v1730
    %v1967 = vadd.f32 %v1085, %v1733
    %v1968 = vadd.f32 %v1090, %v1738
    %v1969 = vadd.f32 %v1093, %v1741
    %v1970 = vadd.f32 %v1098, %v1746
    %v1971 = vadd.f32 %v1101, %v1749
    %v1972 = vadd.f32 %v1106, %v1754
    %v1973 = vadd.f32 %v1109, %v1757
    %v1974 = vadd.f32 %v1114, %v1762
    %v1975 = vadd.f32 %v1117, %v1765
    %v1976 = vadd.f32 %v1122, %v1770
    %v1977 = vadd.f32 %v1125, %v1773
    %v1978 = vadd.f32 %v1130, %v1778
    %v1979 = vadd.f32 %v1133, %v1781
    %v1980 = vadd.f32 %v1138, %v1786
    %v1981 = vadd.f32 %v1141, %v1789
    %v1982 = vadd.f32 %v1146, %v1794
    %v1983 = vadd.f32 %v1149, %v1797
    %v1984 = vadd.f32 %v1154, %v1802
    %v1985 = vadd.f32 %v1157, %v1805
    %v1986 = vadd.f32 %v1162, %v1810
    %v1987 = vadd.f32 %v1165, %v1813
    %v1988 = vadd.f32 %v1170, %v1818
    %v1989 = vadd.f32 %v1173, %v1821
    %v1990 = vadd.f32 %v1178, %v1826
    %v1991 = vadd.f32 %v1181, %v1829
    %v1992 = vadd.f32 %v1186, %v1834
    %v1993 = vadd.f32 %v1189, %v1837
    %v1994 = vadd.f32 %v1194, %v1842
    %v1995 = vadd.f32 %v1197, %v1845
    %v1996 = vadd.f32 %v1202, %v1850
    %v1997 = vadd.f32 %v1205, %v1853
    %v1998 = vadd.f32 %v1210, %v1858
    %v1999 = vadd.f32 %v1213, %v1861
    %v2000 = vadd.f32 %v1218, %v1866
    %v2001 = vadd.f32 %v1221, %v1869
    %v2002 = vadd.f32 %v1226, %v1874
    %v2003 = vadd.f32 %v1229, %v1877
    %v2004 = vadd.f32 %v1234, %v1882
    %v2005 = vadd.f32 %v1237, %v1885
    %v2006 = vadd.f32 %v1242, %v1890
    %v2007 = vadd.f32 %v1245, %v1893
    %v2008 = vadd.f32 %v1250, %v1898
    %v2009 = vadd.f32 %v1253, %v1901
    %v2010 = vadd.f32 %v1258, %v1906
    %v2011 = vadd.f32 %v1261, %v1909
    %v2012 = vadd.f32 %v1266, %v1914
    %v2013 = vadd.f32 %v1269, %v1917
    %v2014 = vadd.f32 %v1274, %v1922
    %v2015 = vadd.f32 %v1277, %v1925
    %v2016 = vadd.f32 %v1282, %v1930
    %v2017 = vadd.f32 %v1285, %v1933
    %v2018 = vadd.f32 %v1290, %v1938
    %v2019 = vadd.f32 %v1293, %v1941
    %v2020 = vadd.f32 %v1298, %v1946
    %v2021 = vadd.f32 %v1301, %v1949
    %v2022 = vadd.f32 %v1306, %v1954
    %v2023 = vadd.f32 %v1309, %v1957
    %v2024 = vld [vmem:[%s6] sm:$0x1]
    %v2026 = vlaneseq
    %v2027 = vshrl.u32 %v2026, 7
    %v2028 = vsub.s32 0, %v2027
    %v2029 = vrot.slane %v2024, %v2028
    %v2031 = vadd.f32 %v1960, %v2029
    %v2032 = vadd.f32 %v1961, %v2029
    %v2033 = vadd.f32 %v1962, %v2029
    %v2034 = vadd.f32 %v1963, %v2029
    %v2035 = vadd.f32 %v1964, %v2029
    %v2036 = vadd.f32 %v1965, %v2029
    %v2037 = vadd.f32 %v1966, %v2029
    %v2038 = vadd.f32 %v1967, %v2029
    %v2039 = vadd.f32 %v1968, %v2029
    %v2040 = vadd.f32 %v1969, %v2029
    %v2041 = vadd.f32 %v1970, %v2029
    %v2042 = vadd.f32 %v1971, %v2029
    %v2043 = vadd.f32 %v1972, %v2029
    %v2044 = vadd.f32 %v1973, %v2029
    %v2045 = vadd.f32 %v1974, %v2029
    %v2046 = vadd.f32 %v1975, %v2029
    %v2047 = vadd.f32 %v1976, %v2029
    %v2048 = vadd.f32 %v1977, %v2029
    %v2049 = vadd.f32 %v1978, %v2029
    %v2050 = vadd.f32 %v1979, %v2029
    %v2051 = vadd.f32 %v1980, %v2029
    %v2052 = vadd.f32 %v1981, %v2029
    %v2053 = vadd.f32 %v1982, %v2029
    %v2054 = vadd.f32 %v1983, %v2029
    %v2055 = vadd.f32 %v1984, %v2029
    %v2056 = vadd.f32 %v1985, %v2029
    %v2057 = vadd.f32 %v1986, %v2029
    %v2058 = vadd.f32 %v1987, %v2029
    %v2059 = vadd.f32 %v1988, %v2029
    %v2060 = vadd.f32 %v1989, %v2029
    %v2061 = vadd.f32 %v1990, %v2029
    %v2062 = vadd.f32 %v1991, %v2029
    %v2063 = vadd.f32 %v1992, %v2029
    %v2064 = vadd.f32 %v1993, %v2029
    %v2065 = vadd.f32 %v1994, %v2029
    %v2066 = vadd.f32 %v1995, %v2029
    %v2067 = vadd.f32 %v1996, %v2029
    %v2068 = vadd.f32 %v1997, %v2029
    %v2069 = vadd.f32 %v1998, %v2029
    %v2070 = vadd.f32 %v1999, %v2029
    %v2071 = vadd.f32 %v2000, %v2029
    %v2072 = vadd.f32 %v2001, %v2029
    %v2073 = vadd.f32 %v2002, %v2029
    %v2074 = vadd.f32 %v2003, %v2029
    %v2075 = vadd.f32 %v2004, %v2029
    %v2076 = vadd.f32 %v2005, %v2029
    %v2077 = vadd.f32 %v2006, %v2029
    %v2078 = vadd.f32 %v2007, %v2029
    %v2079 = vadd.f32 %v2008, %v2029
    %v2080 = vadd.f32 %v2009, %v2029
    %v2081 = vadd.f32 %v2010, %v2029
    %v2082 = vadd.f32 %v2011, %v2029
    %v2083 = vadd.f32 %v2012, %v2029
    %v2084 = vadd.f32 %v2013, %v2029
    %v2085 = vadd.f32 %v2014, %v2029
    %v2086 = vadd.f32 %v2015, %v2029
    %v2087 = vadd.f32 %v2016, %v2029
    %v2088 = vadd.f32 %v2017, %v2029
    %v2089 = vadd.f32 %v2018, %v2029
    %v2090 = vadd.f32 %v2019, %v2029
    %v2091 = vadd.f32 %v2020, %v2029
    %v2092 = vadd.f32 %v2021, %v2029
    %v2093 = vadd.f32 %v2022, %v2029
    %v2094 = vadd.f32 %v2023, %v2029
    %v2095 = vmax.f32 %v2031, 0.0
    %v2096 = vmax.f32 %v2032, 0.0
    %v2097 = vmax.f32 %v2033, 0.0
    %v2098 = vmax.f32 %v2034, 0.0
    %v2099 = vmax.f32 %v2035, 0.0
    %v2100 = vmax.f32 %v2036, 0.0
    %v2101 = vmax.f32 %v2037, 0.0
    %v2102 = vmax.f32 %v2038, 0.0
    %v2103 = vmax.f32 %v2039, 0.0
    %v2104 = vmax.f32 %v2040, 0.0
    %v2105 = vmax.f32 %v2041, 0.0
    %v2106 = vmax.f32 %v2042, 0.0
    %v2107 = vmax.f32 %v2043, 0.0
    %v2108 = vmax.f32 %v2044, 0.0
    %v2109 = vmax.f32 %v2045, 0.0
    %v2110 = vmax.f32 %v2046, 0.0
    %v2111 = vmax.f32 %v2047, 0.0
    %v2112 = vmax.f32 %v2048, 0.0
    %v2113 = vmax.f32 %v2049, 0.0
    %v2114 = vmax.f32 %v2050, 0.0
    %v2115 = vmax.f32 %v2051, 0.0
    %v2116 = vmax.f32 %v2052, 0.0
    %v2117 = vmax.f32 %v2053, 0.0
    %v2118 = vmax.f32 %v2054, 0.0
    %v2119 = vmax.f32 %v2055, 0.0
    %v2120 = vmax.f32 %v2056, 0.0
    %v2121 = vmax.f32 %v2057, 0.0
    %v2122 = vmax.f32 %v2058, 0.0
    %v2123 = vmax.f32 %v2059, 0.0
    %v2124 = vmax.f32 %v2060, 0.0
    %v2125 = vmax.f32 %v2061, 0.0
    %v2126 = vmax.f32 %v2062, 0.0
    %v2127 = vmax.f32 %v2063, 0.0
    %v2128 = vmax.f32 %v2064, 0.0
    %v2129 = vmax.f32 %v2065, 0.0
    %v2130 = vmax.f32 %v2066, 0.0
    %v2131 = vmax.f32 %v2067, 0.0
    %v2132 = vmax.f32 %v2068, 0.0
    %v2133 = vmax.f32 %v2069, 0.0
    %v2134 = vmax.f32 %v2070, 0.0
    %v2135 = vmax.f32 %v2071, 0.0
    %v2136 = vmax.f32 %v2072, 0.0
    %v2137 = vmax.f32 %v2073, 0.0
    %v2138 = vmax.f32 %v2074, 0.0
    %v2139 = vmax.f32 %v2075, 0.0
    %v2140 = vmax.f32 %v2076, 0.0
    %v2141 = vmax.f32 %v2077, 0.0
    %v2142 = vmax.f32 %v2078, 0.0
    %v2143 = vmax.f32 %v2079, 0.0
    %v2144 = vmax.f32 %v2080, 0.0
    %v2145 = vmax.f32 %v2081, 0.0
    %v2146 = vmax.f32 %v2082, 0.0
    %v2147 = vmax.f32 %v2083, 0.0
    %v2148 = vmax.f32 %v2084, 0.0
    %v2149 = vmax.f32 %v2085, 0.0
    %v2150 = vmax.f32 %v2086, 0.0
    %v2151 = vmax.f32 %v2087, 0.0
    %v2152 = vmax.f32 %v2088, 0.0
    %v2153 = vmax.f32 %v2089, 0.0
    %v2154 = vmax.f32 %v2090, 0.0
    %v2155 = vmax.f32 %v2091, 0.0
    %v2156 = vmax.f32 %v2092, 0.0
    %v2157 = vmax.f32 %v2093, 0.0
    %v2158 = vmax.f32 %v2094, 0.0
    %v2159 = vpack.c.bf16 %v2096, %v2095
    %v2160 = vpack.c.bf16 %v2098, %v2097
    %v2161 = vpack.c.bf16 %v2100, %v2099
    %v2162 = vpack.c.bf16 %v2102, %v2101
    %v2163 = vpack.c.bf16 %v2104, %v2103
    %v2164 = vpack.c.bf16 %v2106, %v2105
    %v2165 = vpack.c.bf16 %v2108, %v2107
    %v2166 = vpack.c.bf16 %v2110, %v2109
    %v2167 = vpack.c.bf16 %v2112, %v2111
    %v2168 = vpack.c.bf16 %v2114, %v2113
    %v2169 = vpack.c.bf16 %v2116, %v2115
    %v2170 = vpack.c.bf16 %v2118, %v2117
    %v2171 = vpack.c.bf16 %v2120, %v2119
    %v2172 = vpack.c.bf16 %v2122, %v2121
    %v2173 = vpack.c.bf16 %v2124, %v2123
    %v2174 = vpack.c.bf16 %v2126, %v2125
    %v2175 = vpack.c.bf16 %v2128, %v2127
    %v2176 = vpack.c.bf16 %v2130, %v2129
    %v2177 = vpack.c.bf16 %v2132, %v2131
    %v2178 = vpack.c.bf16 %v2134, %v2133
    %v2179 = vpack.c.bf16 %v2136, %v2135
    %v2180 = vpack.c.bf16 %v2138, %v2137
    %v2181 = vpack.c.bf16 %v2140, %v2139
    %v2182 = vpack.c.bf16 %v2142, %v2141
    %v2183 = vpack.c.bf16 %v2144, %v2143
    %v2184 = vpack.c.bf16 %v2146, %v2145
    %v2185 = vpack.c.bf16 %v2148, %v2147
    %v2186 = vpack.c.bf16 %v2150, %v2149
    %v2187 = vpack.c.bf16 %v2152, %v2151
    %v2188 = vpack.c.bf16 %v2154, %v2153
    %v2189 = vpack.c.bf16 %v2156, %v2155
    %v2190 = vpack.c.bf16 %v2158, %v2157
    %v2223 = vunpack.c.l.b16 %v2159
    %v2224 = vunpack.c.h.b16 %v2159
    %v2225 = vunpack.c.l.b16 %v2160
    %v2226 = vunpack.c.h.b16 %v2160
    %v2227 = vunpack.c.l.b16 %v2161
    %v2228 = vunpack.c.h.b16 %v2161
    %v2229 = vunpack.c.l.b16 %v2162
    %v2230 = vunpack.c.h.b16 %v2162
    %v2231 = vunpack.c.l.b16 %v2163
    %v2232 = vunpack.c.h.b16 %v2163
    %v2233 = vunpack.c.l.b16 %v2164
    %v2234 = vunpack.c.h.b16 %v2164
    %v2235 = vunpack.c.l.b16 %v2165
    %v2236 = vunpack.c.h.b16 %v2165
    %v2237 = vunpack.c.l.b16 %v2166
    %v2238 = vunpack.c.h.b16 %v2166
    %v2239 = vunpack.c.l.b16 %v2167
    %v2240 = vunpack.c.h.b16 %v2167
    %v2241 = vunpack.c.l.b16 %v2168
    %v2242 = vunpack.c.h.b16 %v2168
    %v2243 = vunpack.c.l.b16 %v2169
    %v2244 = vunpack.c.h.b16 %v2169
    %v2245 = vunpack.c.l.b16 %v2170
    %v2246 = vunpack.c.h.b16 %v2170
    %v2247 = vunpack.c.l.b16 %v2171
    %v2248 = vunpack.c.h.b16 %v2171
    %v2249 = vunpack.c.l.b16 %v2172
    %v2250 = vunpack.c.h.b16 %v2172
    %v2251 = vunpack.c.l.b16 %v2173
    %v2252 = vunpack.c.h.b16 %v2173
    %v2253 = vunpack.c.l.b16 %v2174
    %v2254 = vunpack.c.h.b16 %v2174
    %v2255 = vunpack.c.l.b16 %v2175
    %v2256 = vunpack.c.h.b16 %v2175
    %v2257 = vunpack.c.l.b16 %v2176
    %v2258 = vunpack.c.h.b16 %v2176
    %v2259 = vunpack.c.l.b16 %v2177
    %v2260 = vunpack.c.h.b16 %v2177
    %v2261 = vunpack.c.l.b16 %v2178
    %v2262 = vunpack.c.h.b16 %v2178
    %v2263 = vunpack.c.l.b16 %v2179
    %v2264 = vunpack.c.h.b16 %v2179
    %v2265 = vunpack.c.l.b16 %v2180
    %v2266 = vunpack.c.h.b16 %v2180
    %v2267 = vunpack.c.l.b16 %v2181
    %v2268 = vunpack.c.h.b16 %v2181
    %v2269 = vunpack.c.l.b16 %v2182
    %v2270 = vunpack.c.h.b16 %v2182
    %v2271 = vunpack.c.l.b16 %v2183
    %v2272 = vunpack.c.h.b16 %v2183
    %v2273 = vunpack.c.l.b16 %v2184
    %v2274 = vunpack.c.h.b16 %v2184
    %v2275 = vunpack.c.l.b16 %v2185
    %v2276 = vunpack.c.h.b16 %v2185
    %v2277 = vunpack.c.l.b16 %v2186
    %v2278 = vunpack.c.h.b16 %v2186
    %v2279 = vunpack.c.l.b16 %v2187
    %v2280 = vunpack.c.h.b16 %v2187
    %v2281 = vunpack.c.l.b16 %v2188
    %v2282 = vunpack.c.h.b16 %v2188
    %v2283 = vunpack.c.l.b16 %v2189
    %v2284 = vunpack.c.h.b16 %v2189
    %v2285 = vunpack.c.l.b16 %v2190
    %v2286 = vunpack.c.h.b16 %v2190
    %v2287 = vpack.c.b16 %v2223, %v2223
    %v2288 = vpack.c.b16 %v2224, %v2224
    %v2289 = vpack.c.b16 %v2225, %v2225
    %v2290 = vpack.c.b16 %v2226, %v2226
    %v2291 = vpack.c.b16 %v2227, %v2227
    %v2292 = vpack.c.b16 %v2228, %v2228
    %v2293 = vpack.c.b16 %v2229, %v2229
    %v2294 = vpack.c.b16 %v2230, %v2230
    %v2295 = vpack.c.b16 %v2231, %v2231
    %v2296 = vpack.c.b16 %v2232, %v2232
    %v2297 = vpack.c.b16 %v2233, %v2233
    %v2298 = vpack.c.b16 %v2234, %v2234
    %v2299 = vpack.c.b16 %v2235, %v2235
    %v2300 = vpack.c.b16 %v2236, %v2236
    %v2301 = vpack.c.b16 %v2237, %v2237
    %v2302 = vpack.c.b16 %v2238, %v2238
    %v2303 = vpack.c.b16 %v2239, %v2239
    %v2304 = vpack.c.b16 %v2240, %v2240
    %v2305 = vpack.c.b16 %v2241, %v2241
    %v2306 = vpack.c.b16 %v2242, %v2242
    %v2307 = vpack.c.b16 %v2243, %v2243
    %v2308 = vpack.c.b16 %v2244, %v2244
    %v2309 = vpack.c.b16 %v2245, %v2245
    %v2310 = vpack.c.b16 %v2246, %v2246
    %v2311 = vpack.c.b16 %v2247, %v2247
    %v2312 = vpack.c.b16 %v2248, %v2248
    %v2313 = vpack.c.b16 %v2249, %v2249
    %v2314 = vpack.c.b16 %v2250, %v2250
    %v2315 = vpack.c.b16 %v2251, %v2251
    %v2316 = vpack.c.b16 %v2252, %v2252
    %v2317 = vpack.c.b16 %v2253, %v2253
    %v2318 = vpack.c.b16 %v2254, %v2254
    %v2319 = vpack.c.b16 %v2255, %v2255
    %v2320 = vpack.c.b16 %v2256, %v2256
    %v2321 = vpack.c.b16 %v2257, %v2257
    %v2322 = vpack.c.b16 %v2258, %v2258
    %v2323 = vpack.c.b16 %v2259, %v2259
    %v2324 = vpack.c.b16 %v2260, %v2260
    %v2325 = vpack.c.b16 %v2261, %v2261
    %v2326 = vpack.c.b16 %v2262, %v2262
    %v2327 = vpack.c.b16 %v2263, %v2263
    %v2328 = vpack.c.b16 %v2264, %v2264
    %v2329 = vpack.c.b16 %v2265, %v2265
    %v2330 = vpack.c.b16 %v2266, %v2266
    %v2331 = vpack.c.b16 %v2267, %v2267
    %v2332 = vpack.c.b16 %v2268, %v2268
    %v2333 = vpack.c.b16 %v2269, %v2269
    %v2334 = vpack.c.b16 %v2270, %v2270
    %v2335 = vpack.c.b16 %v2271, %v2271
    %v2336 = vpack.c.b16 %v2272, %v2272
    %v2337 = vpack.c.b16 %v2273, %v2273
    %v2338 = vpack.c.b16 %v2274, %v2274
    %v2339 = vpack.c.b16 %v2275, %v2275
    %v2340 = vpack.c.b16 %v2276, %v2276
    %v2341 = vpack.c.b16 %v2277, %v2277
    %v2342 = vpack.c.b16 %v2278, %v2278
    %v2343 = vpack.c.b16 %v2279, %v2279
    %v2344 = vpack.c.b16 %v2280, %v2280
    %v2345 = vpack.c.b16 %v2281, %v2281
    %v2346 = vpack.c.b16 %v2282, %v2282
    %v2347 = vpack.c.b16 %v2283, %v2283
    %v2348 = vpack.c.b16 %v2284, %v2284
    %v2349 = vpack.c.b16 %v2285, %v2285
    %v2350 = vpack.c.b16 %v2286, %v2286
    %vm2415 = vcmask 27648
    %2416 = vst.msk [vmem:[#allocation2] sm:$0xf] %vm2415, %v2287
    %2417 = vst.msk [vmem:[#allocation2 + $0x4] sm:$0xf] %vm2415, %v2288
    %2418 = vst.msk [vmem:[#allocation2 + $0x8] sm:$0xf] %vm2415, %v2289
    %2419 = vst.msk [vmem:[#allocation2 + $0xc] sm:$0xf] %vm2415, %v2290
    %2420 = vst.msk [vmem:[#allocation2 + $0x10] sm:$0xf] %vm2415, %v2291
    %2421 = vst.msk [vmem:[#allocation2 + $0x14] sm:$0xf] %vm2415, %v2292
    %2422 = vst.msk [vmem:[#allocation2 + $0x18] sm:$0xf] %vm2415, %v2293
    %2423 = vst.msk [vmem:[#allocation2 + $0x1c] sm:$0xf] %vm2415, %v2294
    %2424 = vst.msk [vmem:[#allocation2 + $0x20] sm:$0xf] %vm2415, %v2295
    %2425 = vst.msk [vmem:[#allocation2 + $0x24] sm:$0xf] %vm2415, %v2296
    %2426 = vst.msk [vmem:[#allocation2 + $0x28] sm:$0xf] %vm2415, %v2297
    %2427 = vst.msk [vmem:[#allocation2 + $0x2c] sm:$0xf] %vm2415, %v2298
    %2428 = vst.msk [vmem:[#allocation2 + $0x30] sm:$0xf] %vm2415, %v2299
    %2429 = vst.msk [vmem:[#allocation2 + $0x34] sm:$0xf] %vm2415, %v2300
    %2430 = vst.msk [vmem:[#allocation2 + $0x38] sm:$0xf] %vm2415, %v2301
    %2431 = vst.msk [vmem:[#allocation2 + $0x3c] sm:$0xf] %vm2415, %v2302
    %2432 = vst.msk [vmem:[#allocation2 + $0x40] sm:$0xf] %vm2415, %v2303
    %2433 = vst.msk [vmem:[#allocation2 + $0x44] sm:$0xf] %vm2415, %v2304
    %2434 = vst.msk [vmem:[#allocation2 + $0x48] sm:$0xf] %vm2415, %v2305
    %2435 = vst.msk [vmem:[#allocation2 + $0x4c] sm:$0xf] %vm2415, %v2306
    %2436 = vst.msk [vmem:[#allocation2 + $0x50] sm:$0xf] %vm2415, %v2307
    %2437 = vst.msk [vmem:[#allocation2 + $0x54] sm:$0xf] %vm2415, %v2308
    %2438 = vst.msk [vmem:[#allocation2 + $0x58] sm:$0xf] %vm2415, %v2309
    %2439 = vst.msk [vmem:[#allocation2 + $0x5c] sm:$0xf] %vm2415, %v2310
    %2440 = vst.msk [vmem:[#allocation2 + $0x60] sm:$0xf] %vm2415, %v2311
    %2441 = vst.msk [vmem:[#allocation2 + $0x64] sm:$0xf] %vm2415, %v2312
    %2442 = vst.msk [vmem:[#allocation2 + $0x68] sm:$0xf] %vm2415, %v2313
    %2443 = vst.msk [vmem:[#allocation2 + $0x6c] sm:$0xf] %vm2415, %v2314
    %2444 = vst.msk [vmem:[#allocation2 + $0x70] sm:$0xf] %vm2415, %v2315
    %2445 = vst.msk [vmem:[#allocation2 + $0x74] sm:$0xf] %vm2415, %v2316
    %2446 = vst.msk [vmem:[#allocation2 + $0x78] sm:$0xf] %vm2415, %v2317
    %2447 = vst.msk [vmem:[#allocation2 + $0x7c] sm:$0xf] %vm2415, %v2318
    %2448 = vst.msk [vmem:[#allocation2 + $0x80] sm:$0xf] %vm2415, %v2319
    %2449 = vst.msk [vmem:[#allocation2 + $0x84] sm:$0xf] %vm2415, %v2320
    %2450 = vst.msk [vmem:[#allocation2 + $0x88] sm:$0xf] %vm2415, %v2321
    %2451 = vst.msk [vmem:[#allocation2 + $0x8c] sm:$0xf] %vm2415, %v2322
    %2452 = vst.msk [vmem:[#allocation2 + $0x90] sm:$0xf] %vm2415, %v2323
    %2453 = vst.msk [vmem:[#allocation2 + $0x94] sm:$0xf] %vm2415, %v2324
    %2454 = vst.msk [vmem:[#allocation2 + $0x98] sm:$0xf] %vm2415, %v2325
    %2455 = vst.msk [vmem:[#allocation2 + $0x9c] sm:$0xf] %vm2415, %v2326
    %2456 = vst.msk [vmem:[#allocation2 + $0xa0] sm:$0xf] %vm2415, %v2327
    %2457 = vst.msk [vmem:[#allocation2 + $0xa4] sm:$0xf] %vm2415, %v2328
    %2458 = vst.msk [vmem:[#allocation2 + $0xa8] sm:$0xf] %vm2415, %v2329
    %2459 = vst.msk [vmem:[#allocation2 + $0xac] sm:$0xf] %vm2415, %v2330
    %2460 = vst.msk [vmem:[#allocation2 + $0xb0] sm:$0xf] %vm2415, %v2331
    %2461 = vst.msk [vmem:[#allocation2 + $0xb4] sm:$0xf] %vm2415, %v2332
    %2462 = vst.msk [vmem:[#allocation2 + $0xb8] sm:$0xf] %vm2415, %v2333
    %2463 = vst.msk [vmem:[#allocation2 + $0xbc] sm:$0xf] %vm2415, %v2334
    %2464 = vst.msk [vmem:[#allocation2 + $0xc0] sm:$0xf] %vm2415, %v2335
    %2465 = vst.msk [vmem:[#allocation2 + $0xc4] sm:$0xf] %vm2415, %v2336
    %2466 = vst.msk [vmem:[#allocation2 + $0xc8] sm:$0xf] %vm2415, %v2337
    %2467 = vst.msk [vmem:[#allocation2 + $0xcc] sm:$0xf] %vm2415, %v2338
    %2468 = vst.msk [vmem:[#allocation2 + $0xd0] sm:$0xf] %vm2415, %v2339
    %2469 = vst.msk [vmem:[#allocation2 + $0xd4] sm:$0xf] %vm2415, %v2340
    %2470 = vst.msk [vmem:[#allocation2 + $0xd8] sm:$0xf] %vm2415, %v2341
    %2471 = vst.msk [vmem:[#allocation2 + $0xdc] sm:$0xf] %vm2415, %v2342
    %2472 = vst.msk [vmem:[#allocation2 + $0xe0] sm:$0xf] %vm2415, %v2343
    %2473 = vst.msk [vmem:[#allocation2 + $0xe4] sm:$0xf] %vm2415, %v2344
    %2474 = vst.msk [vmem:[#allocation2 + $0xe8] sm:$0xf] %vm2415, %v2345
    %2475 = vst.msk [vmem:[#allocation2 + $0xec] sm:$0xf] %vm2415, %v2346
    %2476 = vst.msk [vmem:[#allocation2 + $0xf0] sm:$0xf] %vm2415, %v2347
    %2477 = vst.msk [vmem:[#allocation2 + $0xf4] sm:$0xf] %vm2415, %v2348
    %2478 = vst.msk [vmem:[#allocation2 + $0xf8] sm:$0xf] %vm2415, %v2349
    %2479 = vst.msk [vmem:[#allocation2 + $0xfc] sm:$0xf] %vm2415, %v2350
    %v2480 = vld [vmem:[%s7] sm:$0xf]
    %v2481 = vld [vmem:[%s8] sm:$0x1]
    %v2483 = vlaneseq
    %v2484 = vshrl.u32 %v2483, 7
    %v2485 = vsub.s32 0, %v2484
    %v2486 = vrot.slane %v2481, %v2485
    %vm2488 = vcmask 31744
    %v2490 = vsel %vm2488, %v2095, 0
    %v2493 = vsel %vm2488, %v2096, 0
    %v2496 = vsel %vm2488, %v2097, 0
    %v2499 = vsel %vm2488, %v2098, 0
    %v2502 = vsel %vm2488, %v2099, 0
    %v2505 = vsel %vm2488, %v2100, 0
    %v2508 = vsel %vm2488, %v2101, 0
    %v2511 = vsel %vm2488, %v2102, 0
    %v2514 = vsel %vm2488, %v2103, 0
    %v2517 = vsel %vm2488, %v2104, 0
    %v2520 = vsel %vm2488, %v2105, 0
    %v2523 = vsel %vm2488, %v2106, 0
    %v2526 = vsel %vm2488, %v2107, 0
    %v2529 = vsel %vm2488, %v2108, 0
    %v2532 = vsel %vm2488, %v2109, 0
    %v2535 = vsel %vm2488, %v2110, 0
    %v2538 = vsel %vm2488, %v2111, 0
    %v2541 = vsel %vm2488, %v2112, 0
    %v2544 = vsel %vm2488, %v2113, 0
    %v2547 = vsel %vm2488, %v2114, 0
    %v2550 = vsel %vm2488, %v2115, 0
    %v2553 = vsel %vm2488, %v2116, 0
    %v2556 = vsel %vm2488, %v2117, 0
    %v2559 = vsel %vm2488, %v2118, 0
    %v2562 = vsel %vm2488, %v2119, 0
    %v2565 = vsel %vm2488, %v2120, 0
    %v2568 = vsel %vm2488, %v2121, 0
    %v2571 = vsel %vm2488, %v2122, 0
    %v2574 = vsel %vm2488, %v2123, 0
    %v2577 = vsel %vm2488, %v2124, 0
    %v2580 = vsel %vm2488, %v2125, 0
    %v2583 = vsel %vm2488, %v2126, 0
    %v2586 = vsel %vm2488, %v2127, 0
    %v2589 = vsel %vm2488, %v2128, 0
    %v2592 = vsel %vm2488, %v2129, 0
    %v2595 = vsel %vm2488, %v2130, 0
    %v2598 = vsel %vm2488, %v2131, 0
    %v2601 = vsel %vm2488, %v2132, 0
    %v2604 = vsel %vm2488, %v2133, 0
    %v2607 = vsel %vm2488, %v2134, 0
    %v2610 = vsel %vm2488, %v2135, 0
    %v2613 = vsel %vm2488, %v2136, 0
    %v2616 = vsel %vm2488, %v2137, 0
    %v2619 = vsel %vm2488, %v2138, 0
    %v2622 = vsel %vm2488, %v2139, 0
    %v2625 = vsel %vm2488, %v2140, 0
    %v2628 = vsel %vm2488, %v2141, 0
    %v2631 = vsel %vm2488, %v2142, 0
    %v2634 = vsel %vm2488, %v2143, 0
    %v2637 = vsel %vm2488, %v2144, 0
    %v2640 = vsel %vm2488, %v2145, 0
    %v2643 = vsel %vm2488, %v2146, 0
    %v2646 = vsel %vm2488, %v2147, 0
    %v2649 = vsel %vm2488, %v2148, 0
    %v2652 = vsel %vm2488, %v2149, 0
    %v2655 = vsel %vm2488, %v2150, 0
    %v2658 = vsel %vm2488, %v2151, 0
    %v2661 = vsel %vm2488, %v2152, 0
    %v2664 = vsel %vm2488, %v2153, 0
    %v2667 = vsel %vm2488, %v2154, 0
    %v2670 = vsel %vm2488, %v2155, 0
    %v2673 = vsel %vm2488, %v2156, 0
    %v2676 = vsel %vm2488, %v2157, 0
    %v2679 = vsel %vm2488, %v2158, 0
    %v2682 = vsel %vm1019, %v2480, 0
    %2684 = vmatprep.subr.mxu0 0.0
    %2685 = vmatpush1.msra.mxu0 %v2682
    %2686 = vmatprep.subr.mxu0 0.0
    %2687 = vmatpush1.msra.mxu0 0.0
    %2688 = vmatprep.subr.mxu0 0.0
    %2689 = vmatpush1.msra.mxu0 0.0
    %2690 = vmatprep.subr.mxu0 0.0
    %2691 = vmatpush1.msra.mxu0 0.0
    %2692 = vmatprep.subr.mxu0 0.0
    %2693 = vmatpush1.msra.mxu0 0.0
    %2694 = vmatprep.subr.mxu0 0.0
    %2695 = vmatpush1.msra.mxu0 0.0
    %2696 = vmatprep.subr.mxu0 0.0
    %2697 = vmatpush1.msra.mxu0 0.0
    %2698 = vmatprep.subr.mxu0 0.0
    %2699 = vmatpush1.msra.mxu0 0.0
    %2700 = vmatprep.subr.mxu0 0.0
    %2701 = vmatpush1.msra.mxu0 0.0
    %2702 = vmatprep.subr.mxu0 0.0
    %2703 = vmatpush1.msra.mxu0 0.0
    %2704 = vmatprep.subr.mxu0 0.0
    %2705 = vmatpush1.msra.mxu0 0.0
    %2706 = vmatprep.subr.mxu0 0.0
    %2707 = vmatpush1.msra.mxu0 0.0
    %2708 = vmatprep.subr.mxu0 0.0
    %2709 = vmatpush1.msra.mxu0 0.0
    %2710 = vmatprep.subr.mxu0 0.0
    %2711 = vmatpush1.msra.mxu0 0.0
    %2712 = vmatprep.subr.mxu0 0.0
    %2713 = vmatpush1.msra.mxu0 0.0
    %2714 = vmatprep.subr.mxu0 0.0
    %2715 = vmatpush1.msra.mxu0 0.0
    %2716 = vmatprep.subr.mxu0 0.0
    %2717 = vmatpush1.msra.mxu0 0.0
    %2718 = vmatprep.subr.mxu0 0.0
    %2719 = vmatpush1.msra.mxu0 0.0
    %2720 = vmatprep.subr.mxu0 0.0
    %2721 = vmatpush1.msra.mxu0 0.0
    %2722 = vmatprep.subr.mxu0 0.0
    %2723 = vmatpush1.msra.mxu0 0.0
    %2724 = vmatprep.subr.mxu0 0.0
    %2725 = vmatpush1.msra.mxu0 0.0
    %2726 = vmatprep.subr.mxu0 0.0
    %2727 = vmatpush1.msra.mxu0 0.0
    %2728 = vmatprep.subr.mxu0 0.0
    %2729 = vmatpush1.msra.mxu0 0.0
    %2730 = vmatprep.subr.mxu0 0.0
    %2731 = vmatpush1.msra.mxu0 0.0
    %2732 = vmatprep.subr.mxu0 0.0
    %2733 = vmatpush1.msra.mxu0 0.0
    %2734 = vmatprep.subr.mxu0 0.0
    %2735 = vmatpush1.msra.mxu0 0.0
    %2736 = vmatprep.subr.mxu0 0.0
    %2737 = vmatpush1.msra.mxu0 0.0
    %2738 = vmatprep.subr.mxu0 0.0
    %2739 = vmatpush1.msra.mxu0 0.0
    %2740 = vmatprep.subr.mxu0 0.0
    %2741 = vmatpush1.msra.mxu0 0.0
    %2742 = vmatprep.subr.mxu0 0.0
    %2743 = vmatpush1.msra.mxu0 0.0
    %2744 = vmatprep.subr.mxu0 0.0
    %2745 = vmatpush1.msra.mxu0 0.0
    %2746 = vmatprep.subr.mxu0 0.0
    %2747 = vmatpush1.msra.mxu0 0.0
    %2748 = vmatprep.mubr.f32.mxu0 0.0
    %2749 = vmatmul.mubr.f32.gmra.mrb[0].mxu0 %v2490
    %v2750 = vpop.f32.mrb[0].mxu0
    %v2751 = vadd.f32 %v2486, %v2750
    %v2752 = vpop.f32.mrb[0].mxu0
    %2753 = vmatprep.mubr.f32.mxu0 0.0
    %2754 = vmatmul.mubr.f32.gmra.mrb[0].mxu0 %v2493
    %v2755 = vpop.f32.mrb[0].mxu0
    %v2756 = vadd.f32 %v2486, %v2755
    %v2757 = vpop.f32.mrb[0].mxu0
    %2758 = vmatprep.mubr.f32.mxu0 0.0
    %2759 = vmatmul.mubr.f32.gmra.mrb[0].mxu0 %v2496
    %v2760 = vpop.f32.mrb[0].mxu0
    %v2761 = vadd.f32 %v2486, %v2760
    %v2762 = vpop.f32.mrb[0].mxu0
    %2763 = vmatprep.mubr.f32.mxu0 0.0
    %2764 = vmatmul.mubr.f32.gmra.mrb[0].mxu0 %v2499
    %v2765 = vpop.f32.mrb[0].mxu0
    %v2766 = vadd.f32 %v2486, %v2765
    %v2767 = vpop.f32.mrb[0].mxu0
    %2768 = vmatprep.mubr.f32.mxu0 0.0
    %2769 = vmatmul.mubr.f32.gmra.mrb[0].mxu0 %v2502
    %v2770 = vpop.f32.mrb[0].mxu0
    %v2771 = vadd.f32 %v2486, %v2770
    %v2772 = vpop.f32.mrb[0].mxu0
    %2773 = vmatprep.mubr.f32.mxu0 0.0
    %2774 = vmatmul.mubr.f32.gmra.mrb[0].mxu0 %v2505
    %v2775 = vpop.f32.mrb[0].mxu0
    %v2776 = vadd.f32 %v2486, %v2775
    %v2777 = vpop.f32.mrb[0].mxu0
    %2778 = vmatprep.mubr.f32.mxu0 0.0
    %2779 = vmatmul.mubr.f32.gmra.mrb[0].mxu0 %v2508
    %v2780 = vpop.f32.mrb[0].mxu0
    %v2781 = vadd.f32 %v2486, %v2780
    %v2782 = vpop.f32.mrb[0].mxu0
    %2783 = vmatprep.mubr.f32.mxu0 0.0
    %2784 = vmatmul.mubr.f32.gmra.mrb[0].mxu0 %v2511
    %v2785 = vpop.f32.mrb[0].mxu0
    %v2786 = vadd.f32 %v2486, %v2785
    %v2787 = vpop.f32.mrb[0].mxu0
    %2788 = vmatprep.mubr.f32.mxu0 0.0
    %2789 = vmatmul.mubr.f32.gmra.mrb[0].mxu0 %v2514
    %v2790 = vpop.f32.mrb[0].mxu0
    %v2791 = vadd.f32 %v2486, %v2790
    %v2792 = vpop.f32.mrb[0].mxu0
    %2793 = vmatprep.mubr.f32.mxu0 0.0
    %2794 = vmatmul.mubr.f32.gmra.mrb[0].mxu0 %v2517
    %v2795 = vpop.f32.mrb[0].mxu0
    %v2796 = vadd.f32 %v2486, %v2795
    %v2797 = vpop.f32.mrb[0].mxu0
    %2798 = vmatprep.mubr.f32.mxu0 0.0
    %2799 = vmatmul.mubr.f32.gmra.mrb[0].mxu0 %v2520
    %v2800 = vpop.f32.mrb[0].mxu0
    %v2801 = vadd.f32 %v2486, %v2800
    %v2802 = vpop.f32.mrb[0].mxu0
    %2803 = vmatprep.mubr.f32.mxu0 0.0
    %2804 = vmatmul.mubr.f32.gmra.mrb[0].mxu0 %v2523
    %v2805 = vpop.f32.mrb[0].mxu0
    %v2806 = vadd.f32 %v2486, %v2805
    %v2807 = vpop.f32.mrb[0].mxu0
    %2808 = vmatprep.mubr.f32.mxu0 0.0
    %2809 = vmatmul.mubr.f32.gmra.mrb[0].mxu0 %v2526
    %v2810 = vpop.f32.mrb[0].mxu0
    %v2811 = vadd.f32 %v2486, %v2810
    %v2812 = vpop.f32.mrb[0].mxu0
    %2813 = vmatprep.mubr.f32.mxu0 0.0
    %2814 = vmatmul.mubr.f32.gmra.mrb[0].mxu0 %v2529
    %v2815 = vpop.f32.mrb[0].mxu0
    %v2816 = vadd.f32 %v2486, %v2815
    %v2817 = vpop.f32.mrb[0].mxu0
    %2818 = vmatprep.mubr.f32.mxu0 0.0
    %2819 = vmatmul.mubr.f32.gmra.mrb[0].mxu0 %v2532
    %v2820 = vpop.f32.mrb[0].mxu0
    %v2821 = vadd.f32 %v2486, %v2820
    %v2822 = vpop.f32.mrb[0].mxu0
    %2823 = vmatprep.mubr.f32.mxu0 0.0
    %2824 = vmatmul.mubr.f32.gmra.mrb[0].mxu0 %v2535
    %v2825 = vpop.f32.mrb[0].mxu0
    %v2826 = vadd.f32 %v2486, %v2825
    %v2827 = vpop.f32.mrb[0].mxu0
    %2828 = vmatprep.mubr.f32.mxu0 0.0
    %2829 = vmatmul.mubr.f32.gmra.mrb[0].mxu0 %v2538
    %v2830 = vpop.f32.mrb[0].mxu0
    %v2831 = vadd.f32 %v2486, %v2830
    %v2832 = vpop.f32.mrb[0].mxu0
    %2833 = vmatprep.mubr.f32.mxu0 0.0
    %2834 = vmatmul.mubr.f32.gmra.mrb[0].mxu0 %v2541
    %v2835 = vpop.f32.mrb[0].mxu0
    %v2836 = vadd.f32 %v2486, %v2835
    %v2837 = vpop.f32.mrb[0].mxu0
    %2838 = vmatprep.mubr.f32.mxu0 0.0
    %2839 = vmatmul.mubr.f32.gmra.mrb[0].mxu0 %v2544
    %v2840 = vpop.f32.mrb[0].mxu0
    %v2841 = vadd.f32 %v2486, %v2840
    %v2842 = vpop.f32.mrb[0].mxu0
    %2843 = vmatprep.mubr.f32.mxu0 0.0
    %2844 = vmatmul.mubr.f32.gmra.mrb[0].mxu0 %v2547
    %v2845 = vpop.f32.mrb[0].mxu0
    %v2846 = vadd.f32 %v2486, %v2845
    %v2847 = vpop.f32.mrb[0].mxu0
    %2848 = vmatprep.mubr.f32.mxu0 0.0
    %2849 = vmatmul.mubr.f32.gmra.mrb[0].mxu0 %v2550
    %v2850 = vpop.f32.mrb[0].mxu0
    %v2851 = vadd.f32 %v2486, %v2850
    %v2852 = vpop.f32.mrb[0].mxu0
    %2853 = vmatprep.mubr.f32.mxu0 0.0
    %2854 = vmatmul.mubr.f32.gmra.mrb[0].mxu0 %v2553
    %v2855 = vpop.f32.mrb[0].mxu0
    %v2856 = vadd.f32 %v2486, %v2855
    %v2857 = vpop.f32.mrb[0].mxu0
    %2858 = vmatprep.mubr.f32.mxu0 0.0
    %2859 = vmatmul.mubr.f32.gmra.mrb[0].mxu0 %v2556
    %v2860 = vpop.f32.mrb[0].mxu0
    %v2861 = vadd.f32 %v2486, %v2860
    %v2862 = vpop.f32.mrb[0].mxu0
    %2863 = vmatprep.mubr.f32.mxu0 0.0
    %2864 = vmatmul.mubr.f32.gmra.mrb[0].mxu0 %v2559
    %v2865 = vpop.f32.mrb[0].mxu0
    %v2866 = vadd.f32 %v2486, %v2865
    %v2867 = vpop.f32.mrb[0].mxu0
    %2868 = vmatprep.mubr.f32.mxu0 0.0
    %2869 = vmatmul.mubr.f32.gmra.mrb[0].mxu0 %v2562
    %v2870 = vpop.f32.mrb[0].mxu0
    %v2871 = vadd.f32 %v2486, %v2870
    %v2872 = vpop.f32.mrb[0].mxu0
    %2873 = vmatprep.mubr.f32.mxu0 0.0
    %2874 = vmatmul.mubr.f32.gmra.mrb[0].mxu0 %v2565
    %v2875 = vpop.f32.mrb[0].mxu0
    %v2876 = vadd.f32 %v2486, %v2875
    %v2877 = vpop.f32.mrb[0].mxu0
    %2878 = vmatprep.mubr.f32.mxu0 0.0
    %2879 = vmatmul.mubr.f32.gmra.mrb[0].mxu0 %v2568
    %v2880 = vpop.f32.mrb[0].mxu0
    %v2881 = vadd.f32 %v2486, %v2880
    %v2882 = vpop.f32.mrb[0].mxu0
    %2883 = vmatprep.mubr.f32.mxu0 0.0
    %2884 = vmatmul.mubr.f32.gmra.mrb[0].mxu0 %v2571
    %v2885 = vpop.f32.mrb[0].mxu0
    %v2886 = vadd.f32 %v2486, %v2885
    %v2887 = vpop.f32.mrb[0].mxu0
    %2888 = vmatprep.mubr.f32.mxu0 0.0
    %2889 = vmatmul.mubr.f32.gmra.mrb[0].mxu0 %v2574
    %v2890 = vpop.f32.mrb[0].mxu0
    %v2891 = vadd.f32 %v2486, %v2890
    %v2892 = vpop.f32.mrb[0].mxu0
    %2893 = vmatprep.mubr.f32.mxu0 0.0
    %2894 = vmatmul.mubr.f32.gmra.mrb[0].mxu0 %v2577
    %v2895 = vpop.f32.mrb[0].mxu0
    %v2896 = vadd.f32 %v2486, %v2895
    %v2897 = vpop.f32.mrb[0].mxu0
    %2898 = vmatprep.mubr.f32.mxu0 0.0
    %2899 = vmatmul.mubr.f32.gmra.mrb[0].mxu0 %v2580
    %v2900 = vpop.f32.mrb[0].mxu0
    %v2901 = vadd.f32 %v2486, %v2900
    %v2902 = vpop.f32.mrb[0].mxu0
    %2903 = vmatprep.mubr.f32.mxu0 0.0
    %2904 = vmatmul.mubr.f32.gmra.mrb[0].mxu0 %v2583
    %v2905 = vpop.f32.mrb[0].mxu0
    %v2906 = vadd.f32 %v2486, %v2905
    %v2907 = vpop.f32.mrb[0].mxu0
    %2908 = vmatprep.mubr.f32.mxu0 0.0
    %2909 = vmatmul.mubr.f32.gmra.mrb[0].mxu0 %v2586
    %v2910 = vpop.f32.mrb[0].mxu0
    %v2911 = vadd.f32 %v2486, %v2910
    %v2912 = vpop.f32.mrb[0].mxu0
    %2913 = vmatprep.mubr.f32.mxu0 0.0
    %2914 = vmatmul.mubr.f32.gmra.mrb[0].mxu0 %v2589
    %v2915 = vpop.f32.mrb[0].mxu0
    %v2916 = vadd.f32 %v2486, %v2915
    %v2917 = vpop.f32.mrb[0].mxu0
    %2918 = vmatprep.mubr.f32.mxu0 0.0
    %2919 = vmatmul.mubr.f32.gmra.mrb[0].mxu0 %v2592
    %v2920 = vpop.f32.mrb[0].mxu0
    %v2921 = vadd.f32 %v2486, %v2920
    %v2922 = vpop.f32.mrb[0].mxu0
    %2923 = vmatprep.mubr.f32.mxu0 0.0
    %2924 = vmatmul.mubr.f32.gmra.mrb[0].mxu0 %v2595
    %v2925 = vpop.f32.mrb[0].mxu0
    %v2926 = vadd.f32 %v2486, %v2925
    %v2927 = vpop.f32.mrb[0].mxu0
    %2928 = vmatprep.mubr.f32.mxu0 0.0
    %2929 = vmatmul.mubr.f32.gmra.mrb[0].mxu0 %v2598
    %v2930 = vpop.f32.mrb[0].mxu0
    %v2931 = vadd.f32 %v2486, %v2930
    %v2932 = vpop.f32.mrb[0].mxu0
    %2933 = vmatprep.mubr.f32.mxu0 0.0
    %2934 = vmatmul.mubr.f32.gmra.mrb[0].mxu0 %v2601
    %v2935 = vpop.f32.mrb[0].mxu0
    %v2936 = vadd.f32 %v2486, %v2935
    %v2937 = vpop.f32.mrb[0].mxu0
    %2938 = vmatprep.mubr.f32.mxu0 0.0
    %2939 = vmatmul.mubr.f32.gmra.mrb[0].mxu0 %v2604
    %v2940 = vpop.f32.mrb[0].mxu0
    %v2941 = vadd.f32 %v2486, %v2940
    %v2942 = vpop.f32.mrb[0].mxu0
    %2943 = vmatprep.mubr.f32.mxu0 0.0
    %2944 = vmatmul.mubr.f32.gmra.mrb[0].mxu0 %v2607
    %v2945 = vpop.f32.mrb[0].mxu0
    %v2946 = vadd.f32 %v2486, %v2945
    %v2947 = vpop.f32.mrb[0].mxu0
    %2948 = vmatprep.mubr.f32.mxu0 0.0
    %2949 = vmatmul.mubr.f32.gmra.mrb[0].mxu0 %v2610
    %v2950 = vpop.f32.mrb[0].mxu0
    %v2951 = vadd.f32 %v2486, %v2950
    %v2952 = vpop.f32.mrb[0].mxu0
    %2953 = vmatprep.mubr.f32.mxu0 0.0
    %2954 = vmatmul.mubr.f32.gmra.mrb[0].mxu0 %v2613
    %v2955 = vpop.f32.mrb[0].mxu0
    %v2956 = vadd.f32 %v2486, %v2955
    %v2957 = vpop.f32.mrb[0].mxu0
    %2958 = vmatprep.mubr.f32.mxu0 0.0
    %2959 = vmatmul.mubr.f32.gmra.mrb[0].mxu0 %v2616
    %v2960 = vpop.f32.mrb[0].mxu0
    %v2961 = vadd.f32 %v2486, %v2960
    %v2962 = vpop.f32.mrb[0].mxu0
    %2963 = vmatprep.mubr.f32.mxu0 0.0
    %2964 = vmatmul.mubr.f32.gmra.mrb[0].mxu0 %v2619
    %v2965 = vpop.f32.mrb[0].mxu0
    %v2966 = vadd.f32 %v2486, %v2965
    %v2967 = vpop.f32.mrb[0].mxu0
    %2968 = vmatprep.mubr.f32.mxu0 0.0
    %2969 = vmatmul.mubr.f32.gmra.mrb[0].mxu0 %v2622
    %v2970 = vpop.f32.mrb[0].mxu0
    %v2971 = vadd.f32 %v2486, %v2970
    %v2972 = vpop.f32.mrb[0].mxu0
    %2973 = vmatprep.mubr.f32.mxu0 0.0
    %2974 = vmatmul.mubr.f32.gmra.mrb[0].mxu0 %v2625
    %v2975 = vpop.f32.mrb[0].mxu0
    %v2976 = vadd.f32 %v2486, %v2975
    %v2977 = vpop.f32.mrb[0].mxu0
    %2978 = vmatprep.mubr.f32.mxu0 0.0
    %2979 = vmatmul.mubr.f32.gmra.mrb[0].mxu0 %v2628
    %v2980 = vpop.f32.mrb[0].mxu0
    %v2981 = vadd.f32 %v2486, %v2980
    %v2982 = vpop.f32.mrb[0].mxu0
    %2983 = vmatprep.mubr.f32.mxu0 0.0
    %2984 = vmatmul.mubr.f32.gmra.mrb[0].mxu0 %v2631
    %v2985 = vpop.f32.mrb[0].mxu0
    %v2986 = vadd.f32 %v2486, %v2985
    %v2987 = vpop.f32.mrb[0].mxu0
    %2988 = vmatprep.mubr.f32.mxu0 0.0
    %2989 = vmatmul.mubr.f32.gmra.mrb[0].mxu0 %v2634
    %v2990 = vpop.f32.mrb[0].mxu0
    %v2991 = vadd.f32 %v2486, %v2990
    %v2992 = vpop.f32.mrb[0].mxu0
    %2993 = vmatprep.mubr.f32.mxu0 0.0
    %2994 = vmatmul.mubr.f32.gmra.mrb[0].mxu0 %v2637
    %v2995 = vpop.f32.mrb[0].mxu0
    %v2996 = vadd.f32 %v2486, %v2995
    %v2997 = vpop.f32.mrb[0].mxu0
    %2998 = vmatprep.mubr.f32.mxu0 0.0
    %2999 = vmatmul.mubr.f32.gmra.mrb[0].mxu0 %v2640
    %v3000 = vpop.f32.mrb[0].mxu0
    %v3001 = vadd.f32 %v2486, %v3000
    %v3002 = vpop.f32.mrb[0].mxu0
    %3003 = vmatprep.mubr.f32.mxu0 0.0
    %3004 = vmatmul.mubr.f32.gmra.mrb[0].mxu0 %v2643
    %v3005 = vpop.f32.mrb[0].mxu0
    %v3006 = vadd.f32 %v2486, %v3005
    %v3007 = vpop.f32.mrb[0].mxu0
    %3008 = vmatprep.mubr.f32.mxu0 0.0
    %3009 = vmatmul.mubr.f32.gmra.mrb[0].mxu0 %v2646
    %v3010 = vpop.f32.mrb[0].mxu0
    %v3011 = vadd.f32 %v2486, %v3010
    %v3012 = vpop.f32.mrb[0].mxu0
    %3013 = vmatprep.mubr.f32.mxu0 0.0
    %3014 = vmatmul.mubr.f32.gmra.mrb[0].mxu0 %v2649
    %v3015 = vpop.f32.mrb[0].mxu0
    %v3016 = vadd.f32 %v2486, %v3015
    %v3017 = vpop.f32.mrb[0].mxu0
    %3018 = vmatprep.mubr.f32.mxu0 0.0
    %3019 = vmatmul.mubr.f32.gmra.mrb[0].mxu0 %v2652
    %v3020 = vpop.f32.mrb[0].mxu0
    %v3021 = vadd.f32 %v2486, %v3020
    %v3022 = vpop.f32.mrb[0].mxu0
    %3023 = vmatprep.mubr.f32.mxu0 0.0
    %3024 = vmatmul.mubr.f32.gmra.mrb[0].mxu0 %v2655
    %v3025 = vpop.f32.mrb[0].mxu0
    %v3026 = vadd.f32 %v2486, %v3025
    %v3027 = vpop.f32.mrb[0].mxu0
    %3028 = vmatprep.mubr.f32.mxu0 0.0
    %3029 = vmatmul.mubr.f32.gmra.mrb[0].mxu0 %v2658
    %v3030 = vpop.f32.mrb[0].mxu0
    %v3031 = vadd.f32 %v2486, %v3030
    %v3032 = vpop.f32.mrb[0].mxu0
    %3033 = vmatprep.mubr.f32.mxu0 0.0
    %3034 = vmatmul.mubr.f32.gmra.mrb[0].mxu0 %v2661
    %v3035 = vpop.f32.mrb[0].mxu0
    %v3036 = vadd.f32 %v2486, %v3035
    %v3037 = vpop.f32.mrb[0].mxu0
    %3038 = vmatprep.mubr.f32.mxu0 0.0
    %3039 = vmatmul.mubr.f32.gmra.mrb[0].mxu0 %v2664
    %v3040 = vpop.f32.mrb[0].mxu0
    %v3041 = vadd.f32 %v2486, %v3040
    %v3042 = vpop.f32.mrb[0].mxu0
    %3043 = vmatprep.mubr.f32.mxu0 0.0
    %3044 = vmatmul.mubr.f32.gmra.mrb[0].mxu0 %v2667
    %v3045 = vpop.f32.mrb[0].mxu0
    %v3046 = vadd.f32 %v2486, %v3045
    %v3047 = vpop.f32.mrb[0].mxu0
    %3048 = vmatprep.mubr.f32.mxu0 0.0
    %3049 = vmatmul.mubr.f32.gmra.mrb[0].mxu0 %v2670
    %v3050 = vpop.f32.mrb[0].mxu0
    %v3051 = vadd.f32 %v2486, %v3050
    %v3052 = vpop.f32.mrb[0].mxu0
    %3053 = vmatprep.mubr.f32.mxu0 0.0
    %3054 = vmatmul.mubr.f32.gmra.mrb[0].mxu0 %v2673
    %v3055 = vpop.f32.mrb[0].mxu0
    %v3056 = vadd.f32 %v2486, %v3055
    %v3057 = vpop.f32.mrb[0].mxu0
    %3058 = vmatprep.mubr.f32.mxu0 0.0
    %3059 = vmatmul.mubr.f32.gmra.mrb[0].mxu0 %v2676
    %v3060 = vpop.f32.mrb[0].mxu0
    %v3061 = vadd.f32 %v2486, %v3060
    %v3062 = vpop.f32.mrb[0].mxu0
    %3063 = vmatprep.mubr.f32.mxu0 0.0
    %3064 = vmatmul.mubr.f32.gmra.mrb[0].mxu0 %v2679
    %v3065 = vpop.f32.mrb[0].mxu0
    %v3066 = vadd.f32 %v2486, %v3065
    %v3067 = vpop.f32.mrb[0].mxu0
    %3068 = vdwg.mxu0
    %v3069 = vtanh.pop %v2751
    %v3070 = vtanh.pop %v2756
    %v3071 = vtanh.pop %v2761
    %v3072 = vtanh.pop %v2766
    %v3073 = vtanh.pop %v2771
    %v3074 = vtanh.pop %v2776
    %v3075 = vtanh.pop %v2781
    %v3076 = vtanh.pop %v2786
    %v3077 = vtanh.pop %v2791
    %v3078 = vtanh.pop %v2796
    %v3079 = vtanh.pop %v2801
    %v3080 = vtanh.pop %v2806
    %v3081 = vtanh.pop %v2811
    %v3082 = vtanh.pop %v2816
    %v3083 = vtanh.pop %v2821
    %v3084 = vtanh.pop %v2826
    %v3085 = vtanh.pop %v2831
    %v3086 = vtanh.pop %v2836
    %v3087 = vtanh.pop %v2841
    %v3088 = vtanh.pop %v2846
    %v3089 = vtanh.pop %v2851
    %v3090 = vtanh.pop %v2856
    %v3091 = vtanh.pop %v2861
    %v3092 = vtanh.pop %v2866
    %v3093 = vtanh.pop %v2871
    %v3094 = vtanh.pop %v2876
    %v3095 = vtanh.pop %v2881
    %v3096 = vtanh.pop %v2886
    %v3097 = vtanh.pop %v2891
    %v3098 = vtanh.pop %v2896
    %v3099 = vtanh.pop %v2901
    %v3100 = vtanh.pop %v2906
    %v3101 = vtanh.pop %v2911
    %v3102 = vtanh.pop %v2916
    %v3103 = vtanh.pop %v2921
    %v3104 = vtanh.pop %v2926
    %v3105 = vtanh.pop %v2931
    %v3106 = vtanh.pop %v2936
    %v3107 = vtanh.pop %v2941
    %v3108 = vtanh.pop %v2946
    %v3109 = vtanh.pop %v2951
    %v3110 = vtanh.pop %v2956
    %v3111 = vtanh.pop %v2961
    %v3112 = vtanh.pop %v2966
    %v3113 = vtanh.pop %v2971
    %v3114 = vtanh.pop %v2976
    %v3115 = vtanh.pop %v2981
    %v3116 = vtanh.pop %v2986
    %v3117 = vtanh.pop %v2991
    %v3118 = vtanh.pop %v2996
    %v3119 = vtanh.pop %v3001
    %v3120 = vtanh.pop %v3006
    %v3121 = vtanh.pop %v3011
    %v3122 = vtanh.pop %v3016
    %v3123 = vtanh.pop %v3021
    %v3124 = vtanh.pop %v3026
    %v3125 = vtanh.pop %v3031
    %v3126 = vtanh.pop %v3036
    %v3127 = vtanh.pop %v3041
    %v3128 = vtanh.pop %v3046
    %v3129 = vtanh.pop %v3051
    %v3130 = vtanh.pop %v3056
    %v3131 = vtanh.pop %v3061
    %v3132 = vtanh.pop %v3066
    %v3133 = vmul.f32 %v3069, 256.0
    %v3134 = vmul.f32 %v3070, 256.0
    %v3135 = vmul.f32 %v3071, 256.0
    %v3136 = vmul.f32 %v3072, 256.0
    %v3137 = vmul.f32 %v3073, 256.0
    %v3138 = vmul.f32 %v3074, 256.0
    %v3139 = vmul.f32 %v3075, 256.0
    %v3140 = vmul.f32 %v3076, 256.0
    %v3141 = vmul.f32 %v3077, 256.0
    %v3142 = vmul.f32 %v3078, 256.0
    %v3143 = vmul.f32 %v3079, 256.0
    %v3144 = vmul.f32 %v3080, 256.0
    %v3145 = vmul.f32 %v3081, 256.0
    %v3146 = vmul.f32 %v3082, 256.0
    %v3147 = vmul.f32 %v3083, 256.0
    %v3148 = vmul.f32 %v3084, 256.0
    %v3149 = vmul.f32 %v3085, 256.0
    %v3150 = vmul.f32 %v3086, 256.0
    %v3151 = vmul.f32 %v3087, 256.0
    %v3152 = vmul.f32 %v3088, 256.0
    %v3153 = vmul.f32 %v3089, 256.0
    %v3154 = vmul.f32 %v3090, 256.0
    %v3155 = vmul.f32 %v3091, 256.0
    %v3156 = vmul.f32 %v3092, 256.0
    %v3157 = vmul.f32 %v3093, 256.0
    %v3158 = vmul.f32 %v3094, 256.0
    %v3159 = vmul.f32 %v3095, 256.0
    %v3160 = vmul.f32 %v3096, 256.0
    %v3161 = vmul.f32 %v3097, 256.0
    %v3162 = vmul.f32 %v3098, 256.0
    %v3163 = vmul.f32 %v3099, 256.0
    %v3164 = vmul.f32 %v3100, 256.0
    %v3165 = vmul.f32 %v3101, 256.0
    %v3166 = vmul.f32 %v3102, 256.0
    %v3167 = vmul.f32 %v3103, 256.0
    %v3168 = vmul.f32 %v3104, 256.0
    %v3169 = vmul.f32 %v3105, 256.0
    %v3170 = vmul.f32 %v3106, 256.0
    %v3171 = vmul.f32 %v3107, 256.0
    %v3172 = vmul.f32 %v3108, 256.0
    %v3173 = vmul.f32 %v3109, 256.0
    %v3174 = vmul.f32 %v3110, 256.0
    %v3175 = vmul.f32 %v3111, 256.0
    %v3176 = vmul.f32 %v3112, 256.0
    %v3177 = vmul.f32 %v3113, 256.0
    %v3178 = vmul.f32 %v3114, 256.0
    %v3179 = vmul.f32 %v3115, 256.0
    %v3180 = vmul.f32 %v3116, 256.0
    %v3181 = vmul.f32 %v3117, 256.0
    %v3182 = vmul.f32 %v3118, 256.0
    %v3183 = vmul.f32 %v3119, 256.0
    %v3184 = vmul.f32 %v3120, 256.0
    %v3185 = vmul.f32 %v3121, 256.0
    %v3186 = vmul.f32 %v3122, 256.0
    %v3187 = vmul.f32 %v3123, 256.0
    %v3188 = vmul.f32 %v3124, 256.0
    %v3189 = vmul.f32 %v3125, 256.0
    %v3190 = vmul.f32 %v3126, 256.0
    %v3191 = vmul.f32 %v3127, 256.0
    %v3192 = vmul.f32 %v3128, 256.0
    %v3193 = vmul.f32 %v3129, 256.0
    %v3194 = vmul.f32 %v3130, 256.0
    %v3195 = vmul.f32 %v3131, 256.0
    %v3196 = vmul.f32 %v3132, 256.0
    %vm3197 = vcmask 15360
    %3198 = vst.msk [vmem:[%s10] sm:$0xff] %vm3197, %v3133
    %3199 = vst.msk [vmem:[%s10 + $0x8] sm:$0xff] %vm3197, %v3134
    %3200 = vst.msk [vmem:[%s10 + $0x10] sm:$0xff] %vm3197, %v3135
    %3201 = vst.msk [vmem:[%s10 + $0x18] sm:$0xff] %vm3197, %v3136
    %3202 = vst.msk [vmem:[%s10 + $0x20] sm:$0xff] %vm3197, %v3137
    %3203 = vst.msk [vmem:[%s10 + $0x28] sm:$0xff] %vm3197, %v3138
    %3204 = vst.msk [vmem:[%s10 + $0x30] sm:$0xff] %vm3197, %v3139
    %3205 = vst.msk [vmem:[%s10 + $0x38] sm:$0xff] %vm3197, %v3140
    %3206 = vst.msk [vmem:[%s10 + $0x40] sm:$0xff] %vm3197, %v3141
    %3207 = vst.msk [vmem:[%s10 + $0x48] sm:$0xff] %vm3197, %v3142
    %3208 = vst.msk [vmem:[%s10 + $0x50] sm:$0xff] %vm3197, %v3143
    %3209 = vst.msk [vmem:[%s10 + $0x58] sm:$0xff] %vm3197, %v3144
    %3210 = vst.msk [vmem:[%s10 + $0x60] sm:$0xff] %vm3197, %v3145
    %3211 = vst.msk [vmem:[%s10 + $0x68] sm:$0xff] %vm3197, %v3146
    %3212 = vst.msk [vmem:[%s10 + $0x70] sm:$0xff] %vm3197, %v3147
    %3213 = vst.msk [vmem:[%s10 + $0x78] sm:$0xff] %vm3197, %v3148
    %3214 = vst.msk [vmem:[%s10 + $0x80] sm:$0xff] %vm3197, %v3149
    %3215 = vst.msk [vmem:[%s10 + $0x88] sm:$0xff] %vm3197, %v3150
    %3216 = vst.msk [vmem:[%s10 + $0x90] sm:$0xff] %vm3197, %v3151
    %3217 = vst.msk [vmem:[%s10 + $0x98] sm:$0xff] %vm3197, %v3152
    %3218 = vst.msk [vmem:[%s10 + $0xa0] sm:$0xff] %vm3197, %v3153
    %3219 = vst.msk [vmem:[%s10 + $0xa8] sm:$0xff] %vm3197, %v3154
    %3220 = vst.msk [vmem:[%s10 + $0xb0] sm:$0xff] %vm3197, %v3155
    %3221 = vst.msk [vmem:[%s10 + $0xb8] sm:$0xff] %vm3197, %v3156
    %3222 = vst.msk [vmem:[%s10 + $0xc0] sm:$0xff] %vm3197, %v3157
    %3223 = vst.msk [vmem:[%s10 + $0xc8] sm:$0xff] %vm3197, %v3158
    %3224 = vst.msk [vmem:[%s10 + $0xd0] sm:$0xff] %vm3197, %v3159
    %3225 = vst.msk [vmem:[%s10 + $0xd8] sm:$0xff] %vm3197, %v3160
    %3226 = vst.msk [vmem:[%s10 + $0xe0] sm:$0xff] %vm3197, %v3161
    %3227 = vst.msk [vmem:[%s10 + $0xe8] sm:$0xff] %vm3197, %v3162
    %3228 = vst.msk [vmem:[%s10 + $0xf0] sm:$0xff] %vm3197, %v3163
    %3229 = vst.msk [vmem:[%s10 + $0xf8] sm:$0xff] %vm3197, %v3164
    %3230 = vst.msk [vmem:[%s10 + $0x100] sm:$0xff] %vm3197, %v3165
    %3231 = vst.msk [vmem:[%s10 + $0x108] sm:$0xff] %vm3197, %v3166
    %3232 = vst.msk [vmem:[%s10 + $0x110] sm:$0xff] %vm3197, %v3167
    %3233 = vst.msk [vmem:[%s10 + $0x118] sm:$0xff] %vm3197, %v3168
    %3234 = vst.msk [vmem:[%s10 + $0x120] sm:$0xff] %vm3197, %v3169
    %3235 = vst.msk [vmem:[%s10 + $0x128] sm:$0xff] %vm3197, %v3170
    %3236 = vst.msk [vmem:[%s10 + $0x130] sm:$0xff] %vm3197, %v3171
    %3237 = vst.msk [vmem:[%s10 + $0x138] sm:$0xff] %vm3197, %v3172
    %3238 = vst.msk [vmem:[%s10 + $0x140] sm:$0xff] %vm3197, %v3173
    %3239 = vst.msk [vmem:[%s10 + $0x148] sm:$0xff] %vm3197, %v3174
    %3240 = vst.msk [vmem:[%s10 + $0x150] sm:$0xff] %vm3197, %v3175
    %3241 = vst.msk [vmem:[%s10 + $0x158] sm:$0xff] %vm3197, %v3176
    %3242 = vst.msk [vmem:[%s10 + $0x160] sm:$0xff] %vm3197, %v3177
    %3243 = vst.msk [vmem:[%s10 + $0x168] sm:$0xff] %vm3197, %v3178
    %3244 = vst.msk [vmem:[%s10 + $0x170] sm:$0xff] %vm3197, %v3179
    %3245 = vst.msk [vmem:[%s10 + $0x178] sm:$0xff] %vm3197, %v3180
    %3246 = vst.msk [vmem:[%s10 + $0x180] sm:$0xff] %vm3197, %v3181
    %3247 = vst.msk [vmem:[%s10 + $0x188] sm:$0xff] %vm3197, %v3182
    %3248 = vst.msk [vmem:[%s10 + $0x190] sm:$0xff] %vm3197, %v3183
    %3249 = vst.msk [vmem:[%s10 + $0x198] sm:$0xff] %vm3197, %v3184
    %3250 = vst.msk [vmem:[%s10 + $0x1a0] sm:$0xff] %vm3197, %v3185
    %3251 = vst.msk [vmem:[%s10 + $0x1a8] sm:$0xff] %vm3197, %v3186
    %3252 = vst.msk [vmem:[%s10 + $0x1b0] sm:$0xff] %vm3197, %v3187
    %3253 = vst.msk [vmem:[%s10 + $0x1b8] sm:$0xff] %vm3197, %v3188
    %3254 = vst.msk [vmem:[%s10 + $0x1c0] sm:$0xff] %vm3197, %v3189
    %3255 = vst.msk [vmem:[%s10 + $0x1c8] sm:$0xff] %vm3197, %v3190
    %3256 = vst.msk [vmem:[%s10 + $0x1d0] sm:$0xff] %vm3197, %v3191
    %3257 = vst.msk [vmem:[%s10 + $0x1d8] sm:$0xff] %vm3197, %v3192
    %3258 = vst.msk [vmem:[%s10 + $0x1e0] sm:$0xff] %vm3197, %v3193
    %3259 = vst.msk [vmem:[%s10 + $0x1e8] sm:$0xff] %vm3197, %v3194
    %3260 = vst.msk [vmem:[%s10 + $0x1f0] sm:$0xff] %vm3197, %v3195
    %3261 = vst.msk [vmem:[%s10 + $0x1f8] sm:$0xff] %vm3197, %v3196
    // Predicated region
    $region38: #{evflownet_forward.23} parent=1 // pred_check
      _
    $region39: #{evflownet_forward.23} parent=1 // pred_check_branch
      %3263 = sbr.rel (0) target = $region41
    $region40: #{evflownet_forward.23} parent=1 // pred_region
      %s3265 = ssub.s32 4096, 4096
      %3266 = vsyncadd [#allocation3], %s3265
      %s3267 = sshll.u32 [#allocation2], 4
      %s3268 = int_to_ptr.vmem [resolvable:$true] %s3267
      %3273 = dma.vmem_to_hbm [thread:$0]  %s3268, 4096, %s9, [#allocation3], 64, 64, 4
    $region41: #{evflownet_forward.23} parent=1 // pred_fallthru
      _
    // Predicated region
    $region42: #{evflownet_forward.23} parent=1 // pred_check
      _
    $region43: #{evflownet_forward.23} parent=1 // pred_check_branch
      %3275 = sbr.rel (0) target = $region45
    $region44: #{evflownet_forward.23} parent=1 // pred_region
      _
    $region45: #{evflownet_forward.23} parent=1 // pred_fallthru
      _
    // Predicated region
    $region46: #{evflownet_forward.23} parent=1 // pred_check
      _
    $region47: #{evflownet_forward.23} parent=1 // pred_check_branch
      %3277 = sbr.rel (0) target = $region49
    $region48: #{evflownet_forward.23} parent=1 // pred_region
      %3278 = dma.done [#allocation3], 4096
    $region49: #{evflownet_forward.23} parent=1 // pred_fallthru
      _
    // Predicated region
    $region50: #{evflownet_forward.23} parent=1 // pred_check
      _
    $region51: #{evflownet_forward.23} parent=1 // pred_check_branch
      %3280 = sbr.rel (0) target = $region53
    $region52: #{evflownet_forward.23} parent=1 // pred_region
      _
    $region53: #{evflownet_forward.23} parent=1 // pred_fallthru
      _
    %3281 = vsyncpa [#allocation3], 1

</llo_original>
